<compile_context>
chip_gen: v5e
topology: v5e:2x2
jax: 0.10.0
libtpu: 0.0.40
codegen_flags: <defaults>
</compile_context>

<pallas_src>
import functools
import math

import jax
import jax.numpy as jnp
from jax.experimental import pallas as pl
from jax.experimental.pallas import tpu as pltpu


# ---------------------------------------------------------------------------
# Scaled-down (but structurally identical) config.
# Real model: dim=2048, heads=16, kv_heads=4, head_dim=128, ffn=8192, layers=16.
class Config:
    dim = 512                 # embedding dim (q_proj out = dim)
    num_heads = 4             # heads used in the attention reshape
    num_kv_heads = 1          # GQA: repeat factor = num_heads // num_kv_heads = 4
    head_dim = 128            # same head_dim as the real model
    intermediate_dim = 1024   # SwiGLU hidden dim
    num_layers = 4
    layer_norm_eps = 1e-4     # sa_norm / mlp_norm eps (reference: 0.0001)
    final_norm_eps = 1e-5     # backbone.norm eps (reference: NORM_EPS)
    clamp_x = 100.0
    clamp_qkv = 10.0


# ---------------------------------------------------------------------------
def _layer_norm(x, w, b, eps):
    """PyTorch nn.LayerNorm over the last dim (biased variance)."""
    mu = jnp.mean(x, axis=-1, keepdims=True)
    var = jnp.mean((x - mu) ** 2, axis=-1, keepdims=True)
    return (x - mu) * jax.lax.rsqrt(var + eps) * w + b


def _sigmoid_stable(x):
    # sigmoid(x) = 0.5 * (1 + tanh(x/2)): EUP tanh, no inf intermediate.
    return 0.5 * (jnp.tanh(0.5 * x) + 1.0)


def _make_backbone_kernel(cfg, B, S):
    D = cfg.dim
    H = cfg.num_heads
    KVH = cfg.num_kv_heads
    HD = cfg.head_dim
    REP = H // KVH
    scale = 1.0 / math.sqrt(HD)
    CX = cfg.clamp_x
    CQ = cfg.clamp_qkv
    LN_EPS = cfg.layer_norm_eps
    FN_EPS = cfg.final_norm_eps

    def kernel(x_ref, vecd_ref, wq_ref, wk_ref, wv_ref, veckv_ref, wo_ref,
               w1_ref, w3_ref, veci_ref, w2_ref, fnw_ref, fnb_ref,
               o_ref, x_sc):
        layer = pl.program_id(0)

        @pl.when(layer == 0)
        def _init():
            x0 = x_ref[...]
            # model-input guard: where(isnan|isinf, 0, x)
            x_sc[...] = jnp.where(jnp.abs(x0) < jnp.inf, x0, 0.0)

        x_before = x_sc[...]                       # (M, D) layer input (guard fallback)
        x = jnp.clip(x_before, -CX, CX)

        # packed per-layer vectors (all f32)
        vd = vecd_ref[0]                           # (8, D)
        sa_w, sa_b = vd[0:1], vd[1:2]
        mn_w, mn_b = vd[2:3], vd[3:4]
        bq, bo, b2 = vd[4:5], vd[5:6], vd[6:7]
        vkv = veckv_ref[0]                         # (2, DKV)
        bk, bv = vkv[0:1], vkv[1:2]
        vi = veci_ref[0]                           # (2, I)
        b1, b3 = vi[0:1], vi[1:2]

        # ---------------- attention block ----------------
        nx = _layer_norm(x, sa_w, sa_b, LN_EPS)
        nxb = nx.astype(jnp.bfloat16)
        q = jnp.dot(nxb, wq_ref[0], preferred_element_type=jnp.float32) + bq
        k = jnp.dot(nxb, wk_ref[0], preferred_element_type=jnp.float32) + bk
        v = jnp.dot(nxb, wv_ref[0], preferred_element_type=jnp.float32) + bv
        # softmax scale folded into q at the clamp/cast
        qb = (jnp.clip(q, -CQ, CQ) * scale).astype(jnp.bfloat16)
        kb = jnp.clip(k, -CQ, CQ).astype(jnp.bfloat16)
        vb = jnp.clip(v, -CQ, CQ).astype(jnp.bfloat16)

        # GQA attention per sequence; static unroll over batch and KV-head
        # groups.  Query heads of one group are stacked along rows so the
        # QK^T / PV matmuls see M = REP*S instead of S.
        batch_rows = []
        for b in range(B):
            r0 = b * S
            qs = qb[r0:r0 + S]                     # (S, DQ)
            ks = kb[r0:r0 + S]                     # (S, DKV)
            vs = vb[r0:r0 + S]                     # (S, DKV)
            head_cols = []
            for g in range(KVH):
                kh = ks[:, g * HD:(g + 1) * HD]    # (S, HD)
                vh = vs[:, g * HD:(g + 1) * HD]    # (S, HD)
                qg = jnp.concatenate(
                    [qs[:, (g * REP + r) * HD:(g * REP + r + 1) * HD]
                     for r in range(REP)], axis=0)  # (REP*S, HD)
                s = jax.lax.dot_general(
                    qg, kh, (((1,), (1,)), ((), ())),
                    preferred_element_type=jnp.float32)      # (REP*S, S)
                m = jnp.max(s, axis=-1, keepdims=True)
                p = jnp.exp(s - m)
                p = p / jnp.sum(p, axis=-1, keepdims=True)    # exact divide
                og = jnp.dot(p.astype(jnp.bfloat16), vh,
                             preferred_element_type=jnp.float32)  # (REP*S, HD)
                for r in range(REP):
                    head_cols.append(og[r * S:(r + 1) * S, :])
            batch_rows.append(jnp.concatenate(head_cols, axis=-1))   # (S, DQ)
        attn_heads = jnp.concatenate(batch_rows, axis=0)             # (M, DQ)

        attn = jnp.dot(attn_heads.astype(jnp.bfloat16), wo_ref[0],
                       preferred_element_type=jnp.float32) + bo
        attn = jnp.clip(attn, -CX, CX)
        x = jnp.clip(x + attn, -CX, CX)

        # ---------------- SwiGLU MLP block ----------------
        nm = _layer_norm(x, mn_w, mn_b, LN_EPS)
        nmb = nm.astype(jnp.bfloat16)
        h1 = jnp.clip(
            jnp.dot(nmb, w1_ref[0], preferred_element_type=jnp.float32) + b1,
            -CX, CX)
        h3 = jnp.clip(
            jnp.dot(nmb, w3_ref[0], preferred_element_type=jnp.float32) + b3,
            -CX, CX)
        hidden = jnp.clip(h1 * _sigmoid_stable(h1) * h3, -CX, CX)    # silu(h1)*h3
        out = jnp.clip(
            jnp.dot(hidden.astype(jnp.bfloat16), w2_ref[0],
                    preferred_element_type=jnp.float32) + b2,
            -CX, CX)
        x_new = jnp.clip(x + out, -CX, CX)

        # per-layer elementwise NaN/Inf guard: revert bad elements to layer input
        x_sc[...] = jnp.where(jnp.abs(x_new) < jnp.inf, x_new, x_before)

        @pl.when(layer == pl.num_programs(0) - 1)
        def _final():
            o_ref[...] = _layer_norm(x_sc[...], fnw_ref[...], fnb_ref[...], FN_EPS)

    return kernel


# ---------------------------------------------------------------------------
def backbone_forward(params, x, cfg):
    """x: (B, S, dim) float32 hidden states -> (B, S, dim) float32."""
    B, S, D = x.shape
    M = B * S
    L = cfg.num_layers
    HD = cfg.head_dim
    DQ = cfg.num_heads * HD
    DKV = cfg.num_kv_heads * HD
    I = cfg.intermediate_dim
    assert D == cfg.dim and DQ == cfg.dim

    kernel = _make_backbone_kernel(cfg, B, S)

    def per_layer(shape):
        return pl.BlockSpec((1,) + shape[1:], lambda l: (l, 0, 0))

    in_specs = [
        pl.BlockSpec((M, D), lambda l: (0, 0)),     # x (flattened tokens)
        per_layer((L, 8, D)),                       # packed D-width vectors
        per_layer((L, D, DQ)),                      # wq
        per_layer((L, D, DKV)),                     # wk
        per_layer((L, D, DKV)),                     # wv
        per_layer((L, 2, DKV)),                     # packed bk / bv
        per_layer((L, DQ, D)),                      # wo
        per_layer((L, D, I)),                       # w1
        per_layer((L, D, I)),                       # w3
        per_layer((L, 2, I)),                       # packed b1 / b3
        per_layer((L, I, D)),                       # w2
        pl.BlockSpec((1, D), lambda l: (0, 0)),     # final norm weight
        pl.BlockSpec((1, D), lambda l: (0, 0)),     # final norm bias
    ]

    grid_spec = pltpu.PrefetchScalarGridSpec(
        num_scalar_prefetch=0,
        grid=(L,),                                  # layers only: weights DMA'd once
        in_specs=in_specs,
        out_specs=pl.BlockSpec((M, D), lambda l: (0, 0)),
        scratch_shapes=[
            pltpu.VMEM((M, D), jnp.float32),        # residual stream (whole batch)
        ],
    )

    out = pl.pallas_call(
        kernel,
        out_shape=jax.ShapeDtypeStruct((M, D), jnp.float32),
        grid_spec=grid_spec,
        compiler_params=pltpu.CompilerParams(
            dimension_semantics=("arbitrary",),
            vmem_limit_bytes=32 * 1024 * 1024),
    )(x.reshape(M, D).astype(jnp.float32),
      params["vecD"],
      params["wq"], params["wk"], params["wv"], params["vecKV"], params["wo"],
      params["w1"], params["w3"], params["vecI"], params["w2"],
      params["fn_w"], params["fn_b"])
    return out.reshape(B, S, D)


# ---------------------------------------------------------------------------
def init_params(key, cfg):
    D = cfg.dim
    HD = cfg.head_dim
    DQ = cfg.num_heads * HD
    DKV = cfg.num_kv_heads * HD
    I = cfg.intermediate_dim
    L = cfg.num_layers
    ks = jax.random.split(key, 14)

    def w(k, fan_in, shape):   # matmul weights stored (in, out), bf16 for the MXU
        return (jax.random.normal(k, shape, jnp.float32)
                * (1.0 / math.sqrt(fan_in))).astype(jnp.bfloat16)

    def b(k, shape):
        return jax.random.normal(k, shape, jnp.float32) * 0.01

    bq = b(ks[1], (L, D))
    bo = b(ks[7], (L, D))
    b2 = b(ks[13], (L, D))
    bk = b(ks[3], (L, DKV))
    bv = b(ks[5], (L, DKV))
    b1 = b(ks[9], (L, I))
    b3 = b(ks[11], (L, I))

    # pack the tiny per-layer vectors (see kernel row assignment)
    vecD = jnp.zeros((L, 8, D), jnp.float32)
    vecD = vecD.at[:, 0].set(1.0)     # sa_norm weight
    vecD = vecD.at[:, 1].set(0.0)     # sa_norm bias
    vecD = vecD.at[:, 2].set(1.0)     # mlp_norm weight
    vecD = vecD.at[:, 3].set(0.0)     # mlp_norm bias
    vecD = vecD.at[:, 4].set(bq)
    vecD = vecD.at[:, 5].set(bo)
    vecD = vecD.at[:, 6].set(b2)
    vecKV = jnp.stack([bk, bv], axis=1)            # (L, 2, DKV)
    vecI = jnp.stack([b1, b3], axis=1)             # (L, 2, I)

    return {
        "vecD": vecD,
        "wq": w(ks[0], D, (L, D, DQ)),
        "wk": w(ks[2], D, (L, D, DKV)),
        "wv": w(ks[4], D, (L, D, DKV)),
        "vecKV": vecKV,
        "wo": w(ks[6], DQ, (L, DQ, D)),
        "w1": w(ks[8], D, (L, D, I)),
        "w3": w(ks[10], D, (L, D, I)),
        "vecI": vecI,
        "w2": w(ks[12], I, (L, I, D)),
        "fn_w": jnp.ones((1, D), jnp.float32),
        "fn_b": jnp.zeros((1, D), jnp.float32),
    }


if __name__ == "__main__":
    cfg = Config()
    key = jax.random.PRNGKey(0)
    pk, xk = jax.random.split(key)
    params = init_params(pk, cfg)

    B, S = 2, 16
    x = jax.random.normal(xk, (B, S, cfg.dim), jnp.float32)

    fwd = jax.jit(functools.partial(backbone_forward, cfg=cfg))
    y = fwd(params, x)
    jax.block_until_ready(y)

    assert y.shape == (B, S, cfg.dim), y.shape
    assert bool(jnp.all(jnp.isfinite(y)))
    print("KERNEL_OK")
</pallas_src>

<mosaic_0001>
module attributes {stable_mosaic.version = 11 : i64} {
  func.func @kernel(%arg0: i32, %arg1: memref<32x512xf32, #tpu.memory_space<vmem>>, %arg2: memref<1x8x512xf32, #tpu.memory_space<vmem>>, %arg3: memref<1x512x512xbf16, #tpu.memory_space<vmem>>, %arg4: memref<1x512x128xbf16, #tpu.memory_space<vmem>>, %arg5: memref<1x512x128xbf16, #tpu.memory_space<vmem>>, %arg6: memref<1x2x128xf32, #tpu.memory_space<vmem>>, %arg7: memref<1x512x512xbf16, #tpu.memory_space<vmem>>, %arg8: memref<1x512x1024xbf16, #tpu.memory_space<vmem>>, %arg9: memref<1x512x1024xbf16, #tpu.memory_space<vmem>>, %arg10: memref<1x2x1024xf32, #tpu.memory_space<vmem>>, %arg11: memref<1x1024x512xbf16, #tpu.memory_space<vmem>>, %arg12: memref<1x512xf32, #tpu.memory_space<vmem>>, %arg13: memref<1x512xf32, #tpu.memory_space<vmem>>, %arg14: memref<32x512xf32, #tpu.memory_space<vmem>>, %arg15: memref<32x512xf32, #tpu.memory_space<vmem>>) attributes {dimension_semantics = [#tpu.dimension_semantics<arbitrary>], iteration_bounds = array<i64: 4>, scalar_prefetch = 0 : i64, scratch_operands = 1 : i64, tpu.core_type = #tpu.core_type<tc>, window_params = [{pipeline_mode = #tpu.pipeline_mode<synchronous>, transform_indices = @transform_0, window_bounds = array<i64: 32, 512>}, {transform_indices = @transform_1, window_bounds = array<i64: 1, 8, 512>}, {transform_indices = @transform_2, window_bounds = array<i64: 1, 512, 512>}, {transform_indices = @transform_3, window_bounds = array<i64: 1, 512, 128>}, {transform_indices = @transform_4, window_bounds = array<i64: 1, 512, 128>}, {transform_indices = @transform_5, window_bounds = array<i64: 1, 2, 128>}, {transform_indices = @transform_6, window_bounds = array<i64: 1, 512, 512>}, {transform_indices = @transform_7, window_bounds = array<i64: 1, 512, 1024>}, {transform_indices = @transform_8, window_bounds = array<i64: 1, 512, 1024>}, {transform_indices = @transform_9, window_bounds = array<i64: 1, 2, 1024>}, {transform_indices = @transform_10, window_bounds = array<i64: 1, 1024, 512>}, {pipeline_mode = #tpu.pipeline_mode<synchronous>, transform_indices = @transform_11, window_bounds = array<i64: 1, 512>}, {pipeline_mode = #tpu.pipeline_mode<synchronous>, transform_indices = @transform_12, window_bounds = array<i64: 1, 512>}, {pipeline_mode = #tpu.pipeline_mode<synchronous>, transform_indices = @transform_13, window_bounds = array<i64: 32, 512>}]} {
    %c0_i32 = arith.constant 0 : i32
    %0 = arith.cmpi eq, %arg0, %c0_i32 : i32
    %1 = arith.extui %0 : i1 to i32
    %c0_i32_0 = arith.constant 0 : i32
    %2 = arith.cmpi ne, %1, %c0_i32_0 : i32
    scf.if %2 {
      %c0_86 = arith.constant 0 : index
      %c0_87 = arith.constant 0 : index
      %223 = vector.load %arg1[%c0_86, %c0_87] : memref<32x512xf32, #tpu.memory_space<vmem>>, vector<32x512xf32>
      %224 = math.absf %223 : vector<32x512xf32>
      %cst_88 = arith.constant 0x7F800000 : f32
      %225 = vector.broadcast %cst_88 : f32 to vector<32x512xf32>
      %226 = arith.cmpf olt, %224, %225 : vector<32x512xf32>
      %cst_89 = arith.constant 0.000000e+00 : f32
      %227 = vector.broadcast %cst_89 : f32 to vector<32x512xf32>
      %228 = arith.select %226, %223, %227 : vector<32x512xi1>, vector<32x512xf32>
      %c0_90 = arith.constant 0 : index
      %c0_91 = arith.constant 0 : index
      %229 = vector.load %arg15[%c0_90, %c0_91] : memref<32x512xf32, #tpu.memory_space<vmem>>, vector<32x512xf32>
      tpu.vector_store %arg15[%c0_90, %c0_91], %228 {strides = array<i32>} : memref<32x512xf32, #tpu.memory_space<vmem>>, vector<32x512xf32>,
    } else {
    }
    %c0 = arith.constant 0 : index
    %c0_1 = arith.constant 0 : index
    %3 = vector.load %arg15[%c0, %c0_1] : memref<32x512xf32, #tpu.memory_space<vmem>>, vector<32x512xf32>
    %cst = arith.constant -1.000000e+02 : f32
    %cst_2 = arith.constant 1.000000e+02 : f32
    %4 = vector.broadcast %cst : f32 to vector<32x512xf32>
    %5 = arith.maximumf %4, %3 : vector<32x512xf32>
    %6 = vector.broadcast %cst_2 : f32 to vector<32x512xf32>
    %7 = arith.minimumf %6, %5 : vector<32x512xf32>
    %c0_3 = arith.constant 0 : index
    %c0_4 = arith.constant 0 : index
    %c0_5 = arith.constant 0 : index
    %8 = vector.load %arg2[%c0_3, %c0_4, %c0_5] : memref<1x8x512xf32, #tpu.memory_space<vmem>>, vector<1x8x512xf32>
    %9 = vector.shape_cast %8 : vector<1x8x512xf32> to vector<8x512xf32>
    %10 = vector.extract_strided_slice %9 {offsets = [0, 0], sizes = [1, 512], strides = [1, 1]} : vector<8x512xf32> to vector<1x512xf32>
    %11 = vector.extract_strided_slice %9 {offsets = [1, 0], sizes = [1, 512], strides = [1, 1]} : vector<8x512xf32> to vector<1x512xf32>
    %12 = vector.extract_strided_slice %9 {offsets = [2, 0], sizes = [1, 512], strides = [1, 1]} : vector<8x512xf32> to vector<1x512xf32>
    %13 = vector.extract_strided_slice %9 {offsets = [3, 0], sizes = [1, 512], strides = [1, 1]} : vector<8x512xf32> to vector<1x512xf32>
    %14 = vector.extract_strided_slice %9 {offsets = [4, 0], sizes = [1, 512], strides = [1, 1]} : vector<8x512xf32> to vector<1x512xf32>
    %15 = vector.extract_strided_slice %9 {offsets = [5, 0], sizes = [1, 512], strides = [1, 1]} : vector<8x512xf32> to vector<1x512xf32>
    %16 = vector.extract_strided_slice %9 {offsets = [6, 0], sizes = [1, 512], strides = [1, 1]} : vector<8x512xf32> to vector<1x512xf32>
    %c0_6 = arith.constant 0 : index
    %c0_7 = arith.constant 0 : index
    %c0_8 = arith.constant 0 : index
    %17 = vector.load %arg6[%c0_6, %c0_7, %c0_8] : memref<1x2x128xf32, #tpu.memory_space<vmem>>, vector<1x2x128xf32>
    %18 = vector.shape_cast %17 : vector<1x2x128xf32> to vector<2x128xf32>
    %19 = vector.extract_strided_slice %18 {offsets = [0, 0], sizes = [1, 128], strides = [1, 1]} : vector<2x128xf32> to vector<1x128xf32>
    %20 = vector.extract_strided_slice %18 {offsets = [1, 0], sizes = [1, 128], strides = [1, 1]} : vector<2x128xf32> to vector<1x128xf32>
    %c0_9 = arith.constant 0 : index
    %c0_10 = arith.constant 0 : index
    %c0_11 = arith.constant 0 : index
    %21 = vector.load %arg10[%c0_9, %c0_10, %c0_11] : memref<1x2x1024xf32, #tpu.memory_space<vmem>>, vector<1x2x1024xf32>
    %22 = vector.shape_cast %21 : vector<1x2x1024xf32> to vector<2x1024xf32>
    %23 = vector.extract_strided_slice %22 {offsets = [0, 0], sizes = [1, 1024], strides = [1, 1]} : vector<2x1024xf32> to vector<1x1024xf32>
    %24 = vector.extract_strided_slice %22 {offsets = [1, 0], sizes = [1, 1024], strides = [1, 1]} : vector<2x1024xf32> to vector<1x1024xf32>
    %cst_12 = arith.constant dense<0.000000e+00> : vector<32xf32>
    %25 = vector.multi_reduction <add>, %7, %cst_12 [1] : vector<32x512xf32> to vector<32xf32>
    %26 = vector.shape_cast %25 : vector<32xf32> to vector<32x1xf32>
    %cst_13 = arith.constant 5.120000e+02 : f32
    %27 = vector.broadcast %cst_13 : f32 to vector<32x1xf32>
    %28 = arith.divf %26, %27 : vector<32x1xf32>
    %29 = vector.broadcast %28 : vector<32x1xf32> to vector<32x512xf32>
    %30 = arith.subf %7, %29 : vector<32x512xf32>
    %31 = arith.mulf %30, %30 : vector<32x512xf32>
    %cst_14 = arith.constant dense<0.000000e+00> : vector<32xf32>
    %32 = vector.multi_reduction <add>, %31, %cst_14 [1] : vector<32x512xf32> to vector<32xf32>
    %33 = vector.shape_cast %32 : vector<32xf32> to vector<32x1xf32>
    %cst_15 = arith.constant 5.120000e+02 : f32
    %34 = vector.broadcast %cst_15 : f32 to vector<32x1xf32>
    %35 = arith.divf %33, %34 : vector<32x1xf32>
    %36 = vector.broadcast %28 : vector<32x1xf32> to vector<32x512xf32>
    %37 = arith.subf %7, %36 : vector<32x512xf32>
    %cst_16 = arith.constant 9.99999974E-5 : f32
    %38 = vector.broadcast %cst_16 : f32 to vector<32x1xf32>
    %39 = arith.addf %35, %38 : vector<32x1xf32>
    %40 = math.rsqrt %39 : vector<32x1xf32>
    %41 = vector.broadcast %40 : vector<32x1xf32> to vector<32x512xf32>
    %42 = arith.mulf %37, %41 : vector<32x512xf32>
    %43 = vector.broadcast %10 : vector<1x512xf32> to vector<32x512xf32>
    %44 = arith.mulf %42, %43 : vector<32x512xf32>
    %45 = vector.broadcast %11 : vector<1x512xf32> to vector<32x512xf32>
    %46 = arith.addf %44, %45 : vector<32x512xf32>
    %47 = arith.truncf %46 : vector<32x512xf32> to vector<32x512xbf16>
    %c0_17 = arith.constant 0 : index
    %c0_18 = arith.constant 0 : index
    %c0_19 = arith.constant 0 : index
    %48 = vector.load %arg3[%c0_17, %c0_18, %c0_19] : memref<1x512x512xbf16, #tpu.memory_space<vmem>>, vector<1x512x512xbf16>
    %49 = vector.shape_cast %48 : vector<1x512x512xbf16> to vector<512x512xbf16>
    %cst_20 = arith.constant dense<0.000000e+00> : vector<32x512xf32>
    %50 = tpu.matmul %47, %49, %cst_20 {dimension_numbers = #tpu.dot_dimension_numbers<[1], [0], [0], [1], [0, 0, 1, 1], [], []>} : vector<32x512xbf16>, vector<512x512xbf16>, vector<32x512xf32> -> vector<32x512xf32>
    %51 = vector.broadcast %14 : vector<1x512xf32> to vector<32x512xf32>
    %52 = arith.addf %50, %51 : vector<32x512xf32>
    %c0_21 = arith.constant 0 : index
    %c0_22 = arith.constant 0 : index
    %c0_23 = arith.constant 0 : index
    %53 = vector.load %arg4[%c0_21, %c0_22, %c0_23] : memref<1x512x128xbf16, #tpu.memory_space<vmem>>, vector<1x512x128xbf16>
    %54 = vector.shape_cast %53 : vector<1x512x128xbf16> to vector<512x128xbf16>
    %cst_24 = arith.constant dense<0.000000e+00> : vector<32x128xf32>
    %55 = tpu.matmul %47, %54, %cst_24 {dimension_numbers = #tpu.dot_dimension_numbers<[1], [0], [0], [1], [0, 0, 1, 1], [], []>} : vector<32x512xbf16>, vector<512x128xbf16>, vector<32x128xf32> -> vector<32x128xf32>
    %56 = vector.broadcast %19 : vector<1x128xf32> to vector<32x128xf32>
    %57 = arith.addf %55, %56 : vector<32x128xf32>
    %c0_25 = arith.constant 0 : index
    %c0_26 = arith.constant 0 : index
    %c0_27 = arith.constant 0 : index
    %58 = vector.load %arg5[%c0_25, %c0_26, %c0_27] : memref<1x512x128xbf16, #tpu.memory_space<vmem>>, vector<1x512x128xbf16>
    %59 = vector.shape_cast %58 : vector<1x512x128xbf16> to vector<512x128xbf16>
    %cst_28 = arith.constant dense<0.000000e+00> : vector<32x128xf32>
    %60 = tpu.matmul %47, %59, %cst_28 {dimension_numbers = #tpu.dot_dimension_numbers<[1], [0], [0], [1], [0, 0, 1, 1], [], []>} : vector<32x512xbf16>, vector<512x128xbf16>, vector<32x128xf32> -> vector<32x128xf32>
    %61 = vector.broadcast %20 : vector<1x128xf32> to vector<32x128xf32>
    %62 = arith.addf %60, %61 : vector<32x128xf32>
    %cst_29 = arith.constant -1.000000e+01 : f32
    %cst_30 = arith.constant 1.000000e+01 : f32
    %63 = vector.broadcast %cst_29 : f32 to vector<32x512xf32>
    %64 = arith.maximumf %63, %52 : vector<32x512xf32>
    %65 = vector.broadcast %cst_30 : f32 to vector<32x512xf32>
    %66 = arith.minimumf %65, %64 : vector<32x512xf32>
    %cst_31 = arith.constant 0.0883883461 : f32
    %67 = vector.broadcast %cst_31 : f32 to vector<32x512xf32>
    %68 = arith.mulf %66, %67 : vector<32x512xf32>
    %69 = arith.truncf %68 : vector<32x512xf32> to vector<32x512xbf16>
    %cst_32 = arith.constant -1.000000e+01 : f32
    %cst_33 = arith.constant 1.000000e+01 : f32
    %70 = vector.broadcast %cst_32 : f32 to vector<32x128xf32>
    %71 = arith.maximumf %70, %57 : vector<32x128xf32>
    %72 = vector.broadcast %cst_33 : f32 to vector<32x128xf32>
    %73 = arith.minimumf %72, %71 : vector<32x128xf32>
    %74 = arith.truncf %73 : vector<32x128xf32> to vector<32x128xbf16>
    %cst_34 = arith.constant -1.000000e+01 : f32
    %cst_35 = arith.constant 1.000000e+01 : f32
    %75 = vector.broadcast %cst_34 : f32 to vector<32x128xf32>
    %76 = arith.maximumf %75, %62 : vector<32x128xf32>
    %77 = vector.broadcast %cst_35 : f32 to vector<32x128xf32>
    %78 = arith.minimumf %77, %76 : vector<32x128xf32>
    %79 = arith.truncf %78 : vector<32x128xf32> to vector<32x128xbf16>
    %80 = vector.extract_strided_slice %69 {offsets = [0, 0], sizes = [16, 512], strides = [1, 1]} : vector<32x512xbf16> to vector<16x512xbf16>
    %81 = vector.extract_strided_slice %74 {offsets = [0, 0], sizes = [16, 128], strides = [1, 1]} : vector<32x128xbf16> to vector<16x128xbf16>
    %82 = vector.extract_strided_slice %79 {offsets = [0, 0], sizes = [16, 128], strides = [1, 1]} : vector<32x128xbf16> to vector<16x128xbf16>
    %83 = vector.extract_strided_slice %80 {offsets = [0, 0], sizes = [16, 128], strides = [1, 1]} : vector<16x512xbf16> to vector<16x128xbf16>
    %84 = vector.extract_strided_slice %80 {offsets = [0, 128], sizes = [16, 128], strides = [1, 1]} : vector<16x512xbf16> to vector<16x128xbf16>
    %85 = vector.extract_strided_slice %80 {offsets = [0, 256], sizes = [16, 128], strides = [1, 1]} : vector<16x512xbf16> to vector<16x128xbf16>
    %86 = vector.extract_strided_slice %80 {offsets = [0, 384], sizes = [16, 128], strides = [1, 1]} : vector<16x512xbf16> to vector<16x128xbf16>
    %87 = tpu.concatenate %83, %84, %85, %86 in 0 : vector<16x128xbf16>, vector<16x128xbf16>, vector<16x128xbf16>, vector<16x128xbf16> -> vector<64x128xbf16>
    %cst_36 = arith.constant dense<0.000000e+00> : vector<64x16xf32>
    %88 = tpu.matmul %87, %81, %cst_36 {dimension_numbers = #tpu.dot_dimension_numbers<[1], [1], [0], [0], [0, 0, 1, 0], [], []>} : vector<64x128xbf16>, vector<16x128xbf16>, vector<64x16xf32> -> vector<64x16xf32>
    %cst_37 = arith.constant dense<0xFF800000> : vector<64xf32>
    %89 = vector.multi_reduction <maximumf>, %88, %cst_37 [1] : vector<64x16xf32> to vector<64xf32>
    %90 = vector.shape_cast %89 : vector<64xf32> to vector<64x1xf32>
    %91 = vector.broadcast %90 : vector<64x1xf32> to vector<64x16xf32>
    %92 = arith.subf %88, %91 : vector<64x16xf32>
    %93 = math.exp %92 : vector<64x16xf32>
    %cst_38 = arith.constant dense<0.000000e+00> : vector<64xf32>
    %94 = vector.multi_reduction <add>, %93, %cst_38 [1] : vector<64x16xf32> to vector<64xf32>
    %95 = vector.shape_cast %94 : vector<64xf32> to vector<64x1xf32>
    %96 = vector.broadcast %95 : vector<64x1xf32> to vector<64x16xf32>
    %97 = arith.divf %93, %96 : vector<64x16xf32>
    %98 = arith.truncf %97 : vector<64x16xf32> to vector<64x16xbf16>
    %cst_39 = arith.constant dense<0.000000e+00> : vector<64x128xf32>
    %99 = tpu.matmul %98, %82, %cst_39 {dimension_numbers = #tpu.dot_dimension_numbers<[1], [0], [0], [1], [0, 0, 1, 1], [], []>} : vector<64x16xbf16>, vector<16x128xbf16>, vector<64x128xf32> -> vector<64x128xf32>
    %100 = vector.extract_strided_slice %99 {offsets = [0, 0], sizes = [16, 128], strides = [1, 1]} : vector<64x128xf32> to vector<16x128xf32>
    %101 = vector.extract_strided_slice %99 {offsets = [16, 0], sizes = [16, 128], strides = [1, 1]} : vector<64x128xf32> to vector<16x128xf32>
    %102 = vector.extract_strided_slice %99 {offsets = [32, 0], sizes = [16, 128], strides = [1, 1]} : vector<64x128xf32> to vector<16x128xf32>
    %103 = vector.extract_strided_slice %99 {offsets = [48, 0], sizes = [16, 128], strides = [1, 1]} : vector<64x128xf32> to vector<16x128xf32>
    %104 = tpu.concatenate %100, %101, %102, %103 in 1 : vector<16x128xf32>, vector<16x128xf32>, vector<16x128xf32>, vector<16x128xf32> -> vector<16x512xf32>
    %105 = vector.extract_strided_slice %69 {offsets = [16, 0], sizes = [16, 512], strides = [1, 1]} : vector<32x512xbf16> to vector<16x512xbf16>
    %106 = vector.extract_strided_slice %74 {offsets = [16, 0], sizes = [16, 128], strides = [1, 1]} : vector<32x128xbf16> to vector<16x128xbf16>
    %107 = vector.extract_strided_slice %79 {offsets = [16, 0], sizes = [16, 128], strides = [1, 1]} : vector<32x128xbf16> to vector<16x128xbf16>
    %108 = vector.extract_strided_slice %105 {offsets = [0, 0], sizes = [16, 128], strides = [1, 1]} : vector<16x512xbf16> to vector<16x128xbf16>
    %109 = vector.extract_strided_slice %105 {offsets = [0, 128], sizes = [16, 128], strides = [1, 1]} : vector<16x512xbf16> to vector<16x128xbf16>
    %110 = vector.extract_strided_slice %105 {offsets = [0, 256], sizes = [16, 128], strides = [1, 1]} : vector<16x512xbf16> to vector<16x128xbf16>
    %111 = vector.extract_strided_slice %105 {offsets = [0, 384], sizes = [16, 128], strides = [1, 1]} : vector<16x512xbf16> to vector<16x128xbf16>
    %112 = tpu.concatenate %108, %109, %110, %111 in 0 : vector<16x128xbf16>, vector<16x128xbf16>, vector<16x128xbf16>, vector<16x128xbf16> -> vector<64x128xbf16>
    %cst_40 = arith.constant dense<0.000000e+00> : vector<64x16xf32>
    %113 = tpu.matmul %112, %106, %cst_40 {dimension_numbers = #tpu.dot_dimension_numbers<[1], [1], [0], [0], [0, 0, 1, 0], [], []>} : vector<64x128xbf16>, vector<16x128xbf16>, vector<64x16xf32> -> vector<64x16xf32>
    %cst_41 = arith.constant dense<0xFF800000> : vector<64xf32>
    %114 = vector.multi_reduction <maximumf>, %113, %cst_41 [1] : vector<64x16xf32> to vector<64xf32>
    %115 = vector.shape_cast %114 : vector<64xf32> to vector<64x1xf32>
    %116 = vector.broadcast %115 : vector<64x1xf32> to vector<64x16xf32>
    %117 = arith.subf %113, %116 : vector<64x16xf32>
    %118 = math.exp %117 : vector<64x16xf32>
    %cst_42 = arith.constant dense<0.000000e+00> : vector<64xf32>
    %119 = vector.multi_reduction <add>, %118, %cst_42 [1] : vector<64x16xf32> to vector<64xf32>
    %120 = vector.shape_cast %119 : vector<64xf32> to vector<64x1xf32>
    %121 = vector.broadcast %120 : vector<64x1xf32> to vector<64x16xf32>
    %122 = arith.divf %118, %121 : vector<64x16xf32>
    %123 = arith.truncf %122 : vector<64x16xf32> to vector<64x16xbf16>
    %cst_43 = arith.constant dense<0.000000e+00> : vector<64x128xf32>
    %124 = tpu.matmul %123, %107, %cst_43 {dimension_numbers = #tpu.dot_dimension_numbers<[1], [0], [0], [1], [0, 0, 1, 1], [], []>} : vector<64x16xbf16>, vector<16x128xbf16>, vector<64x128xf32> -> vector<64x128xf32>
    %125 = vector.extract_strided_slice %124 {offsets = [0, 0], sizes = [16, 128], strides = [1, 1]} : vector<64x128xf32> to vector<16x128xf32>
    %126 = vector.extract_strided_slice %124 {offsets = [16, 0], sizes = [16, 128], strides = [1, 1]} : vector<64x128xf32> to vector<16x128xf32>
    %127 = vector.extract_strided_slice %124 {offsets = [32, 0], sizes = [16, 128], strides = [1, 1]} : vector<64x128xf32> to vector<16x128xf32>
    %128 = vector.extract_strided_slice %124 {offsets = [48, 0], sizes = [16, 128], strides = [1, 1]} : vector<64x128xf32> to vector<16x128xf32>
    %129 = tpu.concatenate %125, %126, %127, %128 in 1 : vector<16x128xf32>, vector<16x128xf32>, vector<16x128xf32>, vector<16x128xf32> -> vector<16x512xf32>
    %130 = tpu.concatenate %104, %129 in 0 : vector<16x512xf32>, vector<16x512xf32> -> vector<32x512xf32>
    %131 = arith.truncf %130 : vector<32x512xf32> to vector<32x512xbf16>
    %c0_44 = arith.constant 0 : index
    %c0_45 = arith.constant 0 : index
    %c0_46 = arith.constant 0 : index
    %132 = vector.load %arg7[%c0_44, %c0_45, %c0_46] : memref<1x512x512xbf16, #tpu.memory_space<vmem>>, vector<1x512x512xbf16>
    %133 = vector.shape_cast %132 : vector<1x512x512xbf16> to vector<512x512xbf16>
    %cst_47 = arith.constant dense<0.000000e+00> : vector<32x512xf32>
    %134 = tpu.matmul %131, %133, %cst_47 {dimension_numbers = #tpu.dot_dimension_numbers<[1], [0], [0], [1], [0, 0, 1, 1], [], []>} : vector<32x512xbf16>, vector<512x512xbf16>, vector<32x512xf32> -> vector<32x512xf32>
    %135 = vector.broadcast %15 : vector<1x512xf32> to vector<32x512xf32>
    %136 = arith.addf %134, %135 : vector<32x512xf32>
    %cst_48 = arith.constant -1.000000e+02 : f32
    %cst_49 = arith.constant 1.000000e+02 : f32
    %137 = vector.broadcast %cst_48 : f32 to vector<32x512xf32>
    %138 = arith.maximumf %137, %136 : vector<32x512xf32>
    %139 = vector.broadcast %cst_49 : f32 to vector<32x512xf32>
    %140 = arith.minimumf %139, %138 : vector<32x512xf32>
    %141 = arith.addf %7, %140 : vector<32x512xf32>
    %cst_50 = arith.constant -1.000000e+02 : f32
    %cst_51 = arith.constant 1.000000e+02 : f32
    %142 = vector.broadcast %cst_50 : f32 to vector<32x512xf32>
    %143 = arith.maximumf %142, %141 : vector<32x512xf32>
    %144 = vector.broadcast %cst_51 : f32 to vector<32x512xf32>
    %145 = arith.minimumf %144, %143 : vector<32x512xf32>
    %cst_52 = arith.constant dense<0.000000e+00> : vector<32xf32>
    %146 = vector.multi_reduction <add>, %145, %cst_52 [1] : vector<32x512xf32> to vector<32xf32>
    %147 = vector.shape_cast %146 : vector<32xf32> to vector<32x1xf32>
    %cst_53 = arith.constant 5.120000e+02 : f32
    %148 = vector.broadcast %cst_53 : f32 to vector<32x1xf32>
    %149 = arith.divf %147, %148 : vector<32x1xf32>
    %150 = vector.broadcast %149 : vector<32x1xf32> to vector<32x512xf32>
    %151 = arith.subf %145, %150 : vector<32x512xf32>
    %152 = arith.mulf %151, %151 : vector<32x512xf32>
    %cst_54 = arith.constant dense<0.000000e+00> : vector<32xf32>
    %153 = vector.multi_reduction <add>, %152, %cst_54 [1] : vector<32x512xf32> to vector<32xf32>
    %154 = vector.shape_cast %153 : vector<32xf32> to vector<32x1xf32>
    %cst_55 = arith.constant 5.120000e+02 : f32
    %155 = vector.broadcast %cst_55 : f32 to vector<32x1xf32>
    %156 = arith.divf %154, %155 : vector<32x1xf32>
    %157 = vector.broadcast %149 : vector<32x1xf32> to vector<32x512xf32>
    %158 = arith.subf %145, %157 : vector<32x512xf32>
    %cst_56 = arith.constant 9.99999974E-5 : f32
    %159 = vector.broadcast %cst_56 : f32 to vector<32x1xf32>
    %160 = arith.addf %156, %159 : vector<32x1xf32>
    %161 = math.rsqrt %160 : vector<32x1xf32>
    %162 = vector.broadcast %161 : vector<32x1xf32> to vector<32x512xf32>
    %163 = arith.mulf %158, %162 : vector<32x512xf32>
    %164 = vector.broadcast %12 : vector<1x512xf32> to vector<32x512xf32>
    %165 = arith.mulf %163, %164 : vector<32x512xf32>
    %166 = vector.broadcast %13 : vector<1x512xf32> to vector<32x512xf32>
    %167 = arith.addf %165, %166 : vector<32x512xf32>
    %168 = arith.truncf %167 : vector<32x512xf32> to vector<32x512xbf16>
    %c0_57 = arith.constant 0 : index
    %c0_58 = arith.constant 0 : index
    %c0_59 = arith.constant 0 : index
    %169 = vector.load %arg8[%c0_57, %c0_58, %c0_59] : memref<1x512x1024xbf16, #tpu.memory_space<vmem>>, vector<1x512x1024xbf16>
    %170 = vector.shape_cast %169 : vector<1x512x1024xbf16> to vector<512x1024xbf16>
    %cst_60 = arith.constant dense<0.000000e+00> : vector<32x1024xf32>
    %171 = tpu.matmul %168, %170, %cst_60 {dimension_numbers = #tpu.dot_dimension_numbers<[1], [0], [0], [1], [0, 0, 1, 1], [], []>} : vector<32x512xbf16>, vector<512x1024xbf16>, vector<32x1024xf32> -> vector<32x1024xf32>
    %172 = vector.broadcast %23 : vector<1x1024xf32> to vector<32x1024xf32>
    %173 = arith.addf %171, %172 : vector<32x1024xf32>
    %cst_61 = arith.constant -1.000000e+02 : f32
    %cst_62 = arith.constant 1.000000e+02 : f32
    %174 = vector.broadcast %cst_61 : f32 to vector<32x1024xf32>
    %175 = arith.maximumf %174, %173 : vector<32x1024xf32>
    %176 = vector.broadcast %cst_62 : f32 to vector<32x1024xf32>
    %177 = arith.minimumf %176, %175 : vector<32x1024xf32>
    %c0_63 = arith.constant 0 : index
    %c0_64 = arith.constant 0 : index
    %c0_65 = arith.constant 0 : index
    %178 = vector.load %arg9[%c0_63, %c0_64, %c0_65] : memref<1x512x1024xbf16, #tpu.memory_space<vmem>>, vector<1x512x1024xbf16>
    %179 = vector.shape_cast %178 : vector<1x512x1024xbf16> to vector<512x1024xbf16>
    %cst_66 = arith.constant dense<0.000000e+00> : vector<32x1024xf32>
    %180 = tpu.matmul %168, %179, %cst_66 {dimension_numbers = #tpu.dot_dimension_numbers<[1], [0], [0], [1], [0, 0, 1, 1], [], []>} : vector<32x512xbf16>, vector<512x1024xbf16>, vector<32x1024xf32> -> vector<32x1024xf32>
    %181 = vector.broadcast %24 : vector<1x1024xf32> to vector<32x1024xf32>
    %182 = arith.addf %180, %181 : vector<32x1024xf32>
    %cst_67 = arith.constant -1.000000e+02 : f32
    %cst_68 = arith.constant 1.000000e+02 : f32
    %183 = vector.broadcast %cst_67 : f32 to vector<32x1024xf32>
    %184 = arith.maximumf %183, %182 : vector<32x1024xf32>
    %185 = vector.broadcast %cst_68 : f32 to vector<32x1024xf32>
    %186 = arith.minimumf %185, %184 : vector<32x1024xf32>
    %cst_69 = arith.constant 5.000000e-01 : f32
    %187 = vector.broadcast %cst_69 : f32 to vector<32x1024xf32>
    %188 = arith.mulf %187, %177 : vector<32x1024xf32>
    %189 = math.tanh %188 : vector<32x1024xf32>
    %cst_70 = arith.constant 1.000000e+00 : f32
    %190 = vector.broadcast %cst_70 : f32 to vector<32x1024xf32>
    %191 = arith.addf %189, %190 : vector<32x1024xf32>
    %cst_71 = arith.constant 5.000000e-01 : f32
    %192 = vector.broadcast %cst_71 : f32 to vector<32x1024xf32>
    %193 = arith.mulf %192, %191 : vector<32x1024xf32>
    %194 = arith.mulf %177, %193 : vector<32x1024xf32>
    %195 = arith.mulf %194, %186 : vector<32x1024xf32>
    %cst_72 = arith.constant -1.000000e+02 : f32
    %cst_73 = arith.constant 1.000000e+02 : f32
    %196 = vector.broadcast %cst_72 : f32 to vector<32x1024xf32>
    %197 = arith.maximumf %196, %195 : vector<32x1024xf32>
    %198 = vector.broadcast %cst_73 : f32 to vector<32x1024xf32>
    %199 = arith.minimumf %198, %197 : vector<32x1024xf32>
    %200 = arith.truncf %199 : vector<32x1024xf32> to vector<32x1024xbf16>
    %c0_74 = arith.constant 0 : index
    %c0_75 = arith.constant 0 : index
    %c0_76 = arith.constant 0 : index
    %201 = vector.load %arg11[%c0_74, %c0_75, %c0_76] : memref<1x1024x512xbf16, #tpu.memory_space<vmem>>, vector<1x1024x512xbf16>
    %202 = vector.shape_cast %201 : vector<1x1024x512xbf16> to vector<1024x512xbf16>
    %cst_77 = arith.constant dense<0.000000e+00> : vector<32x512xf32>
    %203 = tpu.matmul %200, %202, %cst_77 {dimension_numbers = #tpu.dot_dimension_numbers<[1], [0], [0], [1], [0, 0, 1, 1], [], []>} : vector<32x1024xbf16>, vector<1024x512xbf16>, vector<32x512xf32> -> vector<32x512xf32>
    %204 = vector.broadcast %16 : vector<1x512xf32> to vector<32x512xf32>
    %205 = arith.addf %203, %204 : vector<32x512xf32>
    %cst_78 = arith.constant -1.000000e+02 : f32
    %cst_79 = arith.constant 1.000000e+02 : f32
    %206 = vector.broadcast %cst_78 : f32 to vector<32x512xf32>
    %207 = arith.maximumf %206, %205 : vector<32x512xf32>
    %208 = vector.broadcast %cst_79 : f32 to vector<32x512xf32>
    %209 = arith.minimumf %208, %207 : vector<32x512xf32>
    %210 = arith.addf %145, %209 : vector<32x512xf32>
    %cst_80 = arith.constant -1.000000e+02 : f32
    %cst_81 = arith.constant 1.000000e+02 : f32
    %211 = vector.broadcast %cst_80 : f32 to vector<32x512xf32>
    %212 = arith.maximumf %211, %210 : vector<32x512xf32>
    %213 = vector.broadcast %cst_81 : f32 to vector<32x512xf32>
    %214 = arith.minimumf %213, %212 : vector<32x512xf32>
    %215 = math.absf %214 : vector<32x512xf32>
    %cst_82 = arith.constant 0x7F800000 : f32
    %216 = vector.broadcast %cst_82 : f32 to vector<32x512xf32>
    %217 = arith.cmpf olt, %215, %216 : vector<32x512xf32>
    %218 = arith.select %217, %214, %3 : vector<32x512xi1>, vector<32x512xf32>
    %c0_83 = arith.constant 0 : index
    %c0_84 = arith.constant 0 : index
    %219 = vector.load %arg15[%c0_83, %c0_84] : memref<32x512xf32, #tpu.memory_space<vmem>>, vector<32x512xf32>
    tpu.vector_store %arg15[%c0_83, %c0_84], %218 {strides = array<i32>} : memref<32x512xf32, #tpu.memory_space<vmem>>, vector<32x512xf32>,
    %c3_i32 = arith.constant 3 : i32
    %220 = arith.cmpi eq, %arg0, %c3_i32 : i32
    %221 = arith.extui %220 : i1 to i32
    %c0_i32_85 = arith.constant 0 : i32
    %222 = arith.cmpi ne, %221, %c0_i32_85 : i32
    scf.if %222 {
      %c0_86 = arith.constant 0 : index
      %c0_87 = arith.constant 0 : index
      %223 = vector.load %arg15[%c0_86, %c0_87] : memref<32x512xf32, #tpu.memory_space<vmem>>, vector<32x512xf32>
      %c0_88 = arith.constant 0 : index
      %c0_89 = arith.constant 0 : index
      %224 = vector.load %arg12[%c0_88, %c0_89] : memref<1x512xf32, #tpu.memory_space<vmem>>, vector<1x512xf32>
      %c0_90 = arith.constant 0 : index
      %c0_91 = arith.constant 0 : index
      %225 = vector.load %arg13[%c0_90, %c0_91] : memref<1x512xf32, #tpu.memory_space<vmem>>, vector<1x512xf32>
      %cst_92 = arith.constant dense<0.000000e+00> : vector<32xf32>
      %226 = vector.multi_reduction <add>, %223, %cst_92 [1] : vector<32x512xf32> to vector<32xf32>
      %227 = vector.shape_cast %226 : vector<32xf32> to vector<32x1xf32>
      %cst_93 = arith.constant 5.120000e+02 : f32
      %228 = vector.broadcast %cst_93 : f32 to vector<32x1xf32>
      %229 = arith.divf %227, %228 : vector<32x1xf32>
      %230 = vector.broadcast %229 : vector<32x1xf32> to vector<32x512xf32>
      %231 = arith.subf %223, %230 : vector<32x512xf32>
      %232 = arith.mulf %231, %231 : vector<32x512xf32>
      %cst_94 = arith.constant dense<0.000000e+00> : vector<32xf32>
      %233 = vector.multi_reduction <add>, %232, %cst_94 [1] : vector<32x512xf32> to vector<32xf32>
      %234 = vector.shape_cast %233 : vector<32xf32> to vector<32x1xf32>
      %cst_95 = arith.constant 5.120000e+02 : f32
      %235 = vector.broadcast %cst_95 : f32 to vector<32x1xf32>
      %236 = arith.divf %234, %235 : vector<32x1xf32>
      %237 = vector.broadcast %229 : vector<32x1xf32> to vector<32x512xf32>
      %238 = arith.subf %223, %237 : vector<32x512xf32>
      %cst_96 = arith.constant 9.99999974E-6 : f32
      %239 = vector.broadcast %cst_96 : f32 to vector<32x1xf32>
      %240 = arith.addf %236, %239 : vector<32x1xf32>
      %241 = math.rsqrt %240 : vector<32x1xf32>
      %242 = vector.broadcast %241 : vector<32x1xf32> to vector<32x512xf32>
      %243 = arith.mulf %238, %242 : vector<32x512xf32>
      %244 = vector.broadcast %224 : vector<1x512xf32> to vector<32x512xf32>
      %245 = arith.mulf %243, %244 : vector<32x512xf32>
      %246 = vector.broadcast %225 : vector<1x512xf32> to vector<32x512xf32>
      %247 = arith.addf %245, %246 : vector<32x512xf32>
      %c0_97 = arith.constant 0 : index
      %c0_98 = arith.constant 0 : index
      %248 = vector.load %arg14[%c0_97, %c0_98] : memref<32x512xf32, #tpu.memory_space<vmem>>, vector<32x512xf32>
      tpu.vector_store %arg14[%c0_97, %c0_98], %247 {strides = array<i32>} : memref<32x512xf32, #tpu.memory_space<vmem>>, vector<32x512xf32>,
    } else {
    }
    return
  }
  func.func @transform_0(%arg0: i32) -> (i32, i32) {
    %c0_i32 = arith.constant 0 : i32
    %c0_i32_0 = arith.constant 0 : i32
    %c0_i32_1 = arith.constant 0 : i32
    return %c0_i32, %c0_i32_0 : i32, i32
  }
  func.func @transform_1(%arg0: i32) -> (i32, i32, i32) {
    %c0_i32 = arith.constant 0 : i32
    %c0_i32_0 = arith.constant 0 : i32
    %c0_i32_1 = arith.constant 0 : i32
    return %arg0, %c0_i32, %c0_i32_0 : i32, i32, i32
  }
  func.func @transform_2(%arg0: i32) -> (i32, i32, i32) {
    %c0_i32 = arith.constant 0 : i32
    %c0_i32_0 = arith.constant 0 : i32
    %c0_i32_1 = arith.constant 0 : i32
    return %arg0, %c0_i32, %c0_i32_0 : i32, i32, i32
  }
  func.func @transform_3(%arg0: i32) -> (i32, i32, i32) {
    %c0_i32 = arith.constant 0 : i32
    %c0_i32_0 = arith.constant 0 : i32
    %c0_i32_1 = arith.constant 0 : i32
    return %arg0, %c0_i32, %c0_i32_0 : i32, i32, i32
  }
  func.func @transform_4(%arg0: i32) -> (i32, i32, i32) {
    %c0_i32 = arith.constant 0 : i32
    %c0_i32_0 = arith.constant 0 : i32
    %c0_i32_1 = arith.constant 0 : i32
    return %arg0, %c0_i32, %c0_i32_0 : i32, i32, i32
  }
  func.func @transform_5(%arg0: i32) -> (i32, i32, i32) {
    %c0_i32 = arith.constant 0 : i32
    %c0_i32_0 = arith.constant 0 : i32
    %c0_i32_1 = arith.constant 0 : i32
    return %arg0, %c0_i32, %c0_i32_0 : i32, i32, i32
  }
  func.func @transform_6(%arg0: i32) -> (i32, i32, i32) {
    %c0_i32 = arith.constant 0 : i32
    %c0_i32_0 = arith.constant 0 : i32
    %c0_i32_1 = arith.constant 0 : i32
    return %arg0, %c0_i32, %c0_i32_0 : i32, i32, i32
  }
  func.func @transform_7(%arg0: i32) -> (i32, i32, i32) {
    %c0_i32 = arith.constant 0 : i32
    %c0_i32_0 = arith.constant 0 : i32
    %c0_i32_1 = arith.constant 0 : i32
    return %arg0, %c0_i32, %c0_i32_0 : i32, i32, i32
  }
  func.func @transform_8(%arg0: i32) -> (i32, i32, i32) {
    %c0_i32 = arith.constant 0 : i32
    %c0_i32_0 = arith.constant 0 : i32
    %c0_i32_1 = arith.constant 0 : i32
    return %arg0, %c0_i32, %c0_i32_0 : i32, i32, i32
  }
  func.func @transform_9(%arg0: i32) -> (i32, i32, i32) {
    %c0_i32 = arith.constant 0 : i32
    %c0_i32_0 = arith.constant 0 : i32
    %c0_i32_1 = arith.constant 0 : i32
    return %arg0, %c0_i32, %c0_i32_0 : i32, i32, i32
  }
  func.func @transform_10(%arg0: i32) -> (i32, i32, i32) {
    %c0_i32 = arith.constant 0 : i32
    %c0_i32_0 = arith.constant 0 : i32
    %c0_i32_1 = arith.constant 0 : i32
    return %arg0, %c0_i32, %c0_i32_0 : i32, i32, i32
  }
  func.func @transform_11(%arg0: i32) -> (i32, i32) {
    %c0_i32 = arith.constant 0 : i32
    %c0_i32_0 = arith.constant 0 : i32
    %c0_i32_1 = arith.constant 0 : i32
    return %c0_i32, %c0_i32_0 : i32, i32
  }
  func.func @transform_12(%arg0: i32) -> (i32, i32) {
    %c0_i32 = arith.constant 0 : i32
    %c0_i32_0 = arith.constant 0 : i32
    %c0_i32_1 = arith.constant 0 : i32
    return %c0_i32, %c0_i32_0 : i32, i32
  }
  func.func @transform_13(%arg0: i32) -> (i32, i32) {
    %c0_i32 = arith.constant 0 : i32
    %c0_i32_0 = arith.constant 0 : i32
    %c0_i32_1 = arith.constant 0 : i32
    return %c0_i32, %c0_i32_0 : i32, i32
  }
}

</mosaic_0001>

<llo_original>
// kernel: backbone_forward.1
$region0: #{backbone_forward.1}
  #allocation0 [shape = 'u32[]', space=smem, size = 0x4, offset = 0x4, fixed_abs, tag = 'smem constant byte address 0x4 - core index']
  #allocation1 [shape = 'u32[72,128]{1,0:T(1,128)}', space=vmem, size = 0x9000, scoped, tag = 'internal scratch']
  #allocation2 [shape = 'f32[32,512]{1,0:T(8,128)}', space=vmem, size = 0x10000, scoped, tag = 'scratch operand']
  %s0 = inlined_call_operand.hbm [shape: f32[32,512], index: 0, kind: input, shape index: {}]
  %s1 = inlined_call_operand.hbm [shape: f32[4,8,512], index: 1, kind: input, shape index: {}]
  %s2 = inlined_call_operand.hbm [shape: bf16[4,512,512], index: 2, kind: input, shape index: {}]
  %s3 = inlined_call_operand.hbm [shape: bf16[4,512,128], index: 3, kind: input, shape index: {}]
  %s4 = inlined_call_operand.hbm [shape: bf16[4,512,128], index: 4, kind: input, shape index: {}]
  %s5 = inlined_call_operand.hbm [shape: f32[4,2,128], index: 5, kind: input, shape index: {}]
  %s6 = inlined_call_operand.hbm [shape: bf16[4,512,512], index: 6, kind: input, shape index: {}]
  %s7 = inlined_call_operand.hbm [shape: bf16[4,512,1024], index: 7, kind: input, shape index: {}]
  %s8 = inlined_call_operand.hbm [shape: bf16[4,512,1024], index: 8, kind: input, shape index: {}]
  %s9 = inlined_call_operand.hbm [shape: f32[4,2,1024], index: 9, kind: input, shape index: {}]
  %s10 = inlined_call_operand.hbm [shape: bf16[4,1024,512], index: 10, kind: input, shape index: {}]
  %s11 = inlined_call_operand.hbm [shape: f32[1,512], index: 11, kind: input, shape index: {}]
  %s12 = inlined_call_operand.hbm [shape: f32[1,512], index: 12, kind: input, shape index: {}]
  %s13 = inlined_call_operand.hbm [shape: f32[32,512], index: 13, kind: output, shape index: {}]
  %s14 = sld [smem:[#allocation0]]
  $region145: #{backbone_forward.1} parent=0
    _
  %s16 = ssub.s32 1, %s14
  %s17 = scalar_select 0, %s16, %s14
  $region1: #{backbone_forward.1} parent=0
    #allocation3 [shape = 'u8[65536]{0}', space=vmem, size = 0x10000, scoped, tag = 'input window, operand 0, single buffered']
    #allocation4 [shape = 's32[2]{0}', space=sflag, size = 0x8, scoped, tag = 'scoped memory for backbone_forward.1']
    #allocation5 [shape = 's32[2]{0}', space=sflag, size = 0x8, scoped, tag = 'scoped memory for backbone_forward.1']
    #allocation6 [shape = 'u8[32768]{0}', space=vmem, size = 0x8000, scoped, tag = 'input window, operand 1']
    #allocation7 [shape = 's32[2]{0}', space=sflag, size = 0x8, scoped, tag = 'scoped memory for backbone_forward.1']
    #allocation8 [shape = 'u8[1048576]{0}', space=vmem, size = 0x100000, scoped, tag = 'input window, operand 2']
    #allocation9 [shape = 'u8[262144]{0}', space=vmem, size = 0x40000, scoped, tag = 'input window, operand 3']
    #allocation10 [shape = 's32[2]{0}', space=sflag, size = 0x8, scoped, tag = 'scoped memory for backbone_forward.1']
    #allocation11 [shape = 'u8[262144]{0}', space=vmem, size = 0x40000, scoped, tag = 'input window, operand 4']
    #allocation12 [shape = 'u8[2048]{0}', space=vmem, size = 0x800, scoped, tag = 'input window, operand 5']
    #allocation13 [shape = 's32[2]{0}', space=sflag, size = 0x8, scoped, tag = 'scoped memory for backbone_forward.1']
    #allocation14 [shape = 'u8[1048576]{0}', space=vmem, size = 0x100000, scoped, tag = 'input window, operand 6']
    #allocation15 [shape = 'u8[2097152]{0}', space=vmem, size = 0x200000, scoped, tag = 'input window, operand 7']
    #allocation16 [shape = 's32[2]{0}', space=sflag, size = 0x8, scoped, tag = 'scoped memory for backbone_forward.1']
    #allocation17 [shape = 'u8[2097152]{0}', space=vmem, size = 0x200000, scoped, tag = 'input window, operand 8']
    #allocation18 [shape = 'u8[16384]{0}', space=vmem, size = 0x4000, scoped, tag = 'input window, operand 9']
    #allocation19 [shape = 's32[2]{0}', space=sflag, size = 0x8, scoped, tag = 'scoped memory for backbone_forward.1']
    #allocation20 [shape = 'u8[2097152]{0}', space=vmem, size = 0x200000, scoped, tag = 'input window, operand 10']
    #allocation21 [shape = 'u8[2048]{0}', space=vmem, size = 0x800, scoped, tag = 'input window, operand 11, single buffered']
    #allocation22 [shape = 's32[1]{0}', space=sflag, size = 0x4, scoped, tag = 'scoped memory for backbone_forward.1']
    #allocation23 [shape = 'u8[2048]{0}', space=vmem, size = 0x800, scoped, tag = 'input window, operand 12, single buffered']
    #allocation24 [shape = 'u8[65536]{0}', space=vmem, size = 0x10000, scoped, tag = 'output window, operand 0, single buffered']
    %18 = vsyncpa [#allocation4], 0
    %19 = vsyncpa [#allocation7], 0
    %s20 = scalar_lea.sflag [#allocation7], 1
    %21 = vsyncpa %s20, 0
    %22 = vsyncpa [#allocation10], 0
    %s23 = scalar_lea.sflag [#allocation10], 1
    %24 = vsyncpa %s23, 0
    %25 = vsyncpa [#allocation13], 0
    %s26 = scalar_lea.sflag [#allocation13], 1
    %27 = vsyncpa %s26, 0
    %28 = vsyncpa [#allocation16], 0
    %s29 = scalar_lea.sflag [#allocation16], 1
    %30 = vsyncpa %s29, 0
    %31 = vsyncpa [#allocation19], 0
    %s32 = scalar_lea.sflag [#allocation19], 1
    %33 = vsyncpa %s32, 0
    %34 = vsyncpa [#allocation22], 0
    %35 = vsyncpa [#allocation5], 0
    loop: start=0, step=1, limit=6
    $region2: #{backbone_forward.1} parent=1 // loop_pre_header
      _
    $region3: #{backbone_forward.1} parent=1 // loop_header
      %s37 = sphi 0, %s41
      %p38 = scmp.ge.s32.totalorder %s37, 6
      %s45 = sphi 0, %s45
      %s47 = sphi 0, %s45
      %s48 = sphi 0, %s47
      %s62 = sphi 0, %s48
      %s68 = sphi 0, %s70
      %s71 = sphi 0, %s68
      %s72 = sphi 0, %s71
      %s88 = sphi 0, %s72
      %s94 = sphi 0, %s96
      %s97 = sphi 0, %s94
      %s98 = sphi 0, %s97
      %s114 = sphi 0, %s98
      %s120 = sphi 0, %s122
      %s123 = sphi 0, %s120
      %s124 = sphi 0, %s123
      %s140 = sphi 0, %s124
      %s146 = sphi 0, %s148
      %s149 = sphi 0, %s146
      %s150 = sphi 0, %s149
      %s166 = sphi 0, %s150
      %s172 = sphi 0, %s174
      %s175 = sphi 0, %s172
      %s176 = sphi 0, %s175
      %s192 = sphi 0, %s176
      %s198 = sphi 0, %s200
      %s201 = sphi 0, %s198
      %s202 = sphi 0, %s201
      %s218 = sphi 0, %s202
      %s224 = sphi 0, %s226
      %s227 = sphi 0, %s224
      %s228 = sphi 0, %s227
      %s244 = sphi 0, %s228
      %s250 = sphi 0, %s252
      %s253 = sphi 0, %s250
      %s254 = sphi 0, %s253
      %s270 = sphi 0, %s254
      %s276 = sphi 0, %s278
      %s279 = sphi 0, %s276
      %s280 = sphi 0, %s279
      %s296 = sphi 0, %s280
      %s302 = sphi 0, %s304
      %s305 = sphi 0, %s302
      %s306 = sphi 0, %s305
      %s322 = sphi 0, %s306
      %s326 = sphi 0, %s326
      %s328 = sphi 0, %s326
      %s329 = sphi 0, %s328
      %s343 = sphi 0, %s329
      %s347 = sphi 0, %s347
      %s349 = sphi 0, %s347
      %s350 = sphi 0, %s349
      %s364 = sphi 0, %s350
      %s368 = sphi 0, %s368
      %s370 = sphi 0, %s368
      %s371 = sphi 0, %s370
      %s385 = sphi 0, %s371
    $region4: #{backbone_forward.1} parent=1 // loop_header_branch
      %40 = sbr.rel (%p38) target = $region8
    $region5: #{backbone_forward.1} parent=1 // loop_body
      %s42 = ssub.s32 %s37, 1
      %s43 = ssub.s32 %s37, 2
      %s44 = sadd.s32 %s37, 1
      %s46 = sadd.s32 %s45, 1
      %p49 = scmp.eq.s32.totalorder %s37, 3
      %p50 = scmp.ne.s32.totalorder %s45, %s47
      %p51 = scmp.eq.s32.totalorder %s37, 0
      %p52 = por %p50, %p51
      %p53 = scmp.ne.s32.totalorder %s45, %s47
      %p54 = scmp.eq.s32.totalorder %s42, 3
      %p55 = por %p53, %p54
      %p56 = scmp.ne.s32.totalorder %s47, %s48
      %p57 = scmp.eq.s32.totalorder %s42, 0
      %p58 = por %p56, %p57
      %p59 = scmp.ne.s32.totalorder %s47, %s48
      %p60 = scmp.eq.s32.totalorder %s43, 3
      %p61 = por %p59, %p60
      %p63 = scmp.ne.s32.totalorder %s48, %s62
      %p64 = scmp.eq.s32.totalorder %s43, 0
      %p65 = por %p63, %p64
      %s66 = ssub.s32 %s37, %s44
      %p67 = scmp.eq.s32.totalorder %s66, 0
      %s69 = sadd.s32 %s68, 1
      %s70 = scalar_select %p67, %s68, %s69
      %p73 = pneg %p67
      %p74 = scmp.eq.s32.totalorder %s37, 3
      %p75 = por %p73, %p74
      %p76 = scmp.ne.s32.totalorder %s68, %s71
      %p77 = scmp.eq.s32.totalorder %s37, 0
      %p78 = por %p76, %p77
      %p79 = scmp.ne.s32.totalorder %s68, %s71
      %p80 = scmp.eq.s32.totalorder %s42, 3
      %p81 = por %p79, %p80
      %p82 = scmp.ne.s32.totalorder %s71, %s72
      %p83 = scmp.eq.s32.totalorder %s42, 0
      %p84 = por %p82, %p83
      %p85 = scmp.ne.s32.totalorder %s71, %s72
      %p86 = scmp.eq.s32.totalorder %s43, 3
      %p87 = por %p85, %p86
      %p89 = scmp.ne.s32.totalorder %s72, %s88
      %p90 = scmp.eq.s32.totalorder %s43, 0
      %p91 = por %p89, %p90
      %s92 = ssub.s32 %s37, %s44
      %p93 = scmp.eq.s32.totalorder %s92, 0
      %s95 = sadd.s32 %s94, 1
      %s96 = scalar_select %p93, %s94, %s95
      %p99 = pneg %p93
      %p100 = scmp.eq.s32.totalorder %s37, 3
      %p101 = por %p99, %p100
      %p102 = scmp.ne.s32.totalorder %s94, %s97
      %p103 = scmp.eq.s32.totalorder %s37, 0
      %p104 = por %p102, %p103
      %p105 = scmp.ne.s32.totalorder %s94, %s97
      %p106 = scmp.eq.s32.totalorder %s42, 3
      %p107 = por %p105, %p106
      %p108 = scmp.ne.s32.totalorder %s97, %s98
      %p109 = scmp.eq.s32.totalorder %s42, 0
      %p110 = por %p108, %p109
      %p111 = scmp.ne.s32.totalorder %s97, %s98
      %p112 = scmp.eq.s32.totalorder %s43, 3
      %p113 = por %p111, %p112
      %p115 = scmp.ne.s32.totalorder %s98, %s114
      %p116 = scmp.eq.s32.totalorder %s43, 0
      %p117 = por %p115, %p116
      %s118 = ssub.s32 %s37, %s44
      %p119 = scmp.eq.s32.totalorder %s118, 0
      %s121 = sadd.s32 %s120, 1
      %s122 = scalar_select %p119, %s120, %s121
      %p125 = pneg %p119
      %p126 = scmp.eq.s32.totalorder %s37, 3
      %p127 = por %p125, %p126
      %p128 = scmp.ne.s32.totalorder %s120, %s123
      %p129 = scmp.eq.s32.totalorder %s37, 0
      %p130 = por %p128, %p129
      %p131 = scmp.ne.s32.totalorder %s120, %s123
      %p132 = scmp.eq.s32.totalorder %s42, 3
      %p133 = por %p131, %p132
      %p134 = scmp.ne.s32.totalorder %s123, %s124
      %p135 = scmp.eq.s32.totalorder %s42, 0
      %p136 = por %p134, %p135
      %p137 = scmp.ne.s32.totalorder %s123, %s124
      %p138 = scmp.eq.s32.totalorder %s43, 3
      %p139 = por %p137, %p138
      %p141 = scmp.ne.s32.totalorder %s124, %s140
      %p142 = scmp.eq.s32.totalorder %s43, 0
      %p143 = por %p141, %p142
      %s144 = ssub.s32 %s37, %s44
      %p145 = scmp.eq.s32.totalorder %s144, 0
      %s147 = sadd.s32 %s146, 1
      %s148 = scalar_select %p145, %s146, %s147
      %p151 = pneg %p145
      %p152 = scmp.eq.s32.totalorder %s37, 3
      %p153 = por %p151, %p152
      %p154 = scmp.ne.s32.totalorder %s146, %s149
      %p155 = scmp.eq.s32.totalorder %s37, 0
      %p156 = por %p154, %p155
      %p157 = scmp.ne.s32.totalorder %s146, %s149
      %p158 = scmp.eq.s32.totalorder %s42, 3
      %p159 = por %p157, %p158
      %p160 = scmp.ne.s32.totalorder %s149, %s150
      %p161 = scmp.eq.s32.totalorder %s42, 0
      %p162 = por %p160, %p161
      %p163 = scmp.ne.s32.totalorder %s149, %s150
      %p164 = scmp.eq.s32.totalorder %s43, 3
      %p165 = por %p163, %p164
      %p167 = scmp.ne.s32.totalorder %s150, %s166
      %p168 = scmp.eq.s32.totalorder %s43, 0
      %p169 = por %p167, %p168
      %s170 = ssub.s32 %s37, %s44
      %p171 = scmp.eq.s32.totalorder %s170, 0
      %s173 = sadd.s32 %s172, 1
      %s174 = scalar_select %p171, %s172, %s173
      %p177 = pneg %p171
      %p178 = scmp.eq.s32.totalorder %s37, 3
      %p179 = por %p177, %p178
      %p180 = scmp.ne.s32.totalorder %s172, %s175
      %p181 = scmp.eq.s32.totalorder %s37, 0
      %p182 = por %p180, %p181
      %p183 = scmp.ne.s32.totalorder %s172, %s175
      %p184 = scmp.eq.s32.totalorder %s42, 3
      %p185 = por %p183, %p184
      %p186 = scmp.ne.s32.totalorder %s175, %s176
      %p187 = scmp.eq.s32.totalorder %s42, 0
      %p188 = por %p186, %p187
      %p189 = scmp.ne.s32.totalorder %s175, %s176
      %p190 = scmp.eq.s32.totalorder %s43, 3
      %p191 = por %p189, %p190
      %p193 = scmp.ne.s32.totalorder %s176, %s192
      %p194 = scmp.eq.s32.totalorder %s43, 0
      %p195 = por %p193, %p194
      %s196 = ssub.s32 %s37, %s44
      %p197 = scmp.eq.s32.totalorder %s196, 0
      %s199 = sadd.s32 %s198, 1
      %s200 = scalar_select %p197, %s198, %s199
      %p203 = pneg %p197
      %p204 = scmp.eq.s32.totalorder %s37, 3
      %p205 = por %p203, %p204
      %p206 = scmp.ne.s32.totalorder %s198, %s201
      %p207 = scmp.eq.s32.totalorder %s37, 0
      %p208 = por %p206, %p207
      %p209 = scmp.ne.s32.totalorder %s198, %s201
      %p210 = scmp.eq.s32.totalorder %s42, 3
      %p211 = por %p209, %p210
      %p212 = scmp.ne.s32.totalorder %s201, %s202
      %p213 = scmp.eq.s32.totalorder %s42, 0
      %p214 = por %p212, %p213
      %p215 = scmp.ne.s32.totalorder %s201, %s202
      %p216 = scmp.eq.s32.totalorder %s43, 3
      %p217 = por %p215, %p216
      %p219 = scmp.ne.s32.totalorder %s202, %s218
      %p220 = scmp.eq.s32.totalorder %s43, 0
      %p221 = por %p219, %p220
      %s222 = ssub.s32 %s37, %s44
      %p223 = scmp.eq.s32.totalorder %s222, 0
      %s225 = sadd.s32 %s224, 1
      %s226 = scalar_select %p223, %s224, %s225
      %p229 = pneg %p223
      %p230 = scmp.eq.s32.totalorder %s37, 3
      %p231 = por %p229, %p230
      %p232 = scmp.ne.s32.totalorder %s224, %s227
      %p233 = scmp.eq.s32.totalorder %s37, 0
      %p234 = por %p232, %p233
      %p235 = scmp.ne.s32.totalorder %s224, %s227
      %p236 = scmp.eq.s32.totalorder %s42, 3
      %p237 = por %p235, %p236
      %p238 = scmp.ne.s32.totalorder %s227, %s228
      %p239 = scmp.eq.s32.totalorder %s42, 0
      %p240 = por %p238, %p239
      %p241 = scmp.ne.s32.totalorder %s227, %s228
      %p242 = scmp.eq.s32.totalorder %s43, 3
      %p243 = por %p241, %p242
      %p245 = scmp.ne.s32.totalorder %s228, %s244
      %p246 = scmp.eq.s32.totalorder %s43, 0
      %p247 = por %p245, %p246
      %s248 = ssub.s32 %s37, %s44
      %p249 = scmp.eq.s32.totalorder %s248, 0
      %s251 = sadd.s32 %s250, 1
      %s252 = scalar_select %p249, %s250, %s251
      %p255 = pneg %p249
      %p256 = scmp.eq.s32.totalorder %s37, 3
      %p257 = por %p255, %p256
      %p258 = scmp.ne.s32.totalorder %s250, %s253
      %p259 = scmp.eq.s32.totalorder %s37, 0
      %p260 = por %p258, %p259
      %p261 = scmp.ne.s32.totalorder %s250, %s253
      %p262 = scmp.eq.s32.totalorder %s42, 3
      %p263 = por %p261, %p262
      %p264 = scmp.ne.s32.totalorder %s253, %s254
      %p265 = scmp.eq.s32.totalorder %s42, 0
      %p266 = por %p264, %p265
      %p267 = scmp.ne.s32.totalorder %s253, %s254
      %p268 = scmp.eq.s32.totalorder %s43, 3
      %p269 = por %p267, %p268
      %p271 = scmp.ne.s32.totalorder %s254, %s270
      %p272 = scmp.eq.s32.totalorder %s43, 0
      %p273 = por %p271, %p272
      %s274 = ssub.s32 %s37, %s44
      %p275 = scmp.eq.s32.totalorder %s274, 0
      %s277 = sadd.s32 %s276, 1
      %s278 = scalar_select %p275, %s276, %s277
      %p281 = pneg %p275
      %p282 = scmp.eq.s32.totalorder %s37, 3
      %p283 = por %p281, %p282
      %p284 = scmp.ne.s32.totalorder %s276, %s279
      %p285 = scmp.eq.s32.totalorder %s37, 0
      %p286 = por %p284, %p285
      %p287 = scmp.ne.s32.totalorder %s276, %s279
      %p288 = scmp.eq.s32.totalorder %s42, 3
      %p289 = por %p287, %p288
      %p290 = scmp.ne.s32.totalorder %s279, %s280
      %p291 = scmp.eq.s32.totalorder %s42, 0
      %p292 = por %p290, %p291
      %p293 = scmp.ne.s32.totalorder %s279, %s280
      %p294 = scmp.eq.s32.totalorder %s43, 3
      %p295 = por %p293, %p294
      %p297 = scmp.ne.s32.totalorder %s280, %s296
      %p298 = scmp.eq.s32.totalorder %s43, 0
      %p299 = por %p297, %p298
      %s300 = ssub.s32 %s37, %s44
      %p301 = scmp.eq.s32.totalorder %s300, 0
      %s303 = sadd.s32 %s302, 1
      %s304 = scalar_select %p301, %s302, %s303
      %p307 = pneg %p301
      %p308 = scmp.eq.s32.totalorder %s37, 3
      %p309 = por %p307, %p308
      %p310 = scmp.ne.s32.totalorder %s302, %s305
      %p311 = scmp.eq.s32.totalorder %s37, 0
      %p312 = por %p310, %p311
      %p313 = scmp.ne.s32.totalorder %s302, %s305
      %p314 = scmp.eq.s32.totalorder %s42, 3
      %p315 = por %p313, %p314
      %p316 = scmp.ne.s32.totalorder %s305, %s306
      %p317 = scmp.eq.s32.totalorder %s42, 0
      %p318 = por %p316, %p317
      %p319 = scmp.ne.s32.totalorder %s305, %s306
      %p320 = scmp.eq.s32.totalorder %s43, 3
      %p321 = por %p319, %p320
      %p323 = scmp.ne.s32.totalorder %s306, %s322
      %p324 = scmp.eq.s32.totalorder %s43, 0
      %p325 = por %p323, %p324
      %s327 = sadd.s32 %s326, 1
      %p330 = scmp.eq.s32.totalorder %s37, 3
      %p331 = scmp.ne.s32.totalorder %s326, %s328
      %p332 = scmp.eq.s32.totalorder %s37, 0
      %p333 = por %p331, %p332
      %p334 = scmp.ne.s32.totalorder %s326, %s328
      %p335 = scmp.eq.s32.totalorder %s42, 3
      %p336 = por %p334, %p335
      %p337 = scmp.ne.s32.totalorder %s328, %s329
      %p338 = scmp.eq.s32.totalorder %s42, 0
      %p339 = por %p337, %p338
      %p340 = scmp.ne.s32.totalorder %s328, %s329
      %p341 = scmp.eq.s32.totalorder %s43, 3
      %p342 = por %p340, %p341
      %p344 = scmp.ne.s32.totalorder %s329, %s343
      %p345 = scmp.eq.s32.totalorder %s43, 0
      %p346 = por %p344, %p345
      %s348 = sadd.s32 %s347, 1
      %p351 = scmp.eq.s32.totalorder %s37, 3
      %p352 = scmp.ne.s32.totalorder %s347, %s349
      %p353 = scmp.eq.s32.totalorder %s37, 0
      %p354 = por %p352, %p353
      %p355 = scmp.ne.s32.totalorder %s347, %s349
      %p356 = scmp.eq.s32.totalorder %s42, 3
      %p357 = por %p355, %p356
      %p358 = scmp.ne.s32.totalorder %s349, %s350
      %p359 = scmp.eq.s32.totalorder %s42, 0
      %p360 = por %p358, %p359
      %p361 = scmp.ne.s32.totalorder %s349, %s350
      %p362 = scmp.eq.s32.totalorder %s43, 3
      %p363 = por %p361, %p362
      %p365 = scmp.ne.s32.totalorder %s350, %s364
      %p366 = scmp.eq.s32.totalorder %s43, 0
      %p367 = por %p365, %p366
      %s369 = sadd.s32 %s368, 1
      %p372 = scmp.eq.s32.totalorder %s37, 3
      %p373 = scmp.ne.s32.totalorder %s368, %s370
      %p374 = scmp.eq.s32.totalorder %s37, 0
      %p375 = por %p373, %p374
      %p376 = scmp.ne.s32.totalorder %s368, %s370
      %p377 = scmp.eq.s32.totalorder %s42, 3
      %p378 = por %p376, %p377
      %p379 = scmp.ne.s32.totalorder %s370, %s371
      %p380 = scmp.eq.s32.totalorder %s42, 0
      %p381 = por %p379, %p380
      %p382 = scmp.ne.s32.totalorder %s370, %s371
      %p383 = scmp.eq.s32.totalorder %s43, 3
      %p384 = por %p382, %p383
      %p386 = scmp.ne.s32.totalorder %s371, %s385
      %p387 = scmp.eq.s32.totalorder %s43, 0
      %p388 = por %p386, %p387
      %p389 = scmp.le.s32.totalorder 1, %s37
      %p390 = scmp.lt.s32.totalorder %s37, 5
      %p391 = pnand %p389, %p390
      %p392 = pneg %p391
      // Predicated region
      $region9: #{backbone_forward.1} parent=5 // pred_check
        _
      $region10: #{backbone_forward.1} parent=5 // pred_check_branch
        %394 = sbr.rel (%p391) target = $region12
      $region11: #{backbone_forward.1} parent=5 // pred_region
        %s395 = ssub.s32 %s37, 1
        // Predicated region
        $region13: #{backbone_forward.1} parent=11 // pred_check
          %p396 = pneg %p58
        $region14: #{backbone_forward.1} parent=11 // pred_check_branch
          %398 = sbr.rel (%p396) target = $region16
        $region15: #{backbone_forward.1} parent=11 // pred_region
          %400 = vsyncadd [#allocation4], 0
          %s401 = sshll.u32 %s0, 4
          %s402 = int_to_ptr.hbm [resolvable:$true] %s401
          %s403 = sshll.u32 [#allocation3], 4
          %s404 = int_to_ptr.vmem [resolvable:$true] %s403
          %409 = dma.hbm_to_vmem [thread:$0]  %s402, 2048, %s404, [#allocation4], 512, 512, 32
        $region16: #{backbone_forward.1} parent=11 // pred_fallthru
          _
        // Predicated region
        $region17: #{backbone_forward.1} parent=11 // pred_check
          %p410 = pneg %p339
        $region18: #{backbone_forward.1} parent=11 // pred_check_branch
          %412 = sbr.rel (%p410) target = $region20
        $region19: #{backbone_forward.1} parent=11 // pred_region
          %414 = vsyncadd [#allocation22], 0
          %s416 = sshll.u32 %s11, 4
          %s417 = int_to_ptr.hbm [resolvable:$true] %s416
          %s418 = sshll.u32 [#allocation21], 4
          %s419 = int_to_ptr.vmem [resolvable:$true] %s418
          %421 = dma.hbm_to_vmem [thread:$0]  %s417, 64, %s419, [#allocation22]
        $region20: #{backbone_forward.1} parent=11 // pred_fallthru
          _
        // Predicated region
        $region21: #{backbone_forward.1} parent=11 // pred_check
          %p422 = pneg %p360
        $region22: #{backbone_forward.1} parent=11 // pred_check_branch
          %424 = sbr.rel (%p422) target = $region24
        $region23: #{backbone_forward.1} parent=11 // pred_region
          %426 = vsyncadd [#allocation22], 0
          %s428 = sshll.u32 %s12, 4
          %s429 = int_to_ptr.hbm [resolvable:$true] %s428
          %s430 = sshll.u32 [#allocation23], 4
          %s431 = int_to_ptr.vmem [resolvable:$true] %s430
          %433 = dma.hbm_to_vmem [thread:$0]  %s429, 64, %s431, [#allocation22]
        $region24: #{backbone_forward.1} parent=11 // pred_fallthru
          _
      $region12: #{backbone_forward.1} parent=5 // pred_fallthru
        _
      %p434 = scmp.lt.s32.totalorder %s37, 4
      // Predicated region
      $region25: #{backbone_forward.1} parent=5 // pred_check
        %p435 = pneg %p434
      $region26: #{backbone_forward.1} parent=5 // pred_check_branch
        %437 = sbr.rel (%p435) target = $region28
      $region27: #{backbone_forward.1} parent=5 // pred_region
        // Predicated region
        $region29: #{backbone_forward.1} parent=27 // pred_check
          %p438 = pneg %p78
        $region30: #{backbone_forward.1} parent=27 // pred_check_branch
          %440 = sbr.rel (%p438) target = $region32
        $region31: #{backbone_forward.1} parent=27 // pred_region
          %s441 = sand.u32 %s37, 1
          %s442 = scalar_lea.sflag [#allocation7], %s441
          %s443 = sand.u32 %s68, 1
          %s444 = smul.addr %s443, 32
          %s445 = scalar_lea.vmem [#allocation6], %s444
          %447 = vsyncadd %s442, 0
          %s448 = smul.addr %s37, 4
          %s449 = smul.addr %s448, 8
          %s450 = scalar_lea.hbm %s1, %s449
          %s452 = sshll.u32 %s450, 4
          %s453 = int_to_ptr.hbm [resolvable:$true] %s452
          %s454 = sshll.u32 %s445, 4
          %s455 = int_to_ptr.vmem [resolvable:$true] %s454
          %457 = dma.hbm_to_vmem [thread:$0]  %s453, 512, %s455, %s442
        $region32: #{backbone_forward.1} parent=27 // pred_fallthru
          _
        // Predicated region
        $region33: #{backbone_forward.1} parent=27 // pred_check
          %p458 = pneg %p104
        $region34: #{backbone_forward.1} parent=27 // pred_check_branch
          %460 = sbr.rel (%p458) target = $region36
        $region35: #{backbone_forward.1} parent=27 // pred_region
          %s461 = sand.u32 %s37, 1
          %s462 = scalar_lea.sflag [#allocation7], %s461
          %s463 = sand.u32 %s94, 1
          %s464 = smul.addr %s463, 1024
          %s465 = scalar_lea.vmem [#allocation8], %s464
          %467 = vsyncadd %s462, 0
          %s468 = smul.addr %s37, 256
          %s469 = smul.addr %s468, 4
          %s470 = scalar_lea.hbm %s2, %s469
          %s471 = sshll.u32 %s470, 4
          %s472 = int_to_ptr.hbm [resolvable:$true] %s471
          %s473 = sshll.u32 %s465, 4
          %s474 = int_to_ptr.vmem [resolvable:$true] %s473
          %479 = dma.hbm_to_vmem [thread:$0]  %s472, 16384, %s474, %s462, 256, 256, 16
        $region36: #{backbone_forward.1} parent=27 // pred_fallthru
          _
        // Predicated region
        $region37: #{backbone_forward.1} parent=27 // pred_check
          %p480 = pneg %p130
        $region38: #{backbone_forward.1} parent=27 // pred_check_branch
          %482 = sbr.rel (%p480) target = $region40
        $region39: #{backbone_forward.1} parent=27 // pred_region
          %s483 = sand.u32 %s37, 1
          %s484 = scalar_lea.sflag [#allocation10], %s483
          %s485 = sand.u32 %s120, 1
          %s486 = smul.addr %s485, 256
          %s487 = scalar_lea.vmem [#allocation9], %s486
          %489 = vsyncadd %s484, 0
          %s490 = smul.addr %s37, 64
          %s491 = smul.addr %s490, 4
          %s492 = scalar_lea.hbm %s3, %s491
          %s493 = sshll.u32 %s492, 4
          %s494 = int_to_ptr.hbm [resolvable:$true] %s493
          %s495 = sshll.u32 %s487, 4
          %s496 = int_to_ptr.vmem [resolvable:$true] %s495
          %501 = dma.hbm_to_vmem [thread:$0]  %s494, 4096, %s496, %s484, 64, 64, 4
        $region40: #{backbone_forward.1} parent=27 // pred_fallthru
          _
        // Predicated region
        $region41: #{backbone_forward.1} parent=27 // pred_check
          %p502 = pneg %p156
        $region42: #{backbone_forward.1} parent=27 // pred_check_branch
          %504 = sbr.rel (%p502) target = $region44
        $region43: #{backbone_forward.1} parent=27 // pred_region
          %s505 = sand.u32 %s37, 1
          %s506 = scalar_lea.sflag [#allocation10], %s505
          %s507 = sand.u32 %s146, 1
          %s508 = smul.addr %s507, 256
          %s509 = scalar_lea.vmem [#allocation11], %s508
          %511 = vsyncadd %s506, 0
          %s512 = smul.addr %s37, 64
          %s513 = smul.addr %s512, 4
          %s514 = scalar_lea.hbm %s4, %s513
          %s515 = sshll.u32 %s514, 4
          %s516 = int_to_ptr.hbm [resolvable:$true] %s515
          %s517 = sshll.u32 %s509, 4
          %s518 = int_to_ptr.vmem [resolvable:$true] %s517
          %523 = dma.hbm_to_vmem [thread:$0]  %s516, 4096, %s518, %s506, 64, 64, 4
        $region44: #{backbone_forward.1} parent=27 // pred_fallthru
          _
        // Predicated region
        $region45: #{backbone_forward.1} parent=27 // pred_check
          %p524 = pneg %p182
        $region46: #{backbone_forward.1} parent=27 // pred_check_branch
          %526 = sbr.rel (%p524) target = $region48
        $region47: #{backbone_forward.1} parent=27 // pred_region
          %s527 = sand.u32 %s37, 1
          %s528 = scalar_lea.sflag [#allocation13], %s527
          %s529 = sand.u32 %s172, 1
          %s530 = smul.addr %s529, 2
          %s531 = scalar_lea.vmem [#allocation12], %s530
          %533 = vsyncadd %s528, 0
          %s534 = smul.addr %s37, 2
          %s535 = scalar_lea.hbm %s5, %s534
          %s537 = sshll.u32 %s535, 4
          %s538 = int_to_ptr.hbm [resolvable:$true] %s537
          %s539 = sshll.u32 %s531, 4
          %s540 = int_to_ptr.vmem [resolvable:$true] %s539
          %542 = dma.hbm_to_vmem [thread:$0]  %s538, 32, %s540, %s528
        $region48: #{backbone_forward.1} parent=27 // pred_fallthru
          _
        // Predicated region
        $region49: #{backbone_forward.1} parent=27 // pred_check
          %p543 = pneg %p208
        $region50: #{backbone_forward.1} parent=27 // pred_check_branch
          %545 = sbr.rel (%p543) target = $region52
        $region51: #{backbone_forward.1} parent=27 // pred_region
          %s546 = sand.u32 %s37, 1
          %s547 = scalar_lea.sflag [#allocation13], %s546
          %s548 = sand.u32 %s198, 1
          %s549 = smul.addr %s548, 1024
          %s550 = scalar_lea.vmem [#allocation14], %s549
          %552 = vsyncadd %s547, 0
          %s553 = smul.addr %s37, 256
          %s554 = smul.addr %s553, 4
          %s555 = scalar_lea.hbm %s6, %s554
          %s556 = sshll.u32 %s555, 4
          %s557 = int_to_ptr.hbm [resolvable:$true] %s556
          %s558 = sshll.u32 %s550, 4
          %s559 = int_to_ptr.vmem [resolvable:$true] %s558
          %564 = dma.hbm_to_vmem [thread:$0]  %s557, 16384, %s559, %s547, 256, 256, 16
        $region52: #{backbone_forward.1} parent=27 // pred_fallthru
          _
        // Predicated region
        $region53: #{backbone_forward.1} parent=27 // pred_check
          %p565 = pneg %p234
        $region54: #{backbone_forward.1} parent=27 // pred_check_branch
          %567 = sbr.rel (%p565) target = $region56
        $region55: #{backbone_forward.1} parent=27 // pred_region
          %s568 = sand.u32 %s37, 1
          %s569 = scalar_lea.sflag [#allocation16], %s568
          %s570 = sand.u32 %s224, 1
          %s571 = smul.addr %s570, 2048
          %s572 = scalar_lea.vmem [#allocation15], %s571
          %574 = vsyncadd %s569, 0
          %s575 = smul.addr %s37, 512
          %s576 = smul.addr %s575, 4
          %s577 = scalar_lea.hbm %s7, %s576
          %s578 = sshll.u32 %s577, 4
          %s579 = int_to_ptr.hbm [resolvable:$true] %s578
          %s580 = sshll.u32 %s572, 4
          %s581 = int_to_ptr.vmem [resolvable:$true] %s580
          %586 = dma.hbm_to_vmem [thread:$0]  %s579, 32768, %s581, %s569, 512, 512, 32
        $region56: #{backbone_forward.1} parent=27 // pred_fallthru
          _
        // Predicated region
        $region57: #{backbone_forward.1} parent=27 // pred_check
          %p587 = pneg %p260
        $region58: #{backbone_forward.1} parent=27 // pred_check_branch
          %589 = sbr.rel (%p587) target = $region60
        $region59: #{backbone_forward.1} parent=27 // pred_region
          %s590 = sand.u32 %s37, 1
          %s591 = scalar_lea.sflag [#allocation16], %s590
          %s592 = sand.u32 %s250, 1
          %s593 = smul.addr %s592, 2048
          %s594 = scalar_lea.vmem [#allocation17], %s593
          %596 = vsyncadd %s591, 0
          %s597 = smul.addr %s37, 512
          %s598 = smul.addr %s597, 4
          %s599 = scalar_lea.hbm %s8, %s598
          %s600 = sshll.u32 %s599, 4
          %s601 = int_to_ptr.hbm [resolvable:$true] %s600
          %s602 = sshll.u32 %s594, 4
          %s603 = int_to_ptr.vmem [resolvable:$true] %s602
          %608 = dma.hbm_to_vmem [thread:$0]  %s601, 32768, %s603, %s591, 512, 512, 32
        $region60: #{backbone_forward.1} parent=27 // pred_fallthru
          _
        // Predicated region
        $region61: #{backbone_forward.1} parent=27 // pred_check
          %p609 = pneg %p286
        $region62: #{backbone_forward.1} parent=27 // pred_check_branch
          %611 = sbr.rel (%p609) target = $region64
        $region63: #{backbone_forward.1} parent=27 // pred_region
          %s612 = sand.u32 %s37, 1
          %s613 = scalar_lea.sflag [#allocation19], %s612
          %s614 = sand.u32 %s276, 1
          %s615 = smul.addr %s614, 16
          %s616 = scalar_lea.vmem [#allocation18], %s615
          %618 = vsyncadd %s613, 0
          %s619 = smul.addr %s37, 8
          %s620 = smul.addr %s619, 2
          %s621 = scalar_lea.hbm %s9, %s620
          %s623 = sshll.u32 %s621, 4
          %s624 = int_to_ptr.hbm [resolvable:$true] %s623
          %s625 = sshll.u32 %s616, 4
          %s626 = int_to_ptr.vmem [resolvable:$true] %s625
          %628 = dma.hbm_to_vmem [thread:$0]  %s624, 256, %s626, %s613
        $region64: #{backbone_forward.1} parent=27 // pred_fallthru
          _
        // Predicated region
        $region65: #{backbone_forward.1} parent=27 // pred_check
          %p629 = pneg %p312
        $region66: #{backbone_forward.1} parent=27 // pred_check_branch
          %631 = sbr.rel (%p629) target = $region68
        $region67: #{backbone_forward.1} parent=27 // pred_region
          %s632 = sand.u32 %s37, 1
          %s633 = scalar_lea.sflag [#allocation19], %s632
          %s634 = sand.u32 %s302, 1
          %s635 = smul.addr %s634, 2048
          %s636 = scalar_lea.vmem [#allocation20], %s635
          %638 = vsyncadd %s633, 0
          %s639 = smul.addr %s37, 512
          %s640 = smul.addr %s639, 4
          %s641 = scalar_lea.hbm %s10, %s640
          %s642 = sshll.u32 %s641, 4
          %s643 = int_to_ptr.hbm [resolvable:$true] %s642
          %s644 = sshll.u32 %s636, 4
          %s645 = int_to_ptr.vmem [resolvable:$true] %s644
          %650 = dma.hbm_to_vmem [thread:$0]  %s643, 32768, %s645, %s633, 256, 256, 16
        $region68: #{backbone_forward.1} parent=27 // pred_fallthru
          _
      $region28: #{backbone_forward.1} parent=5 // pred_fallthru
        _
      %p651 = scmp.le.s32.totalorder 1, %s37
      %p652 = scmp.lt.s32.totalorder %s37, 5
      %p653 = pnand %p651, %p652
      %p654 = pneg %p653
      // Predicated region
      $region69: #{backbone_forward.1} parent=5 // pred_check
        _
      $region70: #{backbone_forward.1} parent=5 // pred_check_branch
        %656 = sbr.rel (%p653) target = $region72
      $region71: #{backbone_forward.1} parent=5 // pred_region
        %s657 = ssub.s32 %s37, 1
        // Predicated region
        $region73: #{backbone_forward.1} parent=71 // pred_check
          %p658 = pneg %p58
        $region74: #{backbone_forward.1} parent=71 // pred_check_branch
          %660 = sbr.rel (%p658) target = $region76
        $region75: #{backbone_forward.1} parent=71 // pred_region
          %662 = dma.done [#allocation4], 2048
        $region76: #{backbone_forward.1} parent=71 // pred_fallthru
          _
        %s663 = sand.u32 %s42, 1
        %s664 = scalar_lea.sflag [#allocation7], %s663
        %s665 = sand.u32 %s71, 1
        %s666 = smul.addr %s665, 32
        %s667 = scalar_lea.vmem [#allocation6], %s666
        // Predicated region
        $region77: #{backbone_forward.1} parent=71 // pred_check
          %p668 = pneg %p84
        $region78: #{backbone_forward.1} parent=71 // pred_check_branch
          %670 = sbr.rel (%p668) target = $region80
        $region79: #{backbone_forward.1} parent=71 // pred_region
          %672 = dma.done %s664, 512
        $region80: #{backbone_forward.1} parent=71 // pred_fallthru
          _
        %s673 = sand.u32 %s42, 1
        %s674 = scalar_lea.sflag [#allocation7], %s673
        %s675 = sand.u32 %s97, 1
        %s676 = smul.addr %s675, 1024
        %s677 = scalar_lea.vmem [#allocation8], %s676
        // Predicated region
        $region81: #{backbone_forward.1} parent=71 // pred_check
          %p678 = pneg %p110
        $region82: #{backbone_forward.1} parent=71 // pred_check_branch
          %680 = sbr.rel (%p678) target = $region84
        $region83: #{backbone_forward.1} parent=71 // pred_region
          %682 = dma.done %s674, 16384
        $region84: #{backbone_forward.1} parent=71 // pred_fallthru
          _
        %s683 = sand.u32 %s42, 1
        %s684 = scalar_lea.sflag [#allocation10], %s683
        %s685 = sand.u32 %s123, 1
        %s686 = smul.addr %s685, 256
        %s687 = scalar_lea.vmem [#allocation9], %s686
        // Predicated region
        $region85: #{backbone_forward.1} parent=71 // pred_check
          %p688 = pneg %p136
        $region86: #{backbone_forward.1} parent=71 // pred_check_branch
          %690 = sbr.rel (%p688) target = $region88
        $region87: #{backbone_forward.1} parent=71 // pred_region
          %692 = dma.done %s684, 4096
        $region88: #{backbone_forward.1} parent=71 // pred_fallthru
          _
        %s693 = sand.u32 %s42, 1
        %s694 = scalar_lea.sflag [#allocation10], %s693
        %s695 = sand.u32 %s149, 1
        %s696 = smul.addr %s695, 256
        %s697 = scalar_lea.vmem [#allocation11], %s696
        // Predicated region
        $region89: #{backbone_forward.1} parent=71 // pred_check
          %p698 = pneg %p162
        $region90: #{backbone_forward.1} parent=71 // pred_check_branch
          %700 = sbr.rel (%p698) target = $region92
        $region91: #{backbone_forward.1} parent=71 // pred_region
          %702 = dma.done %s694, 4096
        $region92: #{backbone_forward.1} parent=71 // pred_fallthru
          _
        %s703 = sand.u32 %s42, 1
        %s704 = scalar_lea.sflag [#allocation13], %s703
        %s705 = sand.u32 %s175, 1
        %s706 = smul.addr %s705, 2
        %s707 = scalar_lea.vmem [#allocation12], %s706
        // Predicated region
        $region93: #{backbone_forward.1} parent=71 // pred_check
          %p708 = pneg %p188
        $region94: #{backbone_forward.1} parent=71 // pred_check_branch
          %710 = sbr.rel (%p708) target = $region96
        $region95: #{backbone_forward.1} parent=71 // pred_region
          %712 = dma.done %s704, 32
        $region96: #{backbone_forward.1} parent=71 // pred_fallthru
          _
        %s713 = sand.u32 %s42, 1
        %s714 = scalar_lea.sflag [#allocation13], %s713
        %s715 = sand.u32 %s201, 1
        %s716 = smul.addr %s715, 1024
        %s717 = scalar_lea.vmem [#allocation14], %s716
        // Predicated region
        $region97: #{backbone_forward.1} parent=71 // pred_check
          %p718 = pneg %p214
        $region98: #{backbone_forward.1} parent=71 // pred_check_branch
          %720 = sbr.rel (%p718) target = $region100
        $region99: #{backbone_forward.1} parent=71 // pred_region
          %722 = dma.done %s714, 16384
        $region100: #{backbone_forward.1} parent=71 // pred_fallthru
          _
        %s723 = sand.u32 %s42, 1
        %s724 = scalar_lea.sflag [#allocation16], %s723
        %s725 = sand.u32 %s227, 1
        %s726 = smul.addr %s725, 2048
        %s727 = scalar_lea.vmem [#allocation15], %s726
        // Predicated region
        $region101: #{backbone_forward.1} parent=71 // pred_check
          %p728 = pneg %p240
        $region102: #{backbone_forward.1} parent=71 // pred_check_branch
          %730 = sbr.rel (%p728) target = $region104
        $region103: #{backbone_forward.1} parent=71 // pred_region
          %732 = dma.done %s724, 32768
        $region104: #{backbone_forward.1} parent=71 // pred_fallthru
          _
        %s733 = sand.u32 %s42, 1
        %s734 = scalar_lea.sflag [#allocation16], %s733
        %s735 = sand.u32 %s253, 1
        %s736 = smul.addr %s735, 2048
        %s737 = scalar_lea.vmem [#allocation17], %s736
        // Predicated region
        $region105: #{backbone_forward.1} parent=71 // pred_check
          %p738 = pneg %p266
        $region106: #{backbone_forward.1} parent=71 // pred_check_branch
          %740 = sbr.rel (%p738) target = $region108
        $region107: #{backbone_forward.1} parent=71 // pred_region
          %742 = dma.done %s734, 32768
        $region108: #{backbone_forward.1} parent=71 // pred_fallthru
          _
        %s743 = sand.u32 %s42, 1
        %s744 = scalar_lea.sflag [#allocation19], %s743
        %s745 = sand.u32 %s279, 1
        %s746 = smul.addr %s745, 16
        %s747 = scalar_lea.vmem [#allocation18], %s746
        // Predicated region
        $region109: #{backbone_forward.1} parent=71 // pred_check
          %p748 = pneg %p292
        $region110: #{backbone_forward.1} parent=71 // pred_check_branch
          %750 = sbr.rel (%p748) target = $region112
        $region111: #{backbone_forward.1} parent=71 // pred_region
          %752 = dma.done %s744, 256
        $region112: #{backbone_forward.1} parent=71 // pred_fallthru
          _
        %s753 = sand.u32 %s42, 1
        %s754 = scalar_lea.sflag [#allocation19], %s753
        %s755 = sand.u32 %s305, 1
        %s756 = smul.addr %s755, 2048
        %s757 = scalar_lea.vmem [#allocation20], %s756
        // Predicated region
        $region113: #{backbone_forward.1} parent=71 // pred_check
          %p758 = pneg %p318
        $region114: #{backbone_forward.1} parent=71 // pred_check_branch
          %760 = sbr.rel (%p758) target = $region116
        $region115: #{backbone_forward.1} parent=71 // pred_region
          %762 = dma.done %s754, 32768
        $region116: #{backbone_forward.1} parent=71 // pred_fallthru
          _
        // Predicated region
        $region117: #{backbone_forward.1} parent=71 // pred_check
          %p763 = pneg %p339
        $region118: #{backbone_forward.1} parent=71 // pred_check_branch
          %765 = sbr.rel (%p763) target = $region120
        $region119: #{backbone_forward.1} parent=71 // pred_region
          %767 = dma.done [#allocation22], 64
        $region120: #{backbone_forward.1} parent=71 // pred_fallthru
          _
        // Predicated region
        $region121: #{backbone_forward.1} parent=71 // pred_check
          %p768 = pneg %p360
        $region122: #{backbone_forward.1} parent=71 // pred_check_branch
          %770 = sbr.rel (%p768) target = $region124
        $region123: #{backbone_forward.1} parent=71 // pred_region
          %772 = dma.done [#allocation22], 64
        $region124: #{backbone_forward.1} parent=71 // pred_fallthru
          _
        %p773 = pneg %p58
        %p774 = pneg %p55
        %s775 = sand.u32 %s42, 1
        %s776 = scalar_lea.sflag [#allocation7], %s775
        %s777 = sand.u32 %s71, 1
        %s778 = smul.addr %s777, 32
        %s779 = scalar_lea.vmem [#allocation6], %s778
        %p780 = pneg %p84
        %p781 = pneg %p81
        %s782 = sand.u32 %s42, 1
        %s783 = scalar_lea.sflag [#allocation7], %s782
        %s784 = sand.u32 %s97, 1
        %s785 = smul.addr %s784, 1024
        %s786 = scalar_lea.vmem [#allocation8], %s785
        %p787 = pneg %p110
        %p788 = pneg %p107
        %s789 = sand.u32 %s42, 1
        %s790 = scalar_lea.sflag [#allocation10], %s789
        %s791 = sand.u32 %s123, 1
        %s792 = smul.addr %s791, 256
        %s793 = scalar_lea.vmem [#allocation9], %s792
        %p794 = pneg %p136
        %p795 = pneg %p133
        %s796 = sand.u32 %s42, 1
        %s797 = scalar_lea.sflag [#allocation10], %s796
        %s798 = sand.u32 %s149, 1
        %s799 = smul.addr %s798, 256
        %s800 = scalar_lea.vmem [#allocation11], %s799
        %p801 = pneg %p162
        %p802 = pneg %p159
        %s803 = sand.u32 %s42, 1
        %s804 = scalar_lea.sflag [#allocation13], %s803
        %s805 = sand.u32 %s175, 1
        %s806 = smul.addr %s805, 2
        %s807 = scalar_lea.vmem [#allocation12], %s806
        %p808 = pneg %p188
        %p809 = pneg %p185
        %s810 = sand.u32 %s42, 1
        %s811 = scalar_lea.sflag [#allocation13], %s810
        %s812 = sand.u32 %s201, 1
        %s813 = smul.addr %s812, 1024
        %s814 = scalar_lea.vmem [#allocation14], %s813
        %p815 = pneg %p214
        %p816 = pneg %p211
        %s817 = sand.u32 %s42, 1
        %s818 = scalar_lea.sflag [#allocation16], %s817
        %s819 = sand.u32 %s227, 1
        %s820 = smul.addr %s819, 2048
        %s821 = scalar_lea.vmem [#allocation15], %s820
        %p822 = pneg %p240
        %p823 = pneg %p237
        %s824 = sand.u32 %s42, 1
        %s825 = scalar_lea.sflag [#allocation16], %s824
        %s826 = sand.u32 %s253, 1
        %s827 = smul.addr %s826, 2048
        %s828 = scalar_lea.vmem [#allocation17], %s827
        %p829 = pneg %p266
        %p830 = pneg %p263
        %s831 = sand.u32 %s42, 1
        %s832 = scalar_lea.sflag [#allocation19], %s831
        %s833 = sand.u32 %s279, 1
        %s834 = smul.addr %s833, 16
        %s835 = scalar_lea.vmem [#allocation18], %s834
        %p836 = pneg %p292
        %p837 = pneg %p289
        %s838 = sand.u32 %s42, 1
        %s839 = scalar_lea.sflag [#allocation19], %s838
        %s840 = sand.u32 %s305, 1
        %s841 = smul.addr %s840, 2048
        %s842 = scalar_lea.vmem [#allocation20], %s841
        %p843 = pneg %p318
        %p844 = pneg %p315
        %p845 = pneg %p339
        %p846 = pneg %p336
        %p847 = pneg %p360
        %p848 = pneg %p357
        %p849 = pneg %p381
        %p850 = pneg %p378
        %p852 = scmp.eq.s32.totalorder %s42, 0
        // Predicated region
        $region125: #{backbone_forward.1} parent=71 // pred_check
          %p853 = pneg %p852
        $region126: #{backbone_forward.1} parent=71 // pred_check_branch
          %855 = sbr.rel (%p853) target = $region128
        $region127: #{backbone_forward.1} parent=71 // pred_region
          %v856 = vld [vmem:[#allocation3] sm:$0xff]
          %v857 = vld [vmem:[#allocation3 + $0x8] sm:$0xff]
          %v858 = vld [vmem:[#allocation3 + $0x10] sm:$0xff]
          %v859 = vld [vmem:[#allocation3 + $0x18] sm:$0xff]
          %v860 = vld [vmem:[#allocation3 + $0x20] sm:$0xff]
          %v861 = vld [vmem:[#allocation3 + $0x28] sm:$0xff]
          %v862 = vld [vmem:[#allocation3 + $0x30] sm:$0xff]
          %v863 = vld [vmem:[#allocation3 + $0x38] sm:$0xff]
          %v864 = vld [vmem:[#allocation3 + $0x40] sm:$0xff]
          %v865 = vld [vmem:[#allocation3 + $0x48] sm:$0xff]
          %v866 = vld [vmem:[#allocation3 + $0x50] sm:$0xff]
          %v867 = vld [vmem:[#allocation3 + $0x58] sm:$0xff]
          %v868 = vld [vmem:[#allocation3 + $0x60] sm:$0xff]
          %v869 = vld [vmem:[#allocation3 + $0x68] sm:$0xff]
          %v870 = vld [vmem:[#allocation3 + $0x70] sm:$0xff]
          %v871 = vld [vmem:[#allocation3 + $0x78] sm:$0xff]
          %v872 = vand.u32 2147483647, %v856
          %v873 = vand.u32 2147483647, %v857
          %v874 = vand.u32 2147483647, %v858
          %v875 = vand.u32 2147483647, %v859
          %v876 = vand.u32 2147483647, %v860
          %v877 = vand.u32 2147483647, %v861
          %v878 = vand.u32 2147483647, %v862
          %v879 = vand.u32 2147483647, %v863
          %v880 = vand.u32 2147483647, %v864
          %v881 = vand.u32 2147483647, %v865
          %v882 = vand.u32 2147483647, %v866
          %v883 = vand.u32 2147483647, %v867
          %v884 = vand.u32 2147483647, %v868
          %v885 = vand.u32 2147483647, %v869
          %v886 = vand.u32 2147483647, %v870
          %v887 = vand.u32 2147483647, %v871
          %vm888 = vcmp.lt.f32.partialorder %v872, inf
          %vm889 = vcmp.lt.f32.partialorder %v873, inf
          %vm890 = vcmp.lt.f32.partialorder %v874, inf
          %vm891 = vcmp.lt.f32.partialorder %v875, inf
          %vm892 = vcmp.lt.f32.partialorder %v876, inf
          %vm893 = vcmp.lt.f32.partialorder %v877, inf
          %vm894 = vcmp.lt.f32.partialorder %v878, inf
          %vm895 = vcmp.lt.f32.partialorder %v879, inf
          %vm896 = vcmp.lt.f32.partialorder %v880, inf
          %vm897 = vcmp.lt.f32.partialorder %v881, inf
          %vm898 = vcmp.lt.f32.partialorder %v882, inf
          %vm899 = vcmp.lt.f32.partialorder %v883, inf
          %vm900 = vcmp.lt.f32.partialorder %v884, inf
          %vm901 = vcmp.lt.f32.partialorder %v885, inf
          %vm902 = vcmp.lt.f32.partialorder %v886, inf
          %vm903 = vcmp.lt.f32.partialorder %v887, inf
          %v904 = vsel %vm888, %v856, 0.0
          %v905 = vsel %vm889, %v857, 0.0
          %v906 = vsel %vm890, %v858, 0.0
          %v907 = vsel %vm891, %v859, 0.0
          %v908 = vsel %vm892, %v860, 0.0
          %v909 = vsel %vm893, %v861, 0.0
          %v910 = vsel %vm894, %v862, 0.0
          %v911 = vsel %vm895, %v863, 0.0
          %v912 = vsel %vm896, %v864, 0.0
          %v913 = vsel %vm897, %v865, 0.0
          %v914 = vsel %vm898, %v866, 0.0
          %v915 = vsel %vm899, %v867, 0.0
          %v916 = vsel %vm900, %v868, 0.0
          %v917 = vsel %vm901, %v869, 0.0
          %v918 = vsel %vm902, %v870, 0.0
          %v919 = vsel %vm903, %v871, 0.0
          %920 = vst [vmem:[#allocation2] sm:$0xff] %v904
          %921 = vst [vmem:[#allocation2 + $0x8] sm:$0xff] %v905
          %922 = vst [vmem:[#allocation2 + $0x10] sm:$0xff] %v906
          %923 = vst [vmem:[#allocation2 + $0x18] sm:$0xff] %v907
          %924 = vst [vmem:[#allocation2 + $0x20] sm:$0xff] %v908
          %925 = vst [vmem:[#allocation2 + $0x28] sm:$0xff] %v909
          %926 = vst [vmem:[#allocation2 + $0x30] sm:$0xff] %v910
          %927 = vst [vmem:[#allocation2 + $0x38] sm:$0xff] %v911
          %928 = vst [vmem:[#allocation2 + $0x40] sm:$0xff] %v912
          %929 = vst [vmem:[#allocation2 + $0x48] sm:$0xff] %v913
          %930 = vst [vmem:[#allocation2 + $0x50] sm:$0xff] %v914
          %931 = vst [vmem:[#allocation2 + $0x58] sm:$0xff] %v915
          %932 = vst [vmem:[#allocation2 + $0x60] sm:$0xff] %v916
          %933 = vst [vmem:[#allocation2 + $0x68] sm:$0xff] %v917
          %934 = vst [vmem:[#allocation2 + $0x70] sm:$0xff] %v918
          %935 = vst [vmem:[#allocation2 + $0x78] sm:$0xff] %v919
        $region128: #{backbone_forward.1} parent=71 // pred_fallthru
          _
        %v936 = vld [vmem:[#allocation2] sm:$0xff]
        %v937 = vld [vmem:[#allocation2 + $0x8] sm:$0xff]
        %v938 = vld [vmem:[#allocation2 + $0x10] sm:$0xff]
        %v939 = vld [vmem:[#allocation2 + $0x18] sm:$0xff]
        %v940 = vld [vmem:[#allocation2 + $0x20] sm:$0xff]
        %v941 = vld [vmem:[#allocation2 + $0x28] sm:$0xff]
        %v942 = vld [vmem:[#allocation2 + $0x30] sm:$0xff]
        %v943 = vld [vmem:[#allocation2 + $0x38] sm:$0xff]
        %v944 = vld [vmem:[#allocation2 + $0x40] sm:$0xff]
        %v945 = vld [vmem:[#allocation2 + $0x48] sm:$0xff]
        %v946 = vld [vmem:[#allocation2 + $0x50] sm:$0xff]
        %v947 = vld [vmem:[#allocation2 + $0x58] sm:$0xff]
        %v948 = vld [vmem:[#allocation2 + $0x60] sm:$0xff]
        %v949 = vld [vmem:[#allocation2 + $0x68] sm:$0xff]
        %v950 = vld [vmem:[#allocation2 + $0x70] sm:$0xff]
        %v951 = vld [vmem:[#allocation2 + $0x78] sm:$0xff]
        %v952 = vmax.f32 %v936, -100.0
        %v953 = vmax.f32 %v937, -100.0
        %v954 = vmax.f32 %v938, -100.0
        %v955 = vmax.f32 %v939, -100.0
        %v956 = vmax.f32 %v940, -100.0
        %v957 = vmax.f32 %v941, -100.0
        %v958 = vmax.f32 %v942, -100.0
        %v959 = vmax.f32 %v943, -100.0
        %v960 = vmax.f32 %v944, -100.0
        %v961 = vmax.f32 %v945, -100.0
        %v962 = vmax.f32 %v946, -100.0
        %v963 = vmax.f32 %v947, -100.0
        %v964 = vmax.f32 %v948, -100.0
        %v965 = vmax.f32 %v949, -100.0
        %v966 = vmax.f32 %v950, -100.0
        %v967 = vmax.f32 %v951, -100.0
        %v968 = vmin.f32 %v952, 100.0
        %v969 = vmin.f32 %v953, 100.0
        %v970 = vmin.f32 %v954, 100.0
        %v971 = vmin.f32 %v955, 100.0
        %v972 = vmin.f32 %v956, 100.0
        %v973 = vmin.f32 %v957, 100.0
        %v974 = vmin.f32 %v958, 100.0
        %v975 = vmin.f32 %v959, 100.0
        %v976 = vmin.f32 %v960, 100.0
        %v977 = vmin.f32 %v961, 100.0
        %v978 = vmin.f32 %v962, 100.0
        %v979 = vmin.f32 %v963, 100.0
        %v980 = vmin.f32 %v964, 100.0
        %v981 = vmin.f32 %v965, 100.0
        %v982 = vmin.f32 %v966, 100.0
        %v983 = vmin.f32 %v967, 100.0
        %v984 = vld [vmem:[%s667] sm:$0xff]
        %v985 = vld [vmem:[%s667 + $0x8] sm:$0xff]
        %v986 = vld [vmem:[%s667 + $0x10] sm:$0xff]
        %v987 = vld [vmem:[%s667 + $0x18] sm:$0xff]
        %v988 = vld [vmem:[%s707] sm:$0x3]
        %v989 = vld [vmem:[%s747] sm:$0xff]
        %v990 = vld [vmem:[%s747 + $0x8] sm:$0xff]
        %v991 = vadd.f32 %v968, %v969
        %v992 = vadd.f32 %v991, %v970
        %v993 = vadd.f32 %v992, %v971
        %994 = vadd.xlane.f32.xlu0 %v993
        %v995 = vpop.xlane.xlu0 %994
        %v996 = vadd.f32 %v972, %v973
        %v997 = vadd.f32 %v996, %v974
        %v998 = vadd.f32 %v997, %v975
        %999 = vadd.xlane.f32.xlu0 %v998
        %v1000 = vpop.xlane.xlu0 %999
        %v1001 = vadd.f32 %v976, %v977
        %v1002 = vadd.f32 %v1001, %v978
        %v1003 = vadd.f32 %v1002, %v979
        %1004 = vadd.xlane.f32.xlu0 %v1003
        %v1005 = vpop.xlane.xlu0 %1004
        %v1006 = vadd.f32 %v980, %v981
        %v1007 = vadd.f32 %v1006, %v982
        %v1008 = vadd.f32 %v1007, %v983
        %1009 = vadd.xlane.f32.xlu0 %v1008
        %v1010 = vpop.xlane.xlu0 %1009
        %v1011 = vrcp.pop 512.0
        %v1012 = vmul.f32 512.0, %v1011
        %v1013 = vsub.f32 1.0, %v1012
        %v1014 = vmul.f32 %v1011, %v1013
        %v1015 = vadd.f32 %v1011, %v1014
        %vm1016 = vweird.f32 %v1011
        %v1017 = vsel %vm1016, %v1011, %v1015
        %v1018 = vmul.f32 %v995, %v1017
        %v1019 = vmul.f32 %v1000, %v1017
        %v1020 = vmul.f32 %v1005, %v1017
        %v1021 = vmul.f32 %v1010, %v1017
        %v1022 = vsub.f32 %v968, %v1018
        %v1023 = vsub.f32 %v969, %v1018
        %v1024 = vsub.f32 %v970, %v1018
        %v1025 = vsub.f32 %v971, %v1018
        %v1026 = vsub.f32 %v972, %v1019
        %v1027 = vsub.f32 %v973, %v1019
        %v1028 = vsub.f32 %v974, %v1019
        %v1029 = vsub.f32 %v975, %v1019
        %v1030 = vsub.f32 %v976, %v1020
        %v1031 = vsub.f32 %v977, %v1020
        %v1032 = vsub.f32 %v978, %v1020
        %v1033 = vsub.f32 %v979, %v1020
        %v1034 = vsub.f32 %v980, %v1021
        %v1035 = vsub.f32 %v981, %v1021
        %v1036 = vsub.f32 %v982, %v1021
        %v1037 = vsub.f32 %v983, %v1021
        %v1038 = vmul.f32 %v1022, %v1022
        %v1039 = vmul.f32 %v1023, %v1023
        %v1040 = vmul.f32 %v1024, %v1024
        %v1041 = vmul.f32 %v1025, %v1025
        %v1042 = vmul.f32 %v1026, %v1026
        %v1043 = vmul.f32 %v1027, %v1027
        %v1044 = vmul.f32 %v1028, %v1028
        %v1045 = vmul.f32 %v1029, %v1029
        %v1046 = vmul.f32 %v1030, %v1030
        %v1047 = vmul.f32 %v1031, %v1031
        %v1048 = vmul.f32 %v1032, %v1032
        %v1049 = vmul.f32 %v1033, %v1033
        %v1050 = vmul.f32 %v1034, %v1034
        %v1051 = vmul.f32 %v1035, %v1035
        %v1052 = vmul.f32 %v1036, %v1036
        %v1053 = vmul.f32 %v1037, %v1037
        %v1054 = vadd.f32 %v1038, %v1039
        %v1055 = vadd.f32 %v1054, %v1040
        %v1056 = vadd.f32 %v1055, %v1041
        %1057 = vadd.xlane.f32.xlu0 %v1056
        %v1058 = vpop.xlane.xlu0 %1057
        %v1059 = vadd.f32 %v1042, %v1043
        %v1060 = vadd.f32 %v1059, %v1044
        %v1061 = vadd.f32 %v1060, %v1045
        %1062 = vadd.xlane.f32.xlu0 %v1061
        %v1063 = vpop.xlane.xlu0 %1062
        %v1064 = vadd.f32 %v1046, %v1047
        %v1065 = vadd.f32 %v1064, %v1048
        %v1066 = vadd.f32 %v1065, %v1049
        %1067 = vadd.xlane.f32.xlu0 %v1066
        %v1068 = vpop.xlane.xlu0 %1067
        %v1069 = vadd.f32 %v1050, %v1051
        %v1070 = vadd.f32 %v1069, %v1052
        %v1071 = vadd.f32 %v1070, %v1053
        %1072 = vadd.xlane.f32.xlu0 %v1071
        %v1073 = vpop.xlane.xlu0 %1072
        %v1074 = vmul.f32 %v1058, %v1017
        %v1075 = vmul.f32 %v1063, %v1017
        %v1076 = vmul.f32 %v1068, %v1017
        %v1077 = vmul.f32 %v1073, %v1017
        %v1078 = vadd.f32 %v1074, 0.0001
        %v1079 = vadd.f32 %v1075, 0.0001
        %v1080 = vadd.f32 %v1076, 0.0001
        %v1081 = vadd.f32 %v1077, 0.0001
        %v1082 = vrsqrt.pop %v1078
        %v1083 = vmul.f32 %v1082, %v1078
        %v1084 = vmul.f32 %v1083, %v1082
        %v1085 = vmul.f32 0.5, %v1084
        %v1086 = vsub.f32 1.5, %v1085
        %v1087 = vmul.f32 %v1082, %v1086
        %vm1088 = vweird.f32 %v1078
        %vm1089 = vweird.f32 %v1082
        %vm1090 = vmor %vm1088, %vm1089
        %v1091 = vsel %vm1090, %v1082, %v1087
        %v1092 = vrsqrt.pop %v1079
        %v1093 = vmul.f32 %v1092, %v1079
        %v1094 = vmul.f32 %v1093, %v1092
        %v1095 = vmul.f32 0.5, %v1094
        %v1096 = vsub.f32 1.5, %v1095
        %v1097 = vmul.f32 %v1092, %v1096
        %vm1098 = vweird.f32 %v1079
        %vm1099 = vweird.f32 %v1092
        %vm1100 = vmor %vm1098, %vm1099
        %v1101 = vsel %vm1100, %v1092, %v1097
        %v1102 = vrsqrt.pop %v1080
        %v1103 = vmul.f32 %v1102, %v1080
        %v1104 = vmul.f32 %v1103, %v1102
        %v1105 = vmul.f32 0.5, %v1104
        %v1106 = vsub.f32 1.5, %v1105
        %v1107 = vmul.f32 %v1102, %v1106
        %vm1108 = vweird.f32 %v1080
        %vm1109 = vweird.f32 %v1102
        %vm1110 = vmor %vm1108, %vm1109
        %v1111 = vsel %vm1110, %v1102, %v1107
        %v1112 = vrsqrt.pop %v1081
        %v1113 = vmul.f32 %v1112, %v1081
        %v1114 = vmul.f32 %v1113, %v1112
        %v1115 = vmul.f32 0.5, %v1114
        %v1116 = vsub.f32 1.5, %v1115
        %v1117 = vmul.f32 %v1112, %v1116
        %vm1118 = vweird.f32 %v1081
        %vm1119 = vweird.f32 %v1112
        %vm1120 = vmor %vm1118, %vm1119
        %v1121 = vsel %vm1120, %v1112, %v1117
        %v1122 = vmul.f32 %v1022, %v1091
        %v1123 = vmul.f32 %v1023, %v1091
        %v1124 = vmul.f32 %v1024, %v1091
        %v1125 = vmul.f32 %v1025, %v1091
        %v1126 = vmul.f32 %v1026, %v1101
        %v1127 = vmul.f32 %v1027, %v1101
        %v1128 = vmul.f32 %v1028, %v1101
        %v1129 = vmul.f32 %v1029, %v1101
        %v1130 = vmul.f32 %v1030, %v1111
        %v1131 = vmul.f32 %v1031, %v1111
        %v1132 = vmul.f32 %v1032, %v1111
        %v1133 = vmul.f32 %v1033, %v1111
        %v1134 = vmul.f32 %v1034, %v1121
        %v1135 = vmul.f32 %v1035, %v1121
        %v1136 = vmul.f32 %v1036, %v1121
        %v1137 = vmul.f32 %v1037, %v1121
        %v1138 = vperm.slane %v984, 0
        %v1139 = vperm.slane %v985, 0
        %v1140 = vperm.slane %v986, 0
        %v1141 = vperm.slane %v987, 0
        %v1142 = vmul.f32 %v1122, %v1138
        %v1143 = vmul.f32 %v1123, %v1139
        %v1144 = vmul.f32 %v1124, %v1140
        %v1145 = vmul.f32 %v1125, %v1141
        %v1146 = vmul.f32 %v1126, %v1138
        %v1147 = vmul.f32 %v1127, %v1139
        %v1148 = vmul.f32 %v1128, %v1140
        %v1149 = vmul.f32 %v1129, %v1141
        %v1150 = vmul.f32 %v1130, %v1138
        %v1151 = vmul.f32 %v1131, %v1139
        %v1152 = vmul.f32 %v1132, %v1140
        %v1153 = vmul.f32 %v1133, %v1141
        %v1154 = vmul.f32 %v1134, %v1138
        %v1155 = vmul.f32 %v1135, %v1139
        %v1156 = vmul.f32 %v1136, %v1140
        %v1157 = vmul.f32 %v1137, %v1141
        %v1158 = vperm.slane %v984, 1
        %v1159 = vperm.slane %v985, 1
        %v1160 = vperm.slane %v986, 1
        %v1161 = vperm.slane %v987, 1
        %v1162 = vadd.f32 %v1142, %v1158
        %v1163 = vadd.f32 %v1143, %v1159
        %v1164 = vadd.f32 %v1144, %v1160
        %v1165 = vadd.f32 %v1145, %v1161
        %v1166 = vadd.f32 %v1146, %v1158
        %v1167 = vadd.f32 %v1147, %v1159
        %v1168 = vadd.f32 %v1148, %v1160
        %v1169 = vadd.f32 %v1149, %v1161
        %v1170 = vadd.f32 %v1150, %v1158
        %v1171 = vadd.f32 %v1151, %v1159
        %v1172 = vadd.f32 %v1152, %v1160
        %v1173 = vadd.f32 %v1153, %v1161
        %v1174 = vadd.f32 %v1154, %v1158
        %v1175 = vadd.f32 %v1155, %v1159
        %v1176 = vadd.f32 %v1156, %v1160
        %v1177 = vadd.f32 %v1157, %v1161
        %v1178 = vpack.c.bf16 %v1166, %v1162
        %v1179 = vpack.c.bf16 %v1167, %v1163
        %v1180 = vpack.c.bf16 %v1168, %v1164
        %v1181 = vpack.c.bf16 %v1169, %v1165
        %v1182 = vpack.c.bf16 %v1174, %v1170
        %v1183 = vpack.c.bf16 %v1175, %v1171
        %v1184 = vpack.c.bf16 %v1176, %v1172
        %v1185 = vpack.c.bf16 %v1177, %v1173
        %v1186 = vld [vmem:[%s677] sm:$0xff]
        %v1187 = vld [vmem:[%s677 + $0x8] sm:$0xff]
        %v1188 = vld [vmem:[%s677 + $0x10] sm:$0xff]
        %v1189 = vld [vmem:[%s677 + $0x18] sm:$0xff]
        %v1190 = vld [vmem:[%s677 + $0x20] sm:$0xff]
        %v1191 = vld [vmem:[%s677 + $0x28] sm:$0xff]
        %v1192 = vld [vmem:[%s677 + $0x30] sm:$0xff]
        %v1193 = vld [vmem:[%s677 + $0x38] sm:$0xff]
        %v1194 = vld [vmem:[%s677 + $0x40] sm:$0xff]
        %v1195 = vld [vmem:[%s677 + $0x48] sm:$0xff]
        %v1196 = vld [vmem:[%s677 + $0x50] sm:$0xff]
        %v1197 = vld [vmem:[%s677 + $0x58] sm:$0xff]
        %v1198 = vld [vmem:[%s677 + $0x60] sm:$0xff]
        %v1199 = vld [vmem:[%s677 + $0x68] sm:$0xff]
        %v1200 = vld [vmem:[%s677 + $0x70] sm:$0xff]
        %v1201 = vld [vmem:[%s677 + $0x78] sm:$0xff]
        %v1202 = vld [vmem:[%s677 + $0x80] sm:$0xff]
        %v1203 = vld [vmem:[%s677 + $0x88] sm:$0xff]
        %v1204 = vld [vmem:[%s677 + $0x90] sm:$0xff]
        %v1205 = vld [vmem:[%s677 + $0x98] sm:$0xff]
        %v1206 = vld [vmem:[%s677 + $0xa0] sm:$0xff]
        %v1207 = vld [vmem:[%s677 + $0xa8] sm:$0xff]
        %v1208 = vld [vmem:[%s677 + $0xb0] sm:$0xff]
        %v1209 = vld [vmem:[%s677 + $0xb8] sm:$0xff]
        %v1210 = vld [vmem:[%s677 + $0xc0] sm:$0xff]
        %v1211 = vld [vmem:[%s677 + $0xc8] sm:$0xff]
        %v1212 = vld [vmem:[%s677 + $0xd0] sm:$0xff]
        %v1213 = vld [vmem:[%s677 + $0xd8] sm:$0xff]
        %v1214 = vld [vmem:[%s677 + $0xe0] sm:$0xff]
        %v1215 = vld [vmem:[%s677 + $0xe8] sm:$0xff]
        %v1216 = vld [vmem:[%s677 + $0xf0] sm:$0xff]
        %v1217 = vld [vmem:[%s677 + $0xf8] sm:$0xff]
        %v1218 = vld [vmem:[%s677 + $0x100] sm:$0xff]
        %v1219 = vld [vmem:[%s677 + $0x108] sm:$0xff]
        %v1220 = vld [vmem:[%s677 + $0x110] sm:$0xff]
        %v1221 = vld [vmem:[%s677 + $0x118] sm:$0xff]
        %v1222 = vld [vmem:[%s677 + $0x120] sm:$0xff]
        %v1223 = vld [vmem:[%s677 + $0x128] sm:$0xff]
        %v1224 = vld [vmem:[%s677 + $0x130] sm:$0xff]
        %v1225 = vld [vmem:[%s677 + $0x138] sm:$0xff]
        %v1226 = vld [vmem:[%s677 + $0x140] sm:$0xff]
        %v1227 = vld [vmem:[%s677 + $0x148] sm:$0xff]
        %v1228 = vld [vmem:[%s677 + $0x150] sm:$0xff]
        %v1229 = vld [vmem:[%s677 + $0x158] sm:$0xff]
        %v1230 = vld [vmem:[%s677 + $0x160] sm:$0xff]
        %v1231 = vld [vmem:[%s677 + $0x168] sm:$0xff]
        %v1232 = vld [vmem:[%s677 + $0x170] sm:$0xff]
        %v1233 = vld [vmem:[%s677 + $0x178] sm:$0xff]
        %v1234 = vld [vmem:[%s677 + $0x180] sm:$0xff]
        %v1235 = vld [vmem:[%s677 + $0x188] sm:$0xff]
        %v1236 = vld [vmem:[%s677 + $0x190] sm:$0xff]
        %v1237 = vld [vmem:[%s677 + $0x198] sm:$0xff]
        %v1238 = vld [vmem:[%s677 + $0x1a0] sm:$0xff]
        %v1239 = vld [vmem:[%s677 + $0x1a8] sm:$0xff]
        %v1240 = vld [vmem:[%s677 + $0x1b0] sm:$0xff]
        %v1241 = vld [vmem:[%s677 + $0x1b8] sm:$0xff]
        %v1242 = vld [vmem:[%s677 + $0x1c0] sm:$0xff]
        %v1243 = vld [vmem:[%s677 + $0x1c8] sm:$0xff]
        %v1244 = vld [vmem:[%s677 + $0x1d0] sm:$0xff]
        %v1245 = vld [vmem:[%s677 + $0x1d8] sm:$0xff]
        %v1246 = vld [vmem:[%s677 + $0x1e0] sm:$0xff]
        %v1247 = vld [vmem:[%s677 + $0x1e8] sm:$0xff]
        %v1248 = vld [vmem:[%s677 + $0x1f0] sm:$0xff]
        %v1249 = vld [vmem:[%s677 + $0x1f8] sm:$0xff]
        %v1250 = vld [vmem:[%s677 + $0x200] sm:$0xff]
        %v1251 = vld [vmem:[%s677 + $0x208] sm:$0xff]
        %v1252 = vld [vmem:[%s677 + $0x210] sm:$0xff]
        %v1253 = vld [vmem:[%s677 + $0x218] sm:$0xff]
        %v1254 = vld [vmem:[%s677 + $0x220] sm:$0xff]
        %v1255 = vld [vmem:[%s677 + $0x228] sm:$0xff]
        %v1256 = vld [vmem:[%s677 + $0x230] sm:$0xff]
        %v1257 = vld [vmem:[%s677 + $0x238] sm:$0xff]
        %v1258 = vld [vmem:[%s677 + $0x240] sm:$0xff]
        %v1259 = vld [vmem:[%s677 + $0x248] sm:$0xff]
        %v1260 = vld [vmem:[%s677 + $0x250] sm:$0xff]
        %v1261 = vld [vmem:[%s677 + $0x258] sm:$0xff]
        %v1262 = vld [vmem:[%s677 + $0x260] sm:$0xff]
        %v1263 = vld [vmem:[%s677 + $0x268] sm:$0xff]
        %v1264 = vld [vmem:[%s677 + $0x270] sm:$0xff]
        %v1265 = vld [vmem:[%s677 + $0x278] sm:$0xff]
        %v1266 = vld [vmem:[%s677 + $0x280] sm:$0xff]
        %v1267 = vld [vmem:[%s677 + $0x288] sm:$0xff]
        %v1268 = vld [vmem:[%s677 + $0x290] sm:$0xff]
        %v1269 = vld [vmem:[%s677 + $0x298] sm:$0xff]
        %v1270 = vld [vmem:[%s677 + $0x2a0] sm:$0xff]
        %v1271 = vld [vmem:[%s677 + $0x2a8] sm:$0xff]
        %v1272 = vld [vmem:[%s677 + $0x2b0] sm:$0xff]
        %v1273 = vld [vmem:[%s677 + $0x2b8] sm:$0xff]
        %v1274 = vld [vmem:[%s677 + $0x2c0] sm:$0xff]
        %v1275 = vld [vmem:[%s677 + $0x2c8] sm:$0xff]
        %v1276 = vld [vmem:[%s677 + $0x2d0] sm:$0xff]
        %v1277 = vld [vmem:[%s677 + $0x2d8] sm:$0xff]
        %v1278 = vld [vmem:[%s677 + $0x2e0] sm:$0xff]
        %v1279 = vld [vmem:[%s677 + $0x2e8] sm:$0xff]
        %v1280 = vld [vmem:[%s677 + $0x2f0] sm:$0xff]
        %v1281 = vld [vmem:[%s677 + $0x2f8] sm:$0xff]
        %v1282 = vld [vmem:[%s677 + $0x300] sm:$0xff]
        %v1283 = vld [vmem:[%s677 + $0x308] sm:$0xff]
        %v1284 = vld [vmem:[%s677 + $0x310] sm:$0xff]
        %v1285 = vld [vmem:[%s677 + $0x318] sm:$0xff]
        %v1286 = vld [vmem:[%s677 + $0x320] sm:$0xff]
        %v1287 = vld [vmem:[%s677 + $0x328] sm:$0xff]
        %v1288 = vld [vmem:[%s677 + $0x330] sm:$0xff]
        %v1289 = vld [vmem:[%s677 + $0x338] sm:$0xff]
        %v1290 = vld [vmem:[%s677 + $0x340] sm:$0xff]
        %v1291 = vld [vmem:[%s677 + $0x348] sm:$0xff]
        %v1292 = vld [vmem:[%s677 + $0x350] sm:$0xff]
        %v1293 = vld [vmem:[%s677 + $0x358] sm:$0xff]
        %v1294 = vld [vmem:[%s677 + $0x360] sm:$0xff]
        %v1295 = vld [vmem:[%s677 + $0x368] sm:$0xff]
        %v1296 = vld [vmem:[%s677 + $0x370] sm:$0xff]
        %v1297 = vld [vmem:[%s677 + $0x378] sm:$0xff]
        %v1298 = vld [vmem:[%s677 + $0x380] sm:$0xff]
        %v1299 = vld [vmem:[%s677 + $0x388] sm:$0xff]
        %v1300 = vld [vmem:[%s677 + $0x390] sm:$0xff]
        %v1301 = vld [vmem:[%s677 + $0x398] sm:$0xff]
        %v1302 = vld [vmem:[%s677 + $0x3a0] sm:$0xff]
        %v1303 = vld [vmem:[%s677 + $0x3a8] sm:$0xff]
        %v1304 = vld [vmem:[%s677 + $0x3b0] sm:$0xff]
        %v1305 = vld [vmem:[%s677 + $0x3b8] sm:$0xff]
        %v1306 = vld [vmem:[%s677 + $0x3c0] sm:$0xff]
        %v1307 = vld [vmem:[%s677 + $0x3c8] sm:$0xff]
        %v1308 = vld [vmem:[%s677 + $0x3d0] sm:$0xff]
        %v1309 = vld [vmem:[%s677 + $0x3d8] sm:$0xff]
        %v1310 = vld [vmem:[%s677 + $0x3e0] sm:$0xff]
        %v1311 = vld [vmem:[%s677 + $0x3e8] sm:$0xff]
        %v1312 = vld [vmem:[%s677 + $0x3f0] sm:$0xff]
        %v1313 = vld [vmem:[%s677 + $0x3f8] sm:$0xff]
        %v1314 = vperm.slane %v984, 4
        %v1315 = vperm.slane %v985, 4
        %v1316 = vperm.slane %v986, 4
        %v1317 = vperm.slane %v987, 4
        %v1446 = vunpack.c.l.b16 %v1186
        %v1447 = vunpack.c.h.b16 %v1186
        %v1448 = vunpack.c.l.b16 %v1187
        %v1449 = vunpack.c.h.b16 %v1187
        %v1450 = vunpack.c.l.b16 %v1188
        %v1451 = vunpack.c.h.b16 %v1188
        %v1452 = vunpack.c.l.b16 %v1189
        %v1453 = vunpack.c.h.b16 %v1189
        %v1454 = vunpack.c.l.b16 %v1190
        %v1455 = vunpack.c.h.b16 %v1190
        %v1456 = vunpack.c.l.b16 %v1191
        %v1457 = vunpack.c.h.b16 %v1191
        %v1458 = vunpack.c.l.b16 %v1192
        %v1459 = vunpack.c.h.b16 %v1192
        %v1460 = vunpack.c.l.b16 %v1193
        %v1461 = vunpack.c.h.b16 %v1193
        %v1462 = vunpack.c.l.b16 %v1194
        %v1463 = vunpack.c.h.b16 %v1194
        %v1464 = vunpack.c.l.b16 %v1195
        %v1465 = vunpack.c.h.b16 %v1195
        %v1466 = vunpack.c.l.b16 %v1196
        %v1467 = vunpack.c.h.b16 %v1196
        %v1468 = vunpack.c.l.b16 %v1197
        %v1469 = vunpack.c.h.b16 %v1197
        %v1470 = vunpack.c.l.b16 %v1198
        %v1471 = vunpack.c.h.b16 %v1198
        %v1472 = vunpack.c.l.b16 %v1199
        %v1473 = vunpack.c.h.b16 %v1199
        %v1474 = vunpack.c.l.b16 %v1200
        %v1475 = vunpack.c.h.b16 %v1200
        %v1476 = vunpack.c.l.b16 %v1201
        %v1477 = vunpack.c.h.b16 %v1201
        %v1478 = vunpack.c.l.b16 %v1202
        %v1479 = vunpack.c.h.b16 %v1202
        %v1480 = vunpack.c.l.b16 %v1203
        %v1481 = vunpack.c.h.b16 %v1203
        %v1482 = vunpack.c.l.b16 %v1204
        %v1483 = vunpack.c.h.b16 %v1204
        %v1484 = vunpack.c.l.b16 %v1205
        %v1485 = vunpack.c.h.b16 %v1205
        %v1486 = vunpack.c.l.b16 %v1206
        %v1487 = vunpack.c.h.b16 %v1206
        %v1488 = vunpack.c.l.b16 %v1207
        %v1489 = vunpack.c.h.b16 %v1207
        %v1490 = vunpack.c.l.b16 %v1208
        %v1491 = vunpack.c.h.b16 %v1208
        %v1492 = vunpack.c.l.b16 %v1209
        %v1493 = vunpack.c.h.b16 %v1209
        %v1494 = vunpack.c.l.b16 %v1210
        %v1495 = vunpack.c.h.b16 %v1210
        %v1496 = vunpack.c.l.b16 %v1211
        %v1497 = vunpack.c.h.b16 %v1211
        %v1498 = vunpack.c.l.b16 %v1212
        %v1499 = vunpack.c.h.b16 %v1212
        %v1500 = vunpack.c.l.b16 %v1213
        %v1501 = vunpack.c.h.b16 %v1213
        %v1502 = vunpack.c.l.b16 %v1214
        %v1503 = vunpack.c.h.b16 %v1214
        %v1504 = vunpack.c.l.b16 %v1215
        %v1505 = vunpack.c.h.b16 %v1215
        %v1506 = vunpack.c.l.b16 %v1216
        %v1507 = vunpack.c.h.b16 %v1216
        %v1508 = vunpack.c.l.b16 %v1217
        %v1509 = vunpack.c.h.b16 %v1217
        %v1510 = vunpack.c.l.b16 %v1218
        %v1511 = vunpack.c.h.b16 %v1218
        %v1512 = vunpack.c.l.b16 %v1219
        %v1513 = vunpack.c.h.b16 %v1219
        %v1514 = vunpack.c.l.b16 %v1220
        %v1515 = vunpack.c.h.b16 %v1220
        %v1516 = vunpack.c.l.b16 %v1221
        %v1517 = vunpack.c.h.b16 %v1221
        %v1518 = vunpack.c.l.b16 %v1222
        %v1519 = vunpack.c.h.b16 %v1222
        %v1520 = vunpack.c.l.b16 %v1223
        %v1521 = vunpack.c.h.b16 %v1223
        %v1522 = vunpack.c.l.b16 %v1224
        %v1523 = vunpack.c.h.b16 %v1224
        %v1524 = vunpack.c.l.b16 %v1225
        %v1525 = vunpack.c.h.b16 %v1225
        %v1526 = vunpack.c.l.b16 %v1226
        %v1527 = vunpack.c.h.b16 %v1226
        %v1528 = vunpack.c.l.b16 %v1227
        %v1529 = vunpack.c.h.b16 %v1227
        %v1530 = vunpack.c.l.b16 %v1228
        %v1531 = vunpack.c.h.b16 %v1228
        %v1532 = vunpack.c.l.b16 %v1229
        %v1533 = vunpack.c.h.b16 %v1229
        %v1534 = vunpack.c.l.b16 %v1230
        %v1535 = vunpack.c.h.b16 %v1230
        %v1536 = vunpack.c.l.b16 %v1231
        %v1537 = vunpack.c.h.b16 %v1231
        %v1538 = vunpack.c.l.b16 %v1232
        %v1539 = vunpack.c.h.b16 %v1232
        %v1540 = vunpack.c.l.b16 %v1233
        %v1541 = vunpack.c.h.b16 %v1233
        %v1542 = vunpack.c.l.b16 %v1234
        %v1543 = vunpack.c.h.b16 %v1234
        %v1544 = vunpack.c.l.b16 %v1235
        %v1545 = vunpack.c.h.b16 %v1235
        %v1546 = vunpack.c.l.b16 %v1236
        %v1547 = vunpack.c.h.b16 %v1236
        %v1548 = vunpack.c.l.b16 %v1237
        %v1549 = vunpack.c.h.b16 %v1237
        %v1550 = vunpack.c.l.b16 %v1238
        %v1551 = vunpack.c.h.b16 %v1238
        %v1552 = vunpack.c.l.b16 %v1239
        %v1553 = vunpack.c.h.b16 %v1239
        %v1554 = vunpack.c.l.b16 %v1240
        %v1555 = vunpack.c.h.b16 %v1240
        %v1556 = vunpack.c.l.b16 %v1241
        %v1557 = vunpack.c.h.b16 %v1241
        %v1558 = vunpack.c.l.b16 %v1242
        %v1559 = vunpack.c.h.b16 %v1242
        %v1560 = vunpack.c.l.b16 %v1243
        %v1561 = vunpack.c.h.b16 %v1243
        %v1562 = vunpack.c.l.b16 %v1244
        %v1563 = vunpack.c.h.b16 %v1244
        %v1564 = vunpack.c.l.b16 %v1245
        %v1565 = vunpack.c.h.b16 %v1245
        %v1566 = vunpack.c.l.b16 %v1246
        %v1567 = vunpack.c.h.b16 %v1246
        %v1568 = vunpack.c.l.b16 %v1247
        %v1569 = vunpack.c.h.b16 %v1247
        %v1570 = vunpack.c.l.b16 %v1248
        %v1571 = vunpack.c.h.b16 %v1248
        %v1572 = vunpack.c.l.b16 %v1249
        %v1573 = vunpack.c.h.b16 %v1249
        %v1574 = vunpack.c.l.b16 %v1250
        %v1575 = vunpack.c.h.b16 %v1250
        %v1576 = vunpack.c.l.b16 %v1251
        %v1577 = vunpack.c.h.b16 %v1251
        %v1578 = vunpack.c.l.b16 %v1252
        %v1579 = vunpack.c.h.b16 %v1252
        %v1580 = vunpack.c.l.b16 %v1253
        %v1581 = vunpack.c.h.b16 %v1253
        %v1582 = vunpack.c.l.b16 %v1254
        %v1583 = vunpack.c.h.b16 %v1254
        %v1584 = vunpack.c.l.b16 %v1255
        %v1585 = vunpack.c.h.b16 %v1255
        %v1586 = vunpack.c.l.b16 %v1256
        %v1587 = vunpack.c.h.b16 %v1256
        %v1588 = vunpack.c.l.b16 %v1257
        %v1589 = vunpack.c.h.b16 %v1257
        %v1590 = vunpack.c.l.b16 %v1258
        %v1591 = vunpack.c.h.b16 %v1258
        %v1592 = vunpack.c.l.b16 %v1259
        %v1593 = vunpack.c.h.b16 %v1259
        %v1594 = vunpack.c.l.b16 %v1260
        %v1595 = vunpack.c.h.b16 %v1260
        %v1596 = vunpack.c.l.b16 %v1261
        %v1597 = vunpack.c.h.b16 %v1261
        %v1598 = vunpack.c.l.b16 %v1262
        %v1599 = vunpack.c.h.b16 %v1262
        %v1600 = vunpack.c.l.b16 %v1263
        %v1601 = vunpack.c.h.b16 %v1263
        %v1602 = vunpack.c.l.b16 %v1264
        %v1603 = vunpack.c.h.b16 %v1264
        %v1604 = vunpack.c.l.b16 %v1265
        %v1605 = vunpack.c.h.b16 %v1265
        %v1606 = vunpack.c.l.b16 %v1266
        %v1607 = vunpack.c.h.b16 %v1266
        %v1608 = vunpack.c.l.b16 %v1267
        %v1609 = vunpack.c.h.b16 %v1267
        %v1610 = vunpack.c.l.b16 %v1268
        %v1611 = vunpack.c.h.b16 %v1268
        %v1612 = vunpack.c.l.b16 %v1269
        %v1613 = vunpack.c.h.b16 %v1269
        %v1614 = vunpack.c.l.b16 %v1270
        %v1615 = vunpack.c.h.b16 %v1270
        %v1616 = vunpack.c.l.b16 %v1271
        %v1617 = vunpack.c.h.b16 %v1271
        %v1618 = vunpack.c.l.b16 %v1272
        %v1619 = vunpack.c.h.b16 %v1272
        %v1620 = vunpack.c.l.b16 %v1273
        %v1621 = vunpack.c.h.b16 %v1273
        %v1622 = vunpack.c.l.b16 %v1274
        %v1623 = vunpack.c.h.b16 %v1274
        %v1624 = vunpack.c.l.b16 %v1275
        %v1625 = vunpack.c.h.b16 %v1275
        %v1626 = vunpack.c.l.b16 %v1276
        %v1627 = vunpack.c.h.b16 %v1276
        %v1628 = vunpack.c.l.b16 %v1277
        %v1629 = vunpack.c.h.b16 %v1277
        %v1630 = vunpack.c.l.b16 %v1278
        %v1631 = vunpack.c.h.b16 %v1278
        %v1632 = vunpack.c.l.b16 %v1279
        %v1633 = vunpack.c.h.b16 %v1279
        %v1634 = vunpack.c.l.b16 %v1280
        %v1635 = vunpack.c.h.b16 %v1280
        %v1636 = vunpack.c.l.b16 %v1281
        %v1637 = vunpack.c.h.b16 %v1281
        %v1638 = vunpack.c.l.b16 %v1282
        %v1639 = vunpack.c.h.b16 %v1282
        %v1640 = vunpack.c.l.b16 %v1283
        %v1641 = vunpack.c.h.b16 %v1283
        %v1642 = vunpack.c.l.b16 %v1284
        %v1643 = vunpack.c.h.b16 %v1284
        %v1644 = vunpack.c.l.b16 %v1285
        %v1645 = vunpack.c.h.b16 %v1285
        %v1646 = vunpack.c.l.b16 %v1286
        %v1647 = vunpack.c.h.b16 %v1286
        %v1648 = vunpack.c.l.b16 %v1287
        %v1649 = vunpack.c.h.b16 %v1287
        %v1650 = vunpack.c.l.b16 %v1288
        %v1651 = vunpack.c.h.b16 %v1288
        %v1652 = vunpack.c.l.b16 %v1289
        %v1653 = vunpack.c.h.b16 %v1289
        %v1654 = vunpack.c.l.b16 %v1290
        %v1655 = vunpack.c.h.b16 %v1290
        %v1656 = vunpack.c.l.b16 %v1291
        %v1657 = vunpack.c.h.b16 %v1291
        %v1658 = vunpack.c.l.b16 %v1292
        %v1659 = vunpack.c.h.b16 %v1292
        %v1660 = vunpack.c.l.b16 %v1293
        %v1661 = vunpack.c.h.b16 %v1293
        %v1662 = vunpack.c.l.b16 %v1294
        %v1663 = vunpack.c.h.b16 %v1294
        %v1664 = vunpack.c.l.b16 %v1295
        %v1665 = vunpack.c.h.b16 %v1295
        %v1666 = vunpack.c.l.b16 %v1296
        %v1667 = vunpack.c.h.b16 %v1296
        %v1668 = vunpack.c.l.b16 %v1297
        %v1669 = vunpack.c.h.b16 %v1297
        %v1670 = vunpack.c.l.b16 %v1298
        %v1671 = vunpack.c.h.b16 %v1298
        %v1672 = vunpack.c.l.b16 %v1299
        %v1673 = vunpack.c.h.b16 %v1299
        %v1674 = vunpack.c.l.b16 %v1300
        %v1675 = vunpack.c.h.b16 %v1300
        %v1676 = vunpack.c.l.b16 %v1301
        %v1677 = vunpack.c.h.b16 %v1301
        %v1678 = vunpack.c.l.b16 %v1302
        %v1679 = vunpack.c.h.b16 %v1302
        %v1680 = vunpack.c.l.b16 %v1303
        %v1681 = vunpack.c.h.b16 %v1303
        %v1682 = vunpack.c.l.b16 %v1304
        %v1683 = vunpack.c.h.b16 %v1304
        %v1684 = vunpack.c.l.b16 %v1305
        %v1685 = vunpack.c.h.b16 %v1305
        %v1686 = vunpack.c.l.b16 %v1306
        %v1687 = vunpack.c.h.b16 %v1306
        %v1688 = vunpack.c.l.b16 %v1307
        %v1689 = vunpack.c.h.b16 %v1307
        %v1690 = vunpack.c.l.b16 %v1308
        %v1691 = vunpack.c.h.b16 %v1308
        %v1692 = vunpack.c.l.b16 %v1309
        %v1693 = vunpack.c.h.b16 %v1309
        %v1694 = vunpack.c.l.b16 %v1310
        %v1695 = vunpack.c.h.b16 %v1310
        %v1696 = vunpack.c.l.b16 %v1311
        %v1697 = vunpack.c.h.b16 %v1311
        %v1698 = vunpack.c.l.b16 %v1312
        %v1699 = vunpack.c.h.b16 %v1312
        %v1700 = vunpack.c.l.b16 %v1313
        %v1701 = vunpack.c.h.b16 %v1313
        %v1702 = vpack.c.b16 %v1450, %v1446
        %v1703 = vpack.c.b16 %v1451, %v1447
        %v1704 = vpack.c.b16 %v1452, %v1448
        %v1705 = vpack.c.b16 %v1453, %v1449
        %v1706 = vpack.c.b16 %v1458, %v1454
        %v1707 = vpack.c.b16 %v1459, %v1455
        %v1708 = vpack.c.b16 %v1460, %v1456
        %v1709 = vpack.c.b16 %v1461, %v1457
        %v1710 = vpack.c.b16 %v1466, %v1462
        %v1711 = vpack.c.b16 %v1467, %v1463
        %v1712 = vpack.c.b16 %v1468, %v1464
        %v1713 = vpack.c.b16 %v1469, %v1465
        %v1714 = vpack.c.b16 %v1474, %v1470
        %v1715 = vpack.c.b16 %v1475, %v1471
        %v1716 = vpack.c.b16 %v1476, %v1472
        %v1717 = vpack.c.b16 %v1477, %v1473
        %v1718 = vpack.c.b16 %v1482, %v1478
        %v1719 = vpack.c.b16 %v1483, %v1479
        %v1720 = vpack.c.b16 %v1484, %v1480
        %v1721 = vpack.c.b16 %v1485, %v1481
        %v1722 = vpack.c.b16 %v1490, %v1486
        %v1723 = vpack.c.b16 %v1491, %v1487
        %v1724 = vpack.c.b16 %v1492, %v1488
        %v1725 = vpack.c.b16 %v1493, %v1489
        %v1726 = vpack.c.b16 %v1498, %v1494
        %v1727 = vpack.c.b16 %v1499, %v1495
        %v1728 = vpack.c.b16 %v1500, %v1496
        %v1729 = vpack.c.b16 %v1501, %v1497
        %v1730 = vpack.c.b16 %v1506, %v1502
        %v1731 = vpack.c.b16 %v1507, %v1503
        %v1732 = vpack.c.b16 %v1508, %v1504
        %v1733 = vpack.c.b16 %v1509, %v1505
        %v1734 = vpack.c.b16 %v1514, %v1510
        %v1735 = vpack.c.b16 %v1515, %v1511
        %v1736 = vpack.c.b16 %v1516, %v1512
        %v1737 = vpack.c.b16 %v1517, %v1513
        %v1738 = vpack.c.b16 %v1522, %v1518
        %v1739 = vpack.c.b16 %v1523, %v1519
        %v1740 = vpack.c.b16 %v1524, %v1520
        %v1741 = vpack.c.b16 %v1525, %v1521
        %v1742 = vpack.c.b16 %v1530, %v1526
        %v1743 = vpack.c.b16 %v1531, %v1527
        %v1744 = vpack.c.b16 %v1532, %v1528
        %v1745 = vpack.c.b16 %v1533, %v1529
        %v1746 = vpack.c.b16 %v1538, %v1534
        %v1747 = vpack.c.b16 %v1539, %v1535
        %v1748 = vpack.c.b16 %v1540, %v1536
        %v1749 = vpack.c.b16 %v1541, %v1537
        %v1750 = vpack.c.b16 %v1546, %v1542
        %v1751 = vpack.c.b16 %v1547, %v1543
        %v1752 = vpack.c.b16 %v1548, %v1544
        %v1753 = vpack.c.b16 %v1549, %v1545
        %v1754 = vpack.c.b16 %v1554, %v1550
        %v1755 = vpack.c.b16 %v1555, %v1551
        %v1756 = vpack.c.b16 %v1556, %v1552
        %v1757 = vpack.c.b16 %v1557, %v1553
        %v1758 = vpack.c.b16 %v1562, %v1558
        %v1759 = vpack.c.b16 %v1563, %v1559
        %v1760 = vpack.c.b16 %v1564, %v1560
        %v1761 = vpack.c.b16 %v1565, %v1561
        %v1762 = vpack.c.b16 %v1570, %v1566
        %v1763 = vpack.c.b16 %v1571, %v1567
        %v1764 = vpack.c.b16 %v1572, %v1568
        %v1765 = vpack.c.b16 %v1573, %v1569
        %v1766 = vpack.c.b16 %v1578, %v1574
        %v1767 = vpack.c.b16 %v1579, %v1575
        %v1768 = vpack.c.b16 %v1580, %v1576
        %v1769 = vpack.c.b16 %v1581, %v1577
        %v1770 = vpack.c.b16 %v1586, %v1582
        %v1771 = vpack.c.b16 %v1587, %v1583
        %v1772 = vpack.c.b16 %v1588, %v1584
        %v1773 = vpack.c.b16 %v1589, %v1585
        %v1774 = vpack.c.b16 %v1594, %v1590
        %v1775 = vpack.c.b16 %v1595, %v1591
        %v1776 = vpack.c.b16 %v1596, %v1592
        %v1777 = vpack.c.b16 %v1597, %v1593
        %v1778 = vpack.c.b16 %v1602, %v1598
        %v1779 = vpack.c.b16 %v1603, %v1599
        %v1780 = vpack.c.b16 %v1604, %v1600
        %v1781 = vpack.c.b16 %v1605, %v1601
        %v1782 = vpack.c.b16 %v1610, %v1606
        %v1783 = vpack.c.b16 %v1611, %v1607
        %v1784 = vpack.c.b16 %v1612, %v1608
        %v1785 = vpack.c.b16 %v1613, %v1609
        %v1786 = vpack.c.b16 %v1618, %v1614
        %v1787 = vpack.c.b16 %v1619, %v1615
        %v1788 = vpack.c.b16 %v1620, %v1616
        %v1789 = vpack.c.b16 %v1621, %v1617
        %v1790 = vpack.c.b16 %v1626, %v1622
        %v1791 = vpack.c.b16 %v1627, %v1623
        %v1792 = vpack.c.b16 %v1628, %v1624
        %v1793 = vpack.c.b16 %v1629, %v1625
        %v1794 = vpack.c.b16 %v1634, %v1630
        %v1795 = vpack.c.b16 %v1635, %v1631
        %v1796 = vpack.c.b16 %v1636, %v1632
        %v1797 = vpack.c.b16 %v1637, %v1633
        %v1798 = vpack.c.b16 %v1642, %v1638
        %v1799 = vpack.c.b16 %v1643, %v1639
        %v1800 = vpack.c.b16 %v1644, %v1640
        %v1801 = vpack.c.b16 %v1645, %v1641
        %v1802 = vpack.c.b16 %v1650, %v1646
        %v1803 = vpack.c.b16 %v1651, %v1647
        %v1804 = vpack.c.b16 %v1652, %v1648
        %v1805 = vpack.c.b16 %v1653, %v1649
        %v1806 = vpack.c.b16 %v1658, %v1654
        %v1807 = vpack.c.b16 %v1659, %v1655
        %v1808 = vpack.c.b16 %v1660, %v1656
        %v1809 = vpack.c.b16 %v1661, %v1657
        %v1810 = vpack.c.b16 %v1666, %v1662
        %v1811 = vpack.c.b16 %v1667, %v1663
        %v1812 = vpack.c.b16 %v1668, %v1664
        %v1813 = vpack.c.b16 %v1669, %v1665
        %v1814 = vpack.c.b16 %v1674, %v1670
        %v1815 = vpack.c.b16 %v1675, %v1671
        %v1816 = vpack.c.b16 %v1676, %v1672
        %v1817 = vpack.c.b16 %v1677, %v1673
        %v1818 = vpack.c.b16 %v1682, %v1678
        %v1819 = vpack.c.b16 %v1683, %v1679
        %v1820 = vpack.c.b16 %v1684, %v1680
        %v1821 = vpack.c.b16 %v1685, %v1681
        %v1822 = vpack.c.b16 %v1690, %v1686
        %v1823 = vpack.c.b16 %v1691, %v1687
        %v1824 = vpack.c.b16 %v1692, %v1688
        %v1825 = vpack.c.b16 %v1693, %v1689
        %v1826 = vpack.c.b16 %v1698, %v1694
        %v1827 = vpack.c.b16 %v1699, %v1695
        %v1828 = vpack.c.b16 %v1700, %v1696
        %v1829 = vpack.c.b16 %v1701, %v1697
        %1958 = vmatpush.bf16.msra.mxu0 %v1730
        %1959 = vmatpush.bf16.msra.mxu0 %v1726
        %1960 = vmatpush.bf16.msra.mxu0 %v1722
        %1961 = vmatpush.bf16.msra.mxu0 %v1718
        %1962 = vmatpush.bf16.msra.mxu0 %v1714
        %1963 = vmatpush.bf16.msra.mxu0 %v1710
        %1964 = vmatpush.bf16.msra.mxu0 %v1706
        %1965 = vmatpush.bf16.msra.mxu0 %v1702
        %1966 = vmatmul.bf16.gmra.mxu0 %v1178
        %v1967 = vpop.f32.mrf.mxu0
        %v1968 = vadd.f32 %v1314, %v1967
        %v1969 = vpop.f32.mrf.mxu0
        %v1970 = vadd.f32 %v1314, %v1969
        %1971 = vmatmul.bf16.gmra.mxu0 %v1182
        %v1972 = vpop.f32.mrf.mxu0
        %v1973 = vadd.f32 %v1314, %v1972
        %v1974 = vpop.f32.mrf.mxu0
        %v1975 = vadd.f32 %v1314, %v1974
        %1976 = vdwg.mxu0
        %1977 = vmatpush.bf16.msra.mxu0 %v1762
        %1978 = vmatpush.bf16.msra.mxu0 %v1758
        %1979 = vmatpush.bf16.msra.mxu0 %v1754
        %1980 = vmatpush.bf16.msra.mxu0 %v1750
        %1981 = vmatpush.bf16.msra.mxu0 %v1746
        %1982 = vmatpush.bf16.msra.mxu0 %v1742
        %1983 = vmatpush.bf16.msra.mxu0 %v1738
        %1984 = vmatpush.bf16.msra.mxu0 %v1734
        %1985 = vmatmul.bf16.gmra.mxu0 %v1179
        %v1986 = vpop.f32.mrf.mxu0
        %v1987 = vadd.f32 %v1968, %v1986
        %v1988 = vpop.f32.mrf.mxu0
        %v1989 = vadd.f32 %v1970, %v1988
        %1990 = vmatmul.bf16.gmra.mxu0 %v1183
        %v1991 = vpop.f32.mrf.mxu0
        %v1992 = vadd.f32 %v1973, %v1991
        %v1993 = vpop.f32.mrf.mxu0
        %v1994 = vadd.f32 %v1975, %v1993
        %1995 = vdwg.mxu0
        %1996 = vmatpush.bf16.msra.mxu0 %v1794
        %1997 = vmatpush.bf16.msra.mxu0 %v1790
        %1998 = vmatpush.bf16.msra.mxu0 %v1786
        %1999 = vmatpush.bf16.msra.mxu0 %v1782
        %2000 = vmatpush.bf16.msra.mxu0 %v1778
        %2001 = vmatpush.bf16.msra.mxu0 %v1774
        %2002 = vmatpush.bf16.msra.mxu0 %v1770
        %2003 = vmatpush.bf16.msra.mxu0 %v1766
        %2004 = vmatmul.bf16.gmra.mxu0 %v1180
        %v2005 = vpop.f32.mrf.mxu0
        %v2006 = vadd.f32 %v1987, %v2005
        %v2007 = vpop.f32.mrf.mxu0
        %v2008 = vadd.f32 %v1989, %v2007
        %2009 = vmatmul.bf16.gmra.mxu0 %v1184
        %v2010 = vpop.f32.mrf.mxu0
        %v2011 = vadd.f32 %v1992, %v2010
        %v2012 = vpop.f32.mrf.mxu0
        %v2013 = vadd.f32 %v1994, %v2012
        %2014 = vdwg.mxu0
        %2015 = vmatpush.bf16.msra.mxu0 %v1826
        %2016 = vmatpush.bf16.msra.mxu0 %v1822
        %2017 = vmatpush.bf16.msra.mxu0 %v1818
        %2018 = vmatpush.bf16.msra.mxu0 %v1814
        %2019 = vmatpush.bf16.msra.mxu0 %v1810
        %2020 = vmatpush.bf16.msra.mxu0 %v1806
        %2021 = vmatpush.bf16.msra.mxu0 %v1802
        %2022 = vmatpush.bf16.msra.mxu0 %v1798
        %2023 = vmatmul.bf16.gmra.mxu0 %v1181
        %v2024 = vpop.f32.mrf.mxu0
        %v2025 = vadd.f32 %v2006, %v2024
        %v2026 = vpop.f32.mrf.mxu0
        %v2027 = vadd.f32 %v2008, %v2026
        %2028 = vmatmul.bf16.gmra.mxu0 %v1185
        %v2029 = vpop.f32.mrf.mxu0
        %v2030 = vadd.f32 %v2011, %v2029
        %v2031 = vpop.f32.mrf.mxu0
        %v2032 = vadd.f32 %v2013, %v2031
        %2033 = vdwg.mxu0
        %2034 = vmatpush.bf16.msra.mxu0 %v1731
        %2035 = vmatpush.bf16.msra.mxu0 %v1727
        %2036 = vmatpush.bf16.msra.mxu0 %v1723
        %2037 = vmatpush.bf16.msra.mxu0 %v1719
        %2038 = vmatpush.bf16.msra.mxu0 %v1715
        %2039 = vmatpush.bf16.msra.mxu0 %v1711
        %2040 = vmatpush.bf16.msra.mxu0 %v1707
        %2041 = vmatpush.bf16.msra.mxu0 %v1703
        %2042 = vmatmul.bf16.gmra.mxu0 %v1178
        %v2043 = vpop.f32.mrf.mxu0
        %v2044 = vadd.f32 %v1315, %v2043
        %v2045 = vpop.f32.mrf.mxu0
        %v2046 = vadd.f32 %v1315, %v2045
        %2047 = vmatmul.bf16.gmra.mxu0 %v1182
        %v2048 = vpop.f32.mrf.mxu0
        %v2049 = vadd.f32 %v1315, %v2048
        %v2050 = vpop.f32.mrf.mxu0
        %v2051 = vadd.f32 %v1315, %v2050
        %2052 = vdwg.mxu0
        %2053 = vmatpush.bf16.msra.mxu0 %v1763
        %2054 = vmatpush.bf16.msra.mxu0 %v1759
        %2055 = vmatpush.bf16.msra.mxu0 %v1755
        %2056 = vmatpush.bf16.msra.mxu0 %v1751
        %2057 = vmatpush.bf16.msra.mxu0 %v1747
        %2058 = vmatpush.bf16.msra.mxu0 %v1743
        %2059 = vmatpush.bf16.msra.mxu0 %v1739
        %2060 = vmatpush.bf16.msra.mxu0 %v1735
        %2061 = vmatmul.bf16.gmra.mxu0 %v1179
        %v2062 = vpop.f32.mrf.mxu0
        %v2063 = vadd.f32 %v2044, %v2062
        %v2064 = vpop.f32.mrf.mxu0
        %v2065 = vadd.f32 %v2046, %v2064
        %2066 = vmatmul.bf16.gmra.mxu0 %v1183
        %v2067 = vpop.f32.mrf.mxu0
        %v2068 = vadd.f32 %v2049, %v2067
        %v2069 = vpop.f32.mrf.mxu0
        %v2070 = vadd.f32 %v2051, %v2069
        %2071 = vdwg.mxu0
        %2072 = vmatpush.bf16.msra.mxu0 %v1795
        %2073 = vmatpush.bf16.msra.mxu0 %v1791
        %2074 = vmatpush.bf16.msra.mxu0 %v1787
        %2075 = vmatpush.bf16.msra.mxu0 %v1783
        %2076 = vmatpush.bf16.msra.mxu0 %v1779
        %2077 = vmatpush.bf16.msra.mxu0 %v1775
        %2078 = vmatpush.bf16.msra.mxu0 %v1771
        %2079 = vmatpush.bf16.msra.mxu0 %v1767
        %2080 = vmatmul.bf16.gmra.mxu0 %v1180
        %v2081 = vpop.f32.mrf.mxu0
        %v2082 = vadd.f32 %v2063, %v2081
        %v2083 = vpop.f32.mrf.mxu0
        %v2084 = vadd.f32 %v2065, %v2083
        %2085 = vmatmul.bf16.gmra.mxu0 %v1184
        %v2086 = vpop.f32.mrf.mxu0
        %v2087 = vadd.f32 %v2068, %v2086
        %v2088 = vpop.f32.mrf.mxu0
        %v2089 = vadd.f32 %v2070, %v2088
        %2090 = vdwg.mxu0
        %2091 = vmatpush.bf16.msra.mxu0 %v1827
        %2092 = vmatpush.bf16.msra.mxu0 %v1823
        %2093 = vmatpush.bf16.msra.mxu0 %v1819
        %2094 = vmatpush.bf16.msra.mxu0 %v1815
        %2095 = vmatpush.bf16.msra.mxu0 %v1811
        %2096 = vmatpush.bf16.msra.mxu0 %v1807
        %2097 = vmatpush.bf16.msra.mxu0 %v1803
        %2098 = vmatpush.bf16.msra.mxu0 %v1799
        %2099 = vmatmul.bf16.gmra.mxu0 %v1181
        %v2100 = vpop.f32.mrf.mxu0
        %v2101 = vadd.f32 %v2082, %v2100
        %v2102 = vpop.f32.mrf.mxu0
        %v2103 = vadd.f32 %v2084, %v2102
        %2104 = vmatmul.bf16.gmra.mxu0 %v1185
        %v2105 = vpop.f32.mrf.mxu0
        %v2106 = vadd.f32 %v2087, %v2105
        %v2107 = vpop.f32.mrf.mxu0
        %v2108 = vadd.f32 %v2089, %v2107
        %2109 = vdwg.mxu0
        %2110 = vmatpush.bf16.msra.mxu0 %v1732
        %2111 = vmatpush.bf16.msra.mxu0 %v1728
        %2112 = vmatpush.bf16.msra.mxu0 %v1724
        %2113 = vmatpush.bf16.msra.mxu0 %v1720
        %2114 = vmatpush.bf16.msra.mxu0 %v1716
        %2115 = vmatpush.bf16.msra.mxu0 %v1712
        %2116 = vmatpush.bf16.msra.mxu0 %v1708
        %2117 = vmatpush.bf16.msra.mxu0 %v1704
        %2118 = vmatmul.bf16.gmra.mxu0 %v1178
        %v2119 = vpop.f32.mrf.mxu0
        %v2120 = vadd.f32 %v1316, %v2119
        %v2121 = vpop.f32.mrf.mxu0
        %v2122 = vadd.f32 %v1316, %v2121
        %2123 = vmatmul.bf16.gmra.mxu0 %v1182
        %v2124 = vpop.f32.mrf.mxu0
        %v2125 = vadd.f32 %v1316, %v2124
        %v2126 = vpop.f32.mrf.mxu0
        %v2127 = vadd.f32 %v1316, %v2126
        %2128 = vdwg.mxu0
        %2129 = vmatpush.bf16.msra.mxu0 %v1764
        %2130 = vmatpush.bf16.msra.mxu0 %v1760
        %2131 = vmatpush.bf16.msra.mxu0 %v1756
        %2132 = vmatpush.bf16.msra.mxu0 %v1752
        %2133 = vmatpush.bf16.msra.mxu0 %v1748
        %2134 = vmatpush.bf16.msra.mxu0 %v1744
        %2135 = vmatpush.bf16.msra.mxu0 %v1740
        %2136 = vmatpush.bf16.msra.mxu0 %v1736
        %2137 = vmatmul.bf16.gmra.mxu0 %v1179
        %v2138 = vpop.f32.mrf.mxu0
        %v2139 = vadd.f32 %v2120, %v2138
        %v2140 = vpop.f32.mrf.mxu0
        %v2141 = vadd.f32 %v2122, %v2140
        %2142 = vmatmul.bf16.gmra.mxu0 %v1183
        %v2143 = vpop.f32.mrf.mxu0
        %v2144 = vadd.f32 %v2125, %v2143
        %v2145 = vpop.f32.mrf.mxu0
        %v2146 = vadd.f32 %v2127, %v2145
        %2147 = vdwg.mxu0
        %2148 = vmatpush.bf16.msra.mxu0 %v1796
        %2149 = vmatpush.bf16.msra.mxu0 %v1792
        %2150 = vmatpush.bf16.msra.mxu0 %v1788
        %2151 = vmatpush.bf16.msra.mxu0 %v1784
        %2152 = vmatpush.bf16.msra.mxu0 %v1780
        %2153 = vmatpush.bf16.msra.mxu0 %v1776
        %2154 = vmatpush.bf16.msra.mxu0 %v1772
        %2155 = vmatpush.bf16.msra.mxu0 %v1768
        %2156 = vmatmul.bf16.gmra.mxu0 %v1180
        %v2157 = vpop.f32.mrf.mxu0
        %v2158 = vadd.f32 %v2139, %v2157
        %v2159 = vpop.f32.mrf.mxu0
        %v2160 = vadd.f32 %v2141, %v2159
        %2161 = vmatmul.bf16.gmra.mxu0 %v1184
        %v2162 = vpop.f32.mrf.mxu0
        %v2163 = vadd.f32 %v2144, %v2162
        %v2164 = vpop.f32.mrf.mxu0
        %v2165 = vadd.f32 %v2146, %v2164
        %2166 = vdwg.mxu0
        %2167 = vmatpush.bf16.msra.mxu0 %v1828
        %2168 = vmatpush.bf16.msra.mxu0 %v1824
        %2169 = vmatpush.bf16.msra.mxu0 %v1820
        %2170 = vmatpush.bf16.msra.mxu0 %v1816
        %2171 = vmatpush.bf16.msra.mxu0 %v1812
        %2172 = vmatpush.bf16.msra.mxu0 %v1808
        %2173 = vmatpush.bf16.msra.mxu0 %v1804
        %2174 = vmatpush.bf16.msra.mxu0 %v1800
        %2175 = vmatmul.bf16.gmra.mxu0 %v1181
        %v2176 = vpop.f32.mrf.mxu0
        %v2177 = vadd.f32 %v2158, %v2176
        %v2178 = vpop.f32.mrf.mxu0
        %v2179 = vadd.f32 %v2160, %v2178
        %2180 = vmatmul.bf16.gmra.mxu0 %v1185
        %v2181 = vpop.f32.mrf.mxu0
        %v2182 = vadd.f32 %v2163, %v2181
        %v2183 = vpop.f32.mrf.mxu0
        %v2184 = vadd.f32 %v2165, %v2183
        %2185 = vdwg.mxu0
        %2186 = vmatpush.bf16.msra.mxu0 %v1733
        %2187 = vmatpush.bf16.msra.mxu0 %v1729
        %2188 = vmatpush.bf16.msra.mxu0 %v1725
        %2189 = vmatpush.bf16.msra.mxu0 %v1721
        %2190 = vmatpush.bf16.msra.mxu0 %v1717
        %2191 = vmatpush.bf16.msra.mxu0 %v1713
        %2192 = vmatpush.bf16.msra.mxu0 %v1709
        %2193 = vmatpush.bf16.msra.mxu0 %v1705
        %2194 = vmatmul.bf16.gmra.mxu0 %v1178
        %v2195 = vpop.f32.mrf.mxu0
        %v2196 = vadd.f32 %v1317, %v2195
        %v2197 = vpop.f32.mrf.mxu0
        %v2198 = vadd.f32 %v1317, %v2197
        %2199 = vmatmul.bf16.gmra.mxu0 %v1182
        %v2200 = vpop.f32.mrf.mxu0
        %v2201 = vadd.f32 %v1317, %v2200
        %v2202 = vpop.f32.mrf.mxu0
        %v2203 = vadd.f32 %v1317, %v2202
        %2204 = vdwg.mxu0
        %2205 = vmatpush.bf16.msra.mxu0 %v1765
        %2206 = vmatpush.bf16.msra.mxu0 %v1761
        %2207 = vmatpush.bf16.msra.mxu0 %v1757
        %2208 = vmatpush.bf16.msra.mxu0 %v1753
        %2209 = vmatpush.bf16.msra.mxu0 %v1749
        %2210 = vmatpush.bf16.msra.mxu0 %v1745
        %2211 = vmatpush.bf16.msra.mxu0 %v1741
        %2212 = vmatpush.bf16.msra.mxu0 %v1737
        %2213 = vmatmul.bf16.gmra.mxu0 %v1179
        %v2214 = vpop.f32.mrf.mxu0
        %v2215 = vadd.f32 %v2196, %v2214
        %v2216 = vpop.f32.mrf.mxu0
        %v2217 = vadd.f32 %v2198, %v2216
        %2218 = vmatmul.bf16.gmra.mxu0 %v1183
        %v2219 = vpop.f32.mrf.mxu0
        %v2220 = vadd.f32 %v2201, %v2219
        %v2221 = vpop.f32.mrf.mxu0
        %v2222 = vadd.f32 %v2203, %v2221
        %2223 = vdwg.mxu0
        %2224 = vmatpush.bf16.msra.mxu0 %v1797
        %2225 = vmatpush.bf16.msra.mxu0 %v1793
        %2226 = vmatpush.bf16.msra.mxu0 %v1789
        %2227 = vmatpush.bf16.msra.mxu0 %v1785
        %2228 = vmatpush.bf16.msra.mxu0 %v1781
        %2229 = vmatpush.bf16.msra.mxu0 %v1777
        %2230 = vmatpush.bf16.msra.mxu0 %v1773
        %2231 = vmatpush.bf16.msra.mxu0 %v1769
        %2232 = vmatmul.bf16.gmra.mxu0 %v1180
        %v2233 = vpop.f32.mrf.mxu0
        %v2234 = vadd.f32 %v2215, %v2233
        %v2235 = vpop.f32.mrf.mxu0
        %v2236 = vadd.f32 %v2217, %v2235
        %2237 = vmatmul.bf16.gmra.mxu0 %v1184
        %v2238 = vpop.f32.mrf.mxu0
        %v2239 = vadd.f32 %v2220, %v2238
        %v2240 = vpop.f32.mrf.mxu0
        %v2241 = vadd.f32 %v2222, %v2240
        %2242 = vdwg.mxu0
        %2243 = vmatpush.bf16.msra.mxu0 %v1829
        %2244 = vmatpush.bf16.msra.mxu0 %v1825
        %2245 = vmatpush.bf16.msra.mxu0 %v1821
        %2246 = vmatpush.bf16.msra.mxu0 %v1817
        %2247 = vmatpush.bf16.msra.mxu0 %v1813
        %2248 = vmatpush.bf16.msra.mxu0 %v1809
        %2249 = vmatpush.bf16.msra.mxu0 %v1805
        %2250 = vmatpush.bf16.msra.mxu0 %v1801
        %2251 = vmatmul.bf16.gmra.mxu0 %v1181
        %v2252 = vpop.f32.mrf.mxu0
        %v2253 = vadd.f32 %v2234, %v2252
        %v2254 = vpop.f32.mrf.mxu0
        %v2255 = vadd.f32 %v2236, %v2254
        %2256 = vmatmul.bf16.gmra.mxu0 %v1185
        %v2257 = vpop.f32.mrf.mxu0
        %v2258 = vadd.f32 %v2239, %v2257
        %v2259 = vpop.f32.mrf.mxu0
        %v2260 = vadd.f32 %v2241, %v2259
        %2261 = vdwg.mxu0
        %v2262 = vld [vmem:[%s687] sm:$0xf]
        %v2263 = vld [vmem:[%s687 + $0x4] sm:$0xf]
        %v2264 = vld [vmem:[%s687 + $0x8] sm:$0xf]
        %v2265 = vld [vmem:[%s687 + $0xc] sm:$0xf]
        %v2266 = vld [vmem:[%s687 + $0x10] sm:$0xf]
        %v2267 = vld [vmem:[%s687 + $0x14] sm:$0xf]
        %v2268 = vld [vmem:[%s687 + $0x18] sm:$0xf]
        %v2269 = vld [vmem:[%s687 + $0x1c] sm:$0xf]
        %v2270 = vld [vmem:[%s687 + $0x20] sm:$0xf]
        %v2271 = vld [vmem:[%s687 + $0x24] sm:$0xf]
        %v2272 = vld [vmem:[%s687 + $0x28] sm:$0xf]
        %v2273 = vld [vmem:[%s687 + $0x2c] sm:$0xf]
        %v2274 = vld [vmem:[%s687 + $0x30] sm:$0xf]
        %v2275 = vld [vmem:[%s687 + $0x34] sm:$0xf]
        %v2276 = vld [vmem:[%s687 + $0x38] sm:$0xf]
        %v2277 = vld [vmem:[%s687 + $0x3c] sm:$0xf]
        %v2278 = vld [vmem:[%s687 + $0x40] sm:$0xf]
        %v2279 = vld [vmem:[%s687 + $0x44] sm:$0xf]
        %v2280 = vld [vmem:[%s687 + $0x48] sm:$0xf]
        %v2281 = vld [vmem:[%s687 + $0x4c] sm:$0xf]
        %v2282 = vld [vmem:[%s687 + $0x50] sm:$0xf]
        %v2283 = vld [vmem:[%s687 + $0x54] sm:$0xf]
        %v2284 = vld [vmem:[%s687 + $0x58] sm:$0xf]
        %v2285 = vld [vmem:[%s687 + $0x5c] sm:$0xf]
        %v2286 = vld [vmem:[%s687 + $0x60] sm:$0xf]
        %v2287 = vld [vmem:[%s687 + $0x64] sm:$0xf]
        %v2288 = vld [vmem:[%s687 + $0x68] sm:$0xf]
        %v2289 = vld [vmem:[%s687 + $0x6c] sm:$0xf]
        %v2290 = vld [vmem:[%s687 + $0x70] sm:$0xf]
        %v2291 = vld [vmem:[%s687 + $0x74] sm:$0xf]
        %v2292 = vld [vmem:[%s687 + $0x78] sm:$0xf]
        %v2293 = vld [vmem:[%s687 + $0x7c] sm:$0xf]
        %v2294 = vld [vmem:[%s687 + $0x80] sm:$0xf]
        %v2295 = vld [vmem:[%s687 + $0x84] sm:$0xf]
        %v2296 = vld [vmem:[%s687 + $0x88] sm:$0xf]
        %v2297 = vld [vmem:[%s687 + $0x8c] sm:$0xf]
        %v2298 = vld [vmem:[%s687 + $0x90] sm:$0xf]
        %v2299 = vld [vmem:[%s687 + $0x94] sm:$0xf]
        %v2300 = vld [vmem:[%s687 + $0x98] sm:$0xf]
        %v2301 = vld [vmem:[%s687 + $0x9c] sm:$0xf]
        %v2302 = vld [vmem:[%s687 + $0xa0] sm:$0xf]
        %v2303 = vld [vmem:[%s687 + $0xa4] sm:$0xf]
        %v2304 = vld [vmem:[%s687 + $0xa8] sm:$0xf]
        %v2305 = vld [vmem:[%s687 + $0xac] sm:$0xf]
        %v2306 = vld [vmem:[%s687 + $0xb0] sm:$0xf]
        %v2307 = vld [vmem:[%s687 + $0xb4] sm:$0xf]
        %v2308 = vld [vmem:[%s687 + $0xb8] sm:$0xf]
        %v2309 = vld [vmem:[%s687 + $0xbc] sm:$0xf]
        %v2310 = vld [vmem:[%s687 + $0xc0] sm:$0xf]
        %v2311 = vld [vmem:[%s687 + $0xc4] sm:$0xf]
        %v2312 = vld [vmem:[%s687 + $0xc8] sm:$0xf]
        %v2313 = vld [vmem:[%s687 + $0xcc] sm:$0xf]
        %v2314 = vld [vmem:[%s687 + $0xd0] sm:$0xf]
        %v2315 = vld [vmem:[%s687 + $0xd4] sm:$0xf]
        %v2316 = vld [vmem:[%s687 + $0xd8] sm:$0xf]
        %v2317 = vld [vmem:[%s687 + $0xdc] sm:$0xf]
        %v2318 = vld [vmem:[%s687 + $0xe0] sm:$0xf]
        %v2319 = vld [vmem:[%s687 + $0xe4] sm:$0xf]
        %v2320 = vld [vmem:[%s687 + $0xe8] sm:$0xf]
        %v2321 = vld [vmem:[%s687 + $0xec] sm:$0xf]
        %v2322 = vld [vmem:[%s687 + $0xf0] sm:$0xf]
        %v2323 = vld [vmem:[%s687 + $0xf4] sm:$0xf]
        %v2324 = vld [vmem:[%s687 + $0xf8] sm:$0xf]
        %v2325 = vld [vmem:[%s687 + $0xfc] sm:$0xf]
        %v2326 = vperm.slane %v988, 0
        %v2391 = vunpack.c.l.b16 %v2262
        %v2392 = vunpack.c.l.b16 %v2263
        %v2393 = vunpack.c.l.b16 %v2264
        %v2394 = vunpack.c.l.b16 %v2265
        %v2395 = vunpack.c.l.b16 %v2266
        %v2396 = vunpack.c.l.b16 %v2267
        %v2397 = vunpack.c.l.b16 %v2268
        %v2398 = vunpack.c.l.b16 %v2269
        %v2399 = vunpack.c.l.b16 %v2270
        %v2400 = vunpack.c.l.b16 %v2271
        %v2401 = vunpack.c.l.b16 %v2272
        %v2402 = vunpack.c.l.b16 %v2273
        %v2403 = vunpack.c.l.b16 %v2274
        %v2404 = vunpack.c.l.b16 %v2275
        %v2405 = vunpack.c.l.b16 %v2276
        %v2406 = vunpack.c.l.b16 %v2277
        %v2407 = vunpack.c.l.b16 %v2278
        %v2408 = vunpack.c.l.b16 %v2279
        %v2409 = vunpack.c.l.b16 %v2280
        %v2410 = vunpack.c.l.b16 %v2281
        %v2411 = vunpack.c.l.b16 %v2282
        %v2412 = vunpack.c.l.b16 %v2283
        %v2413 = vunpack.c.l.b16 %v2284
        %v2414 = vunpack.c.l.b16 %v2285
        %v2415 = vunpack.c.l.b16 %v2286
        %v2416 = vunpack.c.l.b16 %v2287
        %v2417 = vunpack.c.l.b16 %v2288
        %v2418 = vunpack.c.l.b16 %v2289
        %v2419 = vunpack.c.l.b16 %v2290
        %v2420 = vunpack.c.l.b16 %v2291
        %v2421 = vunpack.c.l.b16 %v2292
        %v2422 = vunpack.c.l.b16 %v2293
        %v2423 = vunpack.c.l.b16 %v2294
        %v2424 = vunpack.c.l.b16 %v2295
        %v2425 = vunpack.c.l.b16 %v2296
        %v2426 = vunpack.c.l.b16 %v2297
        %v2427 = vunpack.c.l.b16 %v2298
        %v2428 = vunpack.c.l.b16 %v2299
        %v2429 = vunpack.c.l.b16 %v2300
        %v2430 = vunpack.c.l.b16 %v2301
        %v2431 = vunpack.c.l.b16 %v2302
        %v2432 = vunpack.c.l.b16 %v2303
        %v2433 = vunpack.c.l.b16 %v2304
        %v2434 = vunpack.c.l.b16 %v2305
        %v2435 = vunpack.c.l.b16 %v2306
        %v2436 = vunpack.c.l.b16 %v2307
        %v2437 = vunpack.c.l.b16 %v2308
        %v2438 = vunpack.c.l.b16 %v2309
        %v2439 = vunpack.c.l.b16 %v2310
        %v2440 = vunpack.c.l.b16 %v2311
        %v2441 = vunpack.c.l.b16 %v2312
        %v2442 = vunpack.c.l.b16 %v2313
        %v2443 = vunpack.c.l.b16 %v2314
        %v2444 = vunpack.c.l.b16 %v2315
        %v2445 = vunpack.c.l.b16 %v2316
        %v2446 = vunpack.c.l.b16 %v2317
        %v2447 = vunpack.c.l.b16 %v2318
        %v2448 = vunpack.c.l.b16 %v2319
        %v2449 = vunpack.c.l.b16 %v2320
        %v2450 = vunpack.c.l.b16 %v2321
        %v2451 = vunpack.c.l.b16 %v2322
        %v2452 = vunpack.c.l.b16 %v2323
        %v2453 = vunpack.c.l.b16 %v2324
        %v2454 = vunpack.c.l.b16 %v2325
        %v2455 = vpack.c.b16 %v2392, %v2391
        %v2456 = vpack.c.b16 %v2394, %v2393
        %v2457 = vpack.c.b16 %v2396, %v2395
        %v2458 = vpack.c.b16 %v2398, %v2397
        %v2459 = vpack.c.b16 %v2400, %v2399
        %v2460 = vpack.c.b16 %v2402, %v2401
        %v2461 = vpack.c.b16 %v2404, %v2403
        %v2462 = vpack.c.b16 %v2406, %v2405
        %v2463 = vpack.c.b16 %v2408, %v2407
        %v2464 = vpack.c.b16 %v2410, %v2409
        %v2465 = vpack.c.b16 %v2412, %v2411
        %v2466 = vpack.c.b16 %v2414, %v2413
        %v2467 = vpack.c.b16 %v2416, %v2415
        %v2468 = vpack.c.b16 %v2418, %v2417
        %v2469 = vpack.c.b16 %v2420, %v2419
        %v2470 = vpack.c.b16 %v2422, %v2421
        %v2471 = vpack.c.b16 %v2424, %v2423
        %v2472 = vpack.c.b16 %v2426, %v2425
        %v2473 = vpack.c.b16 %v2428, %v2427
        %v2474 = vpack.c.b16 %v2430, %v2429
        %v2475 = vpack.c.b16 %v2432, %v2431
        %v2476 = vpack.c.b16 %v2434, %v2433
        %v2477 = vpack.c.b16 %v2436, %v2435
        %v2478 = vpack.c.b16 %v2438, %v2437
        %v2479 = vpack.c.b16 %v2440, %v2439
        %v2480 = vpack.c.b16 %v2442, %v2441
        %v2481 = vpack.c.b16 %v2444, %v2443
        %v2482 = vpack.c.b16 %v2446, %v2445
        %v2483 = vpack.c.b16 %v2448, %v2447
        %v2484 = vpack.c.b16 %v2450, %v2449
        %v2485 = vpack.c.b16 %v2452, %v2451
        %v2486 = vpack.c.b16 %v2454, %v2453
        %2519 = vmatpush.bf16.msra.mxu0 %v2462
        %2520 = vmatpush.bf16.msra.mxu0 %v2461
        %2521 = vmatpush.bf16.msra.mxu0 %v2460
        %2522 = vmatpush.bf16.msra.mxu0 %v2459
        %2523 = vmatpush.bf16.msra.mxu0 %v2458
        %2524 = vmatpush.bf16.msra.mxu0 %v2457
        %2525 = vmatpush.bf16.msra.mxu0 %v2456
        %2526 = vmatpush.bf16.msra.mxu0 %v2455
        %2527 = vmatmul.bf16.gmra.mxu0 %v1178
        %v2528 = vpop.f32.mrf.mxu0
        %v2529 = vadd.f32 %v2326, %v2528
        %v2530 = vpop.f32.mrf.mxu0
        %v2531 = vadd.f32 %v2326, %v2530
        %2532 = vmatmul.bf16.gmra.mxu0 %v1182
        %v2533 = vpop.f32.mrf.mxu0
        %v2534 = vadd.f32 %v2326, %v2533
        %v2535 = vpop.f32.mrf.mxu0
        %v2536 = vadd.f32 %v2326, %v2535
        %2537 = vdwg.mxu0
        %2538 = vmatpush.bf16.msra.mxu0 %v2470
        %2539 = vmatpush.bf16.msra.mxu0 %v2469
        %2540 = vmatpush.bf16.msra.mxu0 %v2468
        %2541 = vmatpush.bf16.msra.mxu0 %v2467
        %2542 = vmatpush.bf16.msra.mxu0 %v2466
        %2543 = vmatpush.bf16.msra.mxu0 %v2465
        %2544 = vmatpush.bf16.msra.mxu0 %v2464
        %2545 = vmatpush.bf16.msra.mxu0 %v2463
        %2546 = vmatmul.bf16.gmra.mxu0 %v1179
        %v2547 = vpop.f32.mrf.mxu0
        %v2548 = vadd.f32 %v2529, %v2547
        %v2549 = vpop.f32.mrf.mxu0
        %v2550 = vadd.f32 %v2531, %v2549
        %2551 = vmatmul.bf16.gmra.mxu0 %v1183
        %v2552 = vpop.f32.mrf.mxu0
        %v2553 = vadd.f32 %v2534, %v2552
        %v2554 = vpop.f32.mrf.mxu0
        %v2555 = vadd.f32 %v2536, %v2554
        %2556 = vdwg.mxu0
        %2557 = vmatpush.bf16.msra.mxu0 %v2478
        %2558 = vmatpush.bf16.msra.mxu0 %v2477
        %2559 = vmatpush.bf16.msra.mxu0 %v2476
        %2560 = vmatpush.bf16.msra.mxu0 %v2475
        %2561 = vmatpush.bf16.msra.mxu0 %v2474
        %2562 = vmatpush.bf16.msra.mxu0 %v2473
        %2563 = vmatpush.bf16.msra.mxu0 %v2472
        %2564 = vmatpush.bf16.msra.mxu0 %v2471
        %2565 = vmatmul.bf16.gmra.mxu0 %v1180
        %v2566 = vpop.f32.mrf.mxu0
        %v2567 = vadd.f32 %v2548, %v2566
        %v2568 = vpop.f32.mrf.mxu0
        %v2569 = vadd.f32 %v2550, %v2568
        %2570 = vmatmul.bf16.gmra.mxu0 %v1184
        %v2571 = vpop.f32.mrf.mxu0
        %v2572 = vadd.f32 %v2553, %v2571
        %v2573 = vpop.f32.mrf.mxu0
        %v2574 = vadd.f32 %v2555, %v2573
        %2575 = vdwg.mxu0
        %2576 = vmatpush.bf16.msra.mxu0 %v2486
        %2577 = vmatpush.bf16.msra.mxu0 %v2485
        %2578 = vmatpush.bf16.msra.mxu0 %v2484
        %2579 = vmatpush.bf16.msra.mxu0 %v2483
        %2580 = vmatpush.bf16.msra.mxu0 %v2482
        %2581 = vmatpush.bf16.msra.mxu0 %v2481
        %2582 = vmatpush.bf16.msra.mxu0 %v2480
        %2583 = vmatpush.bf16.msra.mxu0 %v2479
        %2584 = vmatmul.bf16.gmra.mxu0 %v1181
        %v2585 = vpop.f32.mrf.mxu0
        %v2586 = vadd.f32 %v2567, %v2585
        %v2587 = vpop.f32.mrf.mxu0
        %v2588 = vadd.f32 %v2569, %v2587
        %2589 = vmatmul.bf16.gmra.mxu0 %v1185
        %v2590 = vpop.f32.mrf.mxu0
        %v2591 = vadd.f32 %v2572, %v2590
        %v2592 = vpop.f32.mrf.mxu0
        %v2593 = vadd.f32 %v2574, %v2592
        %2594 = vdwg.mxu0
        %v2595 = vld [vmem:[%s697] sm:$0xf]
        %v2596 = vld [vmem:[%s697 + $0x4] sm:$0xf]
        %v2597 = vld [vmem:[%s697 + $0x8] sm:$0xf]
        %v2598 = vld [vmem:[%s697 + $0xc] sm:$0xf]
        %v2599 = vld [vmem:[%s697 + $0x10] sm:$0xf]
        %v2600 = vld [vmem:[%s697 + $0x14] sm:$0xf]
        %v2601 = vld [vmem:[%s697 + $0x18] sm:$0xf]
        %v2602 = vld [vmem:[%s697 + $0x1c] sm:$0xf]
        %v2603 = vld [vmem:[%s697 + $0x20] sm:$0xf]
        %v2604 = vld [vmem:[%s697 + $0x24] sm:$0xf]
        %v2605 = vld [vmem:[%s697 + $0x28] sm:$0xf]
        %v2606 = vld [vmem:[%s697 + $0x2c] sm:$0xf]
        %v2607 = vld [vmem:[%s697 + $0x30] sm:$0xf]
        %v2608 = vld [vmem:[%s697 + $0x34] sm:$0xf]
        %v2609 = vld [vmem:[%s697 + $0x38] sm:$0xf]
        %v2610 = vld [vmem:[%s697 + $0x3c] sm:$0xf]
        %v2611 = vld [vmem:[%s697 + $0x40] sm:$0xf]
        %v2612 = vld [vmem:[%s697 + $0x44] sm:$0xf]
        %v2613 = vld [vmem:[%s697 + $0x48] sm:$0xf]
        %v2614 = vld [vmem:[%s697 + $0x4c] sm:$0xf]
        %v2615 = vld [vmem:[%s697 + $0x50] sm:$0xf]
        %v2616 = vld [vmem:[%s697 + $0x54] sm:$0xf]
        %v2617 = vld [vmem:[%s697 + $0x58] sm:$0xf]
        %v2618 = vld [vmem:[%s697 + $0x5c] sm:$0xf]
        %v2619 = vld [vmem:[%s697 + $0x60] sm:$0xf]
        %v2620 = vld [vmem:[%s697 + $0x64] sm:$0xf]
        %v2621 = vld [vmem:[%s697 + $0x68] sm:$0xf]
        %v2622 = vld [vmem:[%s697 + $0x6c] sm:$0xf]
        %v2623 = vld [vmem:[%s697 + $0x70] sm:$0xf]
        %v2624 = vld [vmem:[%s697 + $0x74] sm:$0xf]
        %v2625 = vld [vmem:[%s697 + $0x78] sm:$0xf]
        %v2626 = vld [vmem:[%s697 + $0x7c] sm:$0xf]
        %v2627 = vld [vmem:[%s697 + $0x80] sm:$0xf]
        %v2628 = vld [vmem:[%s697 + $0x84] sm:$0xf]
        %v2629 = vld [vmem:[%s697 + $0x88] sm:$0xf]
        %v2630 = vld [vmem:[%s697 + $0x8c] sm:$0xf]
        %v2631 = vld [vmem:[%s697 + $0x90] sm:$0xf]
        %v2632 = vld [vmem:[%s697 + $0x94] sm:$0xf]
        %v2633 = vld [vmem:[%s697 + $0x98] sm:$0xf]
        %v2634 = vld [vmem:[%s697 + $0x9c] sm:$0xf]
        %v2635 = vld [vmem:[%s697 + $0xa0] sm:$0xf]
        %v2636 = vld [vmem:[%s697 + $0xa4] sm:$0xf]
        %v2637 = vld [vmem:[%s697 + $0xa8] sm:$0xf]
        %v2638 = vld [vmem:[%s697 + $0xac] sm:$0xf]
        %v2639 = vld [vmem:[%s697 + $0xb0] sm:$0xf]
        %v2640 = vld [vmem:[%s697 + $0xb4] sm:$0xf]
        %v2641 = vld [vmem:[%s697 + $0xb8] sm:$0xf]
        %v2642 = vld [vmem:[%s697 + $0xbc] sm:$0xf]
        %v2643 = vld [vmem:[%s697 + $0xc0] sm:$0xf]
        %v2644 = vld [vmem:[%s697 + $0xc4] sm:$0xf]
        %v2645 = vld [vmem:[%s697 + $0xc8] sm:$0xf]
        %v2646 = vld [vmem:[%s697 + $0xcc] sm:$0xf]
        %v2647 = vld [vmem:[%s697 + $0xd0] sm:$0xf]
        %v2648 = vld [vmem:[%s697 + $0xd4] sm:$0xf]
        %v2649 = vld [vmem:[%s697 + $0xd8] sm:$0xf]
        %v2650 = vld [vmem:[%s697 + $0xdc] sm:$0xf]
        %v2651 = vld [vmem:[%s697 + $0xe0] sm:$0xf]
        %v2652 = vld [vmem:[%s697 + $0xe4] sm:$0xf]
        %v2653 = vld [vmem:[%s697 + $0xe8] sm:$0xf]
        %v2654 = vld [vmem:[%s697 + $0xec] sm:$0xf]
        %v2655 = vld [vmem:[%s697 + $0xf0] sm:$0xf]
        %v2656 = vld [vmem:[%s697 + $0xf4] sm:$0xf]
        %v2657 = vld [vmem:[%s697 + $0xf8] sm:$0xf]
        %v2658 = vld [vmem:[%s697 + $0xfc] sm:$0xf]
        %v2659 = vperm.slane %v988, 1
        %v2724 = vunpack.c.l.b16 %v2595
        %v2725 = vunpack.c.l.b16 %v2596
        %v2726 = vunpack.c.l.b16 %v2597
        %v2727 = vunpack.c.l.b16 %v2598
        %v2728 = vunpack.c.l.b16 %v2599
        %v2729 = vunpack.c.l.b16 %v2600
        %v2730 = vunpack.c.l.b16 %v2601
        %v2731 = vunpack.c.l.b16 %v2602
        %v2732 = vunpack.c.l.b16 %v2603
        %v2733 = vunpack.c.l.b16 %v2604
        %v2734 = vunpack.c.l.b16 %v2605
        %v2735 = vunpack.c.l.b16 %v2606
        %v2736 = vunpack.c.l.b16 %v2607
        %v2737 = vunpack.c.l.b16 %v2608
        %v2738 = vunpack.c.l.b16 %v2609
        %v2739 = vunpack.c.l.b16 %v2610
        %v2740 = vunpack.c.l.b16 %v2611
        %v2741 = vunpack.c.l.b16 %v2612
        %v2742 = vunpack.c.l.b16 %v2613
        %v2743 = vunpack.c.l.b16 %v2614
        %v2744 = vunpack.c.l.b16 %v2615
        %v2745 = vunpack.c.l.b16 %v2616
        %v2746 = vunpack.c.l.b16 %v2617
        %v2747 = vunpack.c.l.b16 %v2618
        %v2748 = vunpack.c.l.b16 %v2619
        %v2749 = vunpack.c.l.b16 %v2620
        %v2750 = vunpack.c.l.b16 %v2621
        %v2751 = vunpack.c.l.b16 %v2622
        %v2752 = vunpack.c.l.b16 %v2623
        %v2753 = vunpack.c.l.b16 %v2624
        %v2754 = vunpack.c.l.b16 %v2625
        %v2755 = vunpack.c.l.b16 %v2626
        %v2756 = vunpack.c.l.b16 %v2627
        %v2757 = vunpack.c.l.b16 %v2628
        %v2758 = vunpack.c.l.b16 %v2629
        %v2759 = vunpack.c.l.b16 %v2630
        %v2760 = vunpack.c.l.b16 %v2631
        %v2761 = vunpack.c.l.b16 %v2632
        %v2762 = vunpack.c.l.b16 %v2633
        %v2763 = vunpack.c.l.b16 %v2634
        %v2764 = vunpack.c.l.b16 %v2635
        %v2765 = vunpack.c.l.b16 %v2636
        %v2766 = vunpack.c.l.b16 %v2637
        %v2767 = vunpack.c.l.b16 %v2638
        %v2768 = vunpack.c.l.b16 %v2639
        %v2769 = vunpack.c.l.b16 %v2640
        %v2770 = vunpack.c.l.b16 %v2641
        %v2771 = vunpack.c.l.b16 %v2642
        %v2772 = vunpack.c.l.b16 %v2643
        %v2773 = vunpack.c.l.b16 %v2644
        %v2774 = vunpack.c.l.b16 %v2645
        %v2775 = vunpack.c.l.b16 %v2646
        %v2776 = vunpack.c.l.b16 %v2647
        %v2777 = vunpack.c.l.b16 %v2648
        %v2778 = vunpack.c.l.b16 %v2649
        %v2779 = vunpack.c.l.b16 %v2650
        %v2780 = vunpack.c.l.b16 %v2651
        %v2781 = vunpack.c.l.b16 %v2652
        %v2782 = vunpack.c.l.b16 %v2653
        %v2783 = vunpack.c.l.b16 %v2654
        %v2784 = vunpack.c.l.b16 %v2655
        %v2785 = vunpack.c.l.b16 %v2656
        %v2786 = vunpack.c.l.b16 %v2657
        %v2787 = vunpack.c.l.b16 %v2658
        %v2788 = vpack.c.b16 %v2725, %v2724
        %v2789 = vpack.c.b16 %v2727, %v2726
        %v2790 = vpack.c.b16 %v2729, %v2728
        %v2791 = vpack.c.b16 %v2731, %v2730
        %v2792 = vpack.c.b16 %v2733, %v2732
        %v2793 = vpack.c.b16 %v2735, %v2734
        %v2794 = vpack.c.b16 %v2737, %v2736
        %v2795 = vpack.c.b16 %v2739, %v2738
        %v2796 = vpack.c.b16 %v2741, %v2740
        %v2797 = vpack.c.b16 %v2743, %v2742
        %v2798 = vpack.c.b16 %v2745, %v2744
        %v2799 = vpack.c.b16 %v2747, %v2746
        %v2800 = vpack.c.b16 %v2749, %v2748
        %v2801 = vpack.c.b16 %v2751, %v2750
        %v2802 = vpack.c.b16 %v2753, %v2752
        %v2803 = vpack.c.b16 %v2755, %v2754
        %v2804 = vpack.c.b16 %v2757, %v2756
        %v2805 = vpack.c.b16 %v2759, %v2758
        %v2806 = vpack.c.b16 %v2761, %v2760
        %v2807 = vpack.c.b16 %v2763, %v2762
        %v2808 = vpack.c.b16 %v2765, %v2764
        %v2809 = vpack.c.b16 %v2767, %v2766
        %v2810 = vpack.c.b16 %v2769, %v2768
        %v2811 = vpack.c.b16 %v2771, %v2770
        %v2812 = vpack.c.b16 %v2773, %v2772
        %v2813 = vpack.c.b16 %v2775, %v2774
        %v2814 = vpack.c.b16 %v2777, %v2776
        %v2815 = vpack.c.b16 %v2779, %v2778
        %v2816 = vpack.c.b16 %v2781, %v2780
        %v2817 = vpack.c.b16 %v2783, %v2782
        %v2818 = vpack.c.b16 %v2785, %v2784
        %v2819 = vpack.c.b16 %v2787, %v2786
        %2852 = vmatpush.bf16.msra.mxu0 %v2795
        %2853 = vmatpush.bf16.msra.mxu0 %v2794
        %2854 = vmatpush.bf16.msra.mxu0 %v2793
        %2855 = vmatpush.bf16.msra.mxu0 %v2792
        %2856 = vmatpush.bf16.msra.mxu0 %v2791
        %2857 = vmatpush.bf16.msra.mxu0 %v2790
        %2858 = vmatpush.bf16.msra.mxu0 %v2789
        %2859 = vmatpush.bf16.msra.mxu0 %v2788
        %2860 = vmatmul.bf16.gmra.mxu0 %v1178
        %v2861 = vpop.f32.mrf.mxu0
        %v2862 = vadd.f32 %v2659, %v2861
        %v2863 = vpop.f32.mrf.mxu0
        %v2864 = vadd.f32 %v2659, %v2863
        %2865 = vmatmul.bf16.gmra.mxu0 %v1182
        %v2866 = vpop.f32.mrf.mxu0
        %v2867 = vadd.f32 %v2659, %v2866
        %v2868 = vpop.f32.mrf.mxu0
        %v2869 = vadd.f32 %v2659, %v2868
        %2870 = vdwg.mxu0
        %2871 = vmatpush.bf16.msra.mxu0 %v2803
        %2872 = vmatpush.bf16.msra.mxu0 %v2802
        %2873 = vmatpush.bf16.msra.mxu0 %v2801
        %2874 = vmatpush.bf16.msra.mxu0 %v2800
        %2875 = vmatpush.bf16.msra.mxu0 %v2799
        %2876 = vmatpush.bf16.msra.mxu0 %v2798
        %2877 = vmatpush.bf16.msra.mxu0 %v2797
        %2878 = vmatpush.bf16.msra.mxu0 %v2796
        %2879 = vmatmul.bf16.gmra.mxu0 %v1179
        %v2880 = vpop.f32.mrf.mxu0
        %v2881 = vadd.f32 %v2862, %v2880
        %v2882 = vpop.f32.mrf.mxu0
        %v2883 = vadd.f32 %v2864, %v2882
        %2884 = vmatmul.bf16.gmra.mxu0 %v1183
        %v2885 = vpop.f32.mrf.mxu0
        %v2886 = vadd.f32 %v2867, %v2885
        %v2887 = vpop.f32.mrf.mxu0
        %v2888 = vadd.f32 %v2869, %v2887
        %2889 = vdwg.mxu0
        %2890 = vmatpush.bf16.msra.mxu0 %v2811
        %2891 = vmatpush.bf16.msra.mxu0 %v2810
        %2892 = vmatpush.bf16.msra.mxu0 %v2809
        %2893 = vmatpush.bf16.msra.mxu0 %v2808
        %2894 = vmatpush.bf16.msra.mxu0 %v2807
        %2895 = vmatpush.bf16.msra.mxu0 %v2806
        %2896 = vmatpush.bf16.msra.mxu0 %v2805
        %2897 = vmatpush.bf16.msra.mxu0 %v2804
        %2898 = vmatmul.bf16.gmra.mxu0 %v1180
        %v2899 = vpop.f32.mrf.mxu0
        %v2900 = vadd.f32 %v2881, %v2899
        %v2901 = vpop.f32.mrf.mxu0
        %v2902 = vadd.f32 %v2883, %v2901
        %2903 = vmatmul.bf16.gmra.mxu0 %v1184
        %v2904 = vpop.f32.mrf.mxu0
        %v2905 = vadd.f32 %v2886, %v2904
        %v2906 = vpop.f32.mrf.mxu0
        %v2907 = vadd.f32 %v2888, %v2906
        %2908 = vdwg.mxu0
        %2909 = vmatpush.bf16.msra.mxu0 %v2819
        %2910 = vmatpush.bf16.msra.mxu0 %v2818
        %2911 = vmatpush.bf16.msra.mxu0 %v2817
        %2912 = vmatpush.bf16.msra.mxu0 %v2816
        %2913 = vmatpush.bf16.msra.mxu0 %v2815
        %2914 = vmatpush.bf16.msra.mxu0 %v2814
        %2915 = vmatpush.bf16.msra.mxu0 %v2813
        %2916 = vmatpush.bf16.msra.mxu0 %v2812
        %2917 = vmatmul.bf16.gmra.mxu0 %v1181
        %v2918 = vpop.f32.mrf.mxu0
        %v2919 = vadd.f32 %v2900, %v2918
        %v2920 = vpop.f32.mrf.mxu0
        %v2921 = vadd.f32 %v2902, %v2920
        %2922 = vmatmul.bf16.gmra.mxu0 %v1185
        %v2923 = vpop.f32.mrf.mxu0
        %v2924 = vadd.f32 %v2905, %v2923
        %v2925 = vpop.f32.mrf.mxu0
        %v2926 = vadd.f32 %v2907, %v2925
        %2927 = vdwg.mxu0
        %v2928 = vmax.f32 %v2025, -10.0
        %v2929 = vmax.f32 %v2101, -10.0
        %v2930 = vmax.f32 %v2177, -10.0
        %v2931 = vmax.f32 %v2253, -10.0
        %v2932 = vmax.f32 %v2027, -10.0
        %v2933 = vmax.f32 %v2103, -10.0
        %v2934 = vmax.f32 %v2179, -10.0
        %v2935 = vmax.f32 %v2255, -10.0
        %v2936 = vmax.f32 %v2030, -10.0
        %v2937 = vmax.f32 %v2106, -10.0
        %v2938 = vmax.f32 %v2182, -10.0
        %v2939 = vmax.f32 %v2258, -10.0
        %v2940 = vmax.f32 %v2032, -10.0
        %v2941 = vmax.f32 %v2108, -10.0
        %v2942 = vmax.f32 %v2184, -10.0
        %v2943 = vmax.f32 %v2260, -10.0
        %v2944 = vmin.f32 %v2928, 10.0
        %v2945 = vmin.f32 %v2929, 10.0
        %v2946 = vmin.f32 %v2930, 10.0
        %v2947 = vmin.f32 %v2931, 10.0
        %v2948 = vmin.f32 %v2932, 10.0
        %v2949 = vmin.f32 %v2933, 10.0
        %v2950 = vmin.f32 %v2934, 10.0
        %v2951 = vmin.f32 %v2935, 10.0
        %v2952 = vmin.f32 %v2936, 10.0
        %v2953 = vmin.f32 %v2937, 10.0
        %v2954 = vmin.f32 %v2938, 10.0
        %v2955 = vmin.f32 %v2939, 10.0
        %v2956 = vmin.f32 %v2940, 10.0
        %v2957 = vmin.f32 %v2941, 10.0
        %v2958 = vmin.f32 %v2942, 10.0
        %v2959 = vmin.f32 %v2943, 10.0
        %v2960 = vmul.f32 %v2944, 0.088388346
        %v2961 = vmul.f32 %v2945, 0.088388346
        %v2962 = vmul.f32 %v2946, 0.088388346
        %v2963 = vmul.f32 %v2947, 0.088388346
        %v2964 = vmul.f32 %v2948, 0.088388346
        %v2965 = vmul.f32 %v2949, 0.088388346
        %v2966 = vmul.f32 %v2950, 0.088388346
        %v2967 = vmul.f32 %v2951, 0.088388346
        %v2968 = vmul.f32 %v2952, 0.088388346
        %v2969 = vmul.f32 %v2953, 0.088388346
        %v2970 = vmul.f32 %v2954, 0.088388346
        %v2971 = vmul.f32 %v2955, 0.088388346
        %v2972 = vmul.f32 %v2956, 0.088388346
        %v2973 = vmul.f32 %v2957, 0.088388346
        %v2974 = vmul.f32 %v2958, 0.088388346
        %v2975 = vmul.f32 %v2959, 0.088388346
        %v2976 = vpack.c.bf16 %v2961, %v2960
        %v2977 = vpack.c.bf16 %v2963, %v2962
        %v2978 = vpack.c.bf16 %v2965, %v2964
        %v2979 = vpack.c.bf16 %v2967, %v2966
        %v2980 = vpack.c.bf16 %v2969, %v2968
        %v2981 = vpack.c.bf16 %v2971, %v2970
        %v2982 = vpack.c.bf16 %v2973, %v2972
        %v2983 = vpack.c.bf16 %v2975, %v2974
        %v2984 = vmax.f32 %v2586, -10.0
        %v2985 = vmax.f32 %v2588, -10.0
        %v2986 = vmax.f32 %v2591, -10.0
        %v2987 = vmax.f32 %v2593, -10.0
        %v2988 = vmin.f32 %v2984, 10.0
        %v2989 = vmin.f32 %v2985, 10.0
        %v2990 = vmin.f32 %v2986, 10.0
        %v2991 = vmin.f32 %v2987, 10.0
        %v2992 = vpack.c.bf16 %v2988, %v2988
        %v2993 = vpack.c.bf16 %v2989, %v2989
        %v2994 = vpack.c.bf16 %v2990, %v2990
        %v2995 = vpack.c.bf16 %v2991, %v2991
        %v2996 = vmax.f32 %v2919, -10.0
        %v2997 = vmax.f32 %v2921, -10.0
        %v2998 = vmax.f32 %v2924, -10.0
        %v2999 = vmax.f32 %v2926, -10.0
        %v3000 = vmin.f32 %v2996, 10.0
        %v3001 = vmin.f32 %v2997, 10.0
        %v3002 = vmin.f32 %v2998, 10.0
        %v3003 = vmin.f32 %v2999, 10.0
        %v3004 = vpack.c.bf16 %v3000, %v3000
        %v3005 = vpack.c.bf16 %v3001, %v3001
        %v3006 = vpack.c.bf16 %v3002, %v3002
        %v3007 = vpack.c.bf16 %v3003, %v3003
        %v3010 = vunpack.c.l.b16 %v2976
        %v3011 = vunpack.c.l.b16 %v2978
        %v3012 = vpack.c.b16 %v3011, %v3010
        %v3014 = vunpack.c.h.b16 %v2976
        %v3015 = vunpack.c.h.b16 %v2978
        %v3016 = vpack.c.b16 %v3015, %v3014
        %v3020 = vunpack.c.l.b16 %v2977
        %v3021 = vunpack.c.l.b16 %v2979
        %v3022 = vpack.c.b16 %v3021, %v3020
        %v3024 = vunpack.c.h.b16 %v2977
        %v3025 = vunpack.c.h.b16 %v2979
        %v3026 = vpack.c.b16 %v3025, %v3024
        %v3030 = vunpack.c.l.b16 %v2992
        %v3031 = vunpack.c.l.b16 %v2993
        %v3032 = vpack.c.b16 %v3031, %v3030
        %3034 = vmatpush.bf16.xpose.msra.mxu0 0
        %3035 = vmatpush.bf16.xpose.msra.mxu0 0
        %3036 = vmatpush.bf16.xpose.msra.mxu0 0
        %3037 = vmatpush.bf16.xpose.msra.mxu0 0
        %3038 = vmatpush.bf16.xpose.msra.mxu0 0
        %3039 = vmatpush.bf16.xpose.msra.mxu0 0
        %3040 = vmatpush.bf16.xpose.msra.mxu0 0
        %3041 = vmatpush.bf16.xpose.msra.mxu0 %v3032
        %3042 = vmatmul.bf16.gmra.mxu0 %v3012
        %v3043 = vpop.f32.mrf.mxu0
        %v3044 = vadd.f32 0.0, %v3043
        %v3045 = vpop.f32.mrf.mxu0
        %v3046 = vadd.f32 0.0, %v3045
        %3047 = vmatmul.bf16.gmra.mxu0 %v3016
        %v3048 = vpop.f32.mrf.mxu0
        %v3049 = vadd.f32 0.0, %v3048
        %v3050 = vpop.f32.mrf.mxu0
        %v3051 = vadd.f32 0.0, %v3050
        %3052 = vmatmul.bf16.gmra.mxu0 %v3022
        %v3053 = vpop.f32.mrf.mxu0
        %v3054 = vadd.f32 0.0, %v3053
        %v3055 = vpop.f32.mrf.mxu0
        %v3056 = vadd.f32 0.0, %v3055
        %3057 = vmatmul.bf16.gmra.mxu0 %v3026
        %v3058 = vpop.f32.mrf.mxu0
        %v3059 = vadd.f32 0.0, %v3058
        %v3060 = vpop.f32.mrf.mxu0
        %v3061 = vadd.f32 0.0, %v3060
        %3062 = vdwg.mxu0
        %vm3063 = vcmask 130048
        %v3064 = vsel %vm3063, %v3044, -inf
        %3065 = vmax.xlane.f32.xlu0 %v3064
        %v3066 = vpop.xlane.xlu0 %3065
        %v3067 = vsel %vm3063, %v3046, -inf
        %3068 = vmax.xlane.f32.xlu0 %v3067
        %v3069 = vpop.xlane.xlu0 %3068
        %v3070 = vsel %vm3063, %v3049, -inf
        %3071 = vmax.xlane.f32.xlu0 %v3070
        %v3072 = vpop.xlane.xlu0 %3071
        %v3073 = vsel %vm3063, %v3051, -inf
        %3074 = vmax.xlane.f32.xlu0 %v3073
        %v3075 = vpop.xlane.xlu0 %3074
        %v3076 = vsel %vm3063, %v3054, -inf
        %3077 = vmax.xlane.f32.xlu0 %v3076
        %v3078 = vpop.xlane.xlu0 %3077
        %v3079 = vsel %vm3063, %v3056, -inf
        %3080 = vmax.xlane.f32.xlu0 %v3079
        %v3081 = vpop.xlane.xlu0 %3080
        %v3082 = vsel %vm3063, %v3059, -inf
        %3083 = vmax.xlane.f32.xlu0 %v3082
        %v3084 = vpop.xlane.xlu0 %3083
        %v3085 = vsel %vm3063, %v3061, -inf
        %3086 = vmax.xlane.f32.xlu0 %v3085
        %v3087 = vpop.xlane.xlu0 %3086
        %v3088 = vsub.f32 %v3044, %v3066
        %v3089 = vsub.f32 %v3046, %v3069
        %v3090 = vsub.f32 %v3049, %v3072
        %v3091 = vsub.f32 %v3051, %v3075
        %v3092 = vsub.f32 %v3054, %v3078
        %v3093 = vsub.f32 %v3056, %v3081
        %v3094 = vsub.f32 %v3059, %v3084
        %v3095 = vsub.f32 %v3061, %v3087
        %v3096 = vmul.f32 %v3088, 1.442695
        %v3097 = vpow.pop %v3096
        %v3098 = vmul.f32 %v3089, 1.442695
        %v3099 = vpow.pop %v3098
        %v3100 = vmul.f32 %v3090, 1.442695
        %v3101 = vpow.pop %v3100
        %v3102 = vmul.f32 %v3091, 1.442695
        %v3103 = vpow.pop %v3102
        %v3104 = vmul.f32 %v3092, 1.442695
        %v3105 = vpow.pop %v3104
        %v3106 = vmul.f32 %v3093, 1.442695
        %v3107 = vpow.pop %v3106
        %v3108 = vmul.f32 %v3094, 1.442695
        %v3109 = vpow.pop %v3108
        %v3110 = vmul.f32 %v3095, 1.442695
        %v3111 = vpow.pop %v3110
        %v3112 = vsel %vm3063, %v3097, 0.0
        %3113 = vadd.xlane.f32.xlu0 %v3112
        %v3114 = vpop.xlane.xlu0 %3113
        %v3115 = vsel %vm3063, %v3099, 0.0
        %3116 = vadd.xlane.f32.xlu0 %v3115
        %v3117 = vpop.xlane.xlu0 %3116
        %v3118 = vsel %vm3063, %v3101, 0.0
        %3119 = vadd.xlane.f32.xlu0 %v3118
        %v3120 = vpop.xlane.xlu0 %3119
        %v3121 = vsel %vm3063, %v3103, 0.0
        %3122 = vadd.xlane.f32.xlu0 %v3121
        %v3123 = vpop.xlane.xlu0 %3122
        %v3124 = vsel %vm3063, %v3105, 0.0
        %3125 = vadd.xlane.f32.xlu0 %v3124
        %v3126 = vpop.xlane.xlu0 %3125
        %v3127 = vsel %vm3063, %v3107, 0.0
        %3128 = vadd.xlane.f32.xlu0 %v3127
        %v3129 = vpop.xlane.xlu0 %3128
        %v3130 = vsel %vm3063, %v3109, 0.0
        %3131 = vadd.xlane.f32.xlu0 %v3130
        %v3132 = vpop.xlane.xlu0 %3131
        %v3133 = vsel %vm3063, %v3111, 0.0
        %3134 = vadd.xlane.f32.xlu0 %v3133
        %v3135 = vpop.xlane.xlu0 %3134
        %v3136 = vrcp.pop %v3114
        %v3137 = vmul.f32 %v3114, %v3136
        %v3138 = vsub.f32 1.0, %v3137
        %v3139 = vmul.f32 %v3136, %v3138
        %v3140 = vadd.f32 %v3136, %v3139
        %vm3141 = vweird.f32 %v3114
        %vm3142 = vweird.f32 %v3136
        %vm3143 = vmor %vm3141, %vm3142
        %v3144 = vsel %vm3143, %v3136, %v3140
        %v3145 = vand.u32 2147483647, %v3114
        %vm3146 = vcmp.eq.f32.partialorder %v3145, 8.507059e+37
        %v3147 = vand.u32 %v3114, 2147483648
        %v3148 = vor.u32 1.1754944e-38, %v3147
        %v3149 = vsel %vm3146, %v3148, %v3144
        %v3150 = vmul.f32 %v3097, %v3149
        %v3151 = vrcp.pop %v3117
        %v3152 = vmul.f32 %v3117, %v3151
        %v3153 = vsub.f32 1.0, %v3152
        %v3154 = vmul.f32 %v3151, %v3153
        %v3155 = vadd.f32 %v3151, %v3154
        %vm3156 = vweird.f32 %v3117
        %vm3157 = vweird.f32 %v3151
        %vm3158 = vmor %vm3156, %vm3157
        %v3159 = vsel %vm3158, %v3151, %v3155
        %v3160 = vand.u32 2147483647, %v3117
        %vm3161 = vcmp.eq.f32.partialorder %v3160, 8.507059e+37
        %v3162 = vand.u32 %v3117, 2147483648
        %v3163 = vor.u32 1.1754944e-38, %v3162
        %v3164 = vsel %vm3161, %v3163, %v3159
        %v3165 = vmul.f32 %v3099, %v3164
        %v3166 = vrcp.pop %v3120
        %v3167 = vmul.f32 %v3120, %v3166
        %v3168 = vsub.f32 1.0, %v3167
        %v3169 = vmul.f32 %v3166, %v3168
        %v3170 = vadd.f32 %v3166, %v3169
        %vm3171 = vweird.f32 %v3120
        %vm3172 = vweird.f32 %v3166
        %vm3173 = vmor %vm3171, %vm3172
        %v3174 = vsel %vm3173, %v3166, %v3170
        %v3175 = vand.u32 2147483647, %v3120
        %vm3176 = vcmp.eq.f32.partialorder %v3175, 8.507059e+37
        %v3177 = vand.u32 %v3120, 2147483648
        %v3178 = vor.u32 1.1754944e-38, %v3177
        %v3179 = vsel %vm3176, %v3178, %v3174
        %v3180 = vmul.f32 %v3101, %v3179
        %v3181 = vrcp.pop %v3123
        %v3182 = vmul.f32 %v3123, %v3181
        %v3183 = vsub.f32 1.0, %v3182
        %v3184 = vmul.f32 %v3181, %v3183
        %v3185 = vadd.f32 %v3181, %v3184
        %vm3186 = vweird.f32 %v3123
        %vm3187 = vweird.f32 %v3181
        %vm3188 = vmor %vm3186, %vm3187
        %v3189 = vsel %vm3188, %v3181, %v3185
        %v3190 = vand.u32 2147483647, %v3123
        %vm3191 = vcmp.eq.f32.partialorder %v3190, 8.507059e+37
        %v3192 = vand.u32 %v3123, 2147483648
        %v3193 = vor.u32 1.1754944e-38, %v3192
        %v3194 = vsel %vm3191, %v3193, %v3189
        %v3195 = vmul.f32 %v3103, %v3194
        %v3196 = vrcp.pop %v3126
        %v3197 = vmul.f32 %v3126, %v3196
        %v3198 = vsub.f32 1.0, %v3197
        %v3199 = vmul.f32 %v3196, %v3198
        %v3200 = vadd.f32 %v3196, %v3199
        %vm3201 = vweird.f32 %v3126
        %vm3202 = vweird.f32 %v3196
        %vm3203 = vmor %vm3201, %vm3202
        %v3204 = vsel %vm3203, %v3196, %v3200
        %v3205 = vand.u32 2147483647, %v3126
        %vm3206 = vcmp.eq.f32.partialorder %v3205, 8.507059e+37
        %v3207 = vand.u32 %v3126, 2147483648
        %v3208 = vor.u32 1.1754944e-38, %v3207
        %v3209 = vsel %vm3206, %v3208, %v3204
        %v3210 = vmul.f32 %v3105, %v3209
        %v3211 = vrcp.pop %v3129
        %v3212 = vmul.f32 %v3129, %v3211
        %v3213 = vsub.f32 1.0, %v3212
        %v3214 = vmul.f32 %v3211, %v3213
        %v3215 = vadd.f32 %v3211, %v3214
        %vm3216 = vweird.f32 %v3129
        %vm3217 = vweird.f32 %v3211
        %vm3218 = vmor %vm3216, %vm3217
        %v3219 = vsel %vm3218, %v3211, %v3215
        %v3220 = vand.u32 2147483647, %v3129
        %vm3221 = vcmp.eq.f32.partialorder %v3220, 8.507059e+37
        %v3222 = vand.u32 %v3129, 2147483648
        %v3223 = vor.u32 1.1754944e-38, %v3222
        %v3224 = vsel %vm3221, %v3223, %v3219
        %v3225 = vmul.f32 %v3107, %v3224
        %v3226 = vrcp.pop %v3132
        %v3227 = vmul.f32 %v3132, %v3226
        %v3228 = vsub.f32 1.0, %v3227
        %v3229 = vmul.f32 %v3226, %v3228
        %v3230 = vadd.f32 %v3226, %v3229
        %vm3231 = vweird.f32 %v3132
        %vm3232 = vweird.f32 %v3226
        %vm3233 = vmor %vm3231, %vm3232
        %v3234 = vsel %vm3233, %v3226, %v3230
        %v3235 = vand.u32 2147483647, %v3132
        %vm3236 = vcmp.eq.f32.partialorder %v3235, 8.507059e+37
        %v3237 = vand.u32 %v3132, 2147483648
        %v3238 = vor.u32 1.1754944e-38, %v3237
        %v3239 = vsel %vm3236, %v3238, %v3234
        %v3240 = vmul.f32 %v3109, %v3239
        %v3241 = vrcp.pop %v3135
        %v3242 = vmul.f32 %v3135, %v3241
        %v3243 = vsub.f32 1.0, %v3242
        %v3244 = vmul.f32 %v3241, %v3243
        %v3245 = vadd.f32 %v3241, %v3244
        %vm3246 = vweird.f32 %v3135
        %vm3247 = vweird.f32 %v3241
        %vm3248 = vmor %vm3246, %vm3247
        %v3249 = vsel %vm3248, %v3241, %v3245
        %v3250 = vand.u32 2147483647, %v3135
        %vm3251 = vcmp.eq.f32.partialorder %v3250, 8.507059e+37
        %v3252 = vand.u32 %v3135, 2147483648
        %v3253 = vor.u32 1.1754944e-38, %v3252
        %v3254 = vsel %vm3251, %v3253, %v3249
        %v3255 = vmul.f32 %v3111, %v3254
        %v3256 = vpack.c.bf16 %v3165, %v3150
        %v3257 = vpack.c.bf16 %v3195, %v3180
        %v3258 = vpack.c.bf16 %v3225, %v3210
        %v3259 = vpack.c.bf16 %v3255, %v3240
        %v3262 = vunpack.c.l.b16 %v3004
        %v3263 = vunpack.c.l.b16 %v3005
        %v3264 = vpack.c.b16 %v3263, %v3262
        %v3267 = vsel %vm3063, %v3256, 0
        %v3270 = vsel %vm3063, %v3257, 0
        %v3273 = vsel %vm3063, %v3258, 0
        %v3276 = vsel %vm3063, %v3259, 0
        %3278 = vmatpush.bf16.msra.mxu0 0
        %3279 = vmatpush.bf16.msra.mxu0 0
        %3280 = vmatpush.bf16.msra.mxu0 0
        %3281 = vmatpush.bf16.msra.mxu0 0
        %3282 = vmatpush.bf16.msra.mxu0 0
        %3283 = vmatpush.bf16.msra.mxu0 0
        %3284 = vmatpush.bf16.msra.mxu0 0
        %3285 = vmatpush.bf16.msra.mxu0 %v3264
        %3286 = vmatmul.bf16.gmra.mxu0 %v3267
        %v3287 = vpop.f32.mrf.mxu0
        %v3288 = vadd.f32 0.0, %v3287
        %v3289 = vpop.f32.mrf.mxu0
        %v3290 = vadd.f32 0.0, %v3289
        %3291 = vmatmul.bf16.gmra.mxu0 %v3270
        %v3292 = vpop.f32.mrf.mxu0
        %v3293 = vadd.f32 0.0, %v3292
        %v3294 = vpop.f32.mrf.mxu0
        %v3295 = vadd.f32 0.0, %v3294
        %3296 = vmatmul.bf16.gmra.mxu0 %v3273
        %v3297 = vpop.f32.mrf.mxu0
        %v3298 = vadd.f32 0.0, %v3297
        %v3299 = vpop.f32.mrf.mxu0
        %v3300 = vadd.f32 0.0, %v3299
        %3301 = vmatmul.bf16.gmra.mxu0 %v3276
        %v3302 = vpop.f32.mrf.mxu0
        %v3303 = vadd.f32 0.0, %v3302
        %v3304 = vpop.f32.mrf.mxu0
        %v3305 = vadd.f32 0.0, %v3304
        %3306 = vdwg.mxu0
        %v3309 = vunpack.c.l.b16 %v2980
        %v3310 = vunpack.c.l.b16 %v2982
        %v3311 = vpack.c.b16 %v3310, %v3309
        %v3313 = vunpack.c.h.b16 %v2980
        %v3314 = vunpack.c.h.b16 %v2982
        %v3315 = vpack.c.b16 %v3314, %v3313
        %v3319 = vunpack.c.l.b16 %v2981
        %v3320 = vunpack.c.l.b16 %v2983
        %v3321 = vpack.c.b16 %v3320, %v3319
        %v3323 = vunpack.c.h.b16 %v2981
        %v3324 = vunpack.c.h.b16 %v2983
        %v3325 = vpack.c.b16 %v3324, %v3323
        %v3329 = vunpack.c.l.b16 %v2994
        %v3330 = vunpack.c.l.b16 %v2995
        %v3331 = vpack.c.b16 %v3330, %v3329
        %3333 = vmatpush.bf16.xpose.msra.mxu0 0
        %3334 = vmatpush.bf16.xpose.msra.mxu0 0
        %3335 = vmatpush.bf16.xpose.msra.mxu0 0
        %3336 = vmatpush.bf16.xpose.msra.mxu0 0
        %3337 = vmatpush.bf16.xpose.msra.mxu0 0
        %3338 = vmatpush.bf16.xpose.msra.mxu0 0
        %3339 = vmatpush.bf16.xpose.msra.mxu0 0
        %3340 = vmatpush.bf16.xpose.msra.mxu0 %v3331
        %3341 = vmatmul.bf16.gmra.mxu0 %v3311
        %v3342 = vpop.f32.mrf.mxu0
        %v3343 = vadd.f32 0.0, %v3342
        %v3344 = vpop.f32.mrf.mxu0
        %v3345 = vadd.f32 0.0, %v3344
        %3346 = vmatmul.bf16.gmra.mxu0 %v3315
        %v3347 = vpop.f32.mrf.mxu0
        %v3348 = vadd.f32 0.0, %v3347
        %v3349 = vpop.f32.mrf.mxu0
        %v3350 = vadd.f32 0.0, %v3349
        %3351 = vmatmul.bf16.gmra.mxu0 %v3321
        %v3352 = vpop.f32.mrf.mxu0
        %v3353 = vadd.f32 0.0, %v3352
        %v3354 = vpop.f32.mrf.mxu0
        %v3355 = vadd.f32 0.0, %v3354
        %3356 = vmatmul.bf16.gmra.mxu0 %v3325
        %v3357 = vpop.f32.mrf.mxu0
        %v3358 = vadd.f32 0.0, %v3357
        %v3359 = vpop.f32.mrf.mxu0
        %v3360 = vadd.f32 0.0, %v3359
        %3361 = vdwg.mxu0
        %v3362 = vsel %vm3063, %v3343, -inf
        %3363 = vmax.xlane.f32.xlu0 %v3362
        %v3364 = vpop.xlane.xlu0 %3363
        %v3365 = vsel %vm3063, %v3345, -inf
        %3366 = vmax.xlane.f32.xlu0 %v3365
        %v3367 = vpop.xlane.xlu0 %3366
        %v3368 = vsel %vm3063, %v3348, -inf
        %3369 = vmax.xlane.f32.xlu0 %v3368
        %v3370 = vpop.xlane.xlu0 %3369
        %v3371 = vsel %vm3063, %v3350, -inf
        %3372 = vmax.xlane.f32.xlu0 %v3371
        %v3373 = vpop.xlane.xlu0 %3372
        %v3374 = vsel %vm3063, %v3353, -inf
        %3375 = vmax.xlane.f32.xlu0 %v3374
        %v3376 = vpop.xlane.xlu0 %3375
        %v3377 = vsel %vm3063, %v3355, -inf
        %3378 = vmax.xlane.f32.xlu0 %v3377
        %v3379 = vpop.xlane.xlu0 %3378
        %v3380 = vsel %vm3063, %v3358, -inf
        %3381 = vmax.xlane.f32.xlu0 %v3380
        %v3382 = vpop.xlane.xlu0 %3381
        %v3383 = vsel %vm3063, %v3360, -inf
        %3384 = vmax.xlane.f32.xlu0 %v3383
        %v3385 = vpop.xlane.xlu0 %3384
        %v3386 = vsub.f32 %v3343, %v3364
        %v3387 = vsub.f32 %v3345, %v3367
        %v3388 = vsub.f32 %v3348, %v3370
        %v3389 = vsub.f32 %v3350, %v3373
        %v3390 = vsub.f32 %v3353, %v3376
        %v3391 = vsub.f32 %v3355, %v3379
        %v3392 = vsub.f32 %v3358, %v3382
        %v3393 = vsub.f32 %v3360, %v3385
        %v3394 = vmul.f32 %v3386, 1.442695
        %v3395 = vpow.pop %v3394
        %v3396 = vmul.f32 %v3387, 1.442695
        %v3397 = vpow.pop %v3396
        %v3398 = vmul.f32 %v3388, 1.442695
        %v3399 = vpow.pop %v3398
        %v3400 = vmul.f32 %v3389, 1.442695
        %v3401 = vpow.pop %v3400
        %v3402 = vmul.f32 %v3390, 1.442695
        %v3403 = vpow.pop %v3402
        %v3404 = vmul.f32 %v3391, 1.442695
        %v3405 = vpow.pop %v3404
        %v3406 = vmul.f32 %v3392, 1.442695
        %v3407 = vpow.pop %v3406
        %v3408 = vmul.f32 %v3393, 1.442695
        %v3409 = vpow.pop %v3408
        %v3410 = vsel %vm3063, %v3395, 0.0
        %3411 = vadd.xlane.f32.xlu0 %v3410
        %v3412 = vpop.xlane.xlu0 %3411
        %v3413 = vsel %vm3063, %v3397, 0.0
        %3414 = vadd.xlane.f32.xlu0 %v3413
        %v3415 = vpop.xlane.xlu0 %3414
        %v3416 = vsel %vm3063, %v3399, 0.0
        %3417 = vadd.xlane.f32.xlu0 %v3416
        %v3418 = vpop.xlane.xlu0 %3417
        %v3419 = vsel %vm3063, %v3401, 0.0
        %3420 = vadd.xlane.f32.xlu0 %v3419
        %v3421 = vpop.xlane.xlu0 %3420
        %v3422 = vsel %vm3063, %v3403, 0.0
        %3423 = vadd.xlane.f32.xlu0 %v3422
        %v3424 = vpop.xlane.xlu0 %3423
        %v3425 = vsel %vm3063, %v3405, 0.0
        %3426 = vadd.xlane.f32.xlu0 %v3425
        %v3427 = vpop.xlane.xlu0 %3426
        %v3428 = vsel %vm3063, %v3407, 0.0
        %3429 = vadd.xlane.f32.xlu0 %v3428
        %v3430 = vpop.xlane.xlu0 %3429
        %v3431 = vsel %vm3063, %v3409, 0.0
        %3432 = vadd.xlane.f32.xlu0 %v3431
        %v3433 = vpop.xlane.xlu0 %3432
        %v3434 = vrcp.pop %v3412
        %v3435 = vmul.f32 %v3412, %v3434
        %v3436 = vsub.f32 1.0, %v3435
        %v3437 = vmul.f32 %v3434, %v3436
        %v3438 = vadd.f32 %v3434, %v3437
        %vm3439 = vweird.f32 %v3412
        %vm3440 = vweird.f32 %v3434
        %vm3441 = vmor %vm3439, %vm3440
        %v3442 = vsel %vm3441, %v3434, %v3438
        %v3443 = vand.u32 2147483647, %v3412
        %vm3444 = vcmp.eq.f32.partialorder %v3443, 8.507059e+37
        %v3445 = vand.u32 %v3412, 2147483648
        %v3446 = vor.u32 1.1754944e-38, %v3445
        %v3447 = vsel %vm3444, %v3446, %v3442
        %v3448 = vmul.f32 %v3395, %v3447
        %v3449 = vrcp.pop %v3415
        %v3450 = vmul.f32 %v3415, %v3449
        %v3451 = vsub.f32 1.0, %v3450
        %v3452 = vmul.f32 %v3449, %v3451
        %v3453 = vadd.f32 %v3449, %v3452
        %vm3454 = vweird.f32 %v3415
        %vm3455 = vweird.f32 %v3449
        %vm3456 = vmor %vm3454, %vm3455
        %v3457 = vsel %vm3456, %v3449, %v3453
        %v3458 = vand.u32 2147483647, %v3415
        %vm3459 = vcmp.eq.f32.partialorder %v3458, 8.507059e+37
        %v3460 = vand.u32 %v3415, 2147483648
        %v3461 = vor.u32 1.1754944e-38, %v3460
        %v3462 = vsel %vm3459, %v3461, %v3457
        %v3463 = vmul.f32 %v3397, %v3462
        %v3464 = vrcp.pop %v3418
        %v3465 = vmul.f32 %v3418, %v3464
        %v3466 = vsub.f32 1.0, %v3465
        %v3467 = vmul.f32 %v3464, %v3466
        %v3468 = vadd.f32 %v3464, %v3467
        %vm3469 = vweird.f32 %v3418
        %vm3470 = vweird.f32 %v3464
        %vm3471 = vmor %vm3469, %vm3470
        %v3472 = vsel %vm3471, %v3464, %v3468
        %v3473 = vand.u32 2147483647, %v3418
        %vm3474 = vcmp.eq.f32.partialorder %v3473, 8.507059e+37
        %v3475 = vand.u32 %v3418, 2147483648
        %v3476 = vor.u32 1.1754944e-38, %v3475
        %v3477 = vsel %vm3474, %v3476, %v3472
        %v3478 = vmul.f32 %v3399, %v3477
        %v3479 = vrcp.pop %v3421
        %v3480 = vmul.f32 %v3421, %v3479
        %v3481 = vsub.f32 1.0, %v3480
        %v3482 = vmul.f32 %v3479, %v3481
        %v3483 = vadd.f32 %v3479, %v3482
        %vm3484 = vweird.f32 %v3421
        %vm3485 = vweird.f32 %v3479
        %vm3486 = vmor %vm3484, %vm3485
        %v3487 = vsel %vm3486, %v3479, %v3483
        %v3488 = vand.u32 2147483647, %v3421
        %vm3489 = vcmp.eq.f32.partialorder %v3488, 8.507059e+37
        %v3490 = vand.u32 %v3421, 2147483648
        %v3491 = vor.u32 1.1754944e-38, %v3490
        %v3492 = vsel %vm3489, %v3491, %v3487
        %v3493 = vmul.f32 %v3401, %v3492
        %v3494 = vrcp.pop %v3424
        %v3495 = vmul.f32 %v3424, %v3494
        %v3496 = vsub.f32 1.0, %v3495
        %v3497 = vmul.f32 %v3494, %v3496
        %v3498 = vadd.f32 %v3494, %v3497
        %vm3499 = vweird.f32 %v3424
        %vm3500 = vweird.f32 %v3494
        %vm3501 = vmor %vm3499, %vm3500
        %v3502 = vsel %vm3501, %v3494, %v3498
        %v3503 = vand.u32 2147483647, %v3424
        %vm3504 = vcmp.eq.f32.partialorder %v3503, 8.507059e+37
        %v3505 = vand.u32 %v3424, 2147483648
        %v3506 = vor.u32 1.1754944e-38, %v3505
        %v3507 = vsel %vm3504, %v3506, %v3502
        %v3508 = vmul.f32 %v3403, %v3507
        %v3509 = vrcp.pop %v3427
        %v3510 = vmul.f32 %v3427, %v3509
        %v3511 = vsub.f32 1.0, %v3510
        %v3512 = vmul.f32 %v3509, %v3511
        %v3513 = vadd.f32 %v3509, %v3512
        %vm3514 = vweird.f32 %v3427
        %vm3515 = vweird.f32 %v3509
        %vm3516 = vmor %vm3514, %vm3515
        %v3517 = vsel %vm3516, %v3509, %v3513
        %v3518 = vand.u32 2147483647, %v3427
        %vm3519 = vcmp.eq.f32.partialorder %v3518, 8.507059e+37
        %v3520 = vand.u32 %v3427, 2147483648
        %v3521 = vor.u32 1.1754944e-38, %v3520
        %v3522 = vsel %vm3519, %v3521, %v3517
        %v3523 = vmul.f32 %v3405, %v3522
        %v3524 = vrcp.pop %v3430
        %v3525 = vmul.f32 %v3430, %v3524
        %v3526 = vsub.f32 1.0, %v3525
        %v3527 = vmul.f32 %v3524, %v3526
        %v3528 = vadd.f32 %v3524, %v3527
        %vm3529 = vweird.f32 %v3430
        %vm3530 = vweird.f32 %v3524
        %vm3531 = vmor %vm3529, %vm3530
        %v3532 = vsel %vm3531, %v3524, %v3528
        %v3533 = vand.u32 2147483647, %v3430
        %vm3534 = vcmp.eq.f32.partialorder %v3533, 8.507059e+37
        %v3535 = vand.u32 %v3430, 2147483648
        %v3536 = vor.u32 1.1754944e-38, %v3535
        %v3537 = vsel %vm3534, %v3536, %v3532
        %v3538 = vmul.f32 %v3407, %v3537
        %v3539 = vrcp.pop %v3433
        %v3540 = vmul.f32 %v3433, %v3539
        %v3541 = vsub.f32 1.0, %v3540
        %v3542 = vmul.f32 %v3539, %v3541
        %v3543 = vadd.f32 %v3539, %v3542
        %vm3544 = vweird.f32 %v3433
        %vm3545 = vweird.f32 %v3539
        %vm3546 = vmor %vm3544, %vm3545
        %v3547 = vsel %vm3546, %v3539, %v3543
        %v3548 = vand.u32 2147483647, %v3433
        %vm3549 = vcmp.eq.f32.partialorder %v3548, 8.507059e+37
        %v3550 = vand.u32 %v3433, 2147483648
        %v3551 = vor.u32 1.1754944e-38, %v3550
        %v3552 = vsel %vm3549, %v3551, %v3547
        %v3553 = vmul.f32 %v3409, %v3552
        %v3554 = vpack.c.bf16 %v3463, %v3448
        %v3555 = vpack.c.bf16 %v3493, %v3478
        %v3556 = vpack.c.bf16 %v3523, %v3508
        %v3557 = vpack.c.bf16 %v3553, %v3538
        %v3560 = vunpack.c.l.b16 %v3006
        %v3561 = vunpack.c.l.b16 %v3007
        %v3562 = vpack.c.b16 %v3561, %v3560
        %v3565 = vsel %vm3063, %v3554, 0
        %v3568 = vsel %vm3063, %v3555, 0
        %v3571 = vsel %vm3063, %v3556, 0
        %v3574 = vsel %vm3063, %v3557, 0
        %3576 = vmatpush.bf16.msra.mxu0 0
        %3577 = vmatpush.bf16.msra.mxu0 0
        %3578 = vmatpush.bf16.msra.mxu0 0
        %3579 = vmatpush.bf16.msra.mxu0 0
        %3580 = vmatpush.bf16.msra.mxu0 0
        %3581 = vmatpush.bf16.msra.mxu0 0
        %3582 = vmatpush.bf16.msra.mxu0 0
        %3583 = vmatpush.bf16.msra.mxu0 %v3562
        %3584 = vmatmul.bf16.gmra.mxu0 %v3565
        %v3585 = vpop.f32.mrf.mxu0
        %v3586 = vadd.f32 0.0, %v3585
        %v3587 = vpop.f32.mrf.mxu0
        %v3588 = vadd.f32 0.0, %v3587
        %3589 = vmatmul.bf16.gmra.mxu0 %v3568
        %v3590 = vpop.f32.mrf.mxu0
        %v3591 = vadd.f32 0.0, %v3590
        %v3592 = vpop.f32.mrf.mxu0
        %v3593 = vadd.f32 0.0, %v3592
        %3594 = vmatmul.bf16.gmra.mxu0 %v3571
        %v3595 = vpop.f32.mrf.mxu0
        %v3596 = vadd.f32 0.0, %v3595
        %v3597 = vpop.f32.mrf.mxu0
        %v3598 = vadd.f32 0.0, %v3597
        %3599 = vmatmul.bf16.gmra.mxu0 %v3574
        %v3600 = vpop.f32.mrf.mxu0
        %v3601 = vadd.f32 0.0, %v3600
        %v3602 = vpop.f32.mrf.mxu0
        %v3603 = vadd.f32 0.0, %v3602
        %3604 = vdwg.mxu0
        %v3605 = vpack.c.bf16 %v3290, %v3288
        %v3606 = vpack.c.bf16 %v3295, %v3293
        %v3607 = vpack.c.bf16 %v3300, %v3298
        %v3608 = vpack.c.bf16 %v3305, %v3303
        %v3609 = vpack.c.bf16 %v3588, %v3586
        %v3610 = vpack.c.bf16 %v3593, %v3591
        %v3611 = vpack.c.bf16 %v3598, %v3596
        %v3612 = vpack.c.bf16 %v3603, %v3601
        %v3613 = vld [vmem:[%s717] sm:$0xff]
        %v3614 = vld [vmem:[%s717 + $0x8] sm:$0xff]
        %v3615 = vld [vmem:[%s717 + $0x10] sm:$0xff]
        %v3616 = vld [vmem:[%s717 + $0x18] sm:$0xff]
        %v3617 = vld [vmem:[%s717 + $0x20] sm:$0xff]
        %v3618 = vld [vmem:[%s717 + $0x28] sm:$0xff]
        %v3619 = vld [vmem:[%s717 + $0x30] sm:$0xff]
        %v3620 = vld [vmem:[%s717 + $0x38] sm:$0xff]
        %v3621 = vld [vmem:[%s717 + $0x40] sm:$0xff]
        %v3622 = vld [vmem:[%s717 + $0x48] sm:$0xff]
        %v3623 = vld [vmem:[%s717 + $0x50] sm:$0xff]
        %v3624 = vld [vmem:[%s717 + $0x58] sm:$0xff]
        %v3625 = vld [vmem:[%s717 + $0x60] sm:$0xff]
        %v3626 = vld [vmem:[%s717 + $0x68] sm:$0xff]
        %v3627 = vld [vmem:[%s717 + $0x70] sm:$0xff]
        %v3628 = vld [vmem:[%s717 + $0x78] sm:$0xff]
        %v3629 = vld [vmem:[%s717 + $0x80] sm:$0xff]
        %v3630 = vld [vmem:[%s717 + $0x88] sm:$0xff]
        %v3631 = vld [vmem:[%s717 + $0x90] sm:$0xff]
        %v3632 = vld [vmem:[%s717 + $0x98] sm:$0xff]
        %v3633 = vld [vmem:[%s717 + $0xa0] sm:$0xff]
        %v3634 = vld [vmem:[%s717 + $0xa8] sm:$0xff]
        %v3635 = vld [vmem:[%s717 + $0xb0] sm:$0xff]
        %v3636 = vld [vmem:[%s717 + $0xb8] sm:$0xff]
        %v3637 = vld [vmem:[%s717 + $0xc0] sm:$0xff]
        %v3638 = vld [vmem:[%s717 + $0xc8] sm:$0xff]
        %v3639 = vld [vmem:[%s717 + $0xd0] sm:$0xff]
        %v3640 = vld [vmem:[%s717 + $0xd8] sm:$0xff]
        %v3641 = vld [vmem:[%s717 + $0xe0] sm:$0xff]
        %v3642 = vld [vmem:[%s717 + $0xe8] sm:$0xff]
        %v3643 = vld [vmem:[%s717 + $0xf0] sm:$0xff]
        %v3644 = vld [vmem:[%s717 + $0xf8] sm:$0xff]
        %v3645 = vld [vmem:[%s717 + $0x100] sm:$0xff]
        %v3646 = vld [vmem:[%s717 + $0x108] sm:$0xff]
        %v3647 = vld [vmem:[%s717 + $0x110] sm:$0xff]
        %v3648 = vld [vmem:[%s717 + $0x118] sm:$0xff]
        %v3649 = vld [vmem:[%s717 + $0x120] sm:$0xff]
        %v3650 = vld [vmem:[%s717 + $0x128] sm:$0xff]
        %v3651 = vld [vmem:[%s717 + $0x130] sm:$0xff]
        %v3652 = vld [vmem:[%s717 + $0x138] sm:$0xff]
        %v3653 = vld [vmem:[%s717 + $0x140] sm:$0xff]
        %v3654 = vld [vmem:[%s717 + $0x148] sm:$0xff]
        %v3655 = vld [vmem:[%s717 + $0x150] sm:$0xff]
        %v3656 = vld [vmem:[%s717 + $0x158] sm:$0xff]
        %v3657 = vld [vmem:[%s717 + $0x160] sm:$0xff]
        %v3658 = vld [vmem:[%s717 + $0x168] sm:$0xff]
        %v3659 = vld [vmem:[%s717 + $0x170] sm:$0xff]
        %v3660 = vld [vmem:[%s717 + $0x178] sm:$0xff]
        %v3661 = vld [vmem:[%s717 + $0x180] sm:$0xff]
        %v3662 = vld [vmem:[%s717 + $0x188] sm:$0xff]
        %v3663 = vld [vmem:[%s717 + $0x190] sm:$0xff]
        %v3664 = vld [vmem:[%s717 + $0x198] sm:$0xff]
        %v3665 = vld [vmem:[%s717 + $0x1a0] sm:$0xff]
        %v3666 = vld [vmem:[%s717 + $0x1a8] sm:$0xff]
        %v3667 = vld [vmem:[%s717 + $0x1b0] sm:$0xff]
        %v3668 = vld [vmem:[%s717 + $0x1b8] sm:$0xff]
        %v3669 = vld [vmem:[%s717 + $0x1c0] sm:$0xff]
        %v3670 = vld [vmem:[%s717 + $0x1c8] sm:$0xff]
        %v3671 = vld [vmem:[%s717 + $0x1d0] sm:$0xff]
        %v3672 = vld [vmem:[%s717 + $0x1d8] sm:$0xff]
        %v3673 = vld [vmem:[%s717 + $0x1e0] sm:$0xff]
        %v3674 = vld [vmem:[%s717 + $0x1e8] sm:$0xff]
        %v3675 = vld [vmem:[%s717 + $0x1f0] sm:$0xff]
        %v3676 = vld [vmem:[%s717 + $0x1f8] sm:$0xff]
        %v3677 = vld [vmem:[%s717 + $0x200] sm:$0xff]
        %v3678 = vld [vmem:[%s717 + $0x208] sm:$0xff]
        %v3679 = vld [vmem:[%s717 + $0x210] sm:$0xff]
        %v3680 = vld [vmem:[%s717 + $0x218] sm:$0xff]
        %v3681 = vld [vmem:[%s717 + $0x220] sm:$0xff]
        %v3682 = vld [vmem:[%s717 + $0x228] sm:$0xff]
        %v3683 = vld [vmem:[%s717 + $0x230] sm:$0xff]
        %v3684 = vld [vmem:[%s717 + $0x238] sm:$0xff]
        %v3685 = vld [vmem:[%s717 + $0x240] sm:$0xff]
        %v3686 = vld [vmem:[%s717 + $0x248] sm:$0xff]
        %v3687 = vld [vmem:[%s717 + $0x250] sm:$0xff]
        %v3688 = vld [vmem:[%s717 + $0x258] sm:$0xff]
        %v3689 = vld [vmem:[%s717 + $0x260] sm:$0xff]
        %v3690 = vld [vmem:[%s717 + $0x268] sm:$0xff]
        %v3691 = vld [vmem:[%s717 + $0x270] sm:$0xff]
        %v3692 = vld [vmem:[%s717 + $0x278] sm:$0xff]
        %v3693 = vld [vmem:[%s717 + $0x280] sm:$0xff]
        %v3694 = vld [vmem:[%s717 + $0x288] sm:$0xff]
        %v3695 = vld [vmem:[%s717 + $0x290] sm:$0xff]
        %v3696 = vld [vmem:[%s717 + $0x298] sm:$0xff]
        %v3697 = vld [vmem:[%s717 + $0x2a0] sm:$0xff]
        %v3698 = vld [vmem:[%s717 + $0x2a8] sm:$0xff]
        %v3699 = vld [vmem:[%s717 + $0x2b0] sm:$0xff]
        %v3700 = vld [vmem:[%s717 + $0x2b8] sm:$0xff]
        %v3701 = vld [vmem:[%s717 + $0x2c0] sm:$0xff]
        %v3702 = vld [vmem:[%s717 + $0x2c8] sm:$0xff]
        %v3703 = vld [vmem:[%s717 + $0x2d0] sm:$0xff]
        %v3704 = vld [vmem:[%s717 + $0x2d8] sm:$0xff]
        %v3705 = vld [vmem:[%s717 + $0x2e0] sm:$0xff]
        %v3706 = vld [vmem:[%s717 + $0x2e8] sm:$0xff]
        %v3707 = vld [vmem:[%s717 + $0x2f0] sm:$0xff]
        %v3708 = vld [vmem:[%s717 + $0x2f8] sm:$0xff]
        %v3709 = vld [vmem:[%s717 + $0x300] sm:$0xff]
        %v3710 = vld [vmem:[%s717 + $0x308] sm:$0xff]
        %v3711 = vld [vmem:[%s717 + $0x310] sm:$0xff]
        %v3712 = vld [vmem:[%s717 + $0x318] sm:$0xff]
        %v3713 = vld [vmem:[%s717 + $0x320] sm:$0xff]
        %v3714 = vld [vmem:[%s717 + $0x328] sm:$0xff]
        %v3715 = vld [vmem:[%s717 + $0x330] sm:$0xff]
        %v3716 = vld [vmem:[%s717 + $0x338] sm:$0xff]
        %v3717 = vld [vmem:[%s717 + $0x340] sm:$0xff]
        %v3718 = vld [vmem:[%s717 + $0x348] sm:$0xff]
        %v3719 = vld [vmem:[%s717 + $0x350] sm:$0xff]
        %v3720 = vld [vmem:[%s717 + $0x358] sm:$0xff]
        %v3721 = vld [vmem:[%s717 + $0x360] sm:$0xff]
        %v3722 = vld [vmem:[%s717 + $0x368] sm:$0xff]
        %v3723 = vld [vmem:[%s717 + $0x370] sm:$0xff]
        %v3724 = vld [vmem:[%s717 + $0x378] sm:$0xff]
        %v3725 = vld [vmem:[%s717 + $0x380] sm:$0xff]
        %v3726 = vld [vmem:[%s717 + $0x388] sm:$0xff]
        %v3727 = vld [vmem:[%s717 + $0x390] sm:$0xff]
        %v3728 = vld [vmem:[%s717 + $0x398] sm:$0xff]
        %v3729 = vld [vmem:[%s717 + $0x3a0] sm:$0xff]
        %v3730 = vld [vmem:[%s717 + $0x3a8] sm:$0xff]
        %v3731 = vld [vmem:[%s717 + $0x3b0] sm:$0xff]
        %v3732 = vld [vmem:[%s717 + $0x3b8] sm:$0xff]
        %v3733 = vld [vmem:[%s717 + $0x3c0] sm:$0xff]
        %v3734 = vld [vmem:[%s717 + $0x3c8] sm:$0xff]
        %v3735 = vld [vmem:[%s717 + $0x3d0] sm:$0xff]
        %v3736 = vld [vmem:[%s717 + $0x3d8] sm:$0xff]
        %v3737 = vld [vmem:[%s717 + $0x3e0] sm:$0xff]
        %v3738 = vld [vmem:[%s717 + $0x3e8] sm:$0xff]
        %v3739 = vld [vmem:[%s717 + $0x3f0] sm:$0xff]
        %v3740 = vld [vmem:[%s717 + $0x3f8] sm:$0xff]
        %v3741 = vperm.slane %v984, 5
        %v3742 = vperm.slane %v985, 5
        %v3743 = vperm.slane %v986, 5
        %v3744 = vperm.slane %v987, 5
        %v3873 = vunpack.c.l.b16 %v3613
        %v3874 = vunpack.c.h.b16 %v3613
        %v3875 = vunpack.c.l.b16 %v3614
        %v3876 = vunpack.c.h.b16 %v3614
        %v3877 = vunpack.c.l.b16 %v3615
        %v3878 = vunpack.c.h.b16 %v3615
        %v3879 = vunpack.c.l.b16 %v3616
        %v3880 = vunpack.c.h.b16 %v3616
        %v3881 = vunpack.c.l.b16 %v3617
        %v3882 = vunpack.c.h.b16 %v3617
        %v3883 = vunpack.c.l.b16 %v3618
        %v3884 = vunpack.c.h.b16 %v3618
        %v3885 = vunpack.c.l.b16 %v3619
        %v3886 = vunpack.c.h.b16 %v3619
        %v3887 = vunpack.c.l.b16 %v3620
        %v3888 = vunpack.c.h.b16 %v3620
        %v3889 = vunpack.c.l.b16 %v3621
        %v3890 = vunpack.c.h.b16 %v3621
        %v3891 = vunpack.c.l.b16 %v3622
        %v3892 = vunpack.c.h.b16 %v3622
        %v3893 = vunpack.c.l.b16 %v3623
        %v3894 = vunpack.c.h.b16 %v3623
        %v3895 = vunpack.c.l.b16 %v3624
        %v3896 = vunpack.c.h.b16 %v3624
        %v3897 = vunpack.c.l.b16 %v3625
        %v3898 = vunpack.c.h.b16 %v3625
        %v3899 = vunpack.c.l.b16 %v3626
        %v3900 = vunpack.c.h.b16 %v3626
        %v3901 = vunpack.c.l.b16 %v3627
        %v3902 = vunpack.c.h.b16 %v3627
        %v3903 = vunpack.c.l.b16 %v3628
        %v3904 = vunpack.c.h.b16 %v3628
        %v3905 = vunpack.c.l.b16 %v3629
        %v3906 = vunpack.c.h.b16 %v3629
        %v3907 = vunpack.c.l.b16 %v3630
        %v3908 = vunpack.c.h.b16 %v3630
        %v3909 = vunpack.c.l.b16 %v3631
        %v3910 = vunpack.c.h.b16 %v3631
        %v3911 = vunpack.c.l.b16 %v3632
        %v3912 = vunpack.c.h.b16 %v3632
        %v3913 = vunpack.c.l.b16 %v3633
        %v3914 = vunpack.c.h.b16 %v3633
        %v3915 = vunpack.c.l.b16 %v3634
        %v3916 = vunpack.c.h.b16 %v3634
        %v3917 = vunpack.c.l.b16 %v3635
        %v3918 = vunpack.c.h.b16 %v3635
        %v3919 = vunpack.c.l.b16 %v3636
        %v3920 = vunpack.c.h.b16 %v3636
        %v3921 = vunpack.c.l.b16 %v3637
        %v3922 = vunpack.c.h.b16 %v3637
        %v3923 = vunpack.c.l.b16 %v3638
        %v3924 = vunpack.c.h.b16 %v3638
        %v3925 = vunpack.c.l.b16 %v3639
        %v3926 = vunpack.c.h.b16 %v3639
        %v3927 = vunpack.c.l.b16 %v3640
        %v3928 = vunpack.c.h.b16 %v3640
        %v3929 = vunpack.c.l.b16 %v3641
        %v3930 = vunpack.c.h.b16 %v3641
        %v3931 = vunpack.c.l.b16 %v3642
        %v3932 = vunpack.c.h.b16 %v3642
        %v3933 = vunpack.c.l.b16 %v3643
        %v3934 = vunpack.c.h.b16 %v3643
        %v3935 = vunpack.c.l.b16 %v3644
        %v3936 = vunpack.c.h.b16 %v3644
        %v3937 = vunpack.c.l.b16 %v3645
        %v3938 = vunpack.c.h.b16 %v3645
        %v3939 = vunpack.c.l.b16 %v3646
        %v3940 = vunpack.c.h.b16 %v3646
        %v3941 = vunpack.c.l.b16 %v3647
        %v3942 = vunpack.c.h.b16 %v3647
        %v3943 = vunpack.c.l.b16 %v3648
        %v3944 = vunpack.c.h.b16 %v3648
        %v3945 = vunpack.c.l.b16 %v3649
        %v3946 = vunpack.c.h.b16 %v3649
        %v3947 = vunpack.c.l.b16 %v3650
        %v3948 = vunpack.c.h.b16 %v3650
        %v3949 = vunpack.c.l.b16 %v3651
        %v3950 = vunpack.c.h.b16 %v3651
        %v3951 = vunpack.c.l.b16 %v3652
        %v3952 = vunpack.c.h.b16 %v3652
        %v3953 = vunpack.c.l.b16 %v3653
        %v3954 = vunpack.c.h.b16 %v3653
        %v3955 = vunpack.c.l.b16 %v3654
        %v3956 = vunpack.c.h.b16 %v3654
        %v3957 = vunpack.c.l.b16 %v3655
        %v3958 = vunpack.c.h.b16 %v3655
        %v3959 = vunpack.c.l.b16 %v3656
        %v3960 = vunpack.c.h.b16 %v3656
        %v3961 = vunpack.c.l.b16 %v3657
        %v3962 = vunpack.c.h.b16 %v3657
        %v3963 = vunpack.c.l.b16 %v3658
        %v3964 = vunpack.c.h.b16 %v3658
        %v3965 = vunpack.c.l.b16 %v3659
        %v3966 = vunpack.c.h.b16 %v3659
        %v3967 = vunpack.c.l.b16 %v3660
        %v3968 = vunpack.c.h.b16 %v3660
        %v3969 = vunpack.c.l.b16 %v3661
        %v3970 = vunpack.c.h.b16 %v3661
        %v3971 = vunpack.c.l.b16 %v3662
        %v3972 = vunpack.c.h.b16 %v3662
        %v3973 = vunpack.c.l.b16 %v3663
        %v3974 = vunpack.c.h.b16 %v3663
        %v3975 = vunpack.c.l.b16 %v3664
        %v3976 = vunpack.c.h.b16 %v3664
        %v3977 = vunpack.c.l.b16 %v3665
        %v3978 = vunpack.c.h.b16 %v3665
        %v3979 = vunpack.c.l.b16 %v3666
        %v3980 = vunpack.c.h.b16 %v3666
        %v3981 = vunpack.c.l.b16 %v3667
        %v3982 = vunpack.c.h.b16 %v3667
        %v3983 = vunpack.c.l.b16 %v3668
        %v3984 = vunpack.c.h.b16 %v3668
        %v3985 = vunpack.c.l.b16 %v3669
        %v3986 = vunpack.c.h.b16 %v3669
        %v3987 = vunpack.c.l.b16 %v3670
        %v3988 = vunpack.c.h.b16 %v3670
        %v3989 = vunpack.c.l.b16 %v3671
        %v3990 = vunpack.c.h.b16 %v3671
        %v3991 = vunpack.c.l.b16 %v3672
        %v3992 = vunpack.c.h.b16 %v3672
        %v3993 = vunpack.c.l.b16 %v3673
        %v3994 = vunpack.c.h.b16 %v3673
        %v3995 = vunpack.c.l.b16 %v3674
        %v3996 = vunpack.c.h.b16 %v3674
        %v3997 = vunpack.c.l.b16 %v3675
        %v3998 = vunpack.c.h.b16 %v3675
        %v3999 = vunpack.c.l.b16 %v3676
        %v4000 = vunpack.c.h.b16 %v3676
        %v4001 = vunpack.c.l.b16 %v3677
        %v4002 = vunpack.c.h.b16 %v3677
        %v4003 = vunpack.c.l.b16 %v3678
        %v4004 = vunpack.c.h.b16 %v3678
        %v4005 = vunpack.c.l.b16 %v3679
        %v4006 = vunpack.c.h.b16 %v3679
        %v4007 = vunpack.c.l.b16 %v3680
        %v4008 = vunpack.c.h.b16 %v3680
        %v4009 = vunpack.c.l.b16 %v3681
        %v4010 = vunpack.c.h.b16 %v3681
        %v4011 = vunpack.c.l.b16 %v3682
        %v4012 = vunpack.c.h.b16 %v3682
        %v4013 = vunpack.c.l.b16 %v3683
        %v4014 = vunpack.c.h.b16 %v3683
        %v4015 = vunpack.c.l.b16 %v3684
        %v4016 = vunpack.c.h.b16 %v3684
        %v4017 = vunpack.c.l.b16 %v3685
        %v4018 = vunpack.c.h.b16 %v3685
        %v4019 = vunpack.c.l.b16 %v3686
        %v4020 = vunpack.c.h.b16 %v3686
        %v4021 = vunpack.c.l.b16 %v3687
        %v4022 = vunpack.c.h.b16 %v3687
        %v4023 = vunpack.c.l.b16 %v3688
        %v4024 = vunpack.c.h.b16 %v3688
        %v4025 = vunpack.c.l.b16 %v3689
        %v4026 = vunpack.c.h.b16 %v3689
        %v4027 = vunpack.c.l.b16 %v3690
        %v4028 = vunpack.c.h.b16 %v3690
        %v4029 = vunpack.c.l.b16 %v3691
        %v4030 = vunpack.c.h.b16 %v3691
        %v4031 = vunpack.c.l.b16 %v3692
        %v4032 = vunpack.c.h.b16 %v3692
        %v4033 = vunpack.c.l.b16 %v3693
        %v4034 = vunpack.c.h.b16 %v3693
        %v4035 = vunpack.c.l.b16 %v3694
        %v4036 = vunpack.c.h.b16 %v3694
        %v4037 = vunpack.c.l.b16 %v3695
        %v4038 = vunpack.c.h.b16 %v3695
        %v4039 = vunpack.c.l.b16 %v3696
        %v4040 = vunpack.c.h.b16 %v3696
        %v4041 = vunpack.c.l.b16 %v3697
        %v4042 = vunpack.c.h.b16 %v3697
        %v4043 = vunpack.c.l.b16 %v3698
        %v4044 = vunpack.c.h.b16 %v3698
        %v4045 = vunpack.c.l.b16 %v3699
        %v4046 = vunpack.c.h.b16 %v3699
        %v4047 = vunpack.c.l.b16 %v3700
        %v4048 = vunpack.c.h.b16 %v3700
        %v4049 = vunpack.c.l.b16 %v3701
        %v4050 = vunpack.c.h.b16 %v3701
        %v4051 = vunpack.c.l.b16 %v3702
        %v4052 = vunpack.c.h.b16 %v3702
        %v4053 = vunpack.c.l.b16 %v3703
        %v4054 = vunpack.c.h.b16 %v3703
        %v4055 = vunpack.c.l.b16 %v3704
        %v4056 = vunpack.c.h.b16 %v3704
        %v4057 = vunpack.c.l.b16 %v3705
        %v4058 = vunpack.c.h.b16 %v3705
        %v4059 = vunpack.c.l.b16 %v3706
        %v4060 = vunpack.c.h.b16 %v3706
        %v4061 = vunpack.c.l.b16 %v3707
        %v4062 = vunpack.c.h.b16 %v3707
        %v4063 = vunpack.c.l.b16 %v3708
        %v4064 = vunpack.c.h.b16 %v3708
        %v4065 = vunpack.c.l.b16 %v3709
        %v4066 = vunpack.c.h.b16 %v3709
        %v4067 = vunpack.c.l.b16 %v3710
        %v4068 = vunpack.c.h.b16 %v3710
        %v4069 = vunpack.c.l.b16 %v3711
        %v4070 = vunpack.c.h.b16 %v3711
        %v4071 = vunpack.c.l.b16 %v3712
        %v4072 = vunpack.c.h.b16 %v3712
        %v4073 = vunpack.c.l.b16 %v3713
        %v4074 = vunpack.c.h.b16 %v3713
        %v4075 = vunpack.c.l.b16 %v3714
        %v4076 = vunpack.c.h.b16 %v3714
        %v4077 = vunpack.c.l.b16 %v3715
        %v4078 = vunpack.c.h.b16 %v3715
        %v4079 = vunpack.c.l.b16 %v3716
        %v4080 = vunpack.c.h.b16 %v3716
        %v4081 = vunpack.c.l.b16 %v3717
        %v4082 = vunpack.c.h.b16 %v3717
        %v4083 = vunpack.c.l.b16 %v3718
        %v4084 = vunpack.c.h.b16 %v3718
        %v4085 = vunpack.c.l.b16 %v3719
        %v4086 = vunpack.c.h.b16 %v3719
        %v4087 = vunpack.c.l.b16 %v3720
        %v4088 = vunpack.c.h.b16 %v3720
        %v4089 = vunpack.c.l.b16 %v3721
        %v4090 = vunpack.c.h.b16 %v3721
        %v4091 = vunpack.c.l.b16 %v3722
        %v4092 = vunpack.c.h.b16 %v3722
        %v4093 = vunpack.c.l.b16 %v3723
        %v4094 = vunpack.c.h.b16 %v3723
        %v4095 = vunpack.c.l.b16 %v3724
        %v4096 = vunpack.c.h.b16 %v3724
        %v4097 = vunpack.c.l.b16 %v3725
        %v4098 = vunpack.c.h.b16 %v3725
        %v4099 = vunpack.c.l.b16 %v3726
        %v4100 = vunpack.c.h.b16 %v3726
        %v4101 = vunpack.c.l.b16 %v3727
        %v4102 = vunpack.c.h.b16 %v3727
        %v4103 = vunpack.c.l.b16 %v3728
        %v4104 = vunpack.c.h.b16 %v3728
        %v4105 = vunpack.c.l.b16 %v3729
        %v4106 = vunpack.c.h.b16 %v3729
        %v4107 = vunpack.c.l.b16 %v3730
        %v4108 = vunpack.c.h.b16 %v3730
        %v4109 = vunpack.c.l.b16 %v3731
        %v4110 = vunpack.c.h.b16 %v3731
        %v4111 = vunpack.c.l.b16 %v3732
        %v4112 = vunpack.c.h.b16 %v3732
        %v4113 = vunpack.c.l.b16 %v3733
        %v4114 = vunpack.c.h.b16 %v3733
        %v4115 = vunpack.c.l.b16 %v3734
        %v4116 = vunpack.c.h.b16 %v3734
        %v4117 = vunpack.c.l.b16 %v3735
        %v4118 = vunpack.c.h.b16 %v3735
        %v4119 = vunpack.c.l.b16 %v3736
        %v4120 = vunpack.c.h.b16 %v3736
        %v4121 = vunpack.c.l.b16 %v3737
        %v4122 = vunpack.c.h.b16 %v3737
        %v4123 = vunpack.c.l.b16 %v3738
        %v4124 = vunpack.c.h.b16 %v3738
        %v4125 = vunpack.c.l.b16 %v3739
        %v4126 = vunpack.c.h.b16 %v3739
        %v4127 = vunpack.c.l.b16 %v3740
        %v4128 = vunpack.c.h.b16 %v3740
        %v4129 = vpack.c.b16 %v3877, %v3873
        %v4130 = vpack.c.b16 %v3878, %v3874
        %v4131 = vpack.c.b16 %v3879, %v3875
        %v4132 = vpack.c.b16 %v3880, %v3876
        %v4133 = vpack.c.b16 %v3885, %v3881
        %v4134 = vpack.c.b16 %v3886, %v3882
        %v4135 = vpack.c.b16 %v3887, %v3883
        %v4136 = vpack.c.b16 %v3888, %v3884
        %v4137 = vpack.c.b16 %v3893, %v3889
        %v4138 = vpack.c.b16 %v3894, %v3890
        %v4139 = vpack.c.b16 %v3895, %v3891
        %v4140 = vpack.c.b16 %v3896, %v3892
        %v4141 = vpack.c.b16 %v3901, %v3897
        %v4142 = vpack.c.b16 %v3902, %v3898
        %v4143 = vpack.c.b16 %v3903, %v3899
        %v4144 = vpack.c.b16 %v3904, %v3900
        %v4145 = vpack.c.b16 %v3909, %v3905
        %v4146 = vpack.c.b16 %v3910, %v3906
        %v4147 = vpack.c.b16 %v3911, %v3907
        %v4148 = vpack.c.b16 %v3912, %v3908
        %v4149 = vpack.c.b16 %v3917, %v3913
        %v4150 = vpack.c.b16 %v3918, %v3914
        %v4151 = vpack.c.b16 %v3919, %v3915
        %v4152 = vpack.c.b16 %v3920, %v3916
        %v4153 = vpack.c.b16 %v3925, %v3921
        %v4154 = vpack.c.b16 %v3926, %v3922
        %v4155 = vpack.c.b16 %v3927, %v3923
        %v4156 = vpack.c.b16 %v3928, %v3924
        %v4157 = vpack.c.b16 %v3933, %v3929
        %v4158 = vpack.c.b16 %v3934, %v3930
        %v4159 = vpack.c.b16 %v3935, %v3931
        %v4160 = vpack.c.b16 %v3936, %v3932
        %v4161 = vpack.c.b16 %v3941, %v3937
        %v4162 = vpack.c.b16 %v3942, %v3938
        %v4163 = vpack.c.b16 %v3943, %v3939
        %v4164 = vpack.c.b16 %v3944, %v3940
        %v4165 = vpack.c.b16 %v3949, %v3945
        %v4166 = vpack.c.b16 %v3950, %v3946
        %v4167 = vpack.c.b16 %v3951, %v3947
        %v4168 = vpack.c.b16 %v3952, %v3948
        %v4169 = vpack.c.b16 %v3957, %v3953
        %v4170 = vpack.c.b16 %v3958, %v3954
        %v4171 = vpack.c.b16 %v3959, %v3955
        %v4172 = vpack.c.b16 %v3960, %v3956
        %v4173 = vpack.c.b16 %v3965, %v3961
        %v4174 = vpack.c.b16 %v3966, %v3962
        %v4175 = vpack.c.b16 %v3967, %v3963
        %v4176 = vpack.c.b16 %v3968, %v3964
        %v4177 = vpack.c.b16 %v3973, %v3969
        %v4178 = vpack.c.b16 %v3974, %v3970
        %v4179 = vpack.c.b16 %v3975, %v3971
        %v4180 = vpack.c.b16 %v3976, %v3972
        %v4181 = vpack.c.b16 %v3981, %v3977
        %v4182 = vpack.c.b16 %v3982, %v3978
        %v4183 = vpack.c.b16 %v3983, %v3979
        %v4184 = vpack.c.b16 %v3984, %v3980
        %v4185 = vpack.c.b16 %v3989, %v3985
        %v4186 = vpack.c.b16 %v3990, %v3986
        %v4187 = vpack.c.b16 %v3991, %v3987
        %v4188 = vpack.c.b16 %v3992, %v3988
        %v4189 = vpack.c.b16 %v3997, %v3993
        %v4190 = vpack.c.b16 %v3998, %v3994
        %v4191 = vpack.c.b16 %v3999, %v3995
        %v4192 = vpack.c.b16 %v4000, %v3996
        %v4193 = vpack.c.b16 %v4005, %v4001
        %v4194 = vpack.c.b16 %v4006, %v4002
        %v4195 = vpack.c.b16 %v4007, %v4003
        %v4196 = vpack.c.b16 %v4008, %v4004
        %v4197 = vpack.c.b16 %v4013, %v4009
        %v4198 = vpack.c.b16 %v4014, %v4010
        %v4199 = vpack.c.b16 %v4015, %v4011
        %v4200 = vpack.c.b16 %v4016, %v4012
        %v4201 = vpack.c.b16 %v4021, %v4017
        %v4202 = vpack.c.b16 %v4022, %v4018
        %v4203 = vpack.c.b16 %v4023, %v4019
        %v4204 = vpack.c.b16 %v4024, %v4020
        %v4205 = vpack.c.b16 %v4029, %v4025
        %v4206 = vpack.c.b16 %v4030, %v4026
        %v4207 = vpack.c.b16 %v4031, %v4027
        %v4208 = vpack.c.b16 %v4032, %v4028
        %v4209 = vpack.c.b16 %v4037, %v4033
        %v4210 = vpack.c.b16 %v4038, %v4034
        %v4211 = vpack.c.b16 %v4039, %v4035
        %v4212 = vpack.c.b16 %v4040, %v4036
        %v4213 = vpack.c.b16 %v4045, %v4041
        %v4214 = vpack.c.b16 %v4046, %v4042
        %v4215 = vpack.c.b16 %v4047, %v4043
        %v4216 = vpack.c.b16 %v4048, %v4044
        %v4217 = vpack.c.b16 %v4053, %v4049
        %v4218 = vpack.c.b16 %v4054, %v4050
        %v4219 = vpack.c.b16 %v4055, %v4051
        %v4220 = vpack.c.b16 %v4056, %v4052
        %v4221 = vpack.c.b16 %v4061, %v4057
        %v4222 = vpack.c.b16 %v4062, %v4058
        %v4223 = vpack.c.b16 %v4063, %v4059
        %v4224 = vpack.c.b16 %v4064, %v4060
        %v4225 = vpack.c.b16 %v4069, %v4065
        %v4226 = vpack.c.b16 %v4070, %v4066
        %v4227 = vpack.c.b16 %v4071, %v4067
        %v4228 = vpack.c.b16 %v4072, %v4068
        %v4229 = vpack.c.b16 %v4077, %v4073
        %v4230 = vpack.c.b16 %v4078, %v4074
        %v4231 = vpack.c.b16 %v4079, %v4075
        %v4232 = vpack.c.b16 %v4080, %v4076
        %v4233 = vpack.c.b16 %v4085, %v4081
        %v4234 = vpack.c.b16 %v4086, %v4082
        %v4235 = vpack.c.b16 %v4087, %v4083
        %v4236 = vpack.c.b16 %v4088, %v4084
        %v4237 = vpack.c.b16 %v4093, %v4089
        %v4238 = vpack.c.b16 %v4094, %v4090
        %v4239 = vpack.c.b16 %v4095, %v4091
        %v4240 = vpack.c.b16 %v4096, %v4092
        %v4241 = vpack.c.b16 %v4101, %v4097
        %v4242 = vpack.c.b16 %v4102, %v4098
        %v4243 = vpack.c.b16 %v4103, %v4099
        %v4244 = vpack.c.b16 %v4104, %v4100
        %v4245 = vpack.c.b16 %v4109, %v4105
        %v4246 = vpack.c.b16 %v4110, %v4106
        %v4247 = vpack.c.b16 %v4111, %v4107
        %v4248 = vpack.c.b16 %v4112, %v4108
        %v4249 = vpack.c.b16 %v4117, %v4113
        %v4250 = vpack.c.b16 %v4118, %v4114
        %v4251 = vpack.c.b16 %v4119, %v4115
        %v4252 = vpack.c.b16 %v4120, %v4116
        %v4253 = vpack.c.b16 %v4125, %v4121
        %v4254 = vpack.c.b16 %v4126, %v4122
        %v4255 = vpack.c.b16 %v4127, %v4123
        %v4256 = vpack.c.b16 %v4128, %v4124
        %4385 = vmatpush.bf16.msra.mxu0 %v4157
        %4386 = vmatpush.bf16.msra.mxu0 %v4153
        %4387 = vmatpush.bf16.msra.mxu0 %v4149
        %4388 = vmatpush.bf16.msra.mxu0 %v4145
        %4389 = vmatpush.bf16.msra.mxu0 %v4141
        %4390 = vmatpush.bf16.msra.mxu0 %v4137
        %4391 = vmatpush.bf16.msra.mxu0 %v4133
        %4392 = vmatpush.bf16.msra.mxu0 %v4129
        %4393 = vmatmul.bf16.gmra.mxu0 %v3605
        %v4394 = vpop.f32.mrf.mxu0
        %v4395 = vadd.f32 %v3741, %v4394
        %v4396 = vpop.f32.mrf.mxu0
        %v4397 = vadd.f32 %v3741, %v4396
        %4398 = vmatmul.bf16.gmra.mxu0 %v3609
        %v4399 = vpop.f32.mrf.mxu0
        %v4400 = vadd.f32 %v3741, %v4399
        %v4401 = vpop.f32.mrf.mxu0
        %v4402 = vadd.f32 %v3741, %v4401
        %4403 = vdwg.mxu0
        %4404 = vmatpush.bf16.msra.mxu0 %v4189
        %4405 = vmatpush.bf16.msra.mxu0 %v4185
        %4406 = vmatpush.bf16.msra.mxu0 %v4181
        %4407 = vmatpush.bf16.msra.mxu0 %v4177
        %4408 = vmatpush.bf16.msra.mxu0 %v4173
        %4409 = vmatpush.bf16.msra.mxu0 %v4169
        %4410 = vmatpush.bf16.msra.mxu0 %v4165
        %4411 = vmatpush.bf16.msra.mxu0 %v4161
        %4412 = vmatmul.bf16.gmra.mxu0 %v3606
        %v4413 = vpop.f32.mrf.mxu0
        %v4414 = vadd.f32 %v4395, %v4413
        %v4415 = vpop.f32.mrf.mxu0
        %v4416 = vadd.f32 %v4397, %v4415
        %4417 = vmatmul.bf16.gmra.mxu0 %v3610
        %v4418 = vpop.f32.mrf.mxu0
        %v4419 = vadd.f32 %v4400, %v4418
        %v4420 = vpop.f32.mrf.mxu0
        %v4421 = vadd.f32 %v4402, %v4420
        %4422 = vdwg.mxu0
        %4423 = vmatpush.bf16.msra.mxu0 %v4221
        %4424 = vmatpush.bf16.msra.mxu0 %v4217
        %4425 = vmatpush.bf16.msra.mxu0 %v4213
        %4426 = vmatpush.bf16.msra.mxu0 %v4209
        %4427 = vmatpush.bf16.msra.mxu0 %v4205
        %4428 = vmatpush.bf16.msra.mxu0 %v4201
        %4429 = vmatpush.bf16.msra.mxu0 %v4197
        %4430 = vmatpush.bf16.msra.mxu0 %v4193
        %4431 = vmatmul.bf16.gmra.mxu0 %v3607
        %v4432 = vpop.f32.mrf.mxu0
        %v4433 = vadd.f32 %v4414, %v4432
        %v4434 = vpop.f32.mrf.mxu0
        %v4435 = vadd.f32 %v4416, %v4434
        %4436 = vmatmul.bf16.gmra.mxu0 %v3611
        %v4437 = vpop.f32.mrf.mxu0
        %v4438 = vadd.f32 %v4419, %v4437
        %v4439 = vpop.f32.mrf.mxu0
        %v4440 = vadd.f32 %v4421, %v4439
        %4441 = vdwg.mxu0
        %4442 = vmatpush.bf16.msra.mxu0 %v4253
        %4443 = vmatpush.bf16.msra.mxu0 %v4249
        %4444 = vmatpush.bf16.msra.mxu0 %v4245
        %4445 = vmatpush.bf16.msra.mxu0 %v4241
        %4446 = vmatpush.bf16.msra.mxu0 %v4237
        %4447 = vmatpush.bf16.msra.mxu0 %v4233
        %4448 = vmatpush.bf16.msra.mxu0 %v4229
        %4449 = vmatpush.bf16.msra.mxu0 %v4225
        %4450 = vmatmul.bf16.gmra.mxu0 %v3608
        %v4451 = vpop.f32.mrf.mxu0
        %v4452 = vadd.f32 %v4433, %v4451
        %v4453 = vpop.f32.mrf.mxu0
        %v4454 = vadd.f32 %v4435, %v4453
        %4455 = vmatmul.bf16.gmra.mxu0 %v3612
        %v4456 = vpop.f32.mrf.mxu0
        %v4457 = vadd.f32 %v4438, %v4456
        %v4458 = vpop.f32.mrf.mxu0
        %v4459 = vadd.f32 %v4440, %v4458
        %4460 = vdwg.mxu0
        %4461 = vmatpush.bf16.msra.mxu0 %v4158
        %4462 = vmatpush.bf16.msra.mxu0 %v4154
        %4463 = vmatpush.bf16.msra.mxu0 %v4150
        %4464 = vmatpush.bf16.msra.mxu0 %v4146
        %4465 = vmatpush.bf16.msra.mxu0 %v4142
        %4466 = vmatpush.bf16.msra.mxu0 %v4138
        %4467 = vmatpush.bf16.msra.mxu0 %v4134
        %4468 = vmatpush.bf16.msra.mxu0 %v4130
        %4469 = vmatmul.bf16.gmra.mxu0 %v3605
        %v4470 = vpop.f32.mrf.mxu0
        %v4471 = vadd.f32 %v3742, %v4470
        %v4472 = vpop.f32.mrf.mxu0
        %v4473 = vadd.f32 %v3742, %v4472
        %4474 = vmatmul.bf16.gmra.mxu0 %v3609
        %v4475 = vpop.f32.mrf.mxu0
        %v4476 = vadd.f32 %v3742, %v4475
        %v4477 = vpop.f32.mrf.mxu0
        %v4478 = vadd.f32 %v3742, %v4477
        %4479 = vdwg.mxu0
        %4480 = vmatpush.bf16.msra.mxu0 %v4190
        %4481 = vmatpush.bf16.msra.mxu0 %v4186
        %4482 = vmatpush.bf16.msra.mxu0 %v4182
        %4483 = vmatpush.bf16.msra.mxu0 %v4178
        %4484 = vmatpush.bf16.msra.mxu0 %v4174
        %4485 = vmatpush.bf16.msra.mxu0 %v4170
        %4486 = vmatpush.bf16.msra.mxu0 %v4166
        %4487 = vmatpush.bf16.msra.mxu0 %v4162
        %4488 = vmatmul.bf16.gmra.mxu0 %v3606
        %v4489 = vpop.f32.mrf.mxu0
        %v4490 = vadd.f32 %v4471, %v4489
        %v4491 = vpop.f32.mrf.mxu0
        %v4492 = vadd.f32 %v4473, %v4491
        %4493 = vmatmul.bf16.gmra.mxu0 %v3610
        %v4494 = vpop.f32.mrf.mxu0
        %v4495 = vadd.f32 %v4476, %v4494
        %v4496 = vpop.f32.mrf.mxu0
        %v4497 = vadd.f32 %v4478, %v4496
        %4498 = vdwg.mxu0
        %4499 = vmatpush.bf16.msra.mxu0 %v4222
        %4500 = vmatpush.bf16.msra.mxu0 %v4218
        %4501 = vmatpush.bf16.msra.mxu0 %v4214
        %4502 = vmatpush.bf16.msra.mxu0 %v4210
        %4503 = vmatpush.bf16.msra.mxu0 %v4206
        %4504 = vmatpush.bf16.msra.mxu0 %v4202
        %4505 = vmatpush.bf16.msra.mxu0 %v4198
        %4506 = vmatpush.bf16.msra.mxu0 %v4194
        %4507 = vmatmul.bf16.gmra.mxu0 %v3607
        %v4508 = vpop.f32.mrf.mxu0
        %v4509 = vadd.f32 %v4490, %v4508
        %v4510 = vpop.f32.mrf.mxu0
        %v4511 = vadd.f32 %v4492, %v4510
        %4512 = vmatmul.bf16.gmra.mxu0 %v3611
        %v4513 = vpop.f32.mrf.mxu0
        %v4514 = vadd.f32 %v4495, %v4513
        %v4515 = vpop.f32.mrf.mxu0
        %v4516 = vadd.f32 %v4497, %v4515
        %4517 = vdwg.mxu0
        %4518 = vmatpush.bf16.msra.mxu0 %v4254
        %4519 = vmatpush.bf16.msra.mxu0 %v4250
        %4520 = vmatpush.bf16.msra.mxu0 %v4246
        %4521 = vmatpush.bf16.msra.mxu0 %v4242
        %4522 = vmatpush.bf16.msra.mxu0 %v4238
        %4523 = vmatpush.bf16.msra.mxu0 %v4234
        %4524 = vmatpush.bf16.msra.mxu0 %v4230
        %4525 = vmatpush.bf16.msra.mxu0 %v4226
        %4526 = vmatmul.bf16.gmra.mxu0 %v3608
        %v4527 = vpop.f32.mrf.mxu0
        %v4528 = vadd.f32 %v4509, %v4527
        %v4529 = vpop.f32.mrf.mxu0
        %v4530 = vadd.f32 %v4511, %v4529
        %4531 = vmatmul.bf16.gmra.mxu0 %v3612
        %v4532 = vpop.f32.mrf.mxu0
        %v4533 = vadd.f32 %v4514, %v4532
        %v4534 = vpop.f32.mrf.mxu0
        %v4535 = vadd.f32 %v4516, %v4534
        %4536 = vdwg.mxu0
        %4537 = vmatpush.bf16.msra.mxu0 %v4159
        %4538 = vmatpush.bf16.msra.mxu0 %v4155
        %4539 = vmatpush.bf16.msra.mxu0 %v4151
        %4540 = vmatpush.bf16.msra.mxu0 %v4147
        %4541 = vmatpush.bf16.msra.mxu0 %v4143
        %4542 = vmatpush.bf16.msra.mxu0 %v4139
        %4543 = vmatpush.bf16.msra.mxu0 %v4135
        %4544 = vmatpush.bf16.msra.mxu0 %v4131
        %4545 = vmatmul.bf16.gmra.mxu0 %v3605
        %v4546 = vpop.f32.mrf.mxu0
        %v4547 = vadd.f32 %v3743, %v4546
        %v4548 = vpop.f32.mrf.mxu0
        %v4549 = vadd.f32 %v3743, %v4548
        %4550 = vmatmul.bf16.gmra.mxu0 %v3609
        %v4551 = vpop.f32.mrf.mxu0
        %v4552 = vadd.f32 %v3743, %v4551
        %v4553 = vpop.f32.mrf.mxu0
        %v4554 = vadd.f32 %v3743, %v4553
        %4555 = vdwg.mxu0
        %4556 = vmatpush.bf16.msra.mxu0 %v4191
        %4557 = vmatpush.bf16.msra.mxu0 %v4187
        %4558 = vmatpush.bf16.msra.mxu0 %v4183
        %4559 = vmatpush.bf16.msra.mxu0 %v4179
        %4560 = vmatpush.bf16.msra.mxu0 %v4175
        %4561 = vmatpush.bf16.msra.mxu0 %v4171
        %4562 = vmatpush.bf16.msra.mxu0 %v4167
        %4563 = vmatpush.bf16.msra.mxu0 %v4163
        %4564 = vmatmul.bf16.gmra.mxu0 %v3606
        %v4565 = vpop.f32.mrf.mxu0
        %v4566 = vadd.f32 %v4547, %v4565
        %v4567 = vpop.f32.mrf.mxu0
        %v4568 = vadd.f32 %v4549, %v4567
        %4569 = vmatmul.bf16.gmra.mxu0 %v3610
        %v4570 = vpop.f32.mrf.mxu0
        %v4571 = vadd.f32 %v4552, %v4570
        %v4572 = vpop.f32.mrf.mxu0
        %v4573 = vadd.f32 %v4554, %v4572
        %4574 = vdwg.mxu0
        %4575 = vmatpush.bf16.msra.mxu0 %v4223
        %4576 = vmatpush.bf16.msra.mxu0 %v4219
        %4577 = vmatpush.bf16.msra.mxu0 %v4215
        %4578 = vmatpush.bf16.msra.mxu0 %v4211
        %4579 = vmatpush.bf16.msra.mxu0 %v4207
        %4580 = vmatpush.bf16.msra.mxu0 %v4203
        %4581 = vmatpush.bf16.msra.mxu0 %v4199
        %4582 = vmatpush.bf16.msra.mxu0 %v4195
        %4583 = vmatmul.bf16.gmra.mxu0 %v3607
        %v4584 = vpop.f32.mrf.mxu0
        %v4585 = vadd.f32 %v4566, %v4584
        %v4586 = vpop.f32.mrf.mxu0
        %v4587 = vadd.f32 %v4568, %v4586
        %4588 = vmatmul.bf16.gmra.mxu0 %v3611
        %v4589 = vpop.f32.mrf.mxu0
        %v4590 = vadd.f32 %v4571, %v4589
        %v4591 = vpop.f32.mrf.mxu0
        %v4592 = vadd.f32 %v4573, %v4591
        %4593 = vdwg.mxu0
        %4594 = vmatpush.bf16.msra.mxu0 %v4255
        %4595 = vmatpush.bf16.msra.mxu0 %v4251
        %4596 = vmatpush.bf16.msra.mxu0 %v4247
        %4597 = vmatpush.bf16.msra.mxu0 %v4243
        %4598 = vmatpush.bf16.msra.mxu0 %v4239
        %4599 = vmatpush.bf16.msra.mxu0 %v4235
        %4600 = vmatpush.bf16.msra.mxu0 %v4231
        %4601 = vmatpush.bf16.msra.mxu0 %v4227
        %4602 = vmatmul.bf16.gmra.mxu0 %v3608
        %v4603 = vpop.f32.mrf.mxu0
        %v4604 = vadd.f32 %v4585, %v4603
        %v4605 = vpop.f32.mrf.mxu0
        %v4606 = vadd.f32 %v4587, %v4605
        %4607 = vmatmul.bf16.gmra.mxu0 %v3612
        %v4608 = vpop.f32.mrf.mxu0
        %v4609 = vadd.f32 %v4590, %v4608
        %v4610 = vpop.f32.mrf.mxu0
        %v4611 = vadd.f32 %v4592, %v4610
        %4612 = vdwg.mxu0
        %4613 = vmatpush.bf16.msra.mxu0 %v4160
        %4614 = vmatpush.bf16.msra.mxu0 %v4156
        %4615 = vmatpush.bf16.msra.mxu0 %v4152
        %4616 = vmatpush.bf16.msra.mxu0 %v4148
        %4617 = vmatpush.bf16.msra.mxu0 %v4144
        %4618 = vmatpush.bf16.msra.mxu0 %v4140
        %4619 = vmatpush.bf16.msra.mxu0 %v4136
        %4620 = vmatpush.bf16.msra.mxu0 %v4132
        %4621 = vmatmul.bf16.gmra.mxu0 %v3605
        %v4622 = vpop.f32.mrf.mxu0
        %v4623 = vadd.f32 %v3744, %v4622
        %v4624 = vpop.f32.mrf.mxu0
        %v4625 = vadd.f32 %v3744, %v4624
        %4626 = vmatmul.bf16.gmra.mxu0 %v3609
        %v4627 = vpop.f32.mrf.mxu0
        %v4628 = vadd.f32 %v3744, %v4627
        %v4629 = vpop.f32.mrf.mxu0
        %v4630 = vadd.f32 %v3744, %v4629
        %4631 = vdwg.mxu0
        %4632 = vmatpush.bf16.msra.mxu0 %v4192
        %4633 = vmatpush.bf16.msra.mxu0 %v4188
        %4634 = vmatpush.bf16.msra.mxu0 %v4184
        %4635 = vmatpush.bf16.msra.mxu0 %v4180
        %4636 = vmatpush.bf16.msra.mxu0 %v4176
        %4637 = vmatpush.bf16.msra.mxu0 %v4172
        %4638 = vmatpush.bf16.msra.mxu0 %v4168
        %4639 = vmatpush.bf16.msra.mxu0 %v4164
        %4640 = vmatmul.bf16.gmra.mxu0 %v3606
        %v4641 = vpop.f32.mrf.mxu0
        %v4642 = vadd.f32 %v4623, %v4641
        %v4643 = vpop.f32.mrf.mxu0
        %v4644 = vadd.f32 %v4625, %v4643
        %4645 = vmatmul.bf16.gmra.mxu0 %v3610
        %v4646 = vpop.f32.mrf.mxu0
        %v4647 = vadd.f32 %v4628, %v4646
        %v4648 = vpop.f32.mrf.mxu0
        %v4649 = vadd.f32 %v4630, %v4648
        %4650 = vdwg.mxu0
        %4651 = vmatpush.bf16.msra.mxu0 %v4224
        %4652 = vmatpush.bf16.msra.mxu0 %v4220
        %4653 = vmatpush.bf16.msra.mxu0 %v4216
        %4654 = vmatpush.bf16.msra.mxu0 %v4212
        %4655 = vmatpush.bf16.msra.mxu0 %v4208
        %4656 = vmatpush.bf16.msra.mxu0 %v4204
        %4657 = vmatpush.bf16.msra.mxu0 %v4200
        %4658 = vmatpush.bf16.msra.mxu0 %v4196
        %4659 = vmatmul.bf16.gmra.mxu0 %v3607
        %v4660 = vpop.f32.mrf.mxu0
        %v4661 = vadd.f32 %v4642, %v4660
        %v4662 = vpop.f32.mrf.mxu0
        %v4663 = vadd.f32 %v4644, %v4662
        %4664 = vmatmul.bf16.gmra.mxu0 %v3611
        %v4665 = vpop.f32.mrf.mxu0
        %v4666 = vadd.f32 %v4647, %v4665
        %v4667 = vpop.f32.mrf.mxu0
        %v4668 = vadd.f32 %v4649, %v4667
        %4669 = vdwg.mxu0
        %4670 = vmatpush.bf16.msra.mxu0 %v4256
        %4671 = vmatpush.bf16.msra.mxu0 %v4252
        %4672 = vmatpush.bf16.msra.mxu0 %v4248
        %4673 = vmatpush.bf16.msra.mxu0 %v4244
        %4674 = vmatpush.bf16.msra.mxu0 %v4240
        %4675 = vmatpush.bf16.msra.mxu0 %v4236
        %4676 = vmatpush.bf16.msra.mxu0 %v4232
        %4677 = vmatpush.bf16.msra.mxu0 %v4228
        %4678 = vmatmul.bf16.gmra.mxu0 %v3608
        %v4679 = vpop.f32.mrf.mxu0
        %v4680 = vadd.f32 %v4661, %v4679
        %v4681 = vpop.f32.mrf.mxu0
        %v4682 = vadd.f32 %v4663, %v4681
        %4683 = vmatmul.bf16.gmra.mxu0 %v3612
        %v4684 = vpop.f32.mrf.mxu0
        %v4685 = vadd.f32 %v4666, %v4684
        %v4686 = vpop.f32.mrf.mxu0
        %v4687 = vadd.f32 %v4668, %v4686
        %4688 = vdwg.mxu0
        %v4689 = vmax.f32 %v4452, -100.0
        %v4690 = vmax.f32 %v4528, -100.0
        %v4691 = vmax.f32 %v4604, -100.0
        %v4692 = vmax.f32 %v4680, -100.0
        %v4693 = vmax.f32 %v4454, -100.0
        %v4694 = vmax.f32 %v4530, -100.0
        %v4695 = vmax.f32 %v4606, -100.0
        %v4696 = vmax.f32 %v4682, -100.0
        %v4697 = vmax.f32 %v4457, -100.0
        %v4698 = vmax.f32 %v4533, -100.0
        %v4699 = vmax.f32 %v4609, -100.0
        %v4700 = vmax.f32 %v4685, -100.0
        %v4701 = vmax.f32 %v4459, -100.0
        %v4702 = vmax.f32 %v4535, -100.0
        %v4703 = vmax.f32 %v4611, -100.0
        %v4704 = vmax.f32 %v4687, -100.0
        %v4705 = vmin.f32 %v4689, 100.0
        %v4706 = vmin.f32 %v4690, 100.0
        %v4707 = vmin.f32 %v4691, 100.0
        %v4708 = vmin.f32 %v4692, 100.0
        %v4709 = vmin.f32 %v4693, 100.0
        %v4710 = vmin.f32 %v4694, 100.0
        %v4711 = vmin.f32 %v4695, 100.0
        %v4712 = vmin.f32 %v4696, 100.0
        %v4713 = vmin.f32 %v4697, 100.0
        %v4714 = vmin.f32 %v4698, 100.0
        %v4715 = vmin.f32 %v4699, 100.0
        %v4716 = vmin.f32 %v4700, 100.0
        %v4717 = vmin.f32 %v4701, 100.0
        %v4718 = vmin.f32 %v4702, 100.0
        %v4719 = vmin.f32 %v4703, 100.0
        %v4720 = vmin.f32 %v4704, 100.0
        %v4721 = vadd.f32 %v968, %v4705
        %v4722 = vadd.f32 %v969, %v4706
        %v4723 = vadd.f32 %v970, %v4707
        %v4724 = vadd.f32 %v971, %v4708
        %v4725 = vadd.f32 %v972, %v4709
        %v4726 = vadd.f32 %v973, %v4710
        %v4727 = vadd.f32 %v974, %v4711
        %v4728 = vadd.f32 %v975, %v4712
        %v4729 = vadd.f32 %v976, %v4713
        %v4730 = vadd.f32 %v977, %v4714
        %v4731 = vadd.f32 %v978, %v4715
        %v4732 = vadd.f32 %v979, %v4716
        %v4733 = vadd.f32 %v980, %v4717
        %v4734 = vadd.f32 %v981, %v4718
        %v4735 = vadd.f32 %v982, %v4719
        %v4736 = vadd.f32 %v983, %v4720
        %v4737 = vmax.f32 %v4721, -100.0
        %v4738 = vmax.f32 %v4722, -100.0
        %v4739 = vmax.f32 %v4723, -100.0
        %v4740 = vmax.f32 %v4724, -100.0
        %v4741 = vmax.f32 %v4725, -100.0
        %v4742 = vmax.f32 %v4726, -100.0
        %v4743 = vmax.f32 %v4727, -100.0
        %v4744 = vmax.f32 %v4728, -100.0
        %v4745 = vmax.f32 %v4729, -100.0
        %v4746 = vmax.f32 %v4730, -100.0
        %v4747 = vmax.f32 %v4731, -100.0
        %v4748 = vmax.f32 %v4732, -100.0
        %v4749 = vmax.f32 %v4733, -100.0
        %v4750 = vmax.f32 %v4734, -100.0
        %v4751 = vmax.f32 %v4735, -100.0
        %v4752 = vmax.f32 %v4736, -100.0
        %v4753 = vmin.f32 %v4737, 100.0
        %v4754 = vmin.f32 %v4738, 100.0
        %v4755 = vmin.f32 %v4739, 100.0
        %v4756 = vmin.f32 %v4740, 100.0
        %v4757 = vmin.f32 %v4741, 100.0
        %v4758 = vmin.f32 %v4742, 100.0
        %v4759 = vmin.f32 %v4743, 100.0
        %v4760 = vmin.f32 %v4744, 100.0
        %v4761 = vmin.f32 %v4745, 100.0
        %v4762 = vmin.f32 %v4746, 100.0
        %v4763 = vmin.f32 %v4747, 100.0
        %v4764 = vmin.f32 %v4748, 100.0
        %v4765 = vmin.f32 %v4749, 100.0
        %v4766 = vmin.f32 %v4750, 100.0
        %v4767 = vmin.f32 %v4751, 100.0
        %v4768 = vmin.f32 %v4752, 100.0
        %v4769 = vadd.f32 %v4753, %v4754
        %v4770 = vadd.f32 %v4769, %v4755
        %v4771 = vadd.f32 %v4770, %v4756
        %4772 = vadd.xlane.f32.xlu0 %v4771
        %v4773 = vpop.xlane.xlu0 %4772
        %v4774 = vadd.f32 %v4757, %v4758
        %v4775 = vadd.f32 %v4774, %v4759
        %v4776 = vadd.f32 %v4775, %v4760
        %4777 = vadd.xlane.f32.xlu0 %v4776
        %v4778 = vpop.xlane.xlu0 %4777
        %v4779 = vadd.f32 %v4761, %v4762
        %v4780 = vadd.f32 %v4779, %v4763
        %v4781 = vadd.f32 %v4780, %v4764
        %4782 = vadd.xlane.f32.xlu0 %v4781
        %v4783 = vpop.xlane.xlu0 %4782
        %v4784 = vadd.f32 %v4765, %v4766
        %v4785 = vadd.f32 %v4784, %v4767
        %v4786 = vadd.f32 %v4785, %v4768
        %4787 = vadd.xlane.f32.xlu0 %v4786
        %v4788 = vpop.xlane.xlu0 %4787
        %v4789 = vmul.f32 %v4773, %v1017
        %v4790 = vmul.f32 %v4778, %v1017
        %v4791 = vmul.f32 %v4783, %v1017
        %v4792 = vmul.f32 %v4788, %v1017
        %v4793 = vsub.f32 %v4753, %v4789
        %v4794 = vsub.f32 %v4754, %v4789
        %v4795 = vsub.f32 %v4755, %v4789
        %v4796 = vsub.f32 %v4756, %v4789
        %v4797 = vsub.f32 %v4757, %v4790
        %v4798 = vsub.f32 %v4758, %v4790
        %v4799 = vsub.f32 %v4759, %v4790
        %v4800 = vsub.f32 %v4760, %v4790
        %v4801 = vsub.f32 %v4761, %v4791
        %v4802 = vsub.f32 %v4762, %v4791
        %v4803 = vsub.f32 %v4763, %v4791
        %v4804 = vsub.f32 %v4764, %v4791
        %v4805 = vsub.f32 %v4765, %v4792
        %v4806 = vsub.f32 %v4766, %v4792
        %v4807 = vsub.f32 %v4767, %v4792
        %v4808 = vsub.f32 %v4768, %v4792
        %v4809 = vmul.f32 %v4793, %v4793
        %v4810 = vmul.f32 %v4794, %v4794
        %v4811 = vmul.f32 %v4795, %v4795
        %v4812 = vmul.f32 %v4796, %v4796
        %v4813 = vmul.f32 %v4797, %v4797
        %v4814 = vmul.f32 %v4798, %v4798
        %v4815 = vmul.f32 %v4799, %v4799
        %v4816 = vmul.f32 %v4800, %v4800
        %v4817 = vmul.f32 %v4801, %v4801
        %v4818 = vmul.f32 %v4802, %v4802
        %v4819 = vmul.f32 %v4803, %v4803
        %v4820 = vmul.f32 %v4804, %v4804
        %v4821 = vmul.f32 %v4805, %v4805
        %v4822 = vmul.f32 %v4806, %v4806
        %v4823 = vmul.f32 %v4807, %v4807
        %v4824 = vmul.f32 %v4808, %v4808
        %v4825 = vadd.f32 %v4809, %v4810
        %v4826 = vadd.f32 %v4825, %v4811
        %v4827 = vadd.f32 %v4826, %v4812
        %4828 = vadd.xlane.f32.xlu0 %v4827
        %v4829 = vpop.xlane.xlu0 %4828
        %v4830 = vadd.f32 %v4813, %v4814
        %v4831 = vadd.f32 %v4830, %v4815
        %v4832 = vadd.f32 %v4831, %v4816
        %4833 = vadd.xlane.f32.xlu0 %v4832
        %v4834 = vpop.xlane.xlu0 %4833
        %v4835 = vadd.f32 %v4817, %v4818
        %v4836 = vadd.f32 %v4835, %v4819
        %v4837 = vadd.f32 %v4836, %v4820
        %4838 = vadd.xlane.f32.xlu0 %v4837
        %v4839 = vpop.xlane.xlu0 %4838
        %v4840 = vadd.f32 %v4821, %v4822
        %v4841 = vadd.f32 %v4840, %v4823
        %v4842 = vadd.f32 %v4841, %v4824
        %4843 = vadd.xlane.f32.xlu0 %v4842
        %v4844 = vpop.xlane.xlu0 %4843
        %v4845 = vmul.f32 %v4829, %v1017
        %v4846 = vmul.f32 %v4834, %v1017
        %v4847 = vmul.f32 %v4839, %v1017
        %v4848 = vmul.f32 %v4844, %v1017
        %v4849 = vadd.f32 %v4845, 0.0001
        %v4850 = vadd.f32 %v4846, 0.0001
        %v4851 = vadd.f32 %v4847, 0.0001
        %v4852 = vadd.f32 %v4848, 0.0001
        %v4853 = vrsqrt.pop %v4849
        %v4854 = vmul.f32 %v4853, %v4849
        %v4855 = vmul.f32 %v4854, %v4853
        %v4856 = vmul.f32 0.5, %v4855
        %v4857 = vsub.f32 1.5, %v4856
        %v4858 = vmul.f32 %v4853, %v4857
        %vm4859 = vweird.f32 %v4849
        %vm4860 = vweird.f32 %v4853
        %vm4861 = vmor %vm4859, %vm4860
        %v4862 = vsel %vm4861, %v4853, %v4858
        %v4863 = vrsqrt.pop %v4850
        %v4864 = vmul.f32 %v4863, %v4850
        %v4865 = vmul.f32 %v4864, %v4863
        %v4866 = vmul.f32 0.5, %v4865
        %v4867 = vsub.f32 1.5, %v4866
        %v4868 = vmul.f32 %v4863, %v4867
        %vm4869 = vweird.f32 %v4850
        %vm4870 = vweird.f32 %v4863
        %vm4871 = vmor %vm4869, %vm4870
        %v4872 = vsel %vm4871, %v4863, %v4868
        %v4873 = vrsqrt.pop %v4851
        %v4874 = vmul.f32 %v4873, %v4851
        %v4875 = vmul.f32 %v4874, %v4873
        %v4876 = vmul.f32 0.5, %v4875
        %v4877 = vsub.f32 1.5, %v4876
        %v4878 = vmul.f32 %v4873, %v4877
        %vm4879 = vweird.f32 %v4851
        %vm4880 = vweird.f32 %v4873
        %vm4881 = vmor %vm4879, %vm4880
        %v4882 = vsel %vm4881, %v4873, %v4878
        %v4883 = vrsqrt.pop %v4852
        %v4884 = vmul.f32 %v4883, %v4852
        %v4885 = vmul.f32 %v4884, %v4883
        %v4886 = vmul.f32 0.5, %v4885
        %v4887 = vsub.f32 1.5, %v4886
        %v4888 = vmul.f32 %v4883, %v4887
        %vm4889 = vweird.f32 %v4852
        %vm4890 = vweird.f32 %v4883
        %vm4891 = vmor %vm4889, %vm4890
        %v4892 = vsel %vm4891, %v4883, %v4888
        %v4893 = vmul.f32 %v4793, %v4862
        %v4894 = vmul.f32 %v4794, %v4862
        %v4895 = vmul.f32 %v4795, %v4862
        %v4896 = vmul.f32 %v4796, %v4862
        %v4897 = vmul.f32 %v4797, %v4872
        %v4898 = vmul.f32 %v4798, %v4872
        %v4899 = vmul.f32 %v4799, %v4872
        %v4900 = vmul.f32 %v4800, %v4872
        %v4901 = vmul.f32 %v4801, %v4882
        %v4902 = vmul.f32 %v4802, %v4882
        %v4903 = vmul.f32 %v4803, %v4882
        %v4904 = vmul.f32 %v4804, %v4882
        %v4905 = vmul.f32 %v4805, %v4892
        %v4906 = vmul.f32 %v4806, %v4892
        %v4907 = vmul.f32 %v4807, %v4892
        %v4908 = vmul.f32 %v4808, %v4892
        %v4909 = vperm.slane %v984, 2
        %v4910 = vperm.slane %v985, 2
        %v4911 = vperm.slane %v986, 2
        %v4912 = vperm.slane %v987, 2
        %v4913 = vmul.f32 %v4893, %v4909
        %v4914 = vmul.f32 %v4894, %v4910
        %v4915 = vmul.f32 %v4895, %v4911
        %v4916 = vmul.f32 %v4896, %v4912
        %v4917 = vmul.f32 %v4897, %v4909
        %v4918 = vmul.f32 %v4898, %v4910
        %v4919 = vmul.f32 %v4899, %v4911
        %v4920 = vmul.f32 %v4900, %v4912
        %v4921 = vmul.f32 %v4901, %v4909
        %v4922 = vmul.f32 %v4902, %v4910
        %v4923 = vmul.f32 %v4903, %v4911
        %v4924 = vmul.f32 %v4904, %v4912
        %v4925 = vmul.f32 %v4905, %v4909
        %v4926 = vmul.f32 %v4906, %v4910
        %v4927 = vmul.f32 %v4907, %v4911
        %v4928 = vmul.f32 %v4908, %v4912
        %v4929 = vperm.slane %v984, 3
        %v4930 = vperm.slane %v985, 3
        %v4931 = vperm.slane %v986, 3
        %v4932 = vperm.slane %v987, 3
        %v4933 = vadd.f32 %v4913, %v4929
        %v4934 = vadd.f32 %v4914, %v4930
        %v4935 = vadd.f32 %v4915, %v4931
        %v4936 = vadd.f32 %v4916, %v4932
        %v4937 = vadd.f32 %v4917, %v4929
        %v4938 = vadd.f32 %v4918, %v4930
        %v4939 = vadd.f32 %v4919, %v4931
        %v4940 = vadd.f32 %v4920, %v4932
        %v4941 = vadd.f32 %v4921, %v4929
        %v4942 = vadd.f32 %v4922, %v4930
        %v4943 = vadd.f32 %v4923, %v4931
        %v4944 = vadd.f32 %v4924, %v4932
        %v4945 = vadd.f32 %v4925, %v4929
        %v4946 = vadd.f32 %v4926, %v4930
        %v4947 = vadd.f32 %v4927, %v4931
        %v4948 = vadd.f32 %v4928, %v4932
        %v4949 = vpack.c.bf16 %v4937, %v4933
        %v4950 = vpack.c.bf16 %v4938, %v4934
        %v4951 = vpack.c.bf16 %v4939, %v4935
        %v4952 = vpack.c.bf16 %v4940, %v4936
        %v4953 = vpack.c.bf16 %v4945, %v4941
        %v4954 = vpack.c.bf16 %v4946, %v4942
        %v4955 = vpack.c.bf16 %v4947, %v4943
        %v4956 = vpack.c.bf16 %v4948, %v4944
        %v4957 = vld [vmem:[%s727] sm:$0xff]
        %v4958 = vld [vmem:[%s727 + $0x8] sm:$0xff]
        %v4959 = vld [vmem:[%s727 + $0x10] sm:$0xff]
        %v4960 = vld [vmem:[%s727 + $0x18] sm:$0xff]
        %v4961 = vld [vmem:[%s727 + $0x20] sm:$0xff]
        %v4962 = vld [vmem:[%s727 + $0x28] sm:$0xff]
        %v4963 = vld [vmem:[%s727 + $0x30] sm:$0xff]
        %v4964 = vld [vmem:[%s727 + $0x38] sm:$0xff]
        %v4965 = vld [vmem:[%s727 + $0x40] sm:$0xff]
        %v4966 = vld [vmem:[%s727 + $0x48] sm:$0xff]
        %v4967 = vld [vmem:[%s727 + $0x50] sm:$0xff]
        %v4968 = vld [vmem:[%s727 + $0x58] sm:$0xff]
        %v4969 = vld [vmem:[%s727 + $0x60] sm:$0xff]
        %v4970 = vld [vmem:[%s727 + $0x68] sm:$0xff]
        %v4971 = vld [vmem:[%s727 + $0x70] sm:$0xff]
        %v4972 = vld [vmem:[%s727 + $0x78] sm:$0xff]
        %v4973 = vld [vmem:[%s727 + $0x80] sm:$0xff]
        %v4974 = vld [vmem:[%s727 + $0x88] sm:$0xff]
        %v4975 = vld [vmem:[%s727 + $0x90] sm:$0xff]
        %v4976 = vld [vmem:[%s727 + $0x98] sm:$0xff]
        %v4977 = vld [vmem:[%s727 + $0xa0] sm:$0xff]
        %v4978 = vld [vmem:[%s727 + $0xa8] sm:$0xff]
        %v4979 = vld [vmem:[%s727 + $0xb0] sm:$0xff]
        %v4980 = vld [vmem:[%s727 + $0xb8] sm:$0xff]
        %v4981 = vld [vmem:[%s727 + $0xc0] sm:$0xff]
        %v4982 = vld [vmem:[%s727 + $0xc8] sm:$0xff]
        %v4983 = vld [vmem:[%s727 + $0xd0] sm:$0xff]
        %v4984 = vld [vmem:[%s727 + $0xd8] sm:$0xff]
        %v4985 = vld [vmem:[%s727 + $0xe0] sm:$0xff]
        %v4986 = vld [vmem:[%s727 + $0xe8] sm:$0xff]
        %v4987 = vld [vmem:[%s727 + $0xf0] sm:$0xff]
        %v4988 = vld [vmem:[%s727 + $0xf8] sm:$0xff]
        %v4989 = vld [vmem:[%s727 + $0x100] sm:$0xff]
        %v4990 = vld [vmem:[%s727 + $0x108] sm:$0xff]
        %v4991 = vld [vmem:[%s727 + $0x110] sm:$0xff]
        %v4992 = vld [vmem:[%s727 + $0x118] sm:$0xff]
        %v4993 = vld [vmem:[%s727 + $0x120] sm:$0xff]
        %v4994 = vld [vmem:[%s727 + $0x128] sm:$0xff]
        %v4995 = vld [vmem:[%s727 + $0x130] sm:$0xff]
        %v4996 = vld [vmem:[%s727 + $0x138] sm:$0xff]
        %v4997 = vld [vmem:[%s727 + $0x140] sm:$0xff]
        %v4998 = vld [vmem:[%s727 + $0x148] sm:$0xff]
        %v4999 = vld [vmem:[%s727 + $0x150] sm:$0xff]
        %v5000 = vld [vmem:[%s727 + $0x158] sm:$0xff]
        %v5001 = vld [vmem:[%s727 + $0x160] sm:$0xff]
        %v5002 = vld [vmem:[%s727 + $0x168] sm:$0xff]
        %v5003 = vld [vmem:[%s727 + $0x170] sm:$0xff]
        %v5004 = vld [vmem:[%s727 + $0x178] sm:$0xff]
        %v5005 = vld [vmem:[%s727 + $0x180] sm:$0xff]
        %v5006 = vld [vmem:[%s727 + $0x188] sm:$0xff]
        %v5007 = vld [vmem:[%s727 + $0x190] sm:$0xff]
        %v5008 = vld [vmem:[%s727 + $0x198] sm:$0xff]
        %v5009 = vld [vmem:[%s727 + $0x1a0] sm:$0xff]
        %v5010 = vld [vmem:[%s727 + $0x1a8] sm:$0xff]
        %v5011 = vld [vmem:[%s727 + $0x1b0] sm:$0xff]
        %v5012 = vld [vmem:[%s727 + $0x1b8] sm:$0xff]
        %v5013 = vld [vmem:[%s727 + $0x1c0] sm:$0xff]
        %v5014 = vld [vmem:[%s727 + $0x1c8] sm:$0xff]
        %v5015 = vld [vmem:[%s727 + $0x1d0] sm:$0xff]
        %v5016 = vld [vmem:[%s727 + $0x1d8] sm:$0xff]
        %v5017 = vld [vmem:[%s727 + $0x1e0] sm:$0xff]
        %v5018 = vld [vmem:[%s727 + $0x1e8] sm:$0xff]
        %v5019 = vld [vmem:[%s727 + $0x1f0] sm:$0xff]
        %v5020 = vld [vmem:[%s727 + $0x1f8] sm:$0xff]
        %v5021 = vld [vmem:[%s727 + $0x200] sm:$0xff]
        %v5022 = vld [vmem:[%s727 + $0x208] sm:$0xff]
        %v5023 = vld [vmem:[%s727 + $0x210] sm:$0xff]
        %v5024 = vld [vmem:[%s727 + $0x218] sm:$0xff]
        %v5025 = vld [vmem:[%s727 + $0x220] sm:$0xff]
        %v5026 = vld [vmem:[%s727 + $0x228] sm:$0xff]
        %v5027 = vld [vmem:[%s727 + $0x230] sm:$0xff]
        %v5028 = vld [vmem:[%s727 + $0x238] sm:$0xff]
        %v5029 = vld [vmem:[%s727 + $0x240] sm:$0xff]
        %v5030 = vld [vmem:[%s727 + $0x248] sm:$0xff]
        %v5031 = vld [vmem:[%s727 + $0x250] sm:$0xff]
        %v5032 = vld [vmem:[%s727 + $0x258] sm:$0xff]
        %v5033 = vld [vmem:[%s727 + $0x260] sm:$0xff]
        %v5034 = vld [vmem:[%s727 + $0x268] sm:$0xff]
        %v5035 = vld [vmem:[%s727 + $0x270] sm:$0xff]
        %v5036 = vld [vmem:[%s727 + $0x278] sm:$0xff]
        %v5037 = vld [vmem:[%s727 + $0x280] sm:$0xff]
        %v5038 = vld [vmem:[%s727 + $0x288] sm:$0xff]
        %v5039 = vld [vmem:[%s727 + $0x290] sm:$0xff]
        %v5040 = vld [vmem:[%s727 + $0x298] sm:$0xff]
        %v5041 = vld [vmem:[%s727 + $0x2a0] sm:$0xff]
        %v5042 = vld [vmem:[%s727 + $0x2a8] sm:$0xff]
        %v5043 = vld [vmem:[%s727 + $0x2b0] sm:$0xff]
        %v5044 = vld [vmem:[%s727 + $0x2b8] sm:$0xff]
        %v5045 = vld [vmem:[%s727 + $0x2c0] sm:$0xff]
        %v5046 = vld [vmem:[%s727 + $0x2c8] sm:$0xff]
        %v5047 = vld [vmem:[%s727 + $0x2d0] sm:$0xff]
        %v5048 = vld [vmem:[%s727 + $0x2d8] sm:$0xff]
        %v5049 = vld [vmem:[%s727 + $0x2e0] sm:$0xff]
        %v5050 = vld [vmem:[%s727 + $0x2e8] sm:$0xff]
        %v5051 = vld [vmem:[%s727 + $0x2f0] sm:$0xff]
        %v5052 = vld [vmem:[%s727 + $0x2f8] sm:$0xff]
        %v5053 = vld [vmem:[%s727 + $0x300] sm:$0xff]
        %v5054 = vld [vmem:[%s727 + $0x308] sm:$0xff]
        %v5055 = vld [vmem:[%s727 + $0x310] sm:$0xff]
        %v5056 = vld [vmem:[%s727 + $0x318] sm:$0xff]
        %v5057 = vld [vmem:[%s727 + $0x320] sm:$0xff]
        %v5058 = vld [vmem:[%s727 + $0x328] sm:$0xff]
        %v5059 = vld [vmem:[%s727 + $0x330] sm:$0xff]
        %v5060 = vld [vmem:[%s727 + $0x338] sm:$0xff]
        %v5061 = vld [vmem:[%s727 + $0x340] sm:$0xff]
        %v5062 = vld [vmem:[%s727 + $0x348] sm:$0xff]
        %v5063 = vld [vmem:[%s727 + $0x350] sm:$0xff]
        %v5064 = vld [vmem:[%s727 + $0x358] sm:$0xff]
        %v5065 = vld [vmem:[%s727 + $0x360] sm:$0xff]
        %v5066 = vld [vmem:[%s727 + $0x368] sm:$0xff]
        %v5067 = vld [vmem:[%s727 + $0x370] sm:$0xff]
        %v5068 = vld [vmem:[%s727 + $0x378] sm:$0xff]
        %v5069 = vld [vmem:[%s727 + $0x380] sm:$0xff]
        %v5070 = vld [vmem:[%s727 + $0x388] sm:$0xff]
        %v5071 = vld [vmem:[%s727 + $0x390] sm:$0xff]
        %v5072 = vld [vmem:[%s727 + $0x398] sm:$0xff]
        %v5073 = vld [vmem:[%s727 + $0x3a0] sm:$0xff]
        %v5074 = vld [vmem:[%s727 + $0x3a8] sm:$0xff]
        %v5075 = vld [vmem:[%s727 + $0x3b0] sm:$0xff]
        %v5076 = vld [vmem:[%s727 + $0x3b8] sm:$0xff]
        %v5077 = vld [vmem:[%s727 + $0x3c0] sm:$0xff]
        %v5078 = vld [vmem:[%s727 + $0x3c8] sm:$0xff]
        %v5079 = vld [vmem:[%s727 + $0x3d0] sm:$0xff]
        %v5080 = vld [vmem:[%s727 + $0x3d8] sm:$0xff]
        %v5081 = vld [vmem:[%s727 + $0x3e0] sm:$0xff]
        %v5082 = vld [vmem:[%s727 + $0x3e8] sm:$0xff]
        %v5083 = vld [vmem:[%s727 + $0x3f0] sm:$0xff]
        %v5084 = vld [vmem:[%s727 + $0x3f8] sm:$0xff]
        %v5085 = vld [vmem:[%s727 + $0x400] sm:$0xff]
        %v5086 = vld [vmem:[%s727 + $0x408] sm:$0xff]
        %v5087 = vld [vmem:[%s727 + $0x410] sm:$0xff]
        %v5088 = vld [vmem:[%s727 + $0x418] sm:$0xff]
        %v5089 = vld [vmem:[%s727 + $0x420] sm:$0xff]
        %v5090 = vld [vmem:[%s727 + $0x428] sm:$0xff]
        %v5091 = vld [vmem:[%s727 + $0x430] sm:$0xff]
        %v5092 = vld [vmem:[%s727 + $0x438] sm:$0xff]
        %v5093 = vld [vmem:[%s727 + $0x440] sm:$0xff]
        %v5094 = vld [vmem:[%s727 + $0x448] sm:$0xff]
        %v5095 = vld [vmem:[%s727 + $0x450] sm:$0xff]
        %v5096 = vld [vmem:[%s727 + $0x458] sm:$0xff]
        %v5097 = vld [vmem:[%s727 + $0x460] sm:$0xff]
        %v5098 = vld [vmem:[%s727 + $0x468] sm:$0xff]
        %v5099 = vld [vmem:[%s727 + $0x470] sm:$0xff]
        %v5100 = vld [vmem:[%s727 + $0x478] sm:$0xff]
        %v5101 = vld [vmem:[%s727 + $0x480] sm:$0xff]
        %v5102 = vld [vmem:[%s727 + $0x488] sm:$0xff]
        %v5103 = vld [vmem:[%s727 + $0x490] sm:$0xff]
        %v5104 = vld [vmem:[%s727 + $0x498] sm:$0xff]
        %v5105 = vld [vmem:[%s727 + $0x4a0] sm:$0xff]
        %v5106 = vld [vmem:[%s727 + $0x4a8] sm:$0xff]
        %v5107 = vld [vmem:[%s727 + $0x4b0] sm:$0xff]
        %v5108 = vld [vmem:[%s727 + $0x4b8] sm:$0xff]
        %v5109 = vld [vmem:[%s727 + $0x4c0] sm:$0xff]
        %v5110 = vld [vmem:[%s727 + $0x4c8] sm:$0xff]
        %v5111 = vld [vmem:[%s727 + $0x4d0] sm:$0xff]
        %v5112 = vld [vmem:[%s727 + $0x4d8] sm:$0xff]
        %v5113 = vld [vmem:[%s727 + $0x4e0] sm:$0xff]
        %v5114 = vld [vmem:[%s727 + $0x4e8] sm:$0xff]
        %v5115 = vld [vmem:[%s727 + $0x4f0] sm:$0xff]
        %v5116 = vld [vmem:[%s727 + $0x4f8] sm:$0xff]
        %v5117 = vld [vmem:[%s727 + $0x500] sm:$0xff]
        %v5118 = vld [vmem:[%s727 + $0x508] sm:$0xff]
        %v5119 = vld [vmem:[%s727 + $0x510] sm:$0xff]
        %v5120 = vld [vmem:[%s727 + $0x518] sm:$0xff]
        %v5121 = vld [vmem:[%s727 + $0x520] sm:$0xff]
        %v5122 = vld [vmem:[%s727 + $0x528] sm:$0xff]
        %v5123 = vld [vmem:[%s727 + $0x530] sm:$0xff]
        %v5124 = vld [vmem:[%s727 + $0x538] sm:$0xff]
        %v5125 = vld [vmem:[%s727 + $0x540] sm:$0xff]
        %v5126 = vld [vmem:[%s727 + $0x548] sm:$0xff]
        %v5127 = vld [vmem:[%s727 + $0x550] sm:$0xff]
        %v5128 = vld [vmem:[%s727 + $0x558] sm:$0xff]
        %v5129 = vld [vmem:[%s727 + $0x560] sm:$0xff]
        %v5130 = vld [vmem:[%s727 + $0x568] sm:$0xff]
        %v5131 = vld [vmem:[%s727 + $0x570] sm:$0xff]
        %v5132 = vld [vmem:[%s727 + $0x578] sm:$0xff]
        %v5133 = vld [vmem:[%s727 + $0x580] sm:$0xff]
        %v5134 = vld [vmem:[%s727 + $0x588] sm:$0xff]
        %v5135 = vld [vmem:[%s727 + $0x590] sm:$0xff]
        %v5136 = vld [vmem:[%s727 + $0x598] sm:$0xff]
        %v5137 = vld [vmem:[%s727 + $0x5a0] sm:$0xff]
        %v5138 = vld [vmem:[%s727 + $0x5a8] sm:$0xff]
        %v5139 = vld [vmem:[%s727 + $0x5b0] sm:$0xff]
        %v5140 = vld [vmem:[%s727 + $0x5b8] sm:$0xff]
        %v5141 = vld [vmem:[%s727 + $0x5c0] sm:$0xff]
        %v5142 = vld [vmem:[%s727 + $0x5c8] sm:$0xff]
        %v5143 = vld [vmem:[%s727 + $0x5d0] sm:$0xff]
        %v5144 = vld [vmem:[%s727 + $0x5d8] sm:$0xff]
        %v5145 = vld [vmem:[%s727 + $0x5e0] sm:$0xff]
        %v5146 = vld [vmem:[%s727 + $0x5e8] sm:$0xff]
        %v5147 = vld [vmem:[%s727 + $0x5f0] sm:$0xff]
        %v5148 = vld [vmem:[%s727 + $0x5f8] sm:$0xff]
        %v5149 = vld [vmem:[%s727 + $0x600] sm:$0xff]
        %v5150 = vld [vmem:[%s727 + $0x608] sm:$0xff]
        %v5151 = vld [vmem:[%s727 + $0x610] sm:$0xff]
        %v5152 = vld [vmem:[%s727 + $0x618] sm:$0xff]
        %v5153 = vld [vmem:[%s727 + $0x620] sm:$0xff]
        %v5154 = vld [vmem:[%s727 + $0x628] sm:$0xff]
        %v5155 = vld [vmem:[%s727 + $0x630] sm:$0xff]
        %v5156 = vld [vmem:[%s727 + $0x638] sm:$0xff]
        %v5157 = vld [vmem:[%s727 + $0x640] sm:$0xff]
        %v5158 = vld [vmem:[%s727 + $0x648] sm:$0xff]
        %v5159 = vld [vmem:[%s727 + $0x650] sm:$0xff]
        %v5160 = vld [vmem:[%s727 + $0x658] sm:$0xff]
        %v5161 = vld [vmem:[%s727 + $0x660] sm:$0xff]
        %v5162 = vld [vmem:[%s727 + $0x668] sm:$0xff]
        %v5163 = vld [vmem:[%s727 + $0x670] sm:$0xff]
        %v5164 = vld [vmem:[%s727 + $0x678] sm:$0xff]
        %v5165 = vld [vmem:[%s727 + $0x680] sm:$0xff]
        %v5166 = vld [vmem:[%s727 + $0x688] sm:$0xff]
        %v5167 = vld [vmem:[%s727 + $0x690] sm:$0xff]
        %v5168 = vld [vmem:[%s727 + $0x698] sm:$0xff]
        %v5169 = vld [vmem:[%s727 + $0x6a0] sm:$0xff]
        %v5170 = vld [vmem:[%s727 + $0x6a8] sm:$0xff]
        %v5171 = vld [vmem:[%s727 + $0x6b0] sm:$0xff]
        %v5172 = vld [vmem:[%s727 + $0x6b8] sm:$0xff]
        %v5173 = vld [vmem:[%s727 + $0x6c0] sm:$0xff]
        %v5174 = vld [vmem:[%s727 + $0x6c8] sm:$0xff]
        %v5175 = vld [vmem:[%s727 + $0x6d0] sm:$0xff]
        %v5176 = vld [vmem:[%s727 + $0x6d8] sm:$0xff]
        %v5177 = vld [vmem:[%s727 + $0x6e0] sm:$0xff]
        %v5178 = vld [vmem:[%s727 + $0x6e8] sm:$0xff]
        %v5179 = vld [vmem:[%s727 + $0x6f0] sm:$0xff]
        %v5180 = vld [vmem:[%s727 + $0x6f8] sm:$0xff]
        %v5181 = vld [vmem:[%s727 + $0x700] sm:$0xff]
        %v5182 = vld [vmem:[%s727 + $0x708] sm:$0xff]
        %v5183 = vld [vmem:[%s727 + $0x710] sm:$0xff]
        %v5184 = vld [vmem:[%s727 + $0x718] sm:$0xff]
        %v5185 = vld [vmem:[%s727 + $0x720] sm:$0xff]
        %v5186 = vld [vmem:[%s727 + $0x728] sm:$0xff]
        %v5187 = vld [vmem:[%s727 + $0x730] sm:$0xff]
        %v5188 = vld [vmem:[%s727 + $0x738] sm:$0xff]
        %v5189 = vld [vmem:[%s727 + $0x740] sm:$0xff]
        %v5190 = vld [vmem:[%s727 + $0x748] sm:$0xff]
        %v5191 = vld [vmem:[%s727 + $0x750] sm:$0xff]
        %v5192 = vld [vmem:[%s727 + $0x758] sm:$0xff]
        %v5193 = vld [vmem:[%s727 + $0x760] sm:$0xff]
        %v5194 = vld [vmem:[%s727 + $0x768] sm:$0xff]
        %v5195 = vld [vmem:[%s727 + $0x770] sm:$0xff]
        %v5196 = vld [vmem:[%s727 + $0x778] sm:$0xff]
        %v5197 = vld [vmem:[%s727 + $0x780] sm:$0xff]
        %v5198 = vld [vmem:[%s727 + $0x788] sm:$0xff]
        %v5199 = vld [vmem:[%s727 + $0x790] sm:$0xff]
        %v5200 = vld [vmem:[%s727 + $0x798] sm:$0xff]
        %v5201 = vld [vmem:[%s727 + $0x7a0] sm:$0xff]
        %v5202 = vld [vmem:[%s727 + $0x7a8] sm:$0xff]
        %v5203 = vld [vmem:[%s727 + $0x7b0] sm:$0xff]
        %v5204 = vld [vmem:[%s727 + $0x7b8] sm:$0xff]
        %v5205 = vld [vmem:[%s727 + $0x7c0] sm:$0xff]
        %v5206 = vld [vmem:[%s727 + $0x7c8] sm:$0xff]
        %v5207 = vld [vmem:[%s727 + $0x7d0] sm:$0xff]
        %v5208 = vld [vmem:[%s727 + $0x7d8] sm:$0xff]
        %v5209 = vld [vmem:[%s727 + $0x7e0] sm:$0xff]
        %v5210 = vld [vmem:[%s727 + $0x7e8] sm:$0xff]
        %v5211 = vld [vmem:[%s727 + $0x7f0] sm:$0xff]
        %v5212 = vld [vmem:[%s727 + $0x7f8] sm:$0xff]
        %v5215 = vperm.slane %v989, 0
        %v5216 = vperm.slane %v989, 2
        %v5217 = vperm.slane %v989, 4
        %v5218 = vperm.slane %v989, 6
        %v5219 = vperm.slane %v990, 0
        %v5220 = vperm.slane %v990, 2
        %v5221 = vperm.slane %v990, 4
        %v5222 = vperm.slane %v990, 6
        %v5231 = vperm.slane %v5215, 0
        %v5232 = vperm.slane %v5216, 0
        %v5233 = vperm.slane %v5217, 0
        %v5234 = vperm.slane %v5218, 0
        %v5235 = vperm.slane %v5219, 0
        %v5236 = vperm.slane %v5220, 0
        %v5237 = vperm.slane %v5221, 0
        %v5238 = vperm.slane %v5222, 0
        %v5495 = vunpack.c.l.b16 %v4957
        %v5496 = vunpack.c.h.b16 %v4957
        %v5497 = vunpack.c.l.b16 %v4958
        %v5498 = vunpack.c.h.b16 %v4958
        %v5499 = vunpack.c.l.b16 %v4959
        %v5500 = vunpack.c.h.b16 %v4959
        %v5501 = vunpack.c.l.b16 %v4960
        %v5502 = vunpack.c.h.b16 %v4960
        %v5503 = vunpack.c.l.b16 %v4961
        %v5504 = vunpack.c.h.b16 %v4961
        %v5505 = vunpack.c.l.b16 %v4962
        %v5506 = vunpack.c.h.b16 %v4962
        %v5507 = vunpack.c.l.b16 %v4963
        %v5508 = vunpack.c.h.b16 %v4963
        %v5509 = vunpack.c.l.b16 %v4964
        %v5510 = vunpack.c.h.b16 %v4964
        %v5511 = vunpack.c.l.b16 %v4965
        %v5512 = vunpack.c.h.b16 %v4965
        %v5513 = vunpack.c.l.b16 %v4966
        %v5514 = vunpack.c.h.b16 %v4966
        %v5515 = vunpack.c.l.b16 %v4967
        %v5516 = vunpack.c.h.b16 %v4967
        %v5517 = vunpack.c.l.b16 %v4968
        %v5518 = vunpack.c.h.b16 %v4968
        %v5519 = vunpack.c.l.b16 %v4969
        %v5520 = vunpack.c.h.b16 %v4969
        %v5521 = vunpack.c.l.b16 %v4970
        %v5522 = vunpack.c.h.b16 %v4970
        %v5523 = vunpack.c.l.b16 %v4971
        %v5524 = vunpack.c.h.b16 %v4971
        %v5525 = vunpack.c.l.b16 %v4972
        %v5526 = vunpack.c.h.b16 %v4972
        %v5527 = vunpack.c.l.b16 %v4973
        %v5528 = vunpack.c.h.b16 %v4973
        %v5529 = vunpack.c.l.b16 %v4974
        %v5530 = vunpack.c.h.b16 %v4974
        %v5531 = vunpack.c.l.b16 %v4975
        %v5532 = vunpack.c.h.b16 %v4975
        %v5533 = vunpack.c.l.b16 %v4976
        %v5534 = vunpack.c.h.b16 %v4976
        %v5535 = vunpack.c.l.b16 %v4977
        %v5536 = vunpack.c.h.b16 %v4977
        %v5537 = vunpack.c.l.b16 %v4978
        %v5538 = vunpack.c.h.b16 %v4978
        %v5539 = vunpack.c.l.b16 %v4979
        %v5540 = vunpack.c.h.b16 %v4979
        %v5541 = vunpack.c.l.b16 %v4980
        %v5542 = vunpack.c.h.b16 %v4980
        %v5543 = vunpack.c.l.b16 %v4981
        %v5544 = vunpack.c.h.b16 %v4981
        %v5545 = vunpack.c.l.b16 %v4982
        %v5546 = vunpack.c.h.b16 %v4982
        %v5547 = vunpack.c.l.b16 %v4983
        %v5548 = vunpack.c.h.b16 %v4983
        %v5549 = vunpack.c.l.b16 %v4984
        %v5550 = vunpack.c.h.b16 %v4984
        %v5551 = vunpack.c.l.b16 %v4985
        %v5552 = vunpack.c.h.b16 %v4985
        %v5553 = vunpack.c.l.b16 %v4986
        %v5554 = vunpack.c.h.b16 %v4986
        %v5555 = vunpack.c.l.b16 %v4987
        %v5556 = vunpack.c.h.b16 %v4987
        %v5557 = vunpack.c.l.b16 %v4988
        %v5558 = vunpack.c.h.b16 %v4988
        %v5559 = vunpack.c.l.b16 %v4989
        %v5560 = vunpack.c.h.b16 %v4989
        %v5561 = vunpack.c.l.b16 %v4990
        %v5562 = vunpack.c.h.b16 %v4990
        %v5563 = vunpack.c.l.b16 %v4991
        %v5564 = vunpack.c.h.b16 %v4991
        %v5565 = vunpack.c.l.b16 %v4992
        %v5566 = vunpack.c.h.b16 %v4992
        %v5567 = vunpack.c.l.b16 %v4993
        %v5568 = vunpack.c.h.b16 %v4993
        %v5569 = vunpack.c.l.b16 %v4994
        %v5570 = vunpack.c.h.b16 %v4994
        %v5571 = vunpack.c.l.b16 %v4995
        %v5572 = vunpack.c.h.b16 %v4995
        %v5573 = vunpack.c.l.b16 %v4996
        %v5574 = vunpack.c.h.b16 %v4996
        %v5575 = vunpack.c.l.b16 %v4997
        %v5576 = vunpack.c.h.b16 %v4997
        %v5577 = vunpack.c.l.b16 %v4998
        %v5578 = vunpack.c.h.b16 %v4998
        %v5579 = vunpack.c.l.b16 %v4999
        %v5580 = vunpack.c.h.b16 %v4999
        %v5581 = vunpack.c.l.b16 %v5000
        %v5582 = vunpack.c.h.b16 %v5000
        %v5583 = vunpack.c.l.b16 %v5001
        %v5584 = vunpack.c.h.b16 %v5001
        %v5585 = vunpack.c.l.b16 %v5002
        %v5586 = vunpack.c.h.b16 %v5002
        %v5587 = vunpack.c.l.b16 %v5003
        %v5588 = vunpack.c.h.b16 %v5003
        %v5589 = vunpack.c.l.b16 %v5004
        %v5590 = vunpack.c.h.b16 %v5004
        %v5591 = vunpack.c.l.b16 %v5005
        %v5592 = vunpack.c.h.b16 %v5005
        %v5593 = vunpack.c.l.b16 %v5006
        %v5594 = vunpack.c.h.b16 %v5006
        %v5595 = vunpack.c.l.b16 %v5007
        %v5596 = vunpack.c.h.b16 %v5007
        %v5597 = vunpack.c.l.b16 %v5008
        %v5598 = vunpack.c.h.b16 %v5008
        %v5599 = vunpack.c.l.b16 %v5009
        %v5600 = vunpack.c.h.b16 %v5009
        %v5601 = vunpack.c.l.b16 %v5010
        %v5602 = vunpack.c.h.b16 %v5010
        %v5603 = vunpack.c.l.b16 %v5011
        %v5604 = vunpack.c.h.b16 %v5011
        %v5605 = vunpack.c.l.b16 %v5012
        %v5606 = vunpack.c.h.b16 %v5012
        %v5607 = vunpack.c.l.b16 %v5013
        %v5608 = vunpack.c.h.b16 %v5013
        %v5609 = vunpack.c.l.b16 %v5014
        %v5610 = vunpack.c.h.b16 %v5014
        %v5611 = vunpack.c.l.b16 %v5015
        %v5612 = vunpack.c.h.b16 %v5015
        %v5613 = vunpack.c.l.b16 %v5016
        %v5614 = vunpack.c.h.b16 %v5016
        %v5615 = vunpack.c.l.b16 %v5017
        %v5616 = vunpack.c.h.b16 %v5017
        %v5617 = vunpack.c.l.b16 %v5018
        %v5618 = vunpack.c.h.b16 %v5018
        %v5619 = vunpack.c.l.b16 %v5019
        %v5620 = vunpack.c.h.b16 %v5019
        %v5621 = vunpack.c.l.b16 %v5020
        %v5622 = vunpack.c.h.b16 %v5020
        %v5623 = vunpack.c.l.b16 %v5021
        %v5624 = vunpack.c.h.b16 %v5021
        %v5625 = vunpack.c.l.b16 %v5022
        %v5626 = vunpack.c.h.b16 %v5022
        %v5627 = vunpack.c.l.b16 %v5023
        %v5628 = vunpack.c.h.b16 %v5023
        %v5629 = vunpack.c.l.b16 %v5024
        %v5630 = vunpack.c.h.b16 %v5024
        %v5631 = vunpack.c.l.b16 %v5025
        %v5632 = vunpack.c.h.b16 %v5025
        %v5633 = vunpack.c.l.b16 %v5026
        %v5634 = vunpack.c.h.b16 %v5026
        %v5635 = vunpack.c.l.b16 %v5027
        %v5636 = vunpack.c.h.b16 %v5027
        %v5637 = vunpack.c.l.b16 %v5028
        %v5638 = vunpack.c.h.b16 %v5028
        %v5639 = vunpack.c.l.b16 %v5029
        %v5640 = vunpack.c.h.b16 %v5029
        %v5641 = vunpack.c.l.b16 %v5030
        %v5642 = vunpack.c.h.b16 %v5030
        %v5643 = vunpack.c.l.b16 %v5031
        %v5644 = vunpack.c.h.b16 %v5031
        %v5645 = vunpack.c.l.b16 %v5032
        %v5646 = vunpack.c.h.b16 %v5032
        %v5647 = vunpack.c.l.b16 %v5033
        %v5648 = vunpack.c.h.b16 %v5033
        %v5649 = vunpack.c.l.b16 %v5034
        %v5650 = vunpack.c.h.b16 %v5034
        %v5651 = vunpack.c.l.b16 %v5035
        %v5652 = vunpack.c.h.b16 %v5035
        %v5653 = vunpack.c.l.b16 %v5036
        %v5654 = vunpack.c.h.b16 %v5036
        %v5655 = vunpack.c.l.b16 %v5037
        %v5656 = vunpack.c.h.b16 %v5037
        %v5657 = vunpack.c.l.b16 %v5038
        %v5658 = vunpack.c.h.b16 %v5038
        %v5659 = vunpack.c.l.b16 %v5039
        %v5660 = vunpack.c.h.b16 %v5039
        %v5661 = vunpack.c.l.b16 %v5040
        %v5662 = vunpack.c.h.b16 %v5040
        %v5663 = vunpack.c.l.b16 %v5041
        %v5664 = vunpack.c.h.b16 %v5041
        %v5665 = vunpack.c.l.b16 %v5042
        %v5666 = vunpack.c.h.b16 %v5042
        %v5667 = vunpack.c.l.b16 %v5043
        %v5668 = vunpack.c.h.b16 %v5043
        %v5669 = vunpack.c.l.b16 %v5044
        %v5670 = vunpack.c.h.b16 %v5044
        %v5671 = vunpack.c.l.b16 %v5045
        %v5672 = vunpack.c.h.b16 %v5045
        %v5673 = vunpack.c.l.b16 %v5046
        %v5674 = vunpack.c.h.b16 %v5046
        %v5675 = vunpack.c.l.b16 %v5047
        %v5676 = vunpack.c.h.b16 %v5047
        %v5677 = vunpack.c.l.b16 %v5048
        %v5678 = vunpack.c.h.b16 %v5048
        %v5679 = vunpack.c.l.b16 %v5049
        %v5680 = vunpack.c.h.b16 %v5049
        %v5681 = vunpack.c.l.b16 %v5050
        %v5682 = vunpack.c.h.b16 %v5050
        %v5683 = vunpack.c.l.b16 %v5051
        %v5684 = vunpack.c.h.b16 %v5051
        %v5685 = vunpack.c.l.b16 %v5052
        %v5686 = vunpack.c.h.b16 %v5052
        %v5687 = vunpack.c.l.b16 %v5053
        %v5688 = vunpack.c.h.b16 %v5053
        %v5689 = vunpack.c.l.b16 %v5054
        %v5690 = vunpack.c.h.b16 %v5054
        %v5691 = vunpack.c.l.b16 %v5055
        %v5692 = vunpack.c.h.b16 %v5055
        %v5693 = vunpack.c.l.b16 %v5056
        %v5694 = vunpack.c.h.b16 %v5056
        %v5695 = vunpack.c.l.b16 %v5057
        %v5696 = vunpack.c.h.b16 %v5057
        %v5697 = vunpack.c.l.b16 %v5058
        %v5698 = vunpack.c.h.b16 %v5058
        %v5699 = vunpack.c.l.b16 %v5059
        %v5700 = vunpack.c.h.b16 %v5059
        %v5701 = vunpack.c.l.b16 %v5060
        %v5702 = vunpack.c.h.b16 %v5060
        %v5703 = vunpack.c.l.b16 %v5061
        %v5704 = vunpack.c.h.b16 %v5061
        %v5705 = vunpack.c.l.b16 %v5062
        %v5706 = vunpack.c.h.b16 %v5062
        %v5707 = vunpack.c.l.b16 %v5063
        %v5708 = vunpack.c.h.b16 %v5063
        %v5709 = vunpack.c.l.b16 %v5064
        %v5710 = vunpack.c.h.b16 %v5064
        %v5711 = vunpack.c.l.b16 %v5065
        %v5712 = vunpack.c.h.b16 %v5065
        %v5713 = vunpack.c.l.b16 %v5066
        %v5714 = vunpack.c.h.b16 %v5066
        %v5715 = vunpack.c.l.b16 %v5067
        %v5716 = vunpack.c.h.b16 %v5067
        %v5717 = vunpack.c.l.b16 %v5068
        %v5718 = vunpack.c.h.b16 %v5068
        %v5719 = vunpack.c.l.b16 %v5069
        %v5720 = vunpack.c.h.b16 %v5069
        %v5721 = vunpack.c.l.b16 %v5070
        %v5722 = vunpack.c.h.b16 %v5070
        %v5723 = vunpack.c.l.b16 %v5071
        %v5724 = vunpack.c.h.b16 %v5071
        %v5725 = vunpack.c.l.b16 %v5072
        %v5726 = vunpack.c.h.b16 %v5072
        %v5727 = vunpack.c.l.b16 %v5073
        %v5728 = vunpack.c.h.b16 %v5073
        %v5729 = vunpack.c.l.b16 %v5074
        %v5730 = vunpack.c.h.b16 %v5074
        %v5731 = vunpack.c.l.b16 %v5075
        %v5732 = vunpack.c.h.b16 %v5075
        %v5733 = vunpack.c.l.b16 %v5076
        %v5734 = vunpack.c.h.b16 %v5076
        %v5735 = vunpack.c.l.b16 %v5077
        %v5736 = vunpack.c.h.b16 %v5077
        %v5737 = vunpack.c.l.b16 %v5078
        %v5738 = vunpack.c.h.b16 %v5078
        %v5739 = vunpack.c.l.b16 %v5079
        %v5740 = vunpack.c.h.b16 %v5079
        %v5741 = vunpack.c.l.b16 %v5080
        %v5742 = vunpack.c.h.b16 %v5080
        %v5743 = vunpack.c.l.b16 %v5081
        %v5744 = vunpack.c.h.b16 %v5081
        %v5745 = vunpack.c.l.b16 %v5082
        %v5746 = vunpack.c.h.b16 %v5082
        %v5747 = vunpack.c.l.b16 %v5083
        %v5748 = vunpack.c.h.b16 %v5083
        %v5749 = vunpack.c.l.b16 %v5084
        %v5750 = vunpack.c.h.b16 %v5084
        %v5751 = vunpack.c.l.b16 %v5085
        %v5752 = vunpack.c.h.b16 %v5085
        %v5753 = vunpack.c.l.b16 %v5086
        %v5754 = vunpack.c.h.b16 %v5086
        %v5755 = vunpack.c.l.b16 %v5087
        %v5756 = vunpack.c.h.b16 %v5087
        %v5757 = vunpack.c.l.b16 %v5088
        %v5758 = vunpack.c.h.b16 %v5088
        %v5759 = vunpack.c.l.b16 %v5089
        %v5760 = vunpack.c.h.b16 %v5089
        %v5761 = vunpack.c.l.b16 %v5090
        %v5762 = vunpack.c.h.b16 %v5090
        %v5763 = vunpack.c.l.b16 %v5091
        %v5764 = vunpack.c.h.b16 %v5091
        %v5765 = vunpack.c.l.b16 %v5092
        %v5766 = vunpack.c.h.b16 %v5092
        %v5767 = vunpack.c.l.b16 %v5093
        %v5768 = vunpack.c.h.b16 %v5093
        %v5769 = vunpack.c.l.b16 %v5094
        %v5770 = vunpack.c.h.b16 %v5094
        %v5771 = vunpack.c.l.b16 %v5095
        %v5772 = vunpack.c.h.b16 %v5095
        %v5773 = vunpack.c.l.b16 %v5096
        %v5774 = vunpack.c.h.b16 %v5096
        %v5775 = vunpack.c.l.b16 %v5097
        %v5776 = vunpack.c.h.b16 %v5097
        %v5777 = vunpack.c.l.b16 %v5098
        %v5778 = vunpack.c.h.b16 %v5098
        %v5779 = vunpack.c.l.b16 %v5099
        %v5780 = vunpack.c.h.b16 %v5099
        %v5781 = vunpack.c.l.b16 %v5100
        %v5782 = vunpack.c.h.b16 %v5100
        %v5783 = vunpack.c.l.b16 %v5101
        %v5784 = vunpack.c.h.b16 %v5101
        %v5785 = vunpack.c.l.b16 %v5102
        %v5786 = vunpack.c.h.b16 %v5102
        %v5787 = vunpack.c.l.b16 %v5103
        %v5788 = vunpack.c.h.b16 %v5103
        %v5789 = vunpack.c.l.b16 %v5104
        %v5790 = vunpack.c.h.b16 %v5104
        %v5791 = vunpack.c.l.b16 %v5105
        %v5792 = vunpack.c.h.b16 %v5105
        %v5793 = vunpack.c.l.b16 %v5106
        %v5794 = vunpack.c.h.b16 %v5106
        %v5795 = vunpack.c.l.b16 %v5107
        %v5796 = vunpack.c.h.b16 %v5107
        %v5797 = vunpack.c.l.b16 %v5108
        %v5798 = vunpack.c.h.b16 %v5108
        %v5799 = vunpack.c.l.b16 %v5109
        %v5800 = vunpack.c.h.b16 %v5109
        %v5801 = vunpack.c.l.b16 %v5110
        %v5802 = vunpack.c.h.b16 %v5110
        %v5803 = vunpack.c.l.b16 %v5111
        %v5804 = vunpack.c.h.b16 %v5111
        %v5805 = vunpack.c.l.b16 %v5112
        %v5806 = vunpack.c.h.b16 %v5112
        %v5807 = vunpack.c.l.b16 %v5113
        %v5808 = vunpack.c.h.b16 %v5113
        %v5809 = vunpack.c.l.b16 %v5114
        %v5810 = vunpack.c.h.b16 %v5114
        %v5811 = vunpack.c.l.b16 %v5115
        %v5812 = vunpack.c.h.b16 %v5115
        %v5813 = vunpack.c.l.b16 %v5116
        %v5814 = vunpack.c.h.b16 %v5116
        %v5815 = vunpack.c.l.b16 %v5117
        %v5816 = vunpack.c.h.b16 %v5117
        %v5817 = vunpack.c.l.b16 %v5118
        %v5818 = vunpack.c.h.b16 %v5118
        %v5819 = vunpack.c.l.b16 %v5119
        %v5820 = vunpack.c.h.b16 %v5119
        %v5821 = vunpack.c.l.b16 %v5120
        %v5822 = vunpack.c.h.b16 %v5120
        %v5823 = vunpack.c.l.b16 %v5121
        %v5824 = vunpack.c.h.b16 %v5121
        %v5825 = vunpack.c.l.b16 %v5122
        %v5826 = vunpack.c.h.b16 %v5122
        %v5827 = vunpack.c.l.b16 %v5123
        %v5828 = vunpack.c.h.b16 %v5123
        %v5829 = vunpack.c.l.b16 %v5124
        %v5830 = vunpack.c.h.b16 %v5124
        %v5831 = vunpack.c.l.b16 %v5125
        %v5832 = vunpack.c.h.b16 %v5125
        %v5833 = vunpack.c.l.b16 %v5126
        %v5834 = vunpack.c.h.b16 %v5126
        %v5835 = vunpack.c.l.b16 %v5127
        %v5836 = vunpack.c.h.b16 %v5127
        %v5837 = vunpack.c.l.b16 %v5128
        %v5838 = vunpack.c.h.b16 %v5128
        %v5839 = vunpack.c.l.b16 %v5129
        %v5840 = vunpack.c.h.b16 %v5129
        %v5841 = vunpack.c.l.b16 %v5130
        %v5842 = vunpack.c.h.b16 %v5130
        %v5843 = vunpack.c.l.b16 %v5131
        %v5844 = vunpack.c.h.b16 %v5131
        %v5845 = vunpack.c.l.b16 %v5132
        %v5846 = vunpack.c.h.b16 %v5132
        %v5847 = vunpack.c.l.b16 %v5133
        %v5848 = vunpack.c.h.b16 %v5133
        %v5849 = vunpack.c.l.b16 %v5134
        %v5850 = vunpack.c.h.b16 %v5134
        %v5851 = vunpack.c.l.b16 %v5135
        %v5852 = vunpack.c.h.b16 %v5135
        %v5853 = vunpack.c.l.b16 %v5136
        %v5854 = vunpack.c.h.b16 %v5136
        %v5855 = vunpack.c.l.b16 %v5137
        %v5856 = vunpack.c.h.b16 %v5137
        %v5857 = vunpack.c.l.b16 %v5138
        %v5858 = vunpack.c.h.b16 %v5138
        %v5859 = vunpack.c.l.b16 %v5139
        %v5860 = vunpack.c.h.b16 %v5139
        %v5861 = vunpack.c.l.b16 %v5140
        %v5862 = vunpack.c.h.b16 %v5140
        %v5863 = vunpack.c.l.b16 %v5141
        %v5864 = vunpack.c.h.b16 %v5141
        %v5865 = vunpack.c.l.b16 %v5142
        %v5866 = vunpack.c.h.b16 %v5142
        %v5867 = vunpack.c.l.b16 %v5143
        %v5868 = vunpack.c.h.b16 %v5143
        %v5869 = vunpack.c.l.b16 %v5144
        %v5870 = vunpack.c.h.b16 %v5144
        %v5871 = vunpack.c.l.b16 %v5145
        %v5872 = vunpack.c.h.b16 %v5145
        %v5873 = vunpack.c.l.b16 %v5146
        %v5874 = vunpack.c.h.b16 %v5146
        %v5875 = vunpack.c.l.b16 %v5147
        %v5876 = vunpack.c.h.b16 %v5147
        %v5877 = vunpack.c.l.b16 %v5148
        %v5878 = vunpack.c.h.b16 %v5148
        %v5879 = vunpack.c.l.b16 %v5149
        %v5880 = vunpack.c.h.b16 %v5149
        %v5881 = vunpack.c.l.b16 %v5150
        %v5882 = vunpack.c.h.b16 %v5150
        %v5883 = vunpack.c.l.b16 %v5151
        %v5884 = vunpack.c.h.b16 %v5151
        %v5885 = vunpack.c.l.b16 %v5152
        %v5886 = vunpack.c.h.b16 %v5152
        %v5887 = vunpack.c.l.b16 %v5153
        %v5888 = vunpack.c.h.b16 %v5153
        %v5889 = vunpack.c.l.b16 %v5154
        %v5890 = vunpack.c.h.b16 %v5154
        %v5891 = vunpack.c.l.b16 %v5155
        %v5892 = vunpack.c.h.b16 %v5155
        %v5893 = vunpack.c.l.b16 %v5156
        %v5894 = vunpack.c.h.b16 %v5156
        %v5895 = vunpack.c.l.b16 %v5157
        %v5896 = vunpack.c.h.b16 %v5157
        %v5897 = vunpack.c.l.b16 %v5158
        %v5898 = vunpack.c.h.b16 %v5158
        %v5899 = vunpack.c.l.b16 %v5159
        %v5900 = vunpack.c.h.b16 %v5159
        %v5901 = vunpack.c.l.b16 %v5160
        %v5902 = vunpack.c.h.b16 %v5160
        %v5903 = vunpack.c.l.b16 %v5161
        %v5904 = vunpack.c.h.b16 %v5161
        %v5905 = vunpack.c.l.b16 %v5162
        %v5906 = vunpack.c.h.b16 %v5162
        %v5907 = vunpack.c.l.b16 %v5163
        %v5908 = vunpack.c.h.b16 %v5163
        %v5909 = vunpack.c.l.b16 %v5164
        %v5910 = vunpack.c.h.b16 %v5164
        %v5911 = vunpack.c.l.b16 %v5165
        %v5912 = vunpack.c.h.b16 %v5165
        %v5913 = vunpack.c.l.b16 %v5166
        %v5914 = vunpack.c.h.b16 %v5166
        %v5915 = vunpack.c.l.b16 %v5167
        %v5916 = vunpack.c.h.b16 %v5167
        %v5917 = vunpack.c.l.b16 %v5168
        %v5918 = vunpack.c.h.b16 %v5168
        %v5919 = vunpack.c.l.b16 %v5169
        %v5920 = vunpack.c.h.b16 %v5169
        %v5921 = vunpack.c.l.b16 %v5170
        %v5922 = vunpack.c.h.b16 %v5170
        %v5923 = vunpack.c.l.b16 %v5171
        %v5924 = vunpack.c.h.b16 %v5171
        %v5925 = vunpack.c.l.b16 %v5172
        %v5926 = vunpack.c.h.b16 %v5172
        %v5927 = vunpack.c.l.b16 %v5173
        %v5928 = vunpack.c.h.b16 %v5173
        %v5929 = vunpack.c.l.b16 %v5174
        %v5930 = vunpack.c.h.b16 %v5174
        %v5931 = vunpack.c.l.b16 %v5175
        %v5932 = vunpack.c.h.b16 %v5175
        %v5933 = vunpack.c.l.b16 %v5176
        %v5934 = vunpack.c.h.b16 %v5176
        %v5935 = vunpack.c.l.b16 %v5177
        %v5936 = vunpack.c.h.b16 %v5177
        %v5937 = vunpack.c.l.b16 %v5178
        %v5938 = vunpack.c.h.b16 %v5178
        %v5939 = vunpack.c.l.b16 %v5179
        %v5940 = vunpack.c.h.b16 %v5179
        %v5941 = vunpack.c.l.b16 %v5180
        %v5942 = vunpack.c.h.b16 %v5180
        %v5943 = vunpack.c.l.b16 %v5181
        %v5944 = vunpack.c.h.b16 %v5181
        %v5945 = vunpack.c.l.b16 %v5182
        %v5946 = vunpack.c.h.b16 %v5182
        %v5947 = vunpack.c.l.b16 %v5183
        %v5948 = vunpack.c.h.b16 %v5183
        %v5949 = vunpack.c.l.b16 %v5184
        %v5950 = vunpack.c.h.b16 %v5184
        %v5951 = vunpack.c.l.b16 %v5185
        %v5952 = vunpack.c.h.b16 %v5185
        %v5953 = vunpack.c.l.b16 %v5186
        %v5954 = vunpack.c.h.b16 %v5186
        %v5955 = vunpack.c.l.b16 %v5187
        %v5956 = vunpack.c.h.b16 %v5187
        %v5957 = vunpack.c.l.b16 %v5188
        %v5958 = vunpack.c.h.b16 %v5188
        %v5959 = vunpack.c.l.b16 %v5189
        %v5960 = vunpack.c.h.b16 %v5189
        %v5961 = vunpack.c.l.b16 %v5190
        %v5962 = vunpack.c.h.b16 %v5190
        %v5963 = vunpack.c.l.b16 %v5191
        %v5964 = vunpack.c.h.b16 %v5191
        %v5965 = vunpack.c.l.b16 %v5192
        %v5966 = vunpack.c.h.b16 %v5192
        %v5967 = vunpack.c.l.b16 %v5193
        %v5968 = vunpack.c.h.b16 %v5193
        %v5969 = vunpack.c.l.b16 %v5194
        %v5970 = vunpack.c.h.b16 %v5194
        %v5971 = vunpack.c.l.b16 %v5195
        %v5972 = vunpack.c.h.b16 %v5195
        %v5973 = vunpack.c.l.b16 %v5196
        %v5974 = vunpack.c.h.b16 %v5196
        %v5975 = vunpack.c.l.b16 %v5197
        %v5976 = vunpack.c.h.b16 %v5197
        %v5977 = vunpack.c.l.b16 %v5198
        %v5978 = vunpack.c.h.b16 %v5198
        %v5979 = vunpack.c.l.b16 %v5199
        %v5980 = vunpack.c.h.b16 %v5199
        %v5981 = vunpack.c.l.b16 %v5200
        %v5982 = vunpack.c.h.b16 %v5200
        %v5983 = vunpack.c.l.b16 %v5201
        %v5984 = vunpack.c.h.b16 %v5201
        %v5985 = vunpack.c.l.b16 %v5202
        %v5986 = vunpack.c.h.b16 %v5202
        %v5987 = vunpack.c.l.b16 %v5203
        %v5988 = vunpack.c.h.b16 %v5203
        %v5989 = vunpack.c.l.b16 %v5204
        %v5990 = vunpack.c.h.b16 %v5204
        %v5991 = vunpack.c.l.b16 %v5205
        %v5992 = vunpack.c.h.b16 %v5205
        %v5993 = vunpack.c.l.b16 %v5206
        %v5994 = vunpack.c.h.b16 %v5206
        %v5995 = vunpack.c.l.b16 %v5207
        %v5996 = vunpack.c.h.b16 %v5207
        %v5997 = vunpack.c.l.b16 %v5208
        %v5998 = vunpack.c.h.b16 %v5208
        %v5999 = vunpack.c.l.b16 %v5209
        %v6000 = vunpack.c.h.b16 %v5209
        %v6001 = vunpack.c.l.b16 %v5210
        %v6002 = vunpack.c.h.b16 %v5210
        %v6003 = vunpack.c.l.b16 %v5211
        %v6004 = vunpack.c.h.b16 %v5211
        %v6005 = vunpack.c.l.b16 %v5212
        %v6006 = vunpack.c.h.b16 %v5212
        %v6007 = vpack.c.b16 %v5503, %v5495
        %v6008 = vpack.c.b16 %v5504, %v5496
        %v6009 = vpack.c.b16 %v5505, %v5497
        %v6010 = vpack.c.b16 %v5506, %v5498
        %v6011 = vpack.c.b16 %v5507, %v5499
        %v6012 = vpack.c.b16 %v5508, %v5500
        %v6013 = vpack.c.b16 %v5509, %v5501
        %v6014 = vpack.c.b16 %v5510, %v5502
        %v6015 = vpack.c.b16 %v5519, %v5511
        %v6016 = vpack.c.b16 %v5520, %v5512
        %v6017 = vpack.c.b16 %v5521, %v5513
        %v6018 = vpack.c.b16 %v5522, %v5514
        %v6019 = vpack.c.b16 %v5523, %v5515
        %v6020 = vpack.c.b16 %v5524, %v5516
        %v6021 = vpack.c.b16 %v5525, %v5517
        %v6022 = vpack.c.b16 %v5526, %v5518
        %v6023 = vpack.c.b16 %v5535, %v5527
        %v6024 = vpack.c.b16 %v5536, %v5528
        %v6025 = vpack.c.b16 %v5537, %v5529
        %v6026 = vpack.c.b16 %v5538, %v5530
        %v6027 = vpack.c.b16 %v5539, %v5531
        %v6028 = vpack.c.b16 %v5540, %v5532
        %v6029 = vpack.c.b16 %v5541, %v5533
        %v6030 = vpack.c.b16 %v5542, %v5534
        %v6031 = vpack.c.b16 %v5551, %v5543
        %v6032 = vpack.c.b16 %v5552, %v5544
        %v6033 = vpack.c.b16 %v5553, %v5545
        %v6034 = vpack.c.b16 %v5554, %v5546
        %v6035 = vpack.c.b16 %v5555, %v5547
        %v6036 = vpack.c.b16 %v5556, %v5548
        %v6037 = vpack.c.b16 %v5557, %v5549
        %v6038 = vpack.c.b16 %v5558, %v5550
        %v6039 = vpack.c.b16 %v5567, %v5559
        %v6040 = vpack.c.b16 %v5568, %v5560
        %v6041 = vpack.c.b16 %v5569, %v5561
        %v6042 = vpack.c.b16 %v5570, %v5562
        %v6043 = vpack.c.b16 %v5571, %v5563
        %v6044 = vpack.c.b16 %v5572, %v5564
        %v6045 = vpack.c.b16 %v5573, %v5565
        %v6046 = vpack.c.b16 %v5574, %v5566
        %v6047 = vpack.c.b16 %v5583, %v5575
        %v6048 = vpack.c.b16 %v5584, %v5576
        %v6049 = vpack.c.b16 %v5585, %v5577
        %v6050 = vpack.c.b16 %v5586, %v5578
        %v6051 = vpack.c.b16 %v5587, %v5579
        %v6052 = vpack.c.b16 %v5588, %v5580
        %v6053 = vpack.c.b16 %v5589, %v5581
        %v6054 = vpack.c.b16 %v5590, %v5582
        %v6055 = vpack.c.b16 %v5599, %v5591
        %v6056 = vpack.c.b16 %v5600, %v5592
        %v6057 = vpack.c.b16 %v5601, %v5593
        %v6058 = vpack.c.b16 %v5602, %v5594
        %v6059 = vpack.c.b16 %v5603, %v5595
        %v6060 = vpack.c.b16 %v5604, %v5596
        %v6061 = vpack.c.b16 %v5605, %v5597
        %v6062 = vpack.c.b16 %v5606, %v5598
        %v6063 = vpack.c.b16 %v5615, %v5607
        %v6064 = vpack.c.b16 %v5616, %v5608
        %v6065 = vpack.c.b16 %v5617, %v5609
        %v6066 = vpack.c.b16 %v5618, %v5610
        %v6067 = vpack.c.b16 %v5619, %v5611
        %v6068 = vpack.c.b16 %v5620, %v5612
        %v6069 = vpack.c.b16 %v5621, %v5613
        %v6070 = vpack.c.b16 %v5622, %v5614
        %v6071 = vpack.c.b16 %v5631, %v5623
        %v6072 = vpack.c.b16 %v5632, %v5624
        %v6073 = vpack.c.b16 %v5633, %v5625
        %v6074 = vpack.c.b16 %v5634, %v5626
        %v6075 = vpack.c.b16 %v5635, %v5627
        %v6076 = vpack.c.b16 %v5636, %v5628
        %v6077 = vpack.c.b16 %v5637, %v5629
        %v6078 = vpack.c.b16 %v5638, %v5630
        %v6079 = vpack.c.b16 %v5647, %v5639
        %v6080 = vpack.c.b16 %v5648, %v5640
        %v6081 = vpack.c.b16 %v5649, %v5641
        %v6082 = vpack.c.b16 %v5650, %v5642
        %v6083 = vpack.c.b16 %v5651, %v5643
        %v6084 = vpack.c.b16 %v5652, %v5644
        %v6085 = vpack.c.b16 %v5653, %v5645
        %v6086 = vpack.c.b16 %v5654, %v5646
        %v6087 = vpack.c.b16 %v5663, %v5655
        %v6088 = vpack.c.b16 %v5664, %v5656
        %v6089 = vpack.c.b16 %v5665, %v5657
        %v6090 = vpack.c.b16 %v5666, %v5658
        %v6091 = vpack.c.b16 %v5667, %v5659
        %v6092 = vpack.c.b16 %v5668, %v5660
        %v6093 = vpack.c.b16 %v5669, %v5661
        %v6094 = vpack.c.b16 %v5670, %v5662
        %v6095 = vpack.c.b16 %v5679, %v5671
        %v6096 = vpack.c.b16 %v5680, %v5672
        %v6097 = vpack.c.b16 %v5681, %v5673
        %v6098 = vpack.c.b16 %v5682, %v5674
        %v6099 = vpack.c.b16 %v5683, %v5675
        %v6100 = vpack.c.b16 %v5684, %v5676
        %v6101 = vpack.c.b16 %v5685, %v5677
        %v6102 = vpack.c.b16 %v5686, %v5678
        %v6103 = vpack.c.b16 %v5695, %v5687
        %v6104 = vpack.c.b16 %v5696, %v5688
        %v6105 = vpack.c.b16 %v5697, %v5689
        %v6106 = vpack.c.b16 %v5698, %v5690
        %v6107 = vpack.c.b16 %v5699, %v5691
        %v6108 = vpack.c.b16 %v5700, %v5692
        %v6109 = vpack.c.b16 %v5701, %v5693
        %v6110 = vpack.c.b16 %v5702, %v5694
        %v6111 = vpack.c.b16 %v5711, %v5703
        %v6112 = vpack.c.b16 %v5712, %v5704
        %v6113 = vpack.c.b16 %v5713, %v5705
        %v6114 = vpack.c.b16 %v5714, %v5706
        %v6115 = vpack.c.b16 %v5715, %v5707
        %v6116 = vpack.c.b16 %v5716, %v5708
        %v6117 = vpack.c.b16 %v5717, %v5709
        %v6118 = vpack.c.b16 %v5718, %v5710
        %v6119 = vpack.c.b16 %v5727, %v5719
        %v6120 = vpack.c.b16 %v5728, %v5720
        %v6121 = vpack.c.b16 %v5729, %v5721
        %v6122 = vpack.c.b16 %v5730, %v5722
        %v6123 = vpack.c.b16 %v5731, %v5723
        %v6124 = vpack.c.b16 %v5732, %v5724
        %v6125 = vpack.c.b16 %v5733, %v5725
        %v6126 = vpack.c.b16 %v5734, %v5726
        %v6127 = vpack.c.b16 %v5743, %v5735
        %v6128 = vpack.c.b16 %v5744, %v5736
        %v6129 = vpack.c.b16 %v5745, %v5737
        %v6130 = vpack.c.b16 %v5746, %v5738
        %v6131 = vpack.c.b16 %v5747, %v5739
        %v6132 = vpack.c.b16 %v5748, %v5740
        %v6133 = vpack.c.b16 %v5749, %v5741
        %v6134 = vpack.c.b16 %v5750, %v5742
        %v6135 = vpack.c.b16 %v5759, %v5751
        %v6136 = vpack.c.b16 %v5760, %v5752
        %v6137 = vpack.c.b16 %v5761, %v5753
        %v6138 = vpack.c.b16 %v5762, %v5754
        %v6139 = vpack.c.b16 %v5763, %v5755
        %v6140 = vpack.c.b16 %v5764, %v5756
        %v6141 = vpack.c.b16 %v5765, %v5757
        %v6142 = vpack.c.b16 %v5766, %v5758
        %v6143 = vpack.c.b16 %v5775, %v5767
        %v6144 = vpack.c.b16 %v5776, %v5768
        %v6145 = vpack.c.b16 %v5777, %v5769
        %v6146 = vpack.c.b16 %v5778, %v5770
        %v6147 = vpack.c.b16 %v5779, %v5771
        %v6148 = vpack.c.b16 %v5780, %v5772
        %v6149 = vpack.c.b16 %v5781, %v5773
        %v6150 = vpack.c.b16 %v5782, %v5774
        %v6151 = vpack.c.b16 %v5791, %v5783
        %v6152 = vpack.c.b16 %v5792, %v5784
        %v6153 = vpack.c.b16 %v5793, %v5785
        %v6154 = vpack.c.b16 %v5794, %v5786
        %v6155 = vpack.c.b16 %v5795, %v5787
        %v6156 = vpack.c.b16 %v5796, %v5788
        %v6157 = vpack.c.b16 %v5797, %v5789
        %v6158 = vpack.c.b16 %v5798, %v5790
        %v6159 = vpack.c.b16 %v5807, %v5799
        %v6160 = vpack.c.b16 %v5808, %v5800
        %v6161 = vpack.c.b16 %v5809, %v5801
        %v6162 = vpack.c.b16 %v5810, %v5802
        %v6163 = vpack.c.b16 %v5811, %v5803
        %v6164 = vpack.c.b16 %v5812, %v5804
        %v6165 = vpack.c.b16 %v5813, %v5805
        %v6166 = vpack.c.b16 %v5814, %v5806
        %v6167 = vpack.c.b16 %v5823, %v5815
        %v6168 = vpack.c.b16 %v5824, %v5816
        %v6169 = vpack.c.b16 %v5825, %v5817
        %v6170 = vpack.c.b16 %v5826, %v5818
        %v6171 = vpack.c.b16 %v5827, %v5819
        %v6172 = vpack.c.b16 %v5828, %v5820
        %v6173 = vpack.c.b16 %v5829, %v5821
        %v6174 = vpack.c.b16 %v5830, %v5822
        %v6175 = vpack.c.b16 %v5839, %v5831
        %v6176 = vpack.c.b16 %v5840, %v5832
        %v6177 = vpack.c.b16 %v5841, %v5833
        %v6178 = vpack.c.b16 %v5842, %v5834
        %v6179 = vpack.c.b16 %v5843, %v5835
        %v6180 = vpack.c.b16 %v5844, %v5836
        %v6181 = vpack.c.b16 %v5845, %v5837
        %v6182 = vpack.c.b16 %v5846, %v5838
        %v6183 = vpack.c.b16 %v5855, %v5847
        %v6184 = vpack.c.b16 %v5856, %v5848
        %v6185 = vpack.c.b16 %v5857, %v5849
        %v6186 = vpack.c.b16 %v5858, %v5850
        %v6187 = vpack.c.b16 %v5859, %v5851
        %v6188 = vpack.c.b16 %v5860, %v5852
        %v6189 = vpack.c.b16 %v5861, %v5853
        %v6190 = vpack.c.b16 %v5862, %v5854
        %v6191 = vpack.c.b16 %v5871, %v5863
        %v6192 = vpack.c.b16 %v5872, %v5864
        %v6193 = vpack.c.b16 %v5873, %v5865
        %v6194 = vpack.c.b16 %v5874, %v5866
        %v6195 = vpack.c.b16 %v5875, %v5867
        %v6196 = vpack.c.b16 %v5876, %v5868
        %v6197 = vpack.c.b16 %v5877, %v5869
        %v6198 = vpack.c.b16 %v5878, %v5870
        %v6199 = vpack.c.b16 %v5887, %v5879
        %v6200 = vpack.c.b16 %v5888, %v5880
        %v6201 = vpack.c.b16 %v5889, %v5881
        %v6202 = vpack.c.b16 %v5890, %v5882
        %v6203 = vpack.c.b16 %v5891, %v5883
        %v6204 = vpack.c.b16 %v5892, %v5884
        %v6205 = vpack.c.b16 %v5893, %v5885
        %v6206 = vpack.c.b16 %v5894, %v5886
        %v6207 = vpack.c.b16 %v5903, %v5895
        %v6208 = vpack.c.b16 %v5904, %v5896
        %v6209 = vpack.c.b16 %v5905, %v5897
        %v6210 = vpack.c.b16 %v5906, %v5898
        %v6211 = vpack.c.b16 %v5907, %v5899
        %v6212 = vpack.c.b16 %v5908, %v5900
        %v6213 = vpack.c.b16 %v5909, %v5901
        %v6214 = vpack.c.b16 %v5910, %v5902
        %v6215 = vpack.c.b16 %v5919, %v5911
        %v6216 = vpack.c.b16 %v5920, %v5912
        %v6217 = vpack.c.b16 %v5921, %v5913
        %v6218 = vpack.c.b16 %v5922, %v5914
        %v6219 = vpack.c.b16 %v5923, %v5915
        %v6220 = vpack.c.b16 %v5924, %v5916
        %v6221 = vpack.c.b16 %v5925, %v5917
        %v6222 = vpack.c.b16 %v5926, %v5918
        %v6223 = vpack.c.b16 %v5935, %v5927
        %v6224 = vpack.c.b16 %v5936, %v5928
        %v6225 = vpack.c.b16 %v5937, %v5929
        %v6226 = vpack.c.b16 %v5938, %v5930
        %v6227 = vpack.c.b16 %v5939, %v5931
        %v6228 = vpack.c.b16 %v5940, %v5932
        %v6229 = vpack.c.b16 %v5941, %v5933
        %v6230 = vpack.c.b16 %v5942, %v5934
        %v6231 = vpack.c.b16 %v5951, %v5943
        %v6232 = vpack.c.b16 %v5952, %v5944
        %v6233 = vpack.c.b16 %v5953, %v5945
        %v6234 = vpack.c.b16 %v5954, %v5946
        %v6235 = vpack.c.b16 %v5955, %v5947
        %v6236 = vpack.c.b16 %v5956, %v5948
        %v6237 = vpack.c.b16 %v5957, %v5949
        %v6238 = vpack.c.b16 %v5958, %v5950
        %v6239 = vpack.c.b16 %v5967, %v5959
        %v6240 = vpack.c.b16 %v5968, %v5960
        %v6241 = vpack.c.b16 %v5969, %v5961
        %v6242 = vpack.c.b16 %v5970, %v5962
        %v6243 = vpack.c.b16 %v5971, %v5963
        %v6244 = vpack.c.b16 %v5972, %v5964
        %v6245 = vpack.c.b16 %v5973, %v5965
        %v6246 = vpack.c.b16 %v5974, %v5966
        %v6247 = vpack.c.b16 %v5983, %v5975
        %v6248 = vpack.c.b16 %v5984, %v5976
        %v6249 = vpack.c.b16 %v5985, %v5977
        %v6250 = vpack.c.b16 %v5986, %v5978
        %v6251 = vpack.c.b16 %v5987, %v5979
        %v6252 = vpack.c.b16 %v5988, %v5980
        %v6253 = vpack.c.b16 %v5989, %v5981
        %v6254 = vpack.c.b16 %v5990, %v5982
        %v6255 = vpack.c.b16 %v5999, %v5991
        %v6256 = vpack.c.b16 %v6000, %v5992
        %v6257 = vpack.c.b16 %v6001, %v5993
        %v6258 = vpack.c.b16 %v6002, %v5994
        %v6259 = vpack.c.b16 %v6003, %v5995
        %v6260 = vpack.c.b16 %v6004, %v5996
        %v6261 = vpack.c.b16 %v6005, %v5997
        %v6262 = vpack.c.b16 %v6006, %v5998
        %6519 = vmatpush.bf16.msra.mxu0 %v6063
        %6520 = vmatpush.bf16.msra.mxu0 %v6055
        %6521 = vmatpush.bf16.msra.mxu0 %v6047
        %6522 = vmatpush.bf16.msra.mxu0 %v6039
        %6523 = vmatpush.bf16.msra.mxu0 %v6031
        %6524 = vmatpush.bf16.msra.mxu0 %v6023
        %6525 = vmatpush.bf16.msra.mxu0 %v6015
        %6526 = vmatpush.bf16.msra.mxu0 %v6007
        %6527 = vmatmul.bf16.gmra.mxu0 %v4949
        %v6528 = vpop.f32.mrf.mxu0
        %v6529 = vadd.f32 %v5231, %v6528
        %v6530 = vpop.f32.mrf.mxu0
        %v6531 = vadd.f32 %v5231, %v6530
        %6532 = vmatmul.bf16.gmra.mxu0 %v4953
        %v6533 = vpop.f32.mrf.mxu0
        %v6534 = vadd.f32 %v5231, %v6533
        %v6535 = vpop.f32.mrf.mxu0
        %v6536 = vadd.f32 %v5231, %v6535
        %6537 = vdwg.mxu0
        %6538 = vmatpush.bf16.msra.mxu0 %v6127
        %6539 = vmatpush.bf16.msra.mxu0 %v6119
        %6540 = vmatpush.bf16.msra.mxu0 %v6111
        %6541 = vmatpush.bf16.msra.mxu0 %v6103
        %6542 = vmatpush.bf16.msra.mxu0 %v6095
        %6543 = vmatpush.bf16.msra.mxu0 %v6087
        %6544 = vmatpush.bf16.msra.mxu0 %v6079
        %6545 = vmatpush.bf16.msra.mxu0 %v6071
        %6546 = vmatmul.bf16.gmra.mxu0 %v4950
        %v6547 = vpop.f32.mrf.mxu0
        %v6548 = vadd.f32 %v6529, %v6547
        %v6549 = vpop.f32.mrf.mxu0
        %v6550 = vadd.f32 %v6531, %v6549
        %6551 = vmatmul.bf16.gmra.mxu0 %v4954
        %v6552 = vpop.f32.mrf.mxu0
        %v6553 = vadd.f32 %v6534, %v6552
        %v6554 = vpop.f32.mrf.mxu0
        %v6555 = vadd.f32 %v6536, %v6554
        %6556 = vdwg.mxu0
        %6557 = vmatpush.bf16.msra.mxu0 %v6191
        %6558 = vmatpush.bf16.msra.mxu0 %v6183
        %6559 = vmatpush.bf16.msra.mxu0 %v6175
        %6560 = vmatpush.bf16.msra.mxu0 %v6167
        %6561 = vmatpush.bf16.msra.mxu0 %v6159
        %6562 = vmatpush.bf16.msra.mxu0 %v6151
        %6563 = vmatpush.bf16.msra.mxu0 %v6143
        %6564 = vmatpush.bf16.msra.mxu0 %v6135
        %6565 = vmatmul.bf16.gmra.mxu0 %v4951
        %v6566 = vpop.f32.mrf.mxu0
        %v6567 = vadd.f32 %v6548, %v6566
        %v6568 = vpop.f32.mrf.mxu0
        %v6569 = vadd.f32 %v6550, %v6568
        %6570 = vmatmul.bf16.gmra.mxu0 %v4955
        %v6571 = vpop.f32.mrf.mxu0
        %v6572 = vadd.f32 %v6553, %v6571
        %v6573 = vpop.f32.mrf.mxu0
        %v6574 = vadd.f32 %v6555, %v6573
        %6575 = vdwg.mxu0
        %6576 = vmatpush.bf16.msra.mxu0 %v6255
        %6577 = vmatpush.bf16.msra.mxu0 %v6247
        %6578 = vmatpush.bf16.msra.mxu0 %v6239
        %6579 = vmatpush.bf16.msra.mxu0 %v6231
        %6580 = vmatpush.bf16.msra.mxu0 %v6223
        %6581 = vmatpush.bf16.msra.mxu0 %v6215
        %6582 = vmatpush.bf16.msra.mxu0 %v6207
        %6583 = vmatpush.bf16.msra.mxu0 %v6199
        %6584 = vmatmul.bf16.gmra.mxu0 %v4952
        %v6585 = vpop.f32.mrf.mxu0
        %v6586 = vadd.f32 %v6567, %v6585
        %v6587 = vpop.f32.mrf.mxu0
        %v6588 = vadd.f32 %v6569, %v6587
        %6589 = vmatmul.bf16.gmra.mxu0 %v4956
        %v6590 = vpop.f32.mrf.mxu0
        %v6591 = vadd.f32 %v6572, %v6590
        %v6592 = vpop.f32.mrf.mxu0
        %v6593 = vadd.f32 %v6574, %v6592
        %6594 = vdwg.mxu0
        %6595 = vmatpush.bf16.msra.mxu0 %v6064
        %6596 = vmatpush.bf16.msra.mxu0 %v6056
        %6597 = vmatpush.bf16.msra.mxu0 %v6048
        %6598 = vmatpush.bf16.msra.mxu0 %v6040
        %6599 = vmatpush.bf16.msra.mxu0 %v6032
        %6600 = vmatpush.bf16.msra.mxu0 %v6024
        %6601 = vmatpush.bf16.msra.mxu0 %v6016
        %6602 = vmatpush.bf16.msra.mxu0 %v6008
        %6603 = vmatmul.bf16.gmra.mxu0 %v4949
        %v6604 = vpop.f32.mrf.mxu0
        %v6605 = vadd.f32 %v5232, %v6604
        %v6606 = vpop.f32.mrf.mxu0
        %v6607 = vadd.f32 %v5232, %v6606
        %6608 = vmatmul.bf16.gmra.mxu0 %v4953
        %v6609 = vpop.f32.mrf.mxu0
        %v6610 = vadd.f32 %v5232, %v6609
        %v6611 = vpop.f32.mrf.mxu0
        %v6612 = vadd.f32 %v5232, %v6611
        %6613 = vdwg.mxu0
        %6614 = vmatpush.bf16.msra.mxu0 %v6128
        %6615 = vmatpush.bf16.msra.mxu0 %v6120
        %6616 = vmatpush.bf16.msra.mxu0 %v6112
        %6617 = vmatpush.bf16.msra.mxu0 %v6104
        %6618 = vmatpush.bf16.msra.mxu0 %v6096
        %6619 = vmatpush.bf16.msra.mxu0 %v6088
        %6620 = vmatpush.bf16.msra.mxu0 %v6080
        %6621 = vmatpush.bf16.msra.mxu0 %v6072
        %6622 = vmatmul.bf16.gmra.mxu0 %v4950
        %v6623 = vpop.f32.mrf.mxu0
        %v6624 = vadd.f32 %v6605, %v6623
        %v6625 = vpop.f32.mrf.mxu0
        %v6626 = vadd.f32 %v6607, %v6625
        %6627 = vmatmul.bf16.gmra.mxu0 %v4954
        %v6628 = vpop.f32.mrf.mxu0
        %v6629 = vadd.f32 %v6610, %v6628
        %v6630 = vpop.f32.mrf.mxu0
        %v6631 = vadd.f32 %v6612, %v6630
        %6632 = vdwg.mxu0
        %6633 = vmatpush.bf16.msra.mxu0 %v6192
        %6634 = vmatpush.bf16.msra.mxu0 %v6184
        %6635 = vmatpush.bf16.msra.mxu0 %v6176
        %6636 = vmatpush.bf16.msra.mxu0 %v6168
        %6637 = vmatpush.bf16.msra.mxu0 %v6160
        %6638 = vmatpush.bf16.msra.mxu0 %v6152
        %6639 = vmatpush.bf16.msra.mxu0 %v6144
        %6640 = vmatpush.bf16.msra.mxu0 %v6136
        %6641 = vmatmul.bf16.gmra.mxu0 %v4951
        %v6642 = vpop.f32.mrf.mxu0
        %v6643 = vadd.f32 %v6624, %v6642
        %v6644 = vpop.f32.mrf.mxu0
        %v6645 = vadd.f32 %v6626, %v6644
        %6646 = vmatmul.bf16.gmra.mxu0 %v4955
        %v6647 = vpop.f32.mrf.mxu0
        %v6648 = vadd.f32 %v6629, %v6647
        %v6649 = vpop.f32.mrf.mxu0
        %v6650 = vadd.f32 %v6631, %v6649
        %6651 = vdwg.mxu0
        %6652 = vmatpush.bf16.msra.mxu0 %v6256
        %6653 = vmatpush.bf16.msra.mxu0 %v6248
        %6654 = vmatpush.bf16.msra.mxu0 %v6240
        %6655 = vmatpush.bf16.msra.mxu0 %v6232
        %6656 = vmatpush.bf16.msra.mxu0 %v6224
        %6657 = vmatpush.bf16.msra.mxu0 %v6216
        %6658 = vmatpush.bf16.msra.mxu0 %v6208
        %6659 = vmatpush.bf16.msra.mxu0 %v6200
        %6660 = vmatmul.bf16.gmra.mxu0 %v4952
        %v6661 = vpop.f32.mrf.mxu0
        %v6662 = vadd.f32 %v6643, %v6661
        %v6663 = vpop.f32.mrf.mxu0
        %v6664 = vadd.f32 %v6645, %v6663
        %6665 = vmatmul.bf16.gmra.mxu0 %v4956
        %v6666 = vpop.f32.mrf.mxu0
        %v6667 = vadd.f32 %v6648, %v6666
        %v6668 = vpop.f32.mrf.mxu0
        %v6669 = vadd.f32 %v6650, %v6668
        %6670 = vdwg.mxu0
        %6671 = vmatpush.bf16.msra.mxu0 %v6065
        %6672 = vmatpush.bf16.msra.mxu0 %v6057
        %6673 = vmatpush.bf16.msra.mxu0 %v6049
        %6674 = vmatpush.bf16.msra.mxu0 %v6041
        %6675 = vmatpush.bf16.msra.mxu0 %v6033
        %6676 = vmatpush.bf16.msra.mxu0 %v6025
        %6677 = vmatpush.bf16.msra.mxu0 %v6017
        %6678 = vmatpush.bf16.msra.mxu0 %v6009
        %6679 = vmatmul.bf16.gmra.mxu0 %v4949
        %v6680 = vpop.f32.mrf.mxu0
        %v6681 = vadd.f32 %v5233, %v6680
        %v6682 = vpop.f32.mrf.mxu0
        %v6683 = vadd.f32 %v5233, %v6682
        %6684 = vmatmul.bf16.gmra.mxu0 %v4953
        %v6685 = vpop.f32.mrf.mxu0
        %v6686 = vadd.f32 %v5233, %v6685
        %v6687 = vpop.f32.mrf.mxu0
        %v6688 = vadd.f32 %v5233, %v6687
        %6689 = vdwg.mxu0
        %6690 = vmatpush.bf16.msra.mxu0 %v6129
        %6691 = vmatpush.bf16.msra.mxu0 %v6121
        %6692 = vmatpush.bf16.msra.mxu0 %v6113
        %6693 = vmatpush.bf16.msra.mxu0 %v6105
        %6694 = vmatpush.bf16.msra.mxu0 %v6097
        %6695 = vmatpush.bf16.msra.mxu0 %v6089
        %6696 = vmatpush.bf16.msra.mxu0 %v6081
        %6697 = vmatpush.bf16.msra.mxu0 %v6073
        %6698 = vmatmul.bf16.gmra.mxu0 %v4950
        %v6699 = vpop.f32.mrf.mxu0
        %v6700 = vadd.f32 %v6681, %v6699
        %v6701 = vpop.f32.mrf.mxu0
        %v6702 = vadd.f32 %v6683, %v6701
        %6703 = vmatmul.bf16.gmra.mxu0 %v4954
        %v6704 = vpop.f32.mrf.mxu0
        %v6705 = vadd.f32 %v6686, %v6704
        %v6706 = vpop.f32.mrf.mxu0
        %v6707 = vadd.f32 %v6688, %v6706
        %6708 = vdwg.mxu0
        %6709 = vmatpush.bf16.msra.mxu0 %v6193
        %6710 = vmatpush.bf16.msra.mxu0 %v6185
        %6711 = vmatpush.bf16.msra.mxu0 %v6177
        %6712 = vmatpush.bf16.msra.mxu0 %v6169
        %6713 = vmatpush.bf16.msra.mxu0 %v6161
        %6714 = vmatpush.bf16.msra.mxu0 %v6153
        %6715 = vmatpush.bf16.msra.mxu0 %v6145
        %6716 = vmatpush.bf16.msra.mxu0 %v6137
        %6717 = vmatmul.bf16.gmra.mxu0 %v4951
        %v6718 = vpop.f32.mrf.mxu0
        %v6719 = vadd.f32 %v6700, %v6718
        %v6720 = vpop.f32.mrf.mxu0
        %v6721 = vadd.f32 %v6702, %v6720
        %6722 = vmatmul.bf16.gmra.mxu0 %v4955
        %v6723 = vpop.f32.mrf.mxu0
        %v6724 = vadd.f32 %v6705, %v6723
        %v6725 = vpop.f32.mrf.mxu0
        %v6726 = vadd.f32 %v6707, %v6725
        %6727 = vdwg.mxu0
        %6728 = vmatpush.bf16.msra.mxu0 %v6257
        %6729 = vmatpush.bf16.msra.mxu0 %v6249
        %6730 = vmatpush.bf16.msra.mxu0 %v6241
        %6731 = vmatpush.bf16.msra.mxu0 %v6233
        %6732 = vmatpush.bf16.msra.mxu0 %v6225
        %6733 = vmatpush.bf16.msra.mxu0 %v6217
        %6734 = vmatpush.bf16.msra.mxu0 %v6209
        %6735 = vmatpush.bf16.msra.mxu0 %v6201
        %6736 = vmatmul.bf16.gmra.mxu0 %v4952
        %v6737 = vpop.f32.mrf.mxu0
        %v6738 = vadd.f32 %v6719, %v6737
        %v6739 = vpop.f32.mrf.mxu0
        %v6740 = vadd.f32 %v6721, %v6739
        %6741 = vmatmul.bf16.gmra.mxu0 %v4956
        %v6742 = vpop.f32.mrf.mxu0
        %v6743 = vadd.f32 %v6724, %v6742
        %v6744 = vpop.f32.mrf.mxu0
        %v6745 = vadd.f32 %v6726, %v6744
        %6746 = vdwg.mxu0
        %6747 = vmatpush.bf16.msra.mxu0 %v6066
        %6748 = vmatpush.bf16.msra.mxu0 %v6058
        %6749 = vmatpush.bf16.msra.mxu0 %v6050
        %6750 = vmatpush.bf16.msra.mxu0 %v6042
        %6751 = vmatpush.bf16.msra.mxu0 %v6034
        %6752 = vmatpush.bf16.msra.mxu0 %v6026
        %6753 = vmatpush.bf16.msra.mxu0 %v6018
        %6754 = vmatpush.bf16.msra.mxu0 %v6010
        %6755 = vmatmul.bf16.gmra.mxu0 %v4949
        %v6756 = vpop.f32.mrf.mxu0
        %v6757 = vadd.f32 %v5234, %v6756
        %v6758 = vpop.f32.mrf.mxu0
        %v6759 = vadd.f32 %v5234, %v6758
        %6760 = vmatmul.bf16.gmra.mxu0 %v4953
        %v6761 = vpop.f32.mrf.mxu0
        %v6762 = vadd.f32 %v5234, %v6761
        %v6763 = vpop.f32.mrf.mxu0
        %v6764 = vadd.f32 %v5234, %v6763
        %6765 = vdwg.mxu0
        %6766 = vmatpush.bf16.msra.mxu0 %v6130
        %6767 = vmatpush.bf16.msra.mxu0 %v6122
        %6768 = vmatpush.bf16.msra.mxu0 %v6114
        %6769 = vmatpush.bf16.msra.mxu0 %v6106
        %6770 = vmatpush.bf16.msra.mxu0 %v6098
        %6771 = vmatpush.bf16.msra.mxu0 %v6090
        %6772 = vmatpush.bf16.msra.mxu0 %v6082
        %6773 = vmatpush.bf16.msra.mxu0 %v6074
        %6774 = vmatmul.bf16.gmra.mxu0 %v4950
        %v6775 = vpop.f32.mrf.mxu0
        %v6776 = vadd.f32 %v6757, %v6775
        %v6777 = vpop.f32.mrf.mxu0
        %v6778 = vadd.f32 %v6759, %v6777
        %6779 = vmatmul.bf16.gmra.mxu0 %v4954
        %v6780 = vpop.f32.mrf.mxu0
        %v6781 = vadd.f32 %v6762, %v6780
        %v6782 = vpop.f32.mrf.mxu0
        %v6783 = vadd.f32 %v6764, %v6782
        %6784 = vdwg.mxu0
        %6785 = vmatpush.bf16.msra.mxu0 %v6194
        %6786 = vmatpush.bf16.msra.mxu0 %v6186
        %6787 = vmatpush.bf16.msra.mxu0 %v6178
        %6788 = vmatpush.bf16.msra.mxu0 %v6170
        %6789 = vmatpush.bf16.msra.mxu0 %v6162
        %6790 = vmatpush.bf16.msra.mxu0 %v6154
        %6791 = vmatpush.bf16.msra.mxu0 %v6146
        %6792 = vmatpush.bf16.msra.mxu0 %v6138
        %6793 = vmatmul.bf16.gmra.mxu0 %v4951
        %v6794 = vpop.f32.mrf.mxu0
        %v6795 = vadd.f32 %v6776, %v6794
        %v6796 = vpop.f32.mrf.mxu0
        %v6797 = vadd.f32 %v6778, %v6796
        %6798 = vmatmul.bf16.gmra.mxu0 %v4955
        %v6799 = vpop.f32.mrf.mxu0
        %v6800 = vadd.f32 %v6781, %v6799
        %v6801 = vpop.f32.mrf.mxu0
        %v6802 = vadd.f32 %v6783, %v6801
        %6803 = vdwg.mxu0
        %6804 = vmatpush.bf16.msra.mxu0 %v6258
        %6805 = vmatpush.bf16.msra.mxu0 %v6250
        %6806 = vmatpush.bf16.msra.mxu0 %v6242
        %6807 = vmatpush.bf16.msra.mxu0 %v6234
        %6808 = vmatpush.bf16.msra.mxu0 %v6226
        %6809 = vmatpush.bf16.msra.mxu0 %v6218
        %6810 = vmatpush.bf16.msra.mxu0 %v6210
        %6811 = vmatpush.bf16.msra.mxu0 %v6202
        %6812 = vmatmul.bf16.gmra.mxu0 %v4952
        %v6813 = vpop.f32.mrf.mxu0
        %v6814 = vadd.f32 %v6795, %v6813
        %v6815 = vpop.f32.mrf.mxu0
        %v6816 = vadd.f32 %v6797, %v6815
        %6817 = vmatmul.bf16.gmra.mxu0 %v4956
        %v6818 = vpop.f32.mrf.mxu0
        %v6819 = vadd.f32 %v6800, %v6818
        %v6820 = vpop.f32.mrf.mxu0
        %v6821 = vadd.f32 %v6802, %v6820
        %6822 = vdwg.mxu0
        %6823 = vmatpush.bf16.msra.mxu0 %v6067
        %6824 = vmatpush.bf16.msra.mxu0 %v6059
        %6825 = vmatpush.bf16.msra.mxu0 %v6051
        %6826 = vmatpush.bf16.msra.mxu0 %v6043
        %6827 = vmatpush.bf16.msra.mxu0 %v6035
        %6828 = vmatpush.bf16.msra.mxu0 %v6027
        %6829 = vmatpush.bf16.msra.mxu0 %v6019
        %6830 = vmatpush.bf16.msra.mxu0 %v6011
        %6831 = vmatmul.bf16.gmra.mxu0 %v4949
        %v6832 = vpop.f32.mrf.mxu0
        %v6833 = vadd.f32 %v5235, %v6832
        %v6834 = vpop.f32.mrf.mxu0
        %v6835 = vadd.f32 %v5235, %v6834
        %6836 = vmatmul.bf16.gmra.mxu0 %v4953
        %v6837 = vpop.f32.mrf.mxu0
        %v6838 = vadd.f32 %v5235, %v6837
        %v6839 = vpop.f32.mrf.mxu0
        %v6840 = vadd.f32 %v5235, %v6839
        %6841 = vdwg.mxu0
        %6842 = vmatpush.bf16.msra.mxu0 %v6131
        %6843 = vmatpush.bf16.msra.mxu0 %v6123
        %6844 = vmatpush.bf16.msra.mxu0 %v6115
        %6845 = vmatpush.bf16.msra.mxu0 %v6107
        %6846 = vmatpush.bf16.msra.mxu0 %v6099
        %6847 = vmatpush.bf16.msra.mxu0 %v6091
        %6848 = vmatpush.bf16.msra.mxu0 %v6083
        %6849 = vmatpush.bf16.msra.mxu0 %v6075
        %6850 = vmatmul.bf16.gmra.mxu0 %v4950
        %v6851 = vpop.f32.mrf.mxu0
        %v6852 = vadd.f32 %v6833, %v6851
        %v6853 = vpop.f32.mrf.mxu0
        %v6854 = vadd.f32 %v6835, %v6853
        %6855 = vmatmul.bf16.gmra.mxu0 %v4954
        %v6856 = vpop.f32.mrf.mxu0
        %v6857 = vadd.f32 %v6838, %v6856
        %v6858 = vpop.f32.mrf.mxu0
        %v6859 = vadd.f32 %v6840, %v6858
        %6860 = vdwg.mxu0
        %6861 = vmatpush.bf16.msra.mxu0 %v6195
        %6862 = vmatpush.bf16.msra.mxu0 %v6187
        %6863 = vmatpush.bf16.msra.mxu0 %v6179
        %6864 = vmatpush.bf16.msra.mxu0 %v6171
        %6865 = vmatpush.bf16.msra.mxu0 %v6163
        %6866 = vmatpush.bf16.msra.mxu0 %v6155
        %6867 = vmatpush.bf16.msra.mxu0 %v6147
        %6868 = vmatpush.bf16.msra.mxu0 %v6139
        %6869 = vmatmul.bf16.gmra.mxu0 %v4951
        %v6870 = vpop.f32.mrf.mxu0
        %v6871 = vadd.f32 %v6852, %v6870
        %v6872 = vpop.f32.mrf.mxu0
        %v6873 = vadd.f32 %v6854, %v6872
        %6874 = vmatmul.bf16.gmra.mxu0 %v4955
        %v6875 = vpop.f32.mrf.mxu0
        %v6876 = vadd.f32 %v6857, %v6875
        %v6877 = vpop.f32.mrf.mxu0
        %v6878 = vadd.f32 %v6859, %v6877
        %6879 = vdwg.mxu0
        %6880 = vmatpush.bf16.msra.mxu0 %v6259
        %6881 = vmatpush.bf16.msra.mxu0 %v6251
        %6882 = vmatpush.bf16.msra.mxu0 %v6243
        %6883 = vmatpush.bf16.msra.mxu0 %v6235
        %6884 = vmatpush.bf16.msra.mxu0 %v6227
        %6885 = vmatpush.bf16.msra.mxu0 %v6219
        %6886 = vmatpush.bf16.msra.mxu0 %v6211
        %6887 = vmatpush.bf16.msra.mxu0 %v6203
        %6888 = vmatmul.bf16.gmra.mxu0 %v4952
        %v6889 = vpop.f32.mrf.mxu0
        %v6890 = vadd.f32 %v6871, %v6889
        %v6891 = vpop.f32.mrf.mxu0
        %v6892 = vadd.f32 %v6873, %v6891
        %6893 = vmatmul.bf16.gmra.mxu0 %v4956
        %v6894 = vpop.f32.mrf.mxu0
        %v6895 = vadd.f32 %v6876, %v6894
        %v6896 = vpop.f32.mrf.mxu0
        %v6897 = vadd.f32 %v6878, %v6896
        %6898 = vdwg.mxu0
        %6899 = vmatpush.bf16.msra.mxu0 %v6068
        %6900 = vmatpush.bf16.msra.mxu0 %v6060
        %6901 = vmatpush.bf16.msra.mxu0 %v6052
        %6902 = vmatpush.bf16.msra.mxu0 %v6044
        %6903 = vmatpush.bf16.msra.mxu0 %v6036
        %6904 = vmatpush.bf16.msra.mxu0 %v6028
        %6905 = vmatpush.bf16.msra.mxu0 %v6020
        %6906 = vmatpush.bf16.msra.mxu0 %v6012
        %6907 = vmatmul.bf16.gmra.mxu0 %v4949
        %v6908 = vpop.f32.mrf.mxu0
        %v6909 = vadd.f32 %v5236, %v6908
        %v6910 = vpop.f32.mrf.mxu0
        %v6911 = vadd.f32 %v5236, %v6910
        %6912 = vmatmul.bf16.gmra.mxu0 %v4953
        %v6913 = vpop.f32.mrf.mxu0
        %v6914 = vadd.f32 %v5236, %v6913
        %v6915 = vpop.f32.mrf.mxu0
        %v6916 = vadd.f32 %v5236, %v6915
        %6917 = vdwg.mxu0
        %6918 = vmatpush.bf16.msra.mxu0 %v6132
        %6919 = vmatpush.bf16.msra.mxu0 %v6124
        %6920 = vmatpush.bf16.msra.mxu0 %v6116
        %6921 = vmatpush.bf16.msra.mxu0 %v6108
        %6922 = vmatpush.bf16.msra.mxu0 %v6100
        %6923 = vmatpush.bf16.msra.mxu0 %v6092
        %6924 = vmatpush.bf16.msra.mxu0 %v6084
        %6925 = vmatpush.bf16.msra.mxu0 %v6076
        %6926 = vmatmul.bf16.gmra.mxu0 %v4950
        %v6927 = vpop.f32.mrf.mxu0
        %v6928 = vadd.f32 %v6909, %v6927
        %v6929 = vpop.f32.mrf.mxu0
        %v6930 = vadd.f32 %v6911, %v6929
        %6931 = vmatmul.bf16.gmra.mxu0 %v4954
        %v6932 = vpop.f32.mrf.mxu0
        %v6933 = vadd.f32 %v6914, %v6932
        %v6934 = vpop.f32.mrf.mxu0
        %v6935 = vadd.f32 %v6916, %v6934
        %6936 = vdwg.mxu0
        %6937 = vmatpush.bf16.msra.mxu0 %v6196
        %6938 = vmatpush.bf16.msra.mxu0 %v6188
        %6939 = vmatpush.bf16.msra.mxu0 %v6180
        %6940 = vmatpush.bf16.msra.mxu0 %v6172
        %6941 = vmatpush.bf16.msra.mxu0 %v6164
        %6942 = vmatpush.bf16.msra.mxu0 %v6156
        %6943 = vmatpush.bf16.msra.mxu0 %v6148
        %6944 = vmatpush.bf16.msra.mxu0 %v6140
        %6945 = vmatmul.bf16.gmra.mxu0 %v4951
        %v6946 = vpop.f32.mrf.mxu0
        %v6947 = vadd.f32 %v6928, %v6946
        %v6948 = vpop.f32.mrf.mxu0
        %v6949 = vadd.f32 %v6930, %v6948
        %6950 = vmatmul.bf16.gmra.mxu0 %v4955
        %v6951 = vpop.f32.mrf.mxu0
        %v6952 = vadd.f32 %v6933, %v6951
        %v6953 = vpop.f32.mrf.mxu0
        %v6954 = vadd.f32 %v6935, %v6953
        %6955 = vdwg.mxu0
        %6956 = vmatpush.bf16.msra.mxu0 %v6260
        %6957 = vmatpush.bf16.msra.mxu0 %v6252
        %6958 = vmatpush.bf16.msra.mxu0 %v6244
        %6959 = vmatpush.bf16.msra.mxu0 %v6236
        %6960 = vmatpush.bf16.msra.mxu0 %v6228
        %6961 = vmatpush.bf16.msra.mxu0 %v6220
        %6962 = vmatpush.bf16.msra.mxu0 %v6212
        %6963 = vmatpush.bf16.msra.mxu0 %v6204
        %6964 = vmatmul.bf16.gmra.mxu0 %v4952
        %v6965 = vpop.f32.mrf.mxu0
        %v6966 = vadd.f32 %v6947, %v6965
        %v6967 = vpop.f32.mrf.mxu0
        %v6968 = vadd.f32 %v6949, %v6967
        %6969 = vmatmul.bf16.gmra.mxu0 %v4956
        %v6970 = vpop.f32.mrf.mxu0
        %v6971 = vadd.f32 %v6952, %v6970
        %v6972 = vpop.f32.mrf.mxu0
        %v6973 = vadd.f32 %v6954, %v6972
        %6974 = vdwg.mxu0
        %6975 = vmatpush.bf16.msra.mxu0 %v6069
        %6976 = vmatpush.bf16.msra.mxu0 %v6061
        %6977 = vmatpush.bf16.msra.mxu0 %v6053
        %6978 = vmatpush.bf16.msra.mxu0 %v6045
        %6979 = vmatpush.bf16.msra.mxu0 %v6037
        %6980 = vmatpush.bf16.msra.mxu0 %v6029
        %6981 = vmatpush.bf16.msra.mxu0 %v6021
        %6982 = vmatpush.bf16.msra.mxu0 %v6013
        %6983 = vmatmul.bf16.gmra.mxu0 %v4949
        %v6984 = vpop.f32.mrf.mxu0
        %v6985 = vadd.f32 %v5237, %v6984
        %v6986 = vpop.f32.mrf.mxu0
        %v6987 = vadd.f32 %v5237, %v6986
        %6988 = vmatmul.bf16.gmra.mxu0 %v4953
        %v6989 = vpop.f32.mrf.mxu0
        %v6990 = vadd.f32 %v5237, %v6989
        %v6991 = vpop.f32.mrf.mxu0
        %v6992 = vadd.f32 %v5237, %v6991
        %6993 = vdwg.mxu0
        %6994 = vmatpush.bf16.msra.mxu0 %v6133
        %6995 = vmatpush.bf16.msra.mxu0 %v6125
        %6996 = vmatpush.bf16.msra.mxu0 %v6117
        %6997 = vmatpush.bf16.msra.mxu0 %v6109
        %6998 = vmatpush.bf16.msra.mxu0 %v6101
        %6999 = vmatpush.bf16.msra.mxu0 %v6093
        %7000 = vmatpush.bf16.msra.mxu0 %v6085
        %7001 = vmatpush.bf16.msra.mxu0 %v6077
        %7002 = vmatmul.bf16.gmra.mxu0 %v4950
        %v7003 = vpop.f32.mrf.mxu0
        %v7004 = vadd.f32 %v6985, %v7003
        %v7005 = vpop.f32.mrf.mxu0
        %v7006 = vadd.f32 %v6987, %v7005
        %7007 = vmatmul.bf16.gmra.mxu0 %v4954
        %v7008 = vpop.f32.mrf.mxu0
        %v7009 = vadd.f32 %v6990, %v7008
        %v7010 = vpop.f32.mrf.mxu0
        %v7011 = vadd.f32 %v6992, %v7010
        %7012 = vdwg.mxu0
        %7013 = vmatpush.bf16.msra.mxu0 %v6197
        %7014 = vmatpush.bf16.msra.mxu0 %v6189
        %7015 = vmatpush.bf16.msra.mxu0 %v6181
        %7016 = vmatpush.bf16.msra.mxu0 %v6173
        %7017 = vmatpush.bf16.msra.mxu0 %v6165
        %7018 = vmatpush.bf16.msra.mxu0 %v6157
        %7019 = vmatpush.bf16.msra.mxu0 %v6149
        %7020 = vmatpush.bf16.msra.mxu0 %v6141
        %7021 = vmatmul.bf16.gmra.mxu0 %v4951
        %v7022 = vpop.f32.mrf.mxu0
        %v7023 = vadd.f32 %v7004, %v7022
        %v7024 = vpop.f32.mrf.mxu0
        %v7025 = vadd.f32 %v7006, %v7024
        %7026 = vmatmul.bf16.gmra.mxu0 %v4955
        %v7027 = vpop.f32.mrf.mxu0
        %v7028 = vadd.f32 %v7009, %v7027
        %v7029 = vpop.f32.mrf.mxu0
        %v7030 = vadd.f32 %v7011, %v7029
        %7031 = vdwg.mxu0
        %7032 = vmatpush.bf16.msra.mxu0 %v6261
        %7033 = vmatpush.bf16.msra.mxu0 %v6253
        %7034 = vmatpush.bf16.msra.mxu0 %v6245
        %7035 = vmatpush.bf16.msra.mxu0 %v6237
        %7036 = vmatpush.bf16.msra.mxu0 %v6229
        %7037 = vmatpush.bf16.msra.mxu0 %v6221
        %7038 = vmatpush.bf16.msra.mxu0 %v6213
        %7039 = vmatpush.bf16.msra.mxu0 %v6205
        %7040 = vmatmul.bf16.gmra.mxu0 %v4952
        %v7041 = vpop.f32.mrf.mxu0
        %v7042 = vadd.f32 %v7023, %v7041
        %v7043 = vpop.f32.mrf.mxu0
        %v7044 = vadd.f32 %v7025, %v7043
        %7045 = vmatmul.bf16.gmra.mxu0 %v4956
        %v7046 = vpop.f32.mrf.mxu0
        %v7047 = vadd.f32 %v7028, %v7046
        %v7048 = vpop.f32.mrf.mxu0
        %v7049 = vadd.f32 %v7030, %v7048
        %7050 = vdwg.mxu0
        %7051 = vmatpush.bf16.msra.mxu0 %v6070
        %7052 = vmatpush.bf16.msra.mxu0 %v6062
        %7053 = vmatpush.bf16.msra.mxu0 %v6054
        %7054 = vmatpush.bf16.msra.mxu0 %v6046
        %7055 = vmatpush.bf16.msra.mxu0 %v6038
        %7056 = vmatpush.bf16.msra.mxu0 %v6030
        %7057 = vmatpush.bf16.msra.mxu0 %v6022
        %7058 = vmatpush.bf16.msra.mxu0 %v6014
        %7059 = vmatmul.bf16.gmra.mxu0 %v4949
        %v7060 = vpop.f32.mrf.mxu0
        %v7061 = vadd.f32 %v5238, %v7060
        %v7062 = vpop.f32.mrf.mxu0
        %v7063 = vadd.f32 %v5238, %v7062
        %7064 = vmatmul.bf16.gmra.mxu0 %v4953
        %v7065 = vpop.f32.mrf.mxu0
        %v7066 = vadd.f32 %v5238, %v7065
        %v7067 = vpop.f32.mrf.mxu0
        %v7068 = vadd.f32 %v5238, %v7067
        %7069 = vdwg.mxu0
        %7070 = vmatpush.bf16.msra.mxu0 %v6134
        %7071 = vmatpush.bf16.msra.mxu0 %v6126
        %7072 = vmatpush.bf16.msra.mxu0 %v6118
        %7073 = vmatpush.bf16.msra.mxu0 %v6110
        %7074 = vmatpush.bf16.msra.mxu0 %v6102
        %7075 = vmatpush.bf16.msra.mxu0 %v6094
        %7076 = vmatpush.bf16.msra.mxu0 %v6086
        %7077 = vmatpush.bf16.msra.mxu0 %v6078
        %7078 = vmatmul.bf16.gmra.mxu0 %v4950
        %v7079 = vpop.f32.mrf.mxu0
        %v7080 = vadd.f32 %v7061, %v7079
        %v7081 = vpop.f32.mrf.mxu0
        %v7082 = vadd.f32 %v7063, %v7081
        %7083 = vmatmul.bf16.gmra.mxu0 %v4954
        %v7084 = vpop.f32.mrf.mxu0
        %v7085 = vadd.f32 %v7066, %v7084
        %v7086 = vpop.f32.mrf.mxu0
        %v7087 = vadd.f32 %v7068, %v7086
        %7088 = vdwg.mxu0
        %7089 = vmatpush.bf16.msra.mxu0 %v6198
        %7090 = vmatpush.bf16.msra.mxu0 %v6190
        %7091 = vmatpush.bf16.msra.mxu0 %v6182
        %7092 = vmatpush.bf16.msra.mxu0 %v6174
        %7093 = vmatpush.bf16.msra.mxu0 %v6166
        %7094 = vmatpush.bf16.msra.mxu0 %v6158
        %7095 = vmatpush.bf16.msra.mxu0 %v6150
        %7096 = vmatpush.bf16.msra.mxu0 %v6142
        %7097 = vmatmul.bf16.gmra.mxu0 %v4951
        %v7098 = vpop.f32.mrf.mxu0
        %v7099 = vadd.f32 %v7080, %v7098
        %v7100 = vpop.f32.mrf.mxu0
        %v7101 = vadd.f32 %v7082, %v7100
        %7102 = vmatmul.bf16.gmra.mxu0 %v4955
        %v7103 = vpop.f32.mrf.mxu0
        %v7104 = vadd.f32 %v7085, %v7103
        %v7105 = vpop.f32.mrf.mxu0
        %v7106 = vadd.f32 %v7087, %v7105
        %7107 = vdwg.mxu0
        %7108 = vmatpush.bf16.msra.mxu0 %v6262
        %7109 = vmatpush.bf16.msra.mxu0 %v6254
        %7110 = vmatpush.bf16.msra.mxu0 %v6246
        %7111 = vmatpush.bf16.msra.mxu0 %v6238
        %7112 = vmatpush.bf16.msra.mxu0 %v6230
        %7113 = vmatpush.bf16.msra.mxu0 %v6222
        %7114 = vmatpush.bf16.msra.mxu0 %v6214
        %7115 = vmatpush.bf16.msra.mxu0 %v6206
        %7116 = vmatmul.bf16.gmra.mxu0 %v4952
        %v7117 = vpop.f32.mrf.mxu0
        %v7118 = vadd.f32 %v7099, %v7117
        %v7119 = vpop.f32.mrf.mxu0
        %v7120 = vadd.f32 %v7101, %v7119
        %7121 = vmatmul.bf16.gmra.mxu0 %v4956
        %v7122 = vpop.f32.mrf.mxu0
        %v7123 = vadd.f32 %v7104, %v7122
        %v7124 = vpop.f32.mrf.mxu0
        %v7125 = vadd.f32 %v7106, %v7124
        %7126 = vdwg.mxu0
        %v7127 = vmax.f32 %v6586, -100.0
        %v7128 = vmax.f32 %v6662, -100.0
        %v7129 = vmax.f32 %v6738, -100.0
        %v7130 = vmax.f32 %v6814, -100.0
        %v7131 = vmax.f32 %v6890, -100.0
        %v7132 = vmax.f32 %v6966, -100.0
        %v7133 = vmax.f32 %v7042, -100.0
        %v7134 = vmax.f32 %v7118, -100.0
        %v7135 = vmax.f32 %v6588, -100.0
        %v7136 = vmax.f32 %v6664, -100.0
        %v7137 = vmax.f32 %v6740, -100.0
        %v7138 = vmax.f32 %v6816, -100.0
        %v7139 = vmax.f32 %v6892, -100.0
        %v7140 = vmax.f32 %v6968, -100.0
        %v7141 = vmax.f32 %v7044, -100.0
        %v7142 = vmax.f32 %v7120, -100.0
        %v7143 = vmax.f32 %v6591, -100.0
        %v7144 = vmax.f32 %v6667, -100.0
        %v7145 = vmax.f32 %v6743, -100.0
        %v7146 = vmax.f32 %v6819, -100.0
        %v7147 = vmax.f32 %v6895, -100.0
        %v7148 = vmax.f32 %v6971, -100.0
        %v7149 = vmax.f32 %v7047, -100.0
        %v7150 = vmax.f32 %v7123, -100.0
        %v7151 = vmax.f32 %v6593, -100.0
        %v7152 = vmax.f32 %v6669, -100.0
        %v7153 = vmax.f32 %v6745, -100.0
        %v7154 = vmax.f32 %v6821, -100.0
        %v7155 = vmax.f32 %v6897, -100.0
        %v7156 = vmax.f32 %v6973, -100.0
        %v7157 = vmax.f32 %v7049, -100.0
        %v7158 = vmax.f32 %v7125, -100.0
        %v7159 = vmin.f32 %v7127, 100.0
        %v7160 = vmin.f32 %v7128, 100.0
        %v7161 = vmin.f32 %v7129, 100.0
        %v7162 = vmin.f32 %v7130, 100.0
        %v7163 = vmin.f32 %v7131, 100.0
        %v7164 = vmin.f32 %v7132, 100.0
        %v7165 = vmin.f32 %v7133, 100.0
        %v7166 = vmin.f32 %v7134, 100.0
        %v7167 = vmin.f32 %v7135, 100.0
        %v7168 = vmin.f32 %v7136, 100.0
        %v7169 = vmin.f32 %v7137, 100.0
        %v7170 = vmin.f32 %v7138, 100.0
        %v7171 = vmin.f32 %v7139, 100.0
        %v7172 = vmin.f32 %v7140, 100.0
        %v7173 = vmin.f32 %v7141, 100.0
        %v7174 = vmin.f32 %v7142, 100.0
        %v7175 = vmin.f32 %v7143, 100.0
        %v7176 = vmin.f32 %v7144, 100.0
        %v7177 = vmin.f32 %v7145, 100.0
        %v7178 = vmin.f32 %v7146, 100.0
        %v7179 = vmin.f32 %v7147, 100.0
        %v7180 = vmin.f32 %v7148, 100.0
        %v7181 = vmin.f32 %v7149, 100.0
        %v7182 = vmin.f32 %v7150, 100.0
        %v7183 = vmin.f32 %v7151, 100.0
        %v7184 = vmin.f32 %v7152, 100.0
        %v7185 = vmin.f32 %v7153, 100.0
        %v7186 = vmin.f32 %v7154, 100.0
        %v7187 = vmin.f32 %v7155, 100.0
        %v7188 = vmin.f32 %v7156, 100.0
        %v7189 = vmin.f32 %v7157, 100.0
        %v7190 = vmin.f32 %v7158, 100.0
        %v7191 = vld [vmem:[%s737] sm:$0xff]
        %v7192 = vld [vmem:[%s737 + $0x8] sm:$0xff]
        %v7193 = vld [vmem:[%s737 + $0x10] sm:$0xff]
        %v7194 = vld [vmem:[%s737 + $0x18] sm:$0xff]
        %v7195 = vld [vmem:[%s737 + $0x20] sm:$0xff]
        %v7196 = vld [vmem:[%s737 + $0x28] sm:$0xff]
        %v7197 = vld [vmem:[%s737 + $0x30] sm:$0xff]
        %v7198 = vld [vmem:[%s737 + $0x38] sm:$0xff]
        %v7199 = vld [vmem:[%s737 + $0x40] sm:$0xff]
        %v7200 = vld [vmem:[%s737 + $0x48] sm:$0xff]
        %v7201 = vld [vmem:[%s737 + $0x50] sm:$0xff]
        %v7202 = vld [vmem:[%s737 + $0x58] sm:$0xff]
        %v7203 = vld [vmem:[%s737 + $0x60] sm:$0xff]
        %v7204 = vld [vmem:[%s737 + $0x68] sm:$0xff]
        %v7205 = vld [vmem:[%s737 + $0x70] sm:$0xff]
        %v7206 = vld [vmem:[%s737 + $0x78] sm:$0xff]
        %v7207 = vld [vmem:[%s737 + $0x80] sm:$0xff]
        %v7208 = vld [vmem:[%s737 + $0x88] sm:$0xff]
        %v7209 = vld [vmem:[%s737 + $0x90] sm:$0xff]
        %v7210 = vld [vmem:[%s737 + $0x98] sm:$0xff]
        %v7211 = vld [vmem:[%s737 + $0xa0] sm:$0xff]
        %v7212 = vld [vmem:[%s737 + $0xa8] sm:$0xff]
        %v7213 = vld [vmem:[%s737 + $0xb0] sm:$0xff]
        %v7214 = vld [vmem:[%s737 + $0xb8] sm:$0xff]
        %v7215 = vld [vmem:[%s737 + $0xc0] sm:$0xff]
        %v7216 = vld [vmem:[%s737 + $0xc8] sm:$0xff]
        %v7217 = vld [vmem:[%s737 + $0xd0] sm:$0xff]
        %v7218 = vld [vmem:[%s737 + $0xd8] sm:$0xff]
        %v7219 = vld [vmem:[%s737 + $0xe0] sm:$0xff]
        %v7220 = vld [vmem:[%s737 + $0xe8] sm:$0xff]
        %v7221 = vld [vmem:[%s737 + $0xf0] sm:$0xff]
        %v7222 = vld [vmem:[%s737 + $0xf8] sm:$0xff]
        %v7223 = vld [vmem:[%s737 + $0x100] sm:$0xff]
        %v7224 = vld [vmem:[%s737 + $0x108] sm:$0xff]
        %v7225 = vld [vmem:[%s737 + $0x110] sm:$0xff]
        %v7226 = vld [vmem:[%s737 + $0x118] sm:$0xff]
        %v7227 = vld [vmem:[%s737 + $0x120] sm:$0xff]
        %v7228 = vld [vmem:[%s737 + $0x128] sm:$0xff]
        %v7229 = vld [vmem:[%s737 + $0x130] sm:$0xff]
        %v7230 = vld [vmem:[%s737 + $0x138] sm:$0xff]
        %v7231 = vld [vmem:[%s737 + $0x140] sm:$0xff]
        %v7232 = vld [vmem:[%s737 + $0x148] sm:$0xff]
        %v7233 = vld [vmem:[%s737 + $0x150] sm:$0xff]
        %v7234 = vld [vmem:[%s737 + $0x158] sm:$0xff]
        %v7235 = vld [vmem:[%s737 + $0x160] sm:$0xff]
        %v7236 = vld [vmem:[%s737 + $0x168] sm:$0xff]
        %v7237 = vld [vmem:[%s737 + $0x170] sm:$0xff]
        %v7238 = vld [vmem:[%s737 + $0x178] sm:$0xff]
        %v7239 = vld [vmem:[%s737 + $0x180] sm:$0xff]
        %v7240 = vld [vmem:[%s737 + $0x188] sm:$0xff]
        %v7241 = vld [vmem:[%s737 + $0x190] sm:$0xff]
        %v7242 = vld [vmem:[%s737 + $0x198] sm:$0xff]
        %v7243 = vld [vmem:[%s737 + $0x1a0] sm:$0xff]
        %v7244 = vld [vmem:[%s737 + $0x1a8] sm:$0xff]
        %v7245 = vld [vmem:[%s737 + $0x1b0] sm:$0xff]
        %v7246 = vld [vmem:[%s737 + $0x1b8] sm:$0xff]
        %v7247 = vld [vmem:[%s737 + $0x1c0] sm:$0xff]
        %v7248 = vld [vmem:[%s737 + $0x1c8] sm:$0xff]
        %v7249 = vld [vmem:[%s737 + $0x1d0] sm:$0xff]
        %v7250 = vld [vmem:[%s737 + $0x1d8] sm:$0xff]
        %v7251 = vld [vmem:[%s737 + $0x1e0] sm:$0xff]
        %v7252 = vld [vmem:[%s737 + $0x1e8] sm:$0xff]
        %v7253 = vld [vmem:[%s737 + $0x1f0] sm:$0xff]
        %v7254 = vld [vmem:[%s737 + $0x1f8] sm:$0xff]
        %v7255 = vld [vmem:[%s737 + $0x200] sm:$0xff]
        %v7256 = vld [vmem:[%s737 + $0x208] sm:$0xff]
        %v7257 = vld [vmem:[%s737 + $0x210] sm:$0xff]
        %v7258 = vld [vmem:[%s737 + $0x218] sm:$0xff]
        %v7259 = vld [vmem:[%s737 + $0x220] sm:$0xff]
        %v7260 = vld [vmem:[%s737 + $0x228] sm:$0xff]
        %v7261 = vld [vmem:[%s737 + $0x230] sm:$0xff]
        %v7262 = vld [vmem:[%s737 + $0x238] sm:$0xff]
        %v7263 = vld [vmem:[%s737 + $0x240] sm:$0xff]
        %v7264 = vld [vmem:[%s737 + $0x248] sm:$0xff]
        %v7265 = vld [vmem:[%s737 + $0x250] sm:$0xff]
        %v7266 = vld [vmem:[%s737 + $0x258] sm:$0xff]
        %v7267 = vld [vmem:[%s737 + $0x260] sm:$0xff]
        %v7268 = vld [vmem:[%s737 + $0x268] sm:$0xff]
        %v7269 = vld [vmem:[%s737 + $0x270] sm:$0xff]
        %v7270 = vld [vmem:[%s737 + $0x278] sm:$0xff]
        %v7271 = vld [vmem:[%s737 + $0x280] sm:$0xff]
        %v7272 = vld [vmem:[%s737 + $0x288] sm:$0xff]
        %v7273 = vld [vmem:[%s737 + $0x290] sm:$0xff]
        %v7274 = vld [vmem:[%s737 + $0x298] sm:$0xff]
        %v7275 = vld [vmem:[%s737 + $0x2a0] sm:$0xff]
        %v7276 = vld [vmem:[%s737 + $0x2a8] sm:$0xff]
        %v7277 = vld [vmem:[%s737 + $0x2b0] sm:$0xff]
        %v7278 = vld [vmem:[%s737 + $0x2b8] sm:$0xff]
        %v7279 = vld [vmem:[%s737 + $0x2c0] sm:$0xff]
        %v7280 = vld [vmem:[%s737 + $0x2c8] sm:$0xff]
        %v7281 = vld [vmem:[%s737 + $0x2d0] sm:$0xff]
        %v7282 = vld [vmem:[%s737 + $0x2d8] sm:$0xff]
        %v7283 = vld [vmem:[%s737 + $0x2e0] sm:$0xff]
        %v7284 = vld [vmem:[%s737 + $0x2e8] sm:$0xff]
        %v7285 = vld [vmem:[%s737 + $0x2f0] sm:$0xff]
        %v7286 = vld [vmem:[%s737 + $0x2f8] sm:$0xff]
        %v7287 = vld [vmem:[%s737 + $0x300] sm:$0xff]
        %v7288 = vld [vmem:[%s737 + $0x308] sm:$0xff]
        %v7289 = vld [vmem:[%s737 + $0x310] sm:$0xff]
        %v7290 = vld [vmem:[%s737 + $0x318] sm:$0xff]
        %v7291 = vld [vmem:[%s737 + $0x320] sm:$0xff]
        %v7292 = vld [vmem:[%s737 + $0x328] sm:$0xff]
        %v7293 = vld [vmem:[%s737 + $0x330] sm:$0xff]
        %v7294 = vld [vmem:[%s737 + $0x338] sm:$0xff]
        %v7295 = vld [vmem:[%s737 + $0x340] sm:$0xff]
        %v7296 = vld [vmem:[%s737 + $0x348] sm:$0xff]
        %v7297 = vld [vmem:[%s737 + $0x350] sm:$0xff]
        %v7298 = vld [vmem:[%s737 + $0x358] sm:$0xff]
        %v7299 = vld [vmem:[%s737 + $0x360] sm:$0xff]
        %v7300 = vld [vmem:[%s737 + $0x368] sm:$0xff]
        %v7301 = vld [vmem:[%s737 + $0x370] sm:$0xff]
        %v7302 = vld [vmem:[%s737 + $0x378] sm:$0xff]
        %v7303 = vld [vmem:[%s737 + $0x380] sm:$0xff]
        %v7304 = vld [vmem:[%s737 + $0x388] sm:$0xff]
        %v7305 = vld [vmem:[%s737 + $0x390] sm:$0xff]
        %v7306 = vld [vmem:[%s737 + $0x398] sm:$0xff]
        %v7307 = vld [vmem:[%s737 + $0x3a0] sm:$0xff]
        %v7308 = vld [vmem:[%s737 + $0x3a8] sm:$0xff]
        %v7309 = vld [vmem:[%s737 + $0x3b0] sm:$0xff]
        %v7310 = vld [vmem:[%s737 + $0x3b8] sm:$0xff]
        %v7311 = vld [vmem:[%s737 + $0x3c0] sm:$0xff]
        %v7312 = vld [vmem:[%s737 + $0x3c8] sm:$0xff]
        %v7313 = vld [vmem:[%s737 + $0x3d0] sm:$0xff]
        %v7314 = vld [vmem:[%s737 + $0x3d8] sm:$0xff]
        %v7315 = vld [vmem:[%s737 + $0x3e0] sm:$0xff]
        %v7316 = vld [vmem:[%s737 + $0x3e8] sm:$0xff]
        %v7317 = vld [vmem:[%s737 + $0x3f0] sm:$0xff]
        %v7318 = vld [vmem:[%s737 + $0x3f8] sm:$0xff]
        %v7319 = vld [vmem:[%s737 + $0x400] sm:$0xff]
        %v7320 = vld [vmem:[%s737 + $0x408] sm:$0xff]
        %v7321 = vld [vmem:[%s737 + $0x410] sm:$0xff]
        %v7322 = vld [vmem:[%s737 + $0x418] sm:$0xff]
        %v7323 = vld [vmem:[%s737 + $0x420] sm:$0xff]
        %v7324 = vld [vmem:[%s737 + $0x428] sm:$0xff]
        %v7325 = vld [vmem:[%s737 + $0x430] sm:$0xff]
        %v7326 = vld [vmem:[%s737 + $0x438] sm:$0xff]
        %v7327 = vld [vmem:[%s737 + $0x440] sm:$0xff]
        %v7328 = vld [vmem:[%s737 + $0x448] sm:$0xff]
        %v7329 = vld [vmem:[%s737 + $0x450] sm:$0xff]
        %v7330 = vld [vmem:[%s737 + $0x458] sm:$0xff]
        %v7331 = vld [vmem:[%s737 + $0x460] sm:$0xff]
        %v7332 = vld [vmem:[%s737 + $0x468] sm:$0xff]
        %v7333 = vld [vmem:[%s737 + $0x470] sm:$0xff]
        %v7334 = vld [vmem:[%s737 + $0x478] sm:$0xff]
        %v7335 = vld [vmem:[%s737 + $0x480] sm:$0xff]
        %v7336 = vld [vmem:[%s737 + $0x488] sm:$0xff]
        %v7337 = vld [vmem:[%s737 + $0x490] sm:$0xff]
        %v7338 = vld [vmem:[%s737 + $0x498] sm:$0xff]
        %v7339 = vld [vmem:[%s737 + $0x4a0] sm:$0xff]
        %v7340 = vld [vmem:[%s737 + $0x4a8] sm:$0xff]
        %v7341 = vld [vmem:[%s737 + $0x4b0] sm:$0xff]
        %v7342 = vld [vmem:[%s737 + $0x4b8] sm:$0xff]
        %v7343 = vld [vmem:[%s737 + $0x4c0] sm:$0xff]
        %v7344 = vld [vmem:[%s737 + $0x4c8] sm:$0xff]
        %v7345 = vld [vmem:[%s737 + $0x4d0] sm:$0xff]
        %v7346 = vld [vmem:[%s737 + $0x4d8] sm:$0xff]
        %v7347 = vld [vmem:[%s737 + $0x4e0] sm:$0xff]
        %v7348 = vld [vmem:[%s737 + $0x4e8] sm:$0xff]
        %v7349 = vld [vmem:[%s737 + $0x4f0] sm:$0xff]
        %v7350 = vld [vmem:[%s737 + $0x4f8] sm:$0xff]
        %v7351 = vld [vmem:[%s737 + $0x500] sm:$0xff]
        %v7352 = vld [vmem:[%s737 + $0x508] sm:$0xff]
        %v7353 = vld [vmem:[%s737 + $0x510] sm:$0xff]
        %v7354 = vld [vmem:[%s737 + $0x518] sm:$0xff]
        %v7355 = vld [vmem:[%s737 + $0x520] sm:$0xff]
        %v7356 = vld [vmem:[%s737 + $0x528] sm:$0xff]
        %v7357 = vld [vmem:[%s737 + $0x530] sm:$0xff]
        %v7358 = vld [vmem:[%s737 + $0x538] sm:$0xff]
        %v7359 = vld [vmem:[%s737 + $0x540] sm:$0xff]
        %v7360 = vld [vmem:[%s737 + $0x548] sm:$0xff]
        %v7361 = vld [vmem:[%s737 + $0x550] sm:$0xff]
        %v7362 = vld [vmem:[%s737 + $0x558] sm:$0xff]
        %v7363 = vld [vmem:[%s737 + $0x560] sm:$0xff]
        %v7364 = vld [vmem:[%s737 + $0x568] sm:$0xff]
        %v7365 = vld [vmem:[%s737 + $0x570] sm:$0xff]
        %v7366 = vld [vmem:[%s737 + $0x578] sm:$0xff]
        %v7367 = vld [vmem:[%s737 + $0x580] sm:$0xff]
        %v7368 = vld [vmem:[%s737 + $0x588] sm:$0xff]
        %v7369 = vld [vmem:[%s737 + $0x590] sm:$0xff]
        %v7370 = vld [vmem:[%s737 + $0x598] sm:$0xff]
        %v7371 = vld [vmem:[%s737 + $0x5a0] sm:$0xff]
        %v7372 = vld [vmem:[%s737 + $0x5a8] sm:$0xff]
        %v7373 = vld [vmem:[%s737 + $0x5b0] sm:$0xff]
        %v7374 = vld [vmem:[%s737 + $0x5b8] sm:$0xff]
        %v7375 = vld [vmem:[%s737 + $0x5c0] sm:$0xff]
        %v7376 = vld [vmem:[%s737 + $0x5c8] sm:$0xff]
        %v7377 = vld [vmem:[%s737 + $0x5d0] sm:$0xff]
        %v7378 = vld [vmem:[%s737 + $0x5d8] sm:$0xff]
        %v7379 = vld [vmem:[%s737 + $0x5e0] sm:$0xff]
        %v7380 = vld [vmem:[%s737 + $0x5e8] sm:$0xff]
        %v7381 = vld [vmem:[%s737 + $0x5f0] sm:$0xff]
        %v7382 = vld [vmem:[%s737 + $0x5f8] sm:$0xff]
        %v7383 = vld [vmem:[%s737 + $0x600] sm:$0xff]
        %v7384 = vld [vmem:[%s737 + $0x608] sm:$0xff]
        %v7385 = vld [vmem:[%s737 + $0x610] sm:$0xff]
        %v7386 = vld [vmem:[%s737 + $0x618] sm:$0xff]
        %v7387 = vld [vmem:[%s737 + $0x620] sm:$0xff]
        %v7388 = vld [vmem:[%s737 + $0x628] sm:$0xff]
        %v7389 = vld [vmem:[%s737 + $0x630] sm:$0xff]
        %v7390 = vld [vmem:[%s737 + $0x638] sm:$0xff]
        %v7391 = vld [vmem:[%s737 + $0x640] sm:$0xff]
        %v7392 = vld [vmem:[%s737 + $0x648] sm:$0xff]
        %v7393 = vld [vmem:[%s737 + $0x650] sm:$0xff]
        %v7394 = vld [vmem:[%s737 + $0x658] sm:$0xff]
        %v7395 = vld [vmem:[%s737 + $0x660] sm:$0xff]
        %v7396 = vld [vmem:[%s737 + $0x668] sm:$0xff]
        %v7397 = vld [vmem:[%s737 + $0x670] sm:$0xff]
        %v7398 = vld [vmem:[%s737 + $0x678] sm:$0xff]
        %v7399 = vld [vmem:[%s737 + $0x680] sm:$0xff]
        %v7400 = vld [vmem:[%s737 + $0x688] sm:$0xff]
        %v7401 = vld [vmem:[%s737 + $0x690] sm:$0xff]
        %v7402 = vld [vmem:[%s737 + $0x698] sm:$0xff]
        %v7403 = vld [vmem:[%s737 + $0x6a0] sm:$0xff]
        %v7404 = vld [vmem:[%s737 + $0x6a8] sm:$0xff]
        %v7405 = vld [vmem:[%s737 + $0x6b0] sm:$0xff]
        %v7406 = vld [vmem:[%s737 + $0x6b8] sm:$0xff]
        %v7407 = vld [vmem:[%s737 + $0x6c0] sm:$0xff]
        %v7408 = vld [vmem:[%s737 + $0x6c8] sm:$0xff]
        %v7409 = vld [vmem:[%s737 + $0x6d0] sm:$0xff]
        %v7410 = vld [vmem:[%s737 + $0x6d8] sm:$0xff]
        %v7411 = vld [vmem:[%s737 + $0x6e0] sm:$0xff]
        %v7412 = vld [vmem:[%s737 + $0x6e8] sm:$0xff]
        %v7413 = vld [vmem:[%s737 + $0x6f0] sm:$0xff]
        %v7414 = vld [vmem:[%s737 + $0x6f8] sm:$0xff]
        %v7415 = vld [vmem:[%s737 + $0x700] sm:$0xff]
        %v7416 = vld [vmem:[%s737 + $0x708] sm:$0xff]
        %v7417 = vld [vmem:[%s737 + $0x710] sm:$0xff]
        %v7418 = vld [vmem:[%s737 + $0x718] sm:$0xff]
        %v7419 = vld [vmem:[%s737 + $0x720] sm:$0xff]
        %v7420 = vld [vmem:[%s737 + $0x728] sm:$0xff]
        %v7421 = vld [vmem:[%s737 + $0x730] sm:$0xff]
        %v7422 = vld [vmem:[%s737 + $0x738] sm:$0xff]
        %v7423 = vld [vmem:[%s737 + $0x740] sm:$0xff]
        %v7424 = vld [vmem:[%s737 + $0x748] sm:$0xff]
        %v7425 = vld [vmem:[%s737 + $0x750] sm:$0xff]
        %v7426 = vld [vmem:[%s737 + $0x758] sm:$0xff]
        %v7427 = vld [vmem:[%s737 + $0x760] sm:$0xff]
        %v7428 = vld [vmem:[%s737 + $0x768] sm:$0xff]
        %v7429 = vld [vmem:[%s737 + $0x770] sm:$0xff]
        %v7430 = vld [vmem:[%s737 + $0x778] sm:$0xff]
        %v7431 = vld [vmem:[%s737 + $0x780] sm:$0xff]
        %v7432 = vld [vmem:[%s737 + $0x788] sm:$0xff]
        %v7433 = vld [vmem:[%s737 + $0x790] sm:$0xff]
        %v7434 = vld [vmem:[%s737 + $0x798] sm:$0xff]
        %v7435 = vld [vmem:[%s737 + $0x7a0] sm:$0xff]
        %v7436 = vld [vmem:[%s737 + $0x7a8] sm:$0xff]
        %v7437 = vld [vmem:[%s737 + $0x7b0] sm:$0xff]
        %v7438 = vld [vmem:[%s737 + $0x7b8] sm:$0xff]
        %v7439 = vld [vmem:[%s737 + $0x7c0] sm:$0xff]
        %v7440 = vld [vmem:[%s737 + $0x7c8] sm:$0xff]
        %v7441 = vld [vmem:[%s737 + $0x7d0] sm:$0xff]
        %v7442 = vld [vmem:[%s737 + $0x7d8] sm:$0xff]
        %v7443 = vld [vmem:[%s737 + $0x7e0] sm:$0xff]
        %v7444 = vld [vmem:[%s737 + $0x7e8] sm:$0xff]
        %v7445 = vld [vmem:[%s737 + $0x7f0] sm:$0xff]
        %v7446 = vld [vmem:[%s737 + $0x7f8] sm:$0xff]
        %v7447 = vperm.slane %v989, 1
        %v7448 = vperm.slane %v989, 3
        %v7449 = vperm.slane %v989, 5
        %v7450 = vperm.slane %v989, 7
        %v7451 = vperm.slane %v990, 1
        %v7452 = vperm.slane %v990, 3
        %v7453 = vperm.slane %v990, 5
        %v7454 = vperm.slane %v990, 7
        %v7463 = vperm.slane %v7447, 1
        %v7464 = vperm.slane %v7448, 1
        %v7465 = vperm.slane %v7449, 1
        %v7466 = vperm.slane %v7450, 1
        %v7467 = vperm.slane %v7451, 1
        %v7468 = vperm.slane %v7452, 1
        %v7469 = vperm.slane %v7453, 1
        %v7470 = vperm.slane %v7454, 1
        %v7727 = vunpack.c.l.b16 %v7191
        %v7728 = vunpack.c.h.b16 %v7191
        %v7729 = vunpack.c.l.b16 %v7192
        %v7730 = vunpack.c.h.b16 %v7192
        %v7731 = vunpack.c.l.b16 %v7193
        %v7732 = vunpack.c.h.b16 %v7193
        %v7733 = vunpack.c.l.b16 %v7194
        %v7734 = vunpack.c.h.b16 %v7194
        %v7735 = vunpack.c.l.b16 %v7195
        %v7736 = vunpack.c.h.b16 %v7195
        %v7737 = vunpack.c.l.b16 %v7196
        %v7738 = vunpack.c.h.b16 %v7196
        %v7739 = vunpack.c.l.b16 %v7197
        %v7740 = vunpack.c.h.b16 %v7197
        %v7741 = vunpack.c.l.b16 %v7198
        %v7742 = vunpack.c.h.b16 %v7198
        %v7743 = vunpack.c.l.b16 %v7199
        %v7744 = vunpack.c.h.b16 %v7199
        %v7745 = vunpack.c.l.b16 %v7200
        %v7746 = vunpack.c.h.b16 %v7200
        %v7747 = vunpack.c.l.b16 %v7201
        %v7748 = vunpack.c.h.b16 %v7201
        %v7749 = vunpack.c.l.b16 %v7202
        %v7750 = vunpack.c.h.b16 %v7202
        %v7751 = vunpack.c.l.b16 %v7203
        %v7752 = vunpack.c.h.b16 %v7203
        %v7753 = vunpack.c.l.b16 %v7204
        %v7754 = vunpack.c.h.b16 %v7204
        %v7755 = vunpack.c.l.b16 %v7205
        %v7756 = vunpack.c.h.b16 %v7205
        %v7757 = vunpack.c.l.b16 %v7206
        %v7758 = vunpack.c.h.b16 %v7206
        %v7759 = vunpack.c.l.b16 %v7207
        %v7760 = vunpack.c.h.b16 %v7207
        %v7761 = vunpack.c.l.b16 %v7208
        %v7762 = vunpack.c.h.b16 %v7208
        %v7763 = vunpack.c.l.b16 %v7209
        %v7764 = vunpack.c.h.b16 %v7209
        %v7765 = vunpack.c.l.b16 %v7210
        %v7766 = vunpack.c.h.b16 %v7210
        %v7767 = vunpack.c.l.b16 %v7211
        %v7768 = vunpack.c.h.b16 %v7211
        %v7769 = vunpack.c.l.b16 %v7212
        %v7770 = vunpack.c.h.b16 %v7212
        %v7771 = vunpack.c.l.b16 %v7213
        %v7772 = vunpack.c.h.b16 %v7213
        %v7773 = vunpack.c.l.b16 %v7214
        %v7774 = vunpack.c.h.b16 %v7214
        %v7775 = vunpack.c.l.b16 %v7215
        %v7776 = vunpack.c.h.b16 %v7215
        %v7777 = vunpack.c.l.b16 %v7216
        %v7778 = vunpack.c.h.b16 %v7216
        %v7779 = vunpack.c.l.b16 %v7217
        %v7780 = vunpack.c.h.b16 %v7217
        %v7781 = vunpack.c.l.b16 %v7218
        %v7782 = vunpack.c.h.b16 %v7218
        %v7783 = vunpack.c.l.b16 %v7219
        %v7784 = vunpack.c.h.b16 %v7219
        %v7785 = vunpack.c.l.b16 %v7220
        %v7786 = vunpack.c.h.b16 %v7220
        %v7787 = vunpack.c.l.b16 %v7221
        %v7788 = vunpack.c.h.b16 %v7221
        %v7789 = vunpack.c.l.b16 %v7222
        %v7790 = vunpack.c.h.b16 %v7222
        %v7791 = vunpack.c.l.b16 %v7223
        %v7792 = vunpack.c.h.b16 %v7223
        %v7793 = vunpack.c.l.b16 %v7224
        %v7794 = vunpack.c.h.b16 %v7224
        %v7795 = vunpack.c.l.b16 %v7225
        %v7796 = vunpack.c.h.b16 %v7225
        %v7797 = vunpack.c.l.b16 %v7226
        %v7798 = vunpack.c.h.b16 %v7226
        %v7799 = vunpack.c.l.b16 %v7227
        %v7800 = vunpack.c.h.b16 %v7227
        %v7801 = vunpack.c.l.b16 %v7228
        %v7802 = vunpack.c.h.b16 %v7228
        %v7803 = vunpack.c.l.b16 %v7229
        %v7804 = vunpack.c.h.b16 %v7229
        %v7805 = vunpack.c.l.b16 %v7230
        %v7806 = vunpack.c.h.b16 %v7230
        %v7807 = vunpack.c.l.b16 %v7231
        %v7808 = vunpack.c.h.b16 %v7231
        %v7809 = vunpack.c.l.b16 %v7232
        %v7810 = vunpack.c.h.b16 %v7232
        %v7811 = vunpack.c.l.b16 %v7233
        %v7812 = vunpack.c.h.b16 %v7233
        %v7813 = vunpack.c.l.b16 %v7234
        %v7814 = vunpack.c.h.b16 %v7234
        %v7815 = vunpack.c.l.b16 %v7235
        %v7816 = vunpack.c.h.b16 %v7235
        %v7817 = vunpack.c.l.b16 %v7236
        %v7818 = vunpack.c.h.b16 %v7236
        %v7819 = vunpack.c.l.b16 %v7237
        %v7820 = vunpack.c.h.b16 %v7237
        %v7821 = vunpack.c.l.b16 %v7238
        %v7822 = vunpack.c.h.b16 %v7238
        %v7823 = vunpack.c.l.b16 %v7239
        %v7824 = vunpack.c.h.b16 %v7239
        %v7825 = vunpack.c.l.b16 %v7240
        %v7826 = vunpack.c.h.b16 %v7240
        %v7827 = vunpack.c.l.b16 %v7241
        %v7828 = vunpack.c.h.b16 %v7241
        %v7829 = vunpack.c.l.b16 %v7242
        %v7830 = vunpack.c.h.b16 %v7242
        %v7831 = vunpack.c.l.b16 %v7243
        %v7832 = vunpack.c.h.b16 %v7243
        %v7833 = vunpack.c.l.b16 %v7244
        %v7834 = vunpack.c.h.b16 %v7244
        %v7835 = vunpack.c.l.b16 %v7245
        %v7836 = vunpack.c.h.b16 %v7245
        %v7837 = vunpack.c.l.b16 %v7246
        %v7838 = vunpack.c.h.b16 %v7246
        %v7839 = vunpack.c.l.b16 %v7247
        %v7840 = vunpack.c.h.b16 %v7247
        %v7841 = vunpack.c.l.b16 %v7248
        %v7842 = vunpack.c.h.b16 %v7248
        %v7843 = vunpack.c.l.b16 %v7249
        %v7844 = vunpack.c.h.b16 %v7249
        %v7845 = vunpack.c.l.b16 %v7250
        %v7846 = vunpack.c.h.b16 %v7250
        %v7847 = vunpack.c.l.b16 %v7251
        %v7848 = vunpack.c.h.b16 %v7251
        %v7849 = vunpack.c.l.b16 %v7252
        %v7850 = vunpack.c.h.b16 %v7252
        %v7851 = vunpack.c.l.b16 %v7253
        %v7852 = vunpack.c.h.b16 %v7253
        %v7853 = vunpack.c.l.b16 %v7254
        %v7854 = vunpack.c.h.b16 %v7254
        %v7855 = vunpack.c.l.b16 %v7255
        %v7856 = vunpack.c.h.b16 %v7255
        %v7857 = vunpack.c.l.b16 %v7256
        %v7858 = vunpack.c.h.b16 %v7256
        %v7859 = vunpack.c.l.b16 %v7257
        %v7860 = vunpack.c.h.b16 %v7257
        %v7861 = vunpack.c.l.b16 %v7258
        %v7862 = vunpack.c.h.b16 %v7258
        %v7863 = vunpack.c.l.b16 %v7259
        %v7864 = vunpack.c.h.b16 %v7259
        %v7865 = vunpack.c.l.b16 %v7260
        %v7866 = vunpack.c.h.b16 %v7260
        %v7867 = vunpack.c.l.b16 %v7261
        %v7868 = vunpack.c.h.b16 %v7261
        %v7869 = vunpack.c.l.b16 %v7262
        %v7870 = vunpack.c.h.b16 %v7262
        %v7871 = vunpack.c.l.b16 %v7263
        %v7872 = vunpack.c.h.b16 %v7263
        %v7873 = vunpack.c.l.b16 %v7264
        %v7874 = vunpack.c.h.b16 %v7264
        %v7875 = vunpack.c.l.b16 %v7265
        %v7876 = vunpack.c.h.b16 %v7265
        %v7877 = vunpack.c.l.b16 %v7266
        %v7878 = vunpack.c.h.b16 %v7266
        %v7879 = vunpack.c.l.b16 %v7267
        %v7880 = vunpack.c.h.b16 %v7267
        %v7881 = vunpack.c.l.b16 %v7268
        %v7882 = vunpack.c.h.b16 %v7268
        %v7883 = vunpack.c.l.b16 %v7269
        %v7884 = vunpack.c.h.b16 %v7269
        %v7885 = vunpack.c.l.b16 %v7270
        %v7886 = vunpack.c.h.b16 %v7270
        %v7887 = vunpack.c.l.b16 %v7271
        %v7888 = vunpack.c.h.b16 %v7271
        %v7889 = vunpack.c.l.b16 %v7272
        %v7890 = vunpack.c.h.b16 %v7272
        %v7891 = vunpack.c.l.b16 %v7273
        %v7892 = vunpack.c.h.b16 %v7273
        %v7893 = vunpack.c.l.b16 %v7274
        %v7894 = vunpack.c.h.b16 %v7274
        %v7895 = vunpack.c.l.b16 %v7275
        %v7896 = vunpack.c.h.b16 %v7275
        %v7897 = vunpack.c.l.b16 %v7276
        %v7898 = vunpack.c.h.b16 %v7276
        %v7899 = vunpack.c.l.b16 %v7277
        %v7900 = vunpack.c.h.b16 %v7277
        %v7901 = vunpack.c.l.b16 %v7278
        %v7902 = vunpack.c.h.b16 %v7278
        %v7903 = vunpack.c.l.b16 %v7279
        %v7904 = vunpack.c.h.b16 %v7279
        %v7905 = vunpack.c.l.b16 %v7280
        %v7906 = vunpack.c.h.b16 %v7280
        %v7907 = vunpack.c.l.b16 %v7281
        %v7908 = vunpack.c.h.b16 %v7281
        %v7909 = vunpack.c.l.b16 %v7282
        %v7910 = vunpack.c.h.b16 %v7282
        %v7911 = vunpack.c.l.b16 %v7283
        %v7912 = vunpack.c.h.b16 %v7283
        %v7913 = vunpack.c.l.b16 %v7284
        %v7914 = vunpack.c.h.b16 %v7284
        %v7915 = vunpack.c.l.b16 %v7285
        %v7916 = vunpack.c.h.b16 %v7285
        %v7917 = vunpack.c.l.b16 %v7286
        %v7918 = vunpack.c.h.b16 %v7286
        %v7919 = vunpack.c.l.b16 %v7287
        %v7920 = vunpack.c.h.b16 %v7287
        %v7921 = vunpack.c.l.b16 %v7288
        %v7922 = vunpack.c.h.b16 %v7288
        %v7923 = vunpack.c.l.b16 %v7289
        %v7924 = vunpack.c.h.b16 %v7289
        %v7925 = vunpack.c.l.b16 %v7290
        %v7926 = vunpack.c.h.b16 %v7290
        %v7927 = vunpack.c.l.b16 %v7291
        %v7928 = vunpack.c.h.b16 %v7291
        %v7929 = vunpack.c.l.b16 %v7292
        %v7930 = vunpack.c.h.b16 %v7292
        %v7931 = vunpack.c.l.b16 %v7293
        %v7932 = vunpack.c.h.b16 %v7293
        %v7933 = vunpack.c.l.b16 %v7294
        %v7934 = vunpack.c.h.b16 %v7294
        %v7935 = vunpack.c.l.b16 %v7295
        %v7936 = vunpack.c.h.b16 %v7295
        %v7937 = vunpack.c.l.b16 %v7296
        %v7938 = vunpack.c.h.b16 %v7296
        %v7939 = vunpack.c.l.b16 %v7297
        %v7940 = vunpack.c.h.b16 %v7297
        %v7941 = vunpack.c.l.b16 %v7298
        %v7942 = vunpack.c.h.b16 %v7298
        %v7943 = vunpack.c.l.b16 %v7299
        %v7944 = vunpack.c.h.b16 %v7299
        %v7945 = vunpack.c.l.b16 %v7300
        %v7946 = vunpack.c.h.b16 %v7300
        %v7947 = vunpack.c.l.b16 %v7301
        %v7948 = vunpack.c.h.b16 %v7301
        %v7949 = vunpack.c.l.b16 %v7302
        %v7950 = vunpack.c.h.b16 %v7302
        %v7951 = vunpack.c.l.b16 %v7303
        %v7952 = vunpack.c.h.b16 %v7303
        %v7953 = vunpack.c.l.b16 %v7304
        %v7954 = vunpack.c.h.b16 %v7304
        %v7955 = vunpack.c.l.b16 %v7305
        %v7956 = vunpack.c.h.b16 %v7305
        %v7957 = vunpack.c.l.b16 %v7306
        %v7958 = vunpack.c.h.b16 %v7306
        %v7959 = vunpack.c.l.b16 %v7307
        %v7960 = vunpack.c.h.b16 %v7307
        %v7961 = vunpack.c.l.b16 %v7308
        %v7962 = vunpack.c.h.b16 %v7308
        %v7963 = vunpack.c.l.b16 %v7309
        %v7964 = vunpack.c.h.b16 %v7309
        %v7965 = vunpack.c.l.b16 %v7310
        %v7966 = vunpack.c.h.b16 %v7310
        %v7967 = vunpack.c.l.b16 %v7311
        %v7968 = vunpack.c.h.b16 %v7311
        %v7969 = vunpack.c.l.b16 %v7312
        %v7970 = vunpack.c.h.b16 %v7312
        %v7971 = vunpack.c.l.b16 %v7313
        %v7972 = vunpack.c.h.b16 %v7313
        %v7973 = vunpack.c.l.b16 %v7314
        %v7974 = vunpack.c.h.b16 %v7314
        %v7975 = vunpack.c.l.b16 %v7315
        %v7976 = vunpack.c.h.b16 %v7315
        %v7977 = vunpack.c.l.b16 %v7316
        %v7978 = vunpack.c.h.b16 %v7316
        %v7979 = vunpack.c.l.b16 %v7317
        %v7980 = vunpack.c.h.b16 %v7317
        %v7981 = vunpack.c.l.b16 %v7318
        %v7982 = vunpack.c.h.b16 %v7318
        %v7983 = vunpack.c.l.b16 %v7319
        %v7984 = vunpack.c.h.b16 %v7319
        %v7985 = vunpack.c.l.b16 %v7320
        %v7986 = vunpack.c.h.b16 %v7320
        %v7987 = vunpack.c.l.b16 %v7321
        %v7988 = vunpack.c.h.b16 %v7321
        %v7989 = vunpack.c.l.b16 %v7322
        %v7990 = vunpack.c.h.b16 %v7322
        %v7991 = vunpack.c.l.b16 %v7323
        %v7992 = vunpack.c.h.b16 %v7323
        %v7993 = vunpack.c.l.b16 %v7324
        %v7994 = vunpack.c.h.b16 %v7324
        %v7995 = vunpack.c.l.b16 %v7325
        %v7996 = vunpack.c.h.b16 %v7325
        %v7997 = vunpack.c.l.b16 %v7326
        %v7998 = vunpack.c.h.b16 %v7326
        %v7999 = vunpack.c.l.b16 %v7327
        %v8000 = vunpack.c.h.b16 %v7327
        %v8001 = vunpack.c.l.b16 %v7328
        %v8002 = vunpack.c.h.b16 %v7328
        %v8003 = vunpack.c.l.b16 %v7329
        %v8004 = vunpack.c.h.b16 %v7329
        %v8005 = vunpack.c.l.b16 %v7330
        %v8006 = vunpack.c.h.b16 %v7330
        %v8007 = vunpack.c.l.b16 %v7331
        %v8008 = vunpack.c.h.b16 %v7331
        %v8009 = vunpack.c.l.b16 %v7332
        %v8010 = vunpack.c.h.b16 %v7332
        %v8011 = vunpack.c.l.b16 %v7333
        %v8012 = vunpack.c.h.b16 %v7333
        %v8013 = vunpack.c.l.b16 %v7334
        %v8014 = vunpack.c.h.b16 %v7334
        %v8015 = vunpack.c.l.b16 %v7335
        %v8016 = vunpack.c.h.b16 %v7335
        %v8017 = vunpack.c.l.b16 %v7336
        %v8018 = vunpack.c.h.b16 %v7336
        %v8019 = vunpack.c.l.b16 %v7337
        %v8020 = vunpack.c.h.b16 %v7337
        %v8021 = vunpack.c.l.b16 %v7338
        %v8022 = vunpack.c.h.b16 %v7338
        %v8023 = vunpack.c.l.b16 %v7339
        %v8024 = vunpack.c.h.b16 %v7339
        %v8025 = vunpack.c.l.b16 %v7340
        %v8026 = vunpack.c.h.b16 %v7340
        %v8027 = vunpack.c.l.b16 %v7341
        %v8028 = vunpack.c.h.b16 %v7341
        %v8029 = vunpack.c.l.b16 %v7342
        %v8030 = vunpack.c.h.b16 %v7342
        %v8031 = vunpack.c.l.b16 %v7343
        %v8032 = vunpack.c.h.b16 %v7343
        %v8033 = vunpack.c.l.b16 %v7344
        %v8034 = vunpack.c.h.b16 %v7344
        %v8035 = vunpack.c.l.b16 %v7345
        %v8036 = vunpack.c.h.b16 %v7345
        %v8037 = vunpack.c.l.b16 %v7346
        %v8038 = vunpack.c.h.b16 %v7346
        %v8039 = vunpack.c.l.b16 %v7347
        %v8040 = vunpack.c.h.b16 %v7347
        %v8041 = vunpack.c.l.b16 %v7348
        %v8042 = vunpack.c.h.b16 %v7348
        %v8043 = vunpack.c.l.b16 %v7349
        %v8044 = vunpack.c.h.b16 %v7349
        %v8045 = vunpack.c.l.b16 %v7350
        %v8046 = vunpack.c.h.b16 %v7350
        %v8047 = vunpack.c.l.b16 %v7351
        %v8048 = vunpack.c.h.b16 %v7351
        %v8049 = vunpack.c.l.b16 %v7352
        %v8050 = vunpack.c.h.b16 %v7352
        %v8051 = vunpack.c.l.b16 %v7353
        %v8052 = vunpack.c.h.b16 %v7353
        %v8053 = vunpack.c.l.b16 %v7354
        %v8054 = vunpack.c.h.b16 %v7354
        %v8055 = vunpack.c.l.b16 %v7355
        %v8056 = vunpack.c.h.b16 %v7355
        %v8057 = vunpack.c.l.b16 %v7356
        %v8058 = vunpack.c.h.b16 %v7356
        %v8059 = vunpack.c.l.b16 %v7357
        %v8060 = vunpack.c.h.b16 %v7357
        %v8061 = vunpack.c.l.b16 %v7358
        %v8062 = vunpack.c.h.b16 %v7358
        %v8063 = vunpack.c.l.b16 %v7359
        %v8064 = vunpack.c.h.b16 %v7359
        %v8065 = vunpack.c.l.b16 %v7360
        %v8066 = vunpack.c.h.b16 %v7360
        %v8067 = vunpack.c.l.b16 %v7361
        %v8068 = vunpack.c.h.b16 %v7361
        %v8069 = vunpack.c.l.b16 %v7362
        %v8070 = vunpack.c.h.b16 %v7362
        %v8071 = vunpack.c.l.b16 %v7363
        %v8072 = vunpack.c.h.b16 %v7363
        %v8073 = vunpack.c.l.b16 %v7364
        %v8074 = vunpack.c.h.b16 %v7364
        %v8075 = vunpack.c.l.b16 %v7365
        %v8076 = vunpack.c.h.b16 %v7365
        %v8077 = vunpack.c.l.b16 %v7366
        %v8078 = vunpack.c.h.b16 %v7366
        %v8079 = vunpack.c.l.b16 %v7367
        %v8080 = vunpack.c.h.b16 %v7367
        %v8081 = vunpack.c.l.b16 %v7368
        %v8082 = vunpack.c.h.b16 %v7368
        %v8083 = vunpack.c.l.b16 %v7369
        %v8084 = vunpack.c.h.b16 %v7369
        %v8085 = vunpack.c.l.b16 %v7370
        %v8086 = vunpack.c.h.b16 %v7370
        %v8087 = vunpack.c.l.b16 %v7371
        %v8088 = vunpack.c.h.b16 %v7371
        %v8089 = vunpack.c.l.b16 %v7372
        %v8090 = vunpack.c.h.b16 %v7372
        %v8091 = vunpack.c.l.b16 %v7373
        %v8092 = vunpack.c.h.b16 %v7373
        %v8093 = vunpack.c.l.b16 %v7374
        %v8094 = vunpack.c.h.b16 %v7374
        %v8095 = vunpack.c.l.b16 %v7375
        %v8096 = vunpack.c.h.b16 %v7375
        %v8097 = vunpack.c.l.b16 %v7376
        %v8098 = vunpack.c.h.b16 %v7376
        %v8099 = vunpack.c.l.b16 %v7377
        %v8100 = vunpack.c.h.b16 %v7377
        %v8101 = vunpack.c.l.b16 %v7378
        %v8102 = vunpack.c.h.b16 %v7378
        %v8103 = vunpack.c.l.b16 %v7379
        %v8104 = vunpack.c.h.b16 %v7379
        %v8105 = vunpack.c.l.b16 %v7380
        %v8106 = vunpack.c.h.b16 %v7380
        %v8107 = vunpack.c.l.b16 %v7381
        %v8108 = vunpack.c.h.b16 %v7381
        %v8109 = vunpack.c.l.b16 %v7382
        %v8110 = vunpack.c.h.b16 %v7382
        %v8111 = vunpack.c.l.b16 %v7383
        %v8112 = vunpack.c.h.b16 %v7383
        %v8113 = vunpack.c.l.b16 %v7384
        %v8114 = vunpack.c.h.b16 %v7384
        %v8115 = vunpack.c.l.b16 %v7385
        %v8116 = vunpack.c.h.b16 %v7385
        %v8117 = vunpack.c.l.b16 %v7386
        %v8118 = vunpack.c.h.b16 %v7386
        %v8119 = vunpack.c.l.b16 %v7387
        %v8120 = vunpack.c.h.b16 %v7387
        %v8121 = vunpack.c.l.b16 %v7388
        %v8122 = vunpack.c.h.b16 %v7388
        %v8123 = vunpack.c.l.b16 %v7389
        %v8124 = vunpack.c.h.b16 %v7389
        %v8125 = vunpack.c.l.b16 %v7390
        %v8126 = vunpack.c.h.b16 %v7390
        %v8127 = vunpack.c.l.b16 %v7391
        %v8128 = vunpack.c.h.b16 %v7391
        %v8129 = vunpack.c.l.b16 %v7392
        %v8130 = vunpack.c.h.b16 %v7392
        %v8131 = vunpack.c.l.b16 %v7393
        %v8132 = vunpack.c.h.b16 %v7393
        %v8133 = vunpack.c.l.b16 %v7394
        %v8134 = vunpack.c.h.b16 %v7394
        %v8135 = vunpack.c.l.b16 %v7395
        %v8136 = vunpack.c.h.b16 %v7395
        %v8137 = vunpack.c.l.b16 %v7396
        %v8138 = vunpack.c.h.b16 %v7396
        %v8139 = vunpack.c.l.b16 %v7397
        %v8140 = vunpack.c.h.b16 %v7397
        %v8141 = vunpack.c.l.b16 %v7398
        %v8142 = vunpack.c.h.b16 %v7398
        %v8143 = vunpack.c.l.b16 %v7399
        %v8144 = vunpack.c.h.b16 %v7399
        %v8145 = vunpack.c.l.b16 %v7400
        %v8146 = vunpack.c.h.b16 %v7400
        %v8147 = vunpack.c.l.b16 %v7401
        %v8148 = vunpack.c.h.b16 %v7401
        %v8149 = vunpack.c.l.b16 %v7402
        %v8150 = vunpack.c.h.b16 %v7402
        %v8151 = vunpack.c.l.b16 %v7403
        %v8152 = vunpack.c.h.b16 %v7403
        %v8153 = vunpack.c.l.b16 %v7404
        %v8154 = vunpack.c.h.b16 %v7404
        %v8155 = vunpack.c.l.b16 %v7405
        %v8156 = vunpack.c.h.b16 %v7405
        %v8157 = vunpack.c.l.b16 %v7406
        %v8158 = vunpack.c.h.b16 %v7406
        %v8159 = vunpack.c.l.b16 %v7407
        %v8160 = vunpack.c.h.b16 %v7407
        %v8161 = vunpack.c.l.b16 %v7408
        %v8162 = vunpack.c.h.b16 %v7408
        %v8163 = vunpack.c.l.b16 %v7409
        %v8164 = vunpack.c.h.b16 %v7409
        %v8165 = vunpack.c.l.b16 %v7410
        %v8166 = vunpack.c.h.b16 %v7410
        %v8167 = vunpack.c.l.b16 %v7411
        %v8168 = vunpack.c.h.b16 %v7411
        %v8169 = vunpack.c.l.b16 %v7412
        %v8170 = vunpack.c.h.b16 %v7412
        %v8171 = vunpack.c.l.b16 %v7413
        %v8172 = vunpack.c.h.b16 %v7413
        %v8173 = vunpack.c.l.b16 %v7414
        %v8174 = vunpack.c.h.b16 %v7414
        %v8175 = vunpack.c.l.b16 %v7415
        %v8176 = vunpack.c.h.b16 %v7415
        %v8177 = vunpack.c.l.b16 %v7416
        %v8178 = vunpack.c.h.b16 %v7416
        %v8179 = vunpack.c.l.b16 %v7417
        %v8180 = vunpack.c.h.b16 %v7417
        %v8181 = vunpack.c.l.b16 %v7418
        %v8182 = vunpack.c.h.b16 %v7418
        %v8183 = vunpack.c.l.b16 %v7419
        %v8184 = vunpack.c.h.b16 %v7419
        %v8185 = vunpack.c.l.b16 %v7420
        %v8186 = vunpack.c.h.b16 %v7420
        %v8187 = vunpack.c.l.b16 %v7421
        %v8188 = vunpack.c.h.b16 %v7421
        %v8189 = vunpack.c.l.b16 %v7422
        %v8190 = vunpack.c.h.b16 %v7422
        %v8191 = vunpack.c.l.b16 %v7423
        %v8192 = vunpack.c.h.b16 %v7423
        %v8193 = vunpack.c.l.b16 %v7424
        %v8194 = vunpack.c.h.b16 %v7424
        %v8195 = vunpack.c.l.b16 %v7425
        %v8196 = vunpack.c.h.b16 %v7425
        %v8197 = vunpack.c.l.b16 %v7426
        %v8198 = vunpack.c.h.b16 %v7426
        %v8199 = vunpack.c.l.b16 %v7427
        %v8200 = vunpack.c.h.b16 %v7427
        %v8201 = vunpack.c.l.b16 %v7428
        %v8202 = vunpack.c.h.b16 %v7428
        %v8203 = vunpack.c.l.b16 %v7429
        %v8204 = vunpack.c.h.b16 %v7429
        %v8205 = vunpack.c.l.b16 %v7430
        %v8206 = vunpack.c.h.b16 %v7430
        %v8207 = vunpack.c.l.b16 %v7431
        %v8208 = vunpack.c.h.b16 %v7431
        %v8209 = vunpack.c.l.b16 %v7432
        %v8210 = vunpack.c.h.b16 %v7432
        %v8211 = vunpack.c.l.b16 %v7433
        %v8212 = vunpack.c.h.b16 %v7433
        %v8213 = vunpack.c.l.b16 %v7434
        %v8214 = vunpack.c.h.b16 %v7434
        %v8215 = vunpack.c.l.b16 %v7435
        %v8216 = vunpack.c.h.b16 %v7435
        %v8217 = vunpack.c.l.b16 %v7436
        %v8218 = vunpack.c.h.b16 %v7436
        %v8219 = vunpack.c.l.b16 %v7437
        %v8220 = vunpack.c.h.b16 %v7437
        %v8221 = vunpack.c.l.b16 %v7438
        %v8222 = vunpack.c.h.b16 %v7438
        %v8223 = vunpack.c.l.b16 %v7439
        %v8224 = vunpack.c.h.b16 %v7439
        %v8225 = vunpack.c.l.b16 %v7440
        %v8226 = vunpack.c.h.b16 %v7440
        %v8227 = vunpack.c.l.b16 %v7441
        %v8228 = vunpack.c.h.b16 %v7441
        %v8229 = vunpack.c.l.b16 %v7442
        %v8230 = vunpack.c.h.b16 %v7442
        %v8231 = vunpack.c.l.b16 %v7443
        %v8232 = vunpack.c.h.b16 %v7443
        %v8233 = vunpack.c.l.b16 %v7444
        %v8234 = vunpack.c.h.b16 %v7444
        %v8235 = vunpack.c.l.b16 %v7445
        %v8236 = vunpack.c.h.b16 %v7445
        %v8237 = vunpack.c.l.b16 %v7446
        %v8238 = vunpack.c.h.b16 %v7446
        %v8239 = vpack.c.b16 %v7735, %v7727
        %v8240 = vpack.c.b16 %v7736, %v7728
        %v8241 = vpack.c.b16 %v7737, %v7729
        %v8242 = vpack.c.b16 %v7738, %v7730
        %v8243 = vpack.c.b16 %v7739, %v7731
        %v8244 = vpack.c.b16 %v7740, %v7732
        %v8245 = vpack.c.b16 %v7741, %v7733
        %v8246 = vpack.c.b16 %v7742, %v7734
        %v8247 = vpack.c.b16 %v7751, %v7743
        %v8248 = vpack.c.b16 %v7752, %v7744
        %v8249 = vpack.c.b16 %v7753, %v7745
        %v8250 = vpack.c.b16 %v7754, %v7746
        %v8251 = vpack.c.b16 %v7755, %v7747
        %v8252 = vpack.c.b16 %v7756, %v7748
        %v8253 = vpack.c.b16 %v7757, %v7749
        %v8254 = vpack.c.b16 %v7758, %v7750
        %v8255 = vpack.c.b16 %v7767, %v7759
        %v8256 = vpack.c.b16 %v7768, %v7760
        %v8257 = vpack.c.b16 %v7769, %v7761
        %v8258 = vpack.c.b16 %v7770, %v7762
        %v8259 = vpack.c.b16 %v7771, %v7763
        %v8260 = vpack.c.b16 %v7772, %v7764
        %v8261 = vpack.c.b16 %v7773, %v7765
        %v8262 = vpack.c.b16 %v7774, %v7766
        %v8263 = vpack.c.b16 %v7783, %v7775
        %v8264 = vpack.c.b16 %v7784, %v7776
        %v8265 = vpack.c.b16 %v7785, %v7777
        %v8266 = vpack.c.b16 %v7786, %v7778
        %v8267 = vpack.c.b16 %v7787, %v7779
        %v8268 = vpack.c.b16 %v7788, %v7780
        %v8269 = vpack.c.b16 %v7789, %v7781
        %v8270 = vpack.c.b16 %v7790, %v7782
        %v8271 = vpack.c.b16 %v7799, %v7791
        %v8272 = vpack.c.b16 %v7800, %v7792
        %v8273 = vpack.c.b16 %v7801, %v7793
        %v8274 = vpack.c.b16 %v7802, %v7794
        %v8275 = vpack.c.b16 %v7803, %v7795
        %v8276 = vpack.c.b16 %v7804, %v7796
        %v8277 = vpack.c.b16 %v7805, %v7797
        %v8278 = vpack.c.b16 %v7806, %v7798
        %v8279 = vpack.c.b16 %v7815, %v7807
        %v8280 = vpack.c.b16 %v7816, %v7808
        %v8281 = vpack.c.b16 %v7817, %v7809
        %v8282 = vpack.c.b16 %v7818, %v7810
        %v8283 = vpack.c.b16 %v7819, %v7811
        %v8284 = vpack.c.b16 %v7820, %v7812
        %v8285 = vpack.c.b16 %v7821, %v7813
        %v8286 = vpack.c.b16 %v7822, %v7814
        %v8287 = vpack.c.b16 %v7831, %v7823
        %v8288 = vpack.c.b16 %v7832, %v7824
        %v8289 = vpack.c.b16 %v7833, %v7825
        %v8290 = vpack.c.b16 %v7834, %v7826
        %v8291 = vpack.c.b16 %v7835, %v7827
        %v8292 = vpack.c.b16 %v7836, %v7828
        %v8293 = vpack.c.b16 %v7837, %v7829
        %v8294 = vpack.c.b16 %v7838, %v7830
        %v8295 = vpack.c.b16 %v7847, %v7839
        %v8296 = vpack.c.b16 %v7848, %v7840
        %v8297 = vpack.c.b16 %v7849, %v7841
        %v8298 = vpack.c.b16 %v7850, %v7842
        %v8299 = vpack.c.b16 %v7851, %v7843
        %v8300 = vpack.c.b16 %v7852, %v7844
        %v8301 = vpack.c.b16 %v7853, %v7845
        %v8302 = vpack.c.b16 %v7854, %v7846
        %v8303 = vpack.c.b16 %v7863, %v7855
        %v8304 = vpack.c.b16 %v7864, %v7856
        %v8305 = vpack.c.b16 %v7865, %v7857
        %v8306 = vpack.c.b16 %v7866, %v7858
        %v8307 = vpack.c.b16 %v7867, %v7859
        %v8308 = vpack.c.b16 %v7868, %v7860
        %v8309 = vpack.c.b16 %v7869, %v7861
        %v8310 = vpack.c.b16 %v7870, %v7862
        %v8311 = vpack.c.b16 %v7879, %v7871
        %v8312 = vpack.c.b16 %v7880, %v7872
        %v8313 = vpack.c.b16 %v7881, %v7873
        %v8314 = vpack.c.b16 %v7882, %v7874
        %v8315 = vpack.c.b16 %v7883, %v7875
        %v8316 = vpack.c.b16 %v7884, %v7876
        %v8317 = vpack.c.b16 %v7885, %v7877
        %v8318 = vpack.c.b16 %v7886, %v7878
        %v8319 = vpack.c.b16 %v7895, %v7887
        %v8320 = vpack.c.b16 %v7896, %v7888
        %v8321 = vpack.c.b16 %v7897, %v7889
        %v8322 = vpack.c.b16 %v7898, %v7890
        %v8323 = vpack.c.b16 %v7899, %v7891
        %v8324 = vpack.c.b16 %v7900, %v7892
        %v8325 = vpack.c.b16 %v7901, %v7893
        %v8326 = vpack.c.b16 %v7902, %v7894
        %v8327 = vpack.c.b16 %v7911, %v7903
        %v8328 = vpack.c.b16 %v7912, %v7904
        %v8329 = vpack.c.b16 %v7913, %v7905
        %v8330 = vpack.c.b16 %v7914, %v7906
        %v8331 = vpack.c.b16 %v7915, %v7907
        %v8332 = vpack.c.b16 %v7916, %v7908
        %v8333 = vpack.c.b16 %v7917, %v7909
        %v8334 = vpack.c.b16 %v7918, %v7910
        %v8335 = vpack.c.b16 %v7927, %v7919
        %v8336 = vpack.c.b16 %v7928, %v7920
        %v8337 = vpack.c.b16 %v7929, %v7921
        %v8338 = vpack.c.b16 %v7930, %v7922
        %v8339 = vpack.c.b16 %v7931, %v7923
        %v8340 = vpack.c.b16 %v7932, %v7924
        %v8341 = vpack.c.b16 %v7933, %v7925
        %v8342 = vpack.c.b16 %v7934, %v7926
        %v8343 = vpack.c.b16 %v7943, %v7935
        %v8344 = vpack.c.b16 %v7944, %v7936
        %v8345 = vpack.c.b16 %v7945, %v7937
        %v8346 = vpack.c.b16 %v7946, %v7938
        %v8347 = vpack.c.b16 %v7947, %v7939
        %v8348 = vpack.c.b16 %v7948, %v7940
        %v8349 = vpack.c.b16 %v7949, %v7941
        %v8350 = vpack.c.b16 %v7950, %v7942
        %v8351 = vpack.c.b16 %v7959, %v7951
        %v8352 = vpack.c.b16 %v7960, %v7952
        %v8353 = vpack.c.b16 %v7961, %v7953
        %v8354 = vpack.c.b16 %v7962, %v7954
        %v8355 = vpack.c.b16 %v7963, %v7955
        %v8356 = vpack.c.b16 %v7964, %v7956
        %v8357 = vpack.c.b16 %v7965, %v7957
        %v8358 = vpack.c.b16 %v7966, %v7958
        %v8359 = vpack.c.b16 %v7975, %v7967
        %v8360 = vpack.c.b16 %v7976, %v7968
        %v8361 = vpack.c.b16 %v7977, %v7969
        %v8362 = vpack.c.b16 %v7978, %v7970
        %v8363 = vpack.c.b16 %v7979, %v7971
        %v8364 = vpack.c.b16 %v7980, %v7972
        %v8365 = vpack.c.b16 %v7981, %v7973
        %v8366 = vpack.c.b16 %v7982, %v7974
        %v8367 = vpack.c.b16 %v7991, %v7983
        %v8368 = vpack.c.b16 %v7992, %v7984
        %v8369 = vpack.c.b16 %v7993, %v7985
        %v8370 = vpack.c.b16 %v7994, %v7986
        %v8371 = vpack.c.b16 %v7995, %v7987
        %v8372 = vpack.c.b16 %v7996, %v7988
        %v8373 = vpack.c.b16 %v7997, %v7989
        %v8374 = vpack.c.b16 %v7998, %v7990
        %v8375 = vpack.c.b16 %v8007, %v7999
        %v8376 = vpack.c.b16 %v8008, %v8000
        %v8377 = vpack.c.b16 %v8009, %v8001
        %v8378 = vpack.c.b16 %v8010, %v8002
        %v8379 = vpack.c.b16 %v8011, %v8003
        %v8380 = vpack.c.b16 %v8012, %v8004
        %v8381 = vpack.c.b16 %v8013, %v8005
        %v8382 = vpack.c.b16 %v8014, %v8006
        %v8383 = vpack.c.b16 %v8023, %v8015
        %v8384 = vpack.c.b16 %v8024, %v8016
        %v8385 = vpack.c.b16 %v8025, %v8017
        %v8386 = vpack.c.b16 %v8026, %v8018
        %v8387 = vpack.c.b16 %v8027, %v8019
        %v8388 = vpack.c.b16 %v8028, %v8020
        %v8389 = vpack.c.b16 %v8029, %v8021
        %v8390 = vpack.c.b16 %v8030, %v8022
        %v8391 = vpack.c.b16 %v8039, %v8031
        %v8392 = vpack.c.b16 %v8040, %v8032
        %v8393 = vpack.c.b16 %v8041, %v8033
        %v8394 = vpack.c.b16 %v8042, %v8034
        %v8395 = vpack.c.b16 %v8043, %v8035
        %v8396 = vpack.c.b16 %v8044, %v8036
        %v8397 = vpack.c.b16 %v8045, %v8037
        %v8398 = vpack.c.b16 %v8046, %v8038
        %v8399 = vpack.c.b16 %v8055, %v8047
        %v8400 = vpack.c.b16 %v8056, %v8048
        %v8401 = vpack.c.b16 %v8057, %v8049
        %v8402 = vpack.c.b16 %v8058, %v8050
        %v8403 = vpack.c.b16 %v8059, %v8051
        %v8404 = vpack.c.b16 %v8060, %v8052
        %v8405 = vpack.c.b16 %v8061, %v8053
        %v8406 = vpack.c.b16 %v8062, %v8054
        %v8407 = vpack.c.b16 %v8071, %v8063
        %v8408 = vpack.c.b16 %v8072, %v8064
        %v8409 = vpack.c.b16 %v8073, %v8065
        %v8410 = vpack.c.b16 %v8074, %v8066
        %v8411 = vpack.c.b16 %v8075, %v8067
        %v8412 = vpack.c.b16 %v8076, %v8068
        %v8413 = vpack.c.b16 %v8077, %v8069
        %v8414 = vpack.c.b16 %v8078, %v8070
        %v8415 = vpack.c.b16 %v8087, %v8079
        %v8416 = vpack.c.b16 %v8088, %v8080
        %v8417 = vpack.c.b16 %v8089, %v8081
        %v8418 = vpack.c.b16 %v8090, %v8082
        %v8419 = vpack.c.b16 %v8091, %v8083
        %v8420 = vpack.c.b16 %v8092, %v8084
        %v8421 = vpack.c.b16 %v8093, %v8085
        %v8422 = vpack.c.b16 %v8094, %v8086
        %v8423 = vpack.c.b16 %v8103, %v8095
        %v8424 = vpack.c.b16 %v8104, %v8096
        %v8425 = vpack.c.b16 %v8105, %v8097
        %v8426 = vpack.c.b16 %v8106, %v8098
        %v8427 = vpack.c.b16 %v8107, %v8099
        %v8428 = vpack.c.b16 %v8108, %v8100
        %v8429 = vpack.c.b16 %v8109, %v8101
        %v8430 = vpack.c.b16 %v8110, %v8102
        %v8431 = vpack.c.b16 %v8119, %v8111
        %v8432 = vpack.c.b16 %v8120, %v8112
        %v8433 = vpack.c.b16 %v8121, %v8113
        %v8434 = vpack.c.b16 %v8122, %v8114
        %v8435 = vpack.c.b16 %v8123, %v8115
        %v8436 = vpack.c.b16 %v8124, %v8116
        %v8437 = vpack.c.b16 %v8125, %v8117
        %v8438 = vpack.c.b16 %v8126, %v8118
        %v8439 = vpack.c.b16 %v8135, %v8127
        %v8440 = vpack.c.b16 %v8136, %v8128
        %v8441 = vpack.c.b16 %v8137, %v8129
        %v8442 = vpack.c.b16 %v8138, %v8130
        %v8443 = vpack.c.b16 %v8139, %v8131
        %v8444 = vpack.c.b16 %v8140, %v8132
        %v8445 = vpack.c.b16 %v8141, %v8133
        %v8446 = vpack.c.b16 %v8142, %v8134
        %v8447 = vpack.c.b16 %v8151, %v8143
        %v8448 = vpack.c.b16 %v8152, %v8144
        %v8449 = vpack.c.b16 %v8153, %v8145
        %v8450 = vpack.c.b16 %v8154, %v8146
        %v8451 = vpack.c.b16 %v8155, %v8147
        %v8452 = vpack.c.b16 %v8156, %v8148
        %v8453 = vpack.c.b16 %v8157, %v8149
        %v8454 = vpack.c.b16 %v8158, %v8150
        %v8455 = vpack.c.b16 %v8167, %v8159
        %v8456 = vpack.c.b16 %v8168, %v8160
        %v8457 = vpack.c.b16 %v8169, %v8161
        %v8458 = vpack.c.b16 %v8170, %v8162
        %v8459 = vpack.c.b16 %v8171, %v8163
        %v8460 = vpack.c.b16 %v8172, %v8164
        %v8461 = vpack.c.b16 %v8173, %v8165
        %v8462 = vpack.c.b16 %v8174, %v8166
        %v8463 = vpack.c.b16 %v8183, %v8175
        %v8464 = vpack.c.b16 %v8184, %v8176
        %v8465 = vpack.c.b16 %v8185, %v8177
        %v8466 = vpack.c.b16 %v8186, %v8178
        %v8467 = vpack.c.b16 %v8187, %v8179
        %v8468 = vpack.c.b16 %v8188, %v8180
        %v8469 = vpack.c.b16 %v8189, %v8181
        %v8470 = vpack.c.b16 %v8190, %v8182
        %v8471 = vpack.c.b16 %v8199, %v8191
        %v8472 = vpack.c.b16 %v8200, %v8192
        %v8473 = vpack.c.b16 %v8201, %v8193
        %v8474 = vpack.c.b16 %v8202, %v8194
        %v8475 = vpack.c.b16 %v8203, %v8195
        %v8476 = vpack.c.b16 %v8204, %v8196
        %v8477 = vpack.c.b16 %v8205, %v8197
        %v8478 = vpack.c.b16 %v8206, %v8198
        %v8479 = vpack.c.b16 %v8215, %v8207
        %v8480 = vpack.c.b16 %v8216, %v8208
        %v8481 = vpack.c.b16 %v8217, %v8209
        %v8482 = vpack.c.b16 %v8218, %v8210
        %v8483 = vpack.c.b16 %v8219, %v8211
        %v8484 = vpack.c.b16 %v8220, %v8212
        %v8485 = vpack.c.b16 %v8221, %v8213
        %v8486 = vpack.c.b16 %v8222, %v8214
        %v8487 = vpack.c.b16 %v8231, %v8223
        %v8488 = vpack.c.b16 %v8232, %v8224
        %v8489 = vpack.c.b16 %v8233, %v8225
        %v8490 = vpack.c.b16 %v8234, %v8226
        %v8491 = vpack.c.b16 %v8235, %v8227
        %v8492 = vpack.c.b16 %v8236, %v8228
        %v8493 = vpack.c.b16 %v8237, %v8229
        %v8494 = vpack.c.b16 %v8238, %v8230
        %8751 = vmatpush.bf16.msra.mxu0 %v8295
        %8752 = vmatpush.bf16.msra.mxu0 %v8287
        %8753 = vmatpush.bf16.msra.mxu0 %v8279
        %8754 = vmatpush.bf16.msra.mxu0 %v8271
        %8755 = vmatpush.bf16.msra.mxu0 %v8263
        %8756 = vmatpush.bf16.msra.mxu0 %v8255
        %8757 = vmatpush.bf16.msra.mxu0 %v8247
        %8758 = vmatpush.bf16.msra.mxu0 %v8239
        %8759 = vmatmul.bf16.gmra.mxu0 %v4949
        %v8760 = vpop.f32.mrf.mxu0
        %v8761 = vadd.f32 %v7463, %v8760
        %v8762 = vpop.f32.mrf.mxu0
        %v8763 = vadd.f32 %v7463, %v8762
        %8764 = vmatmul.bf16.gmra.mxu0 %v4953
        %v8765 = vpop.f32.mrf.mxu0
        %v8766 = vadd.f32 %v7463, %v8765
        %v8767 = vpop.f32.mrf.mxu0
        %v8768 = vadd.f32 %v7463, %v8767
        %8769 = vdwg.mxu0
        %8770 = vmatpush.bf16.msra.mxu0 %v8359
        %8771 = vmatpush.bf16.msra.mxu0 %v8351
        %8772 = vmatpush.bf16.msra.mxu0 %v8343
        %8773 = vmatpush.bf16.msra.mxu0 %v8335
        %8774 = vmatpush.bf16.msra.mxu0 %v8327
        %8775 = vmatpush.bf16.msra.mxu0 %v8319
        %8776 = vmatpush.bf16.msra.mxu0 %v8311
        %8777 = vmatpush.bf16.msra.mxu0 %v8303
        %8778 = vmatmul.bf16.gmra.mxu0 %v4950
        %v8779 = vpop.f32.mrf.mxu0
        %v8780 = vadd.f32 %v8761, %v8779
        %v8781 = vpop.f32.mrf.mxu0
        %v8782 = vadd.f32 %v8763, %v8781
        %8783 = vmatmul.bf16.gmra.mxu0 %v4954
        %v8784 = vpop.f32.mrf.mxu0
        %v8785 = vadd.f32 %v8766, %v8784
        %v8786 = vpop.f32.mrf.mxu0
        %v8787 = vadd.f32 %v8768, %v8786
        %8788 = vdwg.mxu0
        %8789 = vmatpush.bf16.msra.mxu0 %v8423
        %8790 = vmatpush.bf16.msra.mxu0 %v8415
        %8791 = vmatpush.bf16.msra.mxu0 %v8407
        %8792 = vmatpush.bf16.msra.mxu0 %v8399
        %8793 = vmatpush.bf16.msra.mxu0 %v8391
        %8794 = vmatpush.bf16.msra.mxu0 %v8383
        %8795 = vmatpush.bf16.msra.mxu0 %v8375
        %8796 = vmatpush.bf16.msra.mxu0 %v8367
        %8797 = vmatmul.bf16.gmra.mxu0 %v4951
        %v8798 = vpop.f32.mrf.mxu0
        %v8799 = vadd.f32 %v8780, %v8798
        %v8800 = vpop.f32.mrf.mxu0
        %v8801 = vadd.f32 %v8782, %v8800
        %8802 = vmatmul.bf16.gmra.mxu0 %v4955
        %v8803 = vpop.f32.mrf.mxu0
        %v8804 = vadd.f32 %v8785, %v8803
        %v8805 = vpop.f32.mrf.mxu0
        %v8806 = vadd.f32 %v8787, %v8805
        %8807 = vdwg.mxu0
        %8808 = vmatpush.bf16.msra.mxu0 %v8487
        %8809 = vmatpush.bf16.msra.mxu0 %v8479
        %8810 = vmatpush.bf16.msra.mxu0 %v8471
        %8811 = vmatpush.bf16.msra.mxu0 %v8463
        %8812 = vmatpush.bf16.msra.mxu0 %v8455
        %8813 = vmatpush.bf16.msra.mxu0 %v8447
        %8814 = vmatpush.bf16.msra.mxu0 %v8439
        %8815 = vmatpush.bf16.msra.mxu0 %v8431
        %8816 = vmatmul.bf16.gmra.mxu0 %v4952
        %v8817 = vpop.f32.mrf.mxu0
        %v8818 = vadd.f32 %v8799, %v8817
        %v8819 = vpop.f32.mrf.mxu0
        %v8820 = vadd.f32 %v8801, %v8819
        %8821 = vmatmul.bf16.gmra.mxu0 %v4956
        %v8822 = vpop.f32.mrf.mxu0
        %v8823 = vadd.f32 %v8804, %v8822
        %v8824 = vpop.f32.mrf.mxu0
        %v8825 = vadd.f32 %v8806, %v8824
        %8826 = vdwg.mxu0
        %8827 = vmatpush.bf16.msra.mxu0 %v8296
        %8828 = vmatpush.bf16.msra.mxu0 %v8288
        %8829 = vmatpush.bf16.msra.mxu0 %v8280
        %8830 = vmatpush.bf16.msra.mxu0 %v8272
        %8831 = vmatpush.bf16.msra.mxu0 %v8264
        %8832 = vmatpush.bf16.msra.mxu0 %v8256
        %8833 = vmatpush.bf16.msra.mxu0 %v8248
        %8834 = vmatpush.bf16.msra.mxu0 %v8240
        %8835 = vmatmul.bf16.gmra.mxu0 %v4949
        %v8836 = vpop.f32.mrf.mxu0
        %v8837 = vadd.f32 %v7464, %v8836
        %v8838 = vpop.f32.mrf.mxu0
        %v8839 = vadd.f32 %v7464, %v8838
        %8840 = vmatmul.bf16.gmra.mxu0 %v4953
        %v8841 = vpop.f32.mrf.mxu0
        %v8842 = vadd.f32 %v7464, %v8841
        %v8843 = vpop.f32.mrf.mxu0
        %v8844 = vadd.f32 %v7464, %v8843
        %8845 = vdwg.mxu0
        %8846 = vmatpush.bf16.msra.mxu0 %v8360
        %8847 = vmatpush.bf16.msra.mxu0 %v8352
        %8848 = vmatpush.bf16.msra.mxu0 %v8344
        %8849 = vmatpush.bf16.msra.mxu0 %v8336
        %8850 = vmatpush.bf16.msra.mxu0 %v8328
        %8851 = vmatpush.bf16.msra.mxu0 %v8320
        %8852 = vmatpush.bf16.msra.mxu0 %v8312
        %8853 = vmatpush.bf16.msra.mxu0 %v8304
        %8854 = vmatmul.bf16.gmra.mxu0 %v4950
        %v8855 = vpop.f32.mrf.mxu0
        %v8856 = vadd.f32 %v8837, %v8855
        %v8857 = vpop.f32.mrf.mxu0
        %v8858 = vadd.f32 %v8839, %v8857
        %8859 = vmatmul.bf16.gmra.mxu0 %v4954
        %v8860 = vpop.f32.mrf.mxu0
        %v8861 = vadd.f32 %v8842, %v8860
        %v8862 = vpop.f32.mrf.mxu0
        %v8863 = vadd.f32 %v8844, %v8862
        %8864 = vdwg.mxu0
        %8865 = vmatpush.bf16.msra.mxu0 %v8424
        %8866 = vmatpush.bf16.msra.mxu0 %v8416
        %8867 = vmatpush.bf16.msra.mxu0 %v8408
        %8868 = vmatpush.bf16.msra.mxu0 %v8400
        %8869 = vmatpush.bf16.msra.mxu0 %v8392
        %8870 = vmatpush.bf16.msra.mxu0 %v8384
        %8871 = vmatpush.bf16.msra.mxu0 %v8376
        %8872 = vmatpush.bf16.msra.mxu0 %v8368
        %8873 = vmatmul.bf16.gmra.mxu0 %v4951
        %v8874 = vpop.f32.mrf.mxu0
        %v8875 = vadd.f32 %v8856, %v8874
        %v8876 = vpop.f32.mrf.mxu0
        %v8877 = vadd.f32 %v8858, %v8876
        %8878 = vmatmul.bf16.gmra.mxu0 %v4955
        %v8879 = vpop.f32.mrf.mxu0
        %v8880 = vadd.f32 %v8861, %v8879
        %v8881 = vpop.f32.mrf.mxu0
        %v8882 = vadd.f32 %v8863, %v8881
        %8883 = vdwg.mxu0
        %8884 = vmatpush.bf16.msra.mxu0 %v8488
        %8885 = vmatpush.bf16.msra.mxu0 %v8480
        %8886 = vmatpush.bf16.msra.mxu0 %v8472
        %8887 = vmatpush.bf16.msra.mxu0 %v8464
        %8888 = vmatpush.bf16.msra.mxu0 %v8456
        %8889 = vmatpush.bf16.msra.mxu0 %v8448
        %8890 = vmatpush.bf16.msra.mxu0 %v8440
        %8891 = vmatpush.bf16.msra.mxu0 %v8432
        %8892 = vmatmul.bf16.gmra.mxu0 %v4952
        %v8893 = vpop.f32.mrf.mxu0
        %v8894 = vadd.f32 %v8875, %v8893
        %v8895 = vpop.f32.mrf.mxu0
        %v8896 = vadd.f32 %v8877, %v8895
        %8897 = vmatmul.bf16.gmra.mxu0 %v4956
        %v8898 = vpop.f32.mrf.mxu0
        %v8899 = vadd.f32 %v8880, %v8898
        %v8900 = vpop.f32.mrf.mxu0
        %v8901 = vadd.f32 %v8882, %v8900
        %8902 = vdwg.mxu0
        %8903 = vmatpush.bf16.msra.mxu0 %v8297
        %8904 = vmatpush.bf16.msra.mxu0 %v8289
        %8905 = vmatpush.bf16.msra.mxu0 %v8281
        %8906 = vmatpush.bf16.msra.mxu0 %v8273
        %8907 = vmatpush.bf16.msra.mxu0 %v8265
        %8908 = vmatpush.bf16.msra.mxu0 %v8257
        %8909 = vmatpush.bf16.msra.mxu0 %v8249
        %8910 = vmatpush.bf16.msra.mxu0 %v8241
        %8911 = vmatmul.bf16.gmra.mxu0 %v4949
        %v8912 = vpop.f32.mrf.mxu0
        %v8913 = vadd.f32 %v7465, %v8912
        %v8914 = vpop.f32.mrf.mxu0
        %v8915 = vadd.f32 %v7465, %v8914
        %8916 = vmatmul.bf16.gmra.mxu0 %v4953
        %v8917 = vpop.f32.mrf.mxu0
        %v8918 = vadd.f32 %v7465, %v8917
        %v8919 = vpop.f32.mrf.mxu0
        %v8920 = vadd.f32 %v7465, %v8919
        %8921 = vdwg.mxu0
        %8922 = vmatpush.bf16.msra.mxu0 %v8361
        %8923 = vmatpush.bf16.msra.mxu0 %v8353
        %8924 = vmatpush.bf16.msra.mxu0 %v8345
        %8925 = vmatpush.bf16.msra.mxu0 %v8337
        %8926 = vmatpush.bf16.msra.mxu0 %v8329
        %8927 = vmatpush.bf16.msra.mxu0 %v8321
        %8928 = vmatpush.bf16.msra.mxu0 %v8313
        %8929 = vmatpush.bf16.msra.mxu0 %v8305
        %8930 = vmatmul.bf16.gmra.mxu0 %v4950
        %v8931 = vpop.f32.mrf.mxu0
        %v8932 = vadd.f32 %v8913, %v8931
        %v8933 = vpop.f32.mrf.mxu0
        %v8934 = vadd.f32 %v8915, %v8933
        %8935 = vmatmul.bf16.gmra.mxu0 %v4954
        %v8936 = vpop.f32.mrf.mxu0
        %v8937 = vadd.f32 %v8918, %v8936
        %v8938 = vpop.f32.mrf.mxu0
        %v8939 = vadd.f32 %v8920, %v8938
        %8940 = vdwg.mxu0
        %8941 = vmatpush.bf16.msra.mxu0 %v8425
        %8942 = vmatpush.bf16.msra.mxu0 %v8417
        %8943 = vmatpush.bf16.msra.mxu0 %v8409
        %8944 = vmatpush.bf16.msra.mxu0 %v8401
        %8945 = vmatpush.bf16.msra.mxu0 %v8393
        %8946 = vmatpush.bf16.msra.mxu0 %v8385
        %8947 = vmatpush.bf16.msra.mxu0 %v8377
        %8948 = vmatpush.bf16.msra.mxu0 %v8369
        %8949 = vmatmul.bf16.gmra.mxu0 %v4951
        %v8950 = vpop.f32.mrf.mxu0
        %v8951 = vadd.f32 %v8932, %v8950
        %v8952 = vpop.f32.mrf.mxu0
        %v8953 = vadd.f32 %v8934, %v8952
        %8954 = vmatmul.bf16.gmra.mxu0 %v4955
        %v8955 = vpop.f32.mrf.mxu0
        %v8956 = vadd.f32 %v8937, %v8955
        %v8957 = vpop.f32.mrf.mxu0
        %v8958 = vadd.f32 %v8939, %v8957
        %8959 = vdwg.mxu0
        %8960 = vmatpush.bf16.msra.mxu0 %v8489
        %8961 = vmatpush.bf16.msra.mxu0 %v8481
        %8962 = vmatpush.bf16.msra.mxu0 %v8473
        %8963 = vmatpush.bf16.msra.mxu0 %v8465
        %8964 = vmatpush.bf16.msra.mxu0 %v8457
        %8965 = vmatpush.bf16.msra.mxu0 %v8449
        %8966 = vmatpush.bf16.msra.mxu0 %v8441
        %8967 = vmatpush.bf16.msra.mxu0 %v8433
        %8968 = vmatmul.bf16.gmra.mxu0 %v4952
        %v8969 = vpop.f32.mrf.mxu0
        %v8970 = vadd.f32 %v8951, %v8969
        %v8971 = vpop.f32.mrf.mxu0
        %v8972 = vadd.f32 %v8953, %v8971
        %8973 = vmatmul.bf16.gmra.mxu0 %v4956
        %v8974 = vpop.f32.mrf.mxu0
        %v8975 = vadd.f32 %v8956, %v8974
        %v8976 = vpop.f32.mrf.mxu0
        %v8977 = vadd.f32 %v8958, %v8976
        %8978 = vdwg.mxu0
        %8979 = vmatpush.bf16.msra.mxu0 %v8298
        %8980 = vmatpush.bf16.msra.mxu0 %v8290
        %8981 = vmatpush.bf16.msra.mxu0 %v8282
        %8982 = vmatpush.bf16.msra.mxu0 %v8274
        %8983 = vmatpush.bf16.msra.mxu0 %v8266
        %8984 = vmatpush.bf16.msra.mxu0 %v8258
        %8985 = vmatpush.bf16.msra.mxu0 %v8250
        %8986 = vmatpush.bf16.msra.mxu0 %v8242
        %8987 = vmatmul.bf16.gmra.mxu0 %v4949
        %v8988 = vpop.f32.mrf.mxu0
        %v8989 = vadd.f32 %v7466, %v8988
        %v8990 = vpop.f32.mrf.mxu0
        %v8991 = vadd.f32 %v7466, %v8990
        %8992 = vmatmul.bf16.gmra.mxu0 %v4953
        %v8993 = vpop.f32.mrf.mxu0
        %v8994 = vadd.f32 %v7466, %v8993
        %v8995 = vpop.f32.mrf.mxu0
        %v8996 = vadd.f32 %v7466, %v8995
        %8997 = vdwg.mxu0
        %8998 = vmatpush.bf16.msra.mxu0 %v8362
        %8999 = vmatpush.bf16.msra.mxu0 %v8354
        %9000 = vmatpush.bf16.msra.mxu0 %v8346
        %9001 = vmatpush.bf16.msra.mxu0 %v8338
        %9002 = vmatpush.bf16.msra.mxu0 %v8330
        %9003 = vmatpush.bf16.msra.mxu0 %v8322
        %9004 = vmatpush.bf16.msra.mxu0 %v8314
        %9005 = vmatpush.bf16.msra.mxu0 %v8306
        %9006 = vmatmul.bf16.gmra.mxu0 %v4950
        %v9007 = vpop.f32.mrf.mxu0
        %v9008 = vadd.f32 %v8989, %v9007
        %v9009 = vpop.f32.mrf.mxu0
        %v9010 = vadd.f32 %v8991, %v9009
        %9011 = vmatmul.bf16.gmra.mxu0 %v4954
        %v9012 = vpop.f32.mrf.mxu0
        %v9013 = vadd.f32 %v8994, %v9012
        %v9014 = vpop.f32.mrf.mxu0
        %v9015 = vadd.f32 %v8996, %v9014
        %9016 = vdwg.mxu0
        %9017 = vmatpush.bf16.msra.mxu0 %v8426
        %9018 = vmatpush.bf16.msra.mxu0 %v8418
        %9019 = vmatpush.bf16.msra.mxu0 %v8410
        %9020 = vmatpush.bf16.msra.mxu0 %v8402
        %9021 = vmatpush.bf16.msra.mxu0 %v8394
        %9022 = vmatpush.bf16.msra.mxu0 %v8386
        %9023 = vmatpush.bf16.msra.mxu0 %v8378
        %9024 = vmatpush.bf16.msra.mxu0 %v8370
        %9025 = vmatmul.bf16.gmra.mxu0 %v4951
        %v9026 = vpop.f32.mrf.mxu0
        %v9027 = vadd.f32 %v9008, %v9026
        %v9028 = vpop.f32.mrf.mxu0
        %v9029 = vadd.f32 %v9010, %v9028
        %9030 = vmatmul.bf16.gmra.mxu0 %v4955
        %v9031 = vpop.f32.mrf.mxu0
        %v9032 = vadd.f32 %v9013, %v9031
        %v9033 = vpop.f32.mrf.mxu0
        %v9034 = vadd.f32 %v9015, %v9033
        %9035 = vdwg.mxu0
        %9036 = vmatpush.bf16.msra.mxu0 %v8490
        %9037 = vmatpush.bf16.msra.mxu0 %v8482
        %9038 = vmatpush.bf16.msra.mxu0 %v8474
        %9039 = vmatpush.bf16.msra.mxu0 %v8466
        %9040 = vmatpush.bf16.msra.mxu0 %v8458
        %9041 = vmatpush.bf16.msra.mxu0 %v8450
        %9042 = vmatpush.bf16.msra.mxu0 %v8442
        %9043 = vmatpush.bf16.msra.mxu0 %v8434
        %9044 = vmatmul.bf16.gmra.mxu0 %v4952
        %v9045 = vpop.f32.mrf.mxu0
        %v9046 = vadd.f32 %v9027, %v9045
        %v9047 = vpop.f32.mrf.mxu0
        %v9048 = vadd.f32 %v9029, %v9047
        %9049 = vmatmul.bf16.gmra.mxu0 %v4956
        %v9050 = vpop.f32.mrf.mxu0
        %v9051 = vadd.f32 %v9032, %v9050
        %v9052 = vpop.f32.mrf.mxu0
        %v9053 = vadd.f32 %v9034, %v9052
        %9054 = vdwg.mxu0
        %9055 = vmatpush.bf16.msra.mxu0 %v8299
        %9056 = vmatpush.bf16.msra.mxu0 %v8291
        %9057 = vmatpush.bf16.msra.mxu0 %v8283
        %9058 = vmatpush.bf16.msra.mxu0 %v8275
        %9059 = vmatpush.bf16.msra.mxu0 %v8267
        %9060 = vmatpush.bf16.msra.mxu0 %v8259
        %9061 = vmatpush.bf16.msra.mxu0 %v8251
        %9062 = vmatpush.bf16.msra.mxu0 %v8243
        %9063 = vmatmul.bf16.gmra.mxu0 %v4949
        %v9064 = vpop.f32.mrf.mxu0
        %v9065 = vadd.f32 %v7467, %v9064
        %v9066 = vpop.f32.mrf.mxu0
        %v9067 = vadd.f32 %v7467, %v9066
        %9068 = vmatmul.bf16.gmra.mxu0 %v4953
        %v9069 = vpop.f32.mrf.mxu0
        %v9070 = vadd.f32 %v7467, %v9069
        %v9071 = vpop.f32.mrf.mxu0
        %v9072 = vadd.f32 %v7467, %v9071
        %9073 = vdwg.mxu0
        %9074 = vmatpush.bf16.msra.mxu0 %v8363
        %9075 = vmatpush.bf16.msra.mxu0 %v8355
        %9076 = vmatpush.bf16.msra.mxu0 %v8347
        %9077 = vmatpush.bf16.msra.mxu0 %v8339
        %9078 = vmatpush.bf16.msra.mxu0 %v8331
        %9079 = vmatpush.bf16.msra.mxu0 %v8323
        %9080 = vmatpush.bf16.msra.mxu0 %v8315
        %9081 = vmatpush.bf16.msra.mxu0 %v8307
        %9082 = vmatmul.bf16.gmra.mxu0 %v4950
        %v9083 = vpop.f32.mrf.mxu0
        %v9084 = vadd.f32 %v9065, %v9083
        %v9085 = vpop.f32.mrf.mxu0
        %v9086 = vadd.f32 %v9067, %v9085
        %9087 = vmatmul.bf16.gmra.mxu0 %v4954
        %v9088 = vpop.f32.mrf.mxu0
        %v9089 = vadd.f32 %v9070, %v9088
        %v9090 = vpop.f32.mrf.mxu0
        %v9091 = vadd.f32 %v9072, %v9090
        %9092 = vdwg.mxu0
        %9093 = vmatpush.bf16.msra.mxu0 %v8427
        %9094 = vmatpush.bf16.msra.mxu0 %v8419
        %9095 = vmatpush.bf16.msra.mxu0 %v8411
        %9096 = vmatpush.bf16.msra.mxu0 %v8403
        %9097 = vmatpush.bf16.msra.mxu0 %v8395
        %9098 = vmatpush.bf16.msra.mxu0 %v8387
        %9099 = vmatpush.bf16.msra.mxu0 %v8379
        %9100 = vmatpush.bf16.msra.mxu0 %v8371
        %9101 = vmatmul.bf16.gmra.mxu0 %v4951
        %v9102 = vpop.f32.mrf.mxu0
        %v9103 = vadd.f32 %v9084, %v9102
        %v9104 = vpop.f32.mrf.mxu0
        %v9105 = vadd.f32 %v9086, %v9104
        %9106 = vmatmul.bf16.gmra.mxu0 %v4955
        %v9107 = vpop.f32.mrf.mxu0
        %v9108 = vadd.f32 %v9089, %v9107
        %v9109 = vpop.f32.mrf.mxu0
        %v9110 = vadd.f32 %v9091, %v9109
        %9111 = vdwg.mxu0
        %9112 = vmatpush.bf16.msra.mxu0 %v8491
        %9113 = vmatpush.bf16.msra.mxu0 %v8483
        %9114 = vmatpush.bf16.msra.mxu0 %v8475
        %9115 = vmatpush.bf16.msra.mxu0 %v8467
        %9116 = vmatpush.bf16.msra.mxu0 %v8459
        %9117 = vmatpush.bf16.msra.mxu0 %v8451
        %9118 = vmatpush.bf16.msra.mxu0 %v8443
        %9119 = vmatpush.bf16.msra.mxu0 %v8435
        %9120 = vmatmul.bf16.gmra.mxu0 %v4952
        %v9121 = vpop.f32.mrf.mxu0
        %v9122 = vadd.f32 %v9103, %v9121
        %v9123 = vpop.f32.mrf.mxu0
        %v9124 = vadd.f32 %v9105, %v9123
        %9125 = vmatmul.bf16.gmra.mxu0 %v4956
        %v9126 = vpop.f32.mrf.mxu0
        %v9127 = vadd.f32 %v9108, %v9126
        %v9128 = vpop.f32.mrf.mxu0
        %v9129 = vadd.f32 %v9110, %v9128
        %9130 = vdwg.mxu0
        %9131 = vmatpush.bf16.msra.mxu0 %v8300
        %9132 = vmatpush.bf16.msra.mxu0 %v8292
        %9133 = vmatpush.bf16.msra.mxu0 %v8284
        %9134 = vmatpush.bf16.msra.mxu0 %v8276
        %9135 = vmatpush.bf16.msra.mxu0 %v8268
        %9136 = vmatpush.bf16.msra.mxu0 %v8260
        %9137 = vmatpush.bf16.msra.mxu0 %v8252
        %9138 = vmatpush.bf16.msra.mxu0 %v8244
        %9139 = vmatmul.bf16.gmra.mxu0 %v4949
        %v9140 = vpop.f32.mrf.mxu0
        %v9141 = vadd.f32 %v7468, %v9140
        %v9142 = vpop.f32.mrf.mxu0
        %v9143 = vadd.f32 %v7468, %v9142
        %9144 = vmatmul.bf16.gmra.mxu0 %v4953
        %v9145 = vpop.f32.mrf.mxu0
        %v9146 = vadd.f32 %v7468, %v9145
        %v9147 = vpop.f32.mrf.mxu0
        %v9148 = vadd.f32 %v7468, %v9147
        %9149 = vdwg.mxu0
        %9150 = vmatpush.bf16.msra.mxu0 %v8364
        %9151 = vmatpush.bf16.msra.mxu0 %v8356
        %9152 = vmatpush.bf16.msra.mxu0 %v8348
        %9153 = vmatpush.bf16.msra.mxu0 %v8340
        %9154 = vmatpush.bf16.msra.mxu0 %v8332
        %9155 = vmatpush.bf16.msra.mxu0 %v8324
        %9156 = vmatpush.bf16.msra.mxu0 %v8316
        %9157 = vmatpush.bf16.msra.mxu0 %v8308
        %9158 = vmatmul.bf16.gmra.mxu0 %v4950
        %v9159 = vpop.f32.mrf.mxu0
        %v9160 = vadd.f32 %v9141, %v9159
        %v9161 = vpop.f32.mrf.mxu0
        %v9162 = vadd.f32 %v9143, %v9161
        %9163 = vmatmul.bf16.gmra.mxu0 %v4954
        %v9164 = vpop.f32.mrf.mxu0
        %v9165 = vadd.f32 %v9146, %v9164
        %v9166 = vpop.f32.mrf.mxu0
        %v9167 = vadd.f32 %v9148, %v9166
        %9168 = vdwg.mxu0
        %9169 = vmatpush.bf16.msra.mxu0 %v8428
        %9170 = vmatpush.bf16.msra.mxu0 %v8420
        %9171 = vmatpush.bf16.msra.mxu0 %v8412
        %9172 = vmatpush.bf16.msra.mxu0 %v8404
        %9173 = vmatpush.bf16.msra.mxu0 %v8396
        %9174 = vmatpush.bf16.msra.mxu0 %v8388
        %9175 = vmatpush.bf16.msra.mxu0 %v8380
        %9176 = vmatpush.bf16.msra.mxu0 %v8372
        %9177 = vmatmul.bf16.gmra.mxu0 %v4951
        %v9178 = vpop.f32.mrf.mxu0
        %v9179 = vadd.f32 %v9160, %v9178
        %v9180 = vpop.f32.mrf.mxu0
        %v9181 = vadd.f32 %v9162, %v9180
        %9182 = vmatmul.bf16.gmra.mxu0 %v4955
        %v9183 = vpop.f32.mrf.mxu0
        %v9184 = vadd.f32 %v9165, %v9183
        %v9185 = vpop.f32.mrf.mxu0
        %v9186 = vadd.f32 %v9167, %v9185
        %9187 = vdwg.mxu0
        %9188 = vmatpush.bf16.msra.mxu0 %v8492
        %9189 = vmatpush.bf16.msra.mxu0 %v8484
        %9190 = vmatpush.bf16.msra.mxu0 %v8476
        %9191 = vmatpush.bf16.msra.mxu0 %v8468
        %9192 = vmatpush.bf16.msra.mxu0 %v8460
        %9193 = vmatpush.bf16.msra.mxu0 %v8452
        %9194 = vmatpush.bf16.msra.mxu0 %v8444
        %9195 = vmatpush.bf16.msra.mxu0 %v8436
        %9196 = vmatmul.bf16.gmra.mxu0 %v4952
        %v9197 = vpop.f32.mrf.mxu0
        %v9198 = vadd.f32 %v9179, %v9197
        %v9199 = vpop.f32.mrf.mxu0
        %v9200 = vadd.f32 %v9181, %v9199
        %9201 = vmatmul.bf16.gmra.mxu0 %v4956
        %v9202 = vpop.f32.mrf.mxu0
        %v9203 = vadd.f32 %v9184, %v9202
        %v9204 = vpop.f32.mrf.mxu0
        %v9205 = vadd.f32 %v9186, %v9204
        %9206 = vdwg.mxu0
        %9207 = vmatpush.bf16.msra.mxu0 %v8301
        %9208 = vmatpush.bf16.msra.mxu0 %v8293
        %9209 = vmatpush.bf16.msra.mxu0 %v8285
        %9210 = vmatpush.bf16.msra.mxu0 %v8277
        %9211 = vmatpush.bf16.msra.mxu0 %v8269
        %9212 = vmatpush.bf16.msra.mxu0 %v8261
        %9213 = vmatpush.bf16.msra.mxu0 %v8253
        %9214 = vmatpush.bf16.msra.mxu0 %v8245
        %9215 = vmatmul.bf16.gmra.mxu0 %v4949
        %v9216 = vpop.f32.mrf.mxu0
        %v9217 = vadd.f32 %v7469, %v9216
        %v9218 = vpop.f32.mrf.mxu0
        %v9219 = vadd.f32 %v7469, %v9218
        %9220 = vmatmul.bf16.gmra.mxu0 %v4953
        %v9221 = vpop.f32.mrf.mxu0
        %v9222 = vadd.f32 %v7469, %v9221
        %v9223 = vpop.f32.mrf.mxu0
        %v9224 = vadd.f32 %v7469, %v9223
        %9225 = vdwg.mxu0
        %9226 = vmatpush.bf16.msra.mxu0 %v8365
        %9227 = vmatpush.bf16.msra.mxu0 %v8357
        %9228 = vmatpush.bf16.msra.mxu0 %v8349
        %9229 = vmatpush.bf16.msra.mxu0 %v8341
        %9230 = vmatpush.bf16.msra.mxu0 %v8333
        %9231 = vmatpush.bf16.msra.mxu0 %v8325
        %9232 = vmatpush.bf16.msra.mxu0 %v8317
        %9233 = vmatpush.bf16.msra.mxu0 %v8309
        %9234 = vmatmul.bf16.gmra.mxu0 %v4950
        %v9235 = vpop.f32.mrf.mxu0
        %v9236 = vadd.f32 %v9217, %v9235
        %v9237 = vpop.f32.mrf.mxu0
        %v9238 = vadd.f32 %v9219, %v9237
        %9239 = vmatmul.bf16.gmra.mxu0 %v4954
        %v9240 = vpop.f32.mrf.mxu0
        %v9241 = vadd.f32 %v9222, %v9240
        %v9242 = vpop.f32.mrf.mxu0
        %v9243 = vadd.f32 %v9224, %v9242
        %9244 = vdwg.mxu0
        %9245 = vmatpush.bf16.msra.mxu0 %v8429
        %9246 = vmatpush.bf16.msra.mxu0 %v8421
        %9247 = vmatpush.bf16.msra.mxu0 %v8413
        %9248 = vmatpush.bf16.msra.mxu0 %v8405
        %9249 = vmatpush.bf16.msra.mxu0 %v8397
        %9250 = vmatpush.bf16.msra.mxu0 %v8389
        %9251 = vmatpush.bf16.msra.mxu0 %v8381
        %9252 = vmatpush.bf16.msra.mxu0 %v8373
        %9253 = vmatmul.bf16.gmra.mxu0 %v4951
        %v9254 = vpop.f32.mrf.mxu0
        %v9255 = vadd.f32 %v9236, %v9254
        %v9256 = vpop.f32.mrf.mxu0
        %v9257 = vadd.f32 %v9238, %v9256
        %9258 = vmatmul.bf16.gmra.mxu0 %v4955
        %v9259 = vpop.f32.mrf.mxu0
        %v9260 = vadd.f32 %v9241, %v9259
        %v9261 = vpop.f32.mrf.mxu0
        %v9262 = vadd.f32 %v9243, %v9261
        %9263 = vdwg.mxu0
        %9264 = vmatpush.bf16.msra.mxu0 %v8493
        %9265 = vmatpush.bf16.msra.mxu0 %v8485
        %9266 = vmatpush.bf16.msra.mxu0 %v8477
        %9267 = vmatpush.bf16.msra.mxu0 %v8469
        %9268 = vmatpush.bf16.msra.mxu0 %v8461
        %9269 = vmatpush.bf16.msra.mxu0 %v8453
        %9270 = vmatpush.bf16.msra.mxu0 %v8445
        %9271 = vmatpush.bf16.msra.mxu0 %v8437
        %9272 = vmatmul.bf16.gmra.mxu0 %v4952
        %v9273 = vpop.f32.mrf.mxu0
        %v9274 = vadd.f32 %v9255, %v9273
        %v9275 = vpop.f32.mrf.mxu0
        %v9276 = vadd.f32 %v9257, %v9275
        %9277 = vmatmul.bf16.gmra.mxu0 %v4956
        %v9278 = vpop.f32.mrf.mxu0
        %v9279 = vadd.f32 %v9260, %v9278
        %v9280 = vpop.f32.mrf.mxu0
        %v9281 = vadd.f32 %v9262, %v9280
        %9282 = vdwg.mxu0
        %9283 = vmatpush.bf16.msra.mxu0 %v8302
        %9284 = vmatpush.bf16.msra.mxu0 %v8294
        %9285 = vmatpush.bf16.msra.mxu0 %v8286
        %9286 = vmatpush.bf16.msra.mxu0 %v8278
        %9287 = vmatpush.bf16.msra.mxu0 %v8270
        %9288 = vmatpush.bf16.msra.mxu0 %v8262
        %9289 = vmatpush.bf16.msra.mxu0 %v8254
        %9290 = vmatpush.bf16.msra.mxu0 %v8246
        %9291 = vmatmul.bf16.gmra.mxu0 %v4949
        %v9292 = vpop.f32.mrf.mxu0
        %v9293 = vadd.f32 %v7470, %v9292
        %v9294 = vpop.f32.mrf.mxu0
        %v9295 = vadd.f32 %v7470, %v9294
        %9296 = vmatmul.bf16.gmra.mxu0 %v4953
        %v9297 = vpop.f32.mrf.mxu0
        %v9298 = vadd.f32 %v7470, %v9297
        %v9299 = vpop.f32.mrf.mxu0
        %v9300 = vadd.f32 %v7470, %v9299
        %9301 = vdwg.mxu0
        %9302 = vmatpush.bf16.msra.mxu0 %v8366
        %9303 = vmatpush.bf16.msra.mxu0 %v8358
        %9304 = vmatpush.bf16.msra.mxu0 %v8350
        %9305 = vmatpush.bf16.msra.mxu0 %v8342
        %9306 = vmatpush.bf16.msra.mxu0 %v8334
        %9307 = vmatpush.bf16.msra.mxu0 %v8326
        %9308 = vmatpush.bf16.msra.mxu0 %v8318
        %9309 = vmatpush.bf16.msra.mxu0 %v8310
        %9310 = vmatmul.bf16.gmra.mxu0 %v4950
        %v9311 = vpop.f32.mrf.mxu0
        %v9312 = vadd.f32 %v9293, %v9311
        %v9313 = vpop.f32.mrf.mxu0
        %v9314 = vadd.f32 %v9295, %v9313
        %9315 = vmatmul.bf16.gmra.mxu0 %v4954
        %v9316 = vpop.f32.mrf.mxu0
        %v9317 = vadd.f32 %v9298, %v9316
        %v9318 = vpop.f32.mrf.mxu0
        %v9319 = vadd.f32 %v9300, %v9318
        %9320 = vdwg.mxu0
        %9321 = vmatpush.bf16.msra.mxu0 %v8430
        %9322 = vmatpush.bf16.msra.mxu0 %v8422
        %9323 = vmatpush.bf16.msra.mxu0 %v8414
        %9324 = vmatpush.bf16.msra.mxu0 %v8406
        %9325 = vmatpush.bf16.msra.mxu0 %v8398
        %9326 = vmatpush.bf16.msra.mxu0 %v8390
        %9327 = vmatpush.bf16.msra.mxu0 %v8382
        %9328 = vmatpush.bf16.msra.mxu0 %v8374
        %9329 = vmatmul.bf16.gmra.mxu0 %v4951
        %v9330 = vpop.f32.mrf.mxu0
        %v9331 = vadd.f32 %v9312, %v9330
        %v9332 = vpop.f32.mrf.mxu0
        %v9333 = vadd.f32 %v9314, %v9332
        %9334 = vmatmul.bf16.gmra.mxu0 %v4955
        %v9335 = vpop.f32.mrf.mxu0
        %v9336 = vadd.f32 %v9317, %v9335
        %v9337 = vpop.f32.mrf.mxu0
        %v9338 = vadd.f32 %v9319, %v9337
        %9339 = vdwg.mxu0
        %9340 = vmatpush.bf16.msra.mxu0 %v8494
        %9341 = vmatpush.bf16.msra.mxu0 %v8486
        %9342 = vmatpush.bf16.msra.mxu0 %v8478
        %9343 = vmatpush.bf16.msra.mxu0 %v8470
        %9344 = vmatpush.bf16.msra.mxu0 %v8462
        %9345 = vmatpush.bf16.msra.mxu0 %v8454
        %9346 = vmatpush.bf16.msra.mxu0 %v8446
        %9347 = vmatpush.bf16.msra.mxu0 %v8438
        %9348 = vmatmul.bf16.gmra.mxu0 %v4952
        %v9349 = vpop.f32.mrf.mxu0
        %v9350 = vadd.f32 %v9331, %v9349
        %v9351 = vpop.f32.mrf.mxu0
        %v9352 = vadd.f32 %v9333, %v9351
        %9353 = vmatmul.bf16.gmra.mxu0 %v4956
        %v9354 = vpop.f32.mrf.mxu0
        %v9355 = vadd.f32 %v9336, %v9354
        %v9356 = vpop.f32.mrf.mxu0
        %v9357 = vadd.f32 %v9338, %v9356
        %9358 = vdwg.mxu0
        %v9359 = vmax.f32 %v8818, -100.0
        %v9360 = vmax.f32 %v8894, -100.0
        %v9361 = vmax.f32 %v8970, -100.0
        %v9362 = vmax.f32 %v9046, -100.0
        %v9363 = vmax.f32 %v9122, -100.0
        %v9364 = vmax.f32 %v9198, -100.0
        %v9365 = vmax.f32 %v9274, -100.0
        %v9366 = vmax.f32 %v9350, -100.0
        %v9367 = vmax.f32 %v8820, -100.0
        %v9368 = vmax.f32 %v8896, -100.0
        %v9369 = vmax.f32 %v8972, -100.0
        %v9370 = vmax.f32 %v9048, -100.0
        %v9371 = vmax.f32 %v9124, -100.0
        %v9372 = vmax.f32 %v9200, -100.0
        %v9373 = vmax.f32 %v9276, -100.0
        %v9374 = vmax.f32 %v9352, -100.0
        %v9375 = vmax.f32 %v8823, -100.0
        %v9376 = vmax.f32 %v8899, -100.0
        %v9377 = vmax.f32 %v8975, -100.0
        %v9378 = vmax.f32 %v9051, -100.0
        %v9379 = vmax.f32 %v9127, -100.0
        %v9380 = vmax.f32 %v9203, -100.0
        %v9381 = vmax.f32 %v9279, -100.0
        %v9382 = vmax.f32 %v9355, -100.0
        %v9383 = vmax.f32 %v8825, -100.0
        %v9384 = vmax.f32 %v8901, -100.0
        %v9385 = vmax.f32 %v8977, -100.0
        %v9386 = vmax.f32 %v9053, -100.0
        %v9387 = vmax.f32 %v9129, -100.0
        %v9388 = vmax.f32 %v9205, -100.0
        %v9389 = vmax.f32 %v9281, -100.0
        %v9390 = vmax.f32 %v9357, -100.0
        %v9391 = vmin.f32 %v9359, 100.0
        %v9392 = vmin.f32 %v9360, 100.0
        %v9393 = vmin.f32 %v9361, 100.0
        %v9394 = vmin.f32 %v9362, 100.0
        %v9395 = vmin.f32 %v9363, 100.0
        %v9396 = vmin.f32 %v9364, 100.0
        %v9397 = vmin.f32 %v9365, 100.0
        %v9398 = vmin.f32 %v9366, 100.0
        %v9399 = vmin.f32 %v9367, 100.0
        %v9400 = vmin.f32 %v9368, 100.0
        %v9401 = vmin.f32 %v9369, 100.0
        %v9402 = vmin.f32 %v9370, 100.0
        %v9403 = vmin.f32 %v9371, 100.0
        %v9404 = vmin.f32 %v9372, 100.0
        %v9405 = vmin.f32 %v9373, 100.0
        %v9406 = vmin.f32 %v9374, 100.0
        %v9407 = vmin.f32 %v9375, 100.0
        %v9408 = vmin.f32 %v9376, 100.0
        %v9409 = vmin.f32 %v9377, 100.0
        %v9410 = vmin.f32 %v9378, 100.0
        %v9411 = vmin.f32 %v9379, 100.0
        %v9412 = vmin.f32 %v9380, 100.0
        %v9413 = vmin.f32 %v9381, 100.0
        %v9414 = vmin.f32 %v9382, 100.0
        %v9415 = vmin.f32 %v9383, 100.0
        %v9416 = vmin.f32 %v9384, 100.0
        %v9417 = vmin.f32 %v9385, 100.0
        %v9418 = vmin.f32 %v9386, 100.0
        %v9419 = vmin.f32 %v9387, 100.0
        %v9420 = vmin.f32 %v9388, 100.0
        %v9421 = vmin.f32 %v9389, 100.0
        %v9422 = vmin.f32 %v9390, 100.0
        %v9423 = vmul.f32 %v7159, 0.5
        %v9424 = vmul.f32 %v7160, 0.5
        %v9425 = vmul.f32 %v7161, 0.5
        %v9426 = vmul.f32 %v7162, 0.5
        %v9427 = vmul.f32 %v7163, 0.5
        %v9428 = vmul.f32 %v7164, 0.5
        %v9429 = vmul.f32 %v7165, 0.5
        %v9430 = vmul.f32 %v7166, 0.5
        %v9431 = vmul.f32 %v7167, 0.5
        %v9432 = vmul.f32 %v7168, 0.5
        %v9433 = vmul.f32 %v7169, 0.5
        %v9434 = vmul.f32 %v7170, 0.5
        %v9435 = vmul.f32 %v7171, 0.5
        %v9436 = vmul.f32 %v7172, 0.5
        %v9437 = vmul.f32 %v7173, 0.5
        %v9438 = vmul.f32 %v7174, 0.5
        %v9439 = vmul.f32 %v7175, 0.5
        %v9440 = vmul.f32 %v7176, 0.5
        %v9441 = vmul.f32 %v7177, 0.5
        %v9442 = vmul.f32 %v7178, 0.5
        %v9443 = vmul.f32 %v7179, 0.5
        %v9444 = vmul.f32 %v7180, 0.5
        %v9445 = vmul.f32 %v7181, 0.5
        %v9446 = vmul.f32 %v7182, 0.5
        %v9447 = vmul.f32 %v7183, 0.5
        %v9448 = vmul.f32 %v7184, 0.5
        %v9449 = vmul.f32 %v7185, 0.5
        %v9450 = vmul.f32 %v7186, 0.5
        %v9451 = vmul.f32 %v7187, 0.5
        %v9452 = vmul.f32 %v7188, 0.5
        %v9453 = vmul.f32 %v7189, 0.5
        %v9454 = vmul.f32 %v7190, 0.5
        %v9455 = vtanh.pop %v9423
        %v9456 = vtanh.pop %v9424
        %v9457 = vtanh.pop %v9425
        %v9458 = vtanh.pop %v9426
        %v9459 = vtanh.pop %v9427
        %v9460 = vtanh.pop %v9428
        %v9461 = vtanh.pop %v9429
        %v9462 = vtanh.pop %v9430
        %v9463 = vtanh.pop %v9431
        %v9464 = vtanh.pop %v9432
        %v9465 = vtanh.pop %v9433
        %v9466 = vtanh.pop %v9434
        %v9467 = vtanh.pop %v9435
        %v9468 = vtanh.pop %v9436
        %v9469 = vtanh.pop %v9437
        %v9470 = vtanh.pop %v9438
        %v9471 = vtanh.pop %v9439
        %v9472 = vtanh.pop %v9440
        %v9473 = vtanh.pop %v9441
        %v9474 = vtanh.pop %v9442
        %v9475 = vtanh.pop %v9443
        %v9476 = vtanh.pop %v9444
        %v9477 = vtanh.pop %v9445
        %v9478 = vtanh.pop %v9446
        %v9479 = vtanh.pop %v9447
        %v9480 = vtanh.pop %v9448
        %v9481 = vtanh.pop %v9449
        %v9482 = vtanh.pop %v9450
        %v9483 = vtanh.pop %v9451
        %v9484 = vtanh.pop %v9452
        %v9485 = vtanh.pop %v9453
        %v9486 = vtanh.pop %v9454
        %v9487 = vadd.f32 %v9455, 1.0
        %v9488 = vadd.f32 %v9456, 1.0
        %v9489 = vadd.f32 %v9457, 1.0
        %v9490 = vadd.f32 %v9458, 1.0
        %v9491 = vadd.f32 %v9459, 1.0
        %v9492 = vadd.f32 %v9460, 1.0
        %v9493 = vadd.f32 %v9461, 1.0
        %v9494 = vadd.f32 %v9462, 1.0
        %v9495 = vadd.f32 %v9463, 1.0
        %v9496 = vadd.f32 %v9464, 1.0
        %v9497 = vadd.f32 %v9465, 1.0
        %v9498 = vadd.f32 %v9466, 1.0
        %v9499 = vadd.f32 %v9467, 1.0
        %v9500 = vadd.f32 %v9468, 1.0
        %v9501 = vadd.f32 %v9469, 1.0
        %v9502 = vadd.f32 %v9470, 1.0
        %v9503 = vadd.f32 %v9471, 1.0
        %v9504 = vadd.f32 %v9472, 1.0
        %v9505 = vadd.f32 %v9473, 1.0
        %v9506 = vadd.f32 %v9474, 1.0
        %v9507 = vadd.f32 %v9475, 1.0
        %v9508 = vadd.f32 %v9476, 1.0
        %v9509 = vadd.f32 %v9477, 1.0
        %v9510 = vadd.f32 %v9478, 1.0
        %v9511 = vadd.f32 %v9479, 1.0
        %v9512 = vadd.f32 %v9480, 1.0
        %v9513 = vadd.f32 %v9481, 1.0
        %v9514 = vadd.f32 %v9482, 1.0
        %v9515 = vadd.f32 %v9483, 1.0
        %v9516 = vadd.f32 %v9484, 1.0
        %v9517 = vadd.f32 %v9485, 1.0
        %v9518 = vadd.f32 %v9486, 1.0
        %v9519 = vmul.f32 %v9487, 0.5
        %v9520 = vmul.f32 %v9488, 0.5
        %v9521 = vmul.f32 %v9489, 0.5
        %v9522 = vmul.f32 %v9490, 0.5
        %v9523 = vmul.f32 %v9491, 0.5
        %v9524 = vmul.f32 %v9492, 0.5
        %v9525 = vmul.f32 %v9493, 0.5
        %v9526 = vmul.f32 %v9494, 0.5
        %v9527 = vmul.f32 %v9495, 0.5
        %v9528 = vmul.f32 %v9496, 0.5
        %v9529 = vmul.f32 %v9497, 0.5
        %v9530 = vmul.f32 %v9498, 0.5
        %v9531 = vmul.f32 %v9499, 0.5
        %v9532 = vmul.f32 %v9500, 0.5
        %v9533 = vmul.f32 %v9501, 0.5
        %v9534 = vmul.f32 %v9502, 0.5
        %v9535 = vmul.f32 %v9503, 0.5
        %v9536 = vmul.f32 %v9504, 0.5
        %v9537 = vmul.f32 %v9505, 0.5
        %v9538 = vmul.f32 %v9506, 0.5
        %v9539 = vmul.f32 %v9507, 0.5
        %v9540 = vmul.f32 %v9508, 0.5
        %v9541 = vmul.f32 %v9509, 0.5
        %v9542 = vmul.f32 %v9510, 0.5
        %v9543 = vmul.f32 %v9511, 0.5
        %v9544 = vmul.f32 %v9512, 0.5
        %v9545 = vmul.f32 %v9513, 0.5
        %v9546 = vmul.f32 %v9514, 0.5
        %v9547 = vmul.f32 %v9515, 0.5
        %v9548 = vmul.f32 %v9516, 0.5
        %v9549 = vmul.f32 %v9517, 0.5
        %v9550 = vmul.f32 %v9518, 0.5
        %v9551 = vmul.f32 %v7159, %v9519
        %v9552 = vmul.f32 %v7160, %v9520
        %v9553 = vmul.f32 %v7161, %v9521
        %v9554 = vmul.f32 %v7162, %v9522
        %v9555 = vmul.f32 %v7163, %v9523
        %v9556 = vmul.f32 %v7164, %v9524
        %v9557 = vmul.f32 %v7165, %v9525
        %v9558 = vmul.f32 %v7166, %v9526
        %v9559 = vmul.f32 %v7167, %v9527
        %v9560 = vmul.f32 %v7168, %v9528
        %v9561 = vmul.f32 %v7169, %v9529
        %v9562 = vmul.f32 %v7170, %v9530
        %v9563 = vmul.f32 %v7171, %v9531
        %v9564 = vmul.f32 %v7172, %v9532
        %v9565 = vmul.f32 %v7173, %v9533
        %v9566 = vmul.f32 %v7174, %v9534
        %v9567 = vmul.f32 %v7175, %v9535
        %v9568 = vmul.f32 %v7176, %v9536
        %v9569 = vmul.f32 %v7177, %v9537
        %v9570 = vmul.f32 %v7178, %v9538
        %v9571 = vmul.f32 %v7179, %v9539
        %v9572 = vmul.f32 %v7180, %v9540
        %v9573 = vmul.f32 %v7181, %v9541
        %v9574 = vmul.f32 %v7182, %v9542
        %v9575 = vmul.f32 %v7183, %v9543
        %v9576 = vmul.f32 %v7184, %v9544
        %v9577 = vmul.f32 %v7185, %v9545
        %v9578 = vmul.f32 %v7186, %v9546
        %v9579 = vmul.f32 %v7187, %v9547
        %v9580 = vmul.f32 %v7188, %v9548
        %v9581 = vmul.f32 %v7189, %v9549
        %v9582 = vmul.f32 %v7190, %v9550
        %v9583 = vmul.f32 %v9551, %v9391
        %v9584 = vmul.f32 %v9552, %v9392
        %v9585 = vmul.f32 %v9553, %v9393
        %v9586 = vmul.f32 %v9554, %v9394
        %v9587 = vmul.f32 %v9555, %v9395
        %v9588 = vmul.f32 %v9556, %v9396
        %v9589 = vmul.f32 %v9557, %v9397
        %v9590 = vmul.f32 %v9558, %v9398
        %v9591 = vmul.f32 %v9559, %v9399
        %v9592 = vmul.f32 %v9560, %v9400
        %v9593 = vmul.f32 %v9561, %v9401
        %v9594 = vmul.f32 %v9562, %v9402
        %v9595 = vmul.f32 %v9563, %v9403
        %v9596 = vmul.f32 %v9564, %v9404
        %v9597 = vmul.f32 %v9565, %v9405
        %v9598 = vmul.f32 %v9566, %v9406
        %v9599 = vmul.f32 %v9567, %v9407
        %v9600 = vmul.f32 %v9568, %v9408
        %v9601 = vmul.f32 %v9569, %v9409
        %v9602 = vmul.f32 %v9570, %v9410
        %v9603 = vmul.f32 %v9571, %v9411
        %v9604 = vmul.f32 %v9572, %v9412
        %v9605 = vmul.f32 %v9573, %v9413
        %v9606 = vmul.f32 %v9574, %v9414
        %v9607 = vmul.f32 %v9575, %v9415
        %v9608 = vmul.f32 %v9576, %v9416
        %v9609 = vmul.f32 %v9577, %v9417
        %v9610 = vmul.f32 %v9578, %v9418
        %v9611 = vmul.f32 %v9579, %v9419
        %v9612 = vmul.f32 %v9580, %v9420
        %v9613 = vmul.f32 %v9581, %v9421
        %v9614 = vmul.f32 %v9582, %v9422
        %v9615 = vmax.f32 %v9583, -100.0
        %v9616 = vmax.f32 %v9584, -100.0
        %v9617 = vmax.f32 %v9585, -100.0
        %v9618 = vmax.f32 %v9586, -100.0
        %v9619 = vmax.f32 %v9587, -100.0
        %v9620 = vmax.f32 %v9588, -100.0
        %v9621 = vmax.f32 %v9589, -100.0
        %v9622 = vmax.f32 %v9590, -100.0
        %v9623 = vmax.f32 %v9591, -100.0
        %v9624 = vmax.f32 %v9592, -100.0
        %v9625 = vmax.f32 %v9593, -100.0
        %v9626 = vmax.f32 %v9594, -100.0
        %v9627 = vmax.f32 %v9595, -100.0
        %v9628 = vmax.f32 %v9596, -100.0
        %v9629 = vmax.f32 %v9597, -100.0
        %v9630 = vmax.f32 %v9598, -100.0
        %v9631 = vmax.f32 %v9599, -100.0
        %v9632 = vmax.f32 %v9600, -100.0
        %v9633 = vmax.f32 %v9601, -100.0
        %v9634 = vmax.f32 %v9602, -100.0
        %v9635 = vmax.f32 %v9603, -100.0
        %v9636 = vmax.f32 %v9604, -100.0
        %v9637 = vmax.f32 %v9605, -100.0
        %v9638 = vmax.f32 %v9606, -100.0
        %v9639 = vmax.f32 %v9607, -100.0
        %v9640 = vmax.f32 %v9608, -100.0
        %v9641 = vmax.f32 %v9609, -100.0
        %v9642 = vmax.f32 %v9610, -100.0
        %v9643 = vmax.f32 %v9611, -100.0
        %v9644 = vmax.f32 %v9612, -100.0
        %v9645 = vmax.f32 %v9613, -100.0
        %v9646 = vmax.f32 %v9614, -100.0
        %v9647 = vmin.f32 %v9615, 100.0
        %v9648 = vmin.f32 %v9616, 100.0
        %v9649 = vmin.f32 %v9617, 100.0
        %v9650 = vmin.f32 %v9618, 100.0
        %v9651 = vmin.f32 %v9619, 100.0
        %v9652 = vmin.f32 %v9620, 100.0
        %v9653 = vmin.f32 %v9621, 100.0
        %v9654 = vmin.f32 %v9622, 100.0
        %v9655 = vmin.f32 %v9623, 100.0
        %v9656 = vmin.f32 %v9624, 100.0
        %v9657 = vmin.f32 %v9625, 100.0
        %v9658 = vmin.f32 %v9626, 100.0
        %v9659 = vmin.f32 %v9627, 100.0
        %v9660 = vmin.f32 %v9628, 100.0
        %v9661 = vmin.f32 %v9629, 100.0
        %v9662 = vmin.f32 %v9630, 100.0
        %v9663 = vmin.f32 %v9631, 100.0
        %v9664 = vmin.f32 %v9632, 100.0
        %v9665 = vmin.f32 %v9633, 100.0
        %v9666 = vmin.f32 %v9634, 100.0
        %v9667 = vmin.f32 %v9635, 100.0
        %v9668 = vmin.f32 %v9636, 100.0
        %v9669 = vmin.f32 %v9637, 100.0
        %v9670 = vmin.f32 %v9638, 100.0
        %v9671 = vmin.f32 %v9639, 100.0
        %v9672 = vmin.f32 %v9640, 100.0
        %v9673 = vmin.f32 %v9641, 100.0
        %v9674 = vmin.f32 %v9642, 100.0
        %v9675 = vmin.f32 %v9643, 100.0
        %v9676 = vmin.f32 %v9644, 100.0
        %v9677 = vmin.f32 %v9645, 100.0
        %v9678 = vmin.f32 %v9646, 100.0
        %v9679 = vpack.c.bf16 %v9655, %v9647
        %v9680 = vpack.c.bf16 %v9656, %v9648
        %v9681 = vpack.c.bf16 %v9657, %v9649
        %v9682 = vpack.c.bf16 %v9658, %v9650
        %v9683 = vpack.c.bf16 %v9659, %v9651
        %v9684 = vpack.c.bf16 %v9660, %v9652
        %v9685 = vpack.c.bf16 %v9661, %v9653
        %v9686 = vpack.c.bf16 %v9662, %v9654
        %v9687 = vpack.c.bf16 %v9671, %v9663
        %v9688 = vpack.c.bf16 %v9672, %v9664
        %v9689 = vpack.c.bf16 %v9673, %v9665
        %v9690 = vpack.c.bf16 %v9674, %v9666
        %v9691 = vpack.c.bf16 %v9675, %v9667
        %v9692 = vpack.c.bf16 %v9676, %v9668
        %v9693 = vpack.c.bf16 %v9677, %v9669
        %v9694 = vpack.c.bf16 %v9678, %v9670
        %v9695 = vld [vmem:[%s757] sm:$0xff]
        %v9696 = vld [vmem:[%s757 + $0x8] sm:$0xff]
        %v9697 = vld [vmem:[%s757 + $0x10] sm:$0xff]
        %v9698 = vld [vmem:[%s757 + $0x18] sm:$0xff]
        %v9699 = vld [vmem:[%s757 + $0x20] sm:$0xff]
        %v9700 = vld [vmem:[%s757 + $0x28] sm:$0xff]
        %v9701 = vld [vmem:[%s757 + $0x30] sm:$0xff]
        %v9702 = vld [vmem:[%s757 + $0x38] sm:$0xff]
        %v9703 = vld [vmem:[%s757 + $0x40] sm:$0xff]
        %v9704 = vld [vmem:[%s757 + $0x48] sm:$0xff]
        %v9705 = vld [vmem:[%s757 + $0x50] sm:$0xff]
        %v9706 = vld [vmem:[%s757 + $0x58] sm:$0xff]
        %v9707 = vld [vmem:[%s757 + $0x60] sm:$0xff]
        %v9708 = vld [vmem:[%s757 + $0x68] sm:$0xff]
        %v9709 = vld [vmem:[%s757 + $0x70] sm:$0xff]
        %v9710 = vld [vmem:[%s757 + $0x78] sm:$0xff]
        %v9711 = vld [vmem:[%s757 + $0x80] sm:$0xff]
        %v9712 = vld [vmem:[%s757 + $0x88] sm:$0xff]
        %v9713 = vld [vmem:[%s757 + $0x90] sm:$0xff]
        %v9714 = vld [vmem:[%s757 + $0x98] sm:$0xff]
        %v9715 = vld [vmem:[%s757 + $0xa0] sm:$0xff]
        %v9716 = vld [vmem:[%s757 + $0xa8] sm:$0xff]
        %v9717 = vld [vmem:[%s757 + $0xb0] sm:$0xff]
        %v9718 = vld [vmem:[%s757 + $0xb8] sm:$0xff]
        %v9719 = vld [vmem:[%s757 + $0xc0] sm:$0xff]
        %v9720 = vld [vmem:[%s757 + $0xc8] sm:$0xff]
        %v9721 = vld [vmem:[%s757 + $0xd0] sm:$0xff]
        %v9722 = vld [vmem:[%s757 + $0xd8] sm:$0xff]
        %v9723 = vld [vmem:[%s757 + $0xe0] sm:$0xff]
        %v9724 = vld [vmem:[%s757 + $0xe8] sm:$0xff]
        %v9725 = vld [vmem:[%s757 + $0xf0] sm:$0xff]
        %v9726 = vld [vmem:[%s757 + $0xf8] sm:$0xff]
        %v9727 = vld [vmem:[%s757 + $0x100] sm:$0xff]
        %v9728 = vld [vmem:[%s757 + $0x108] sm:$0xff]
        %v9729 = vld [vmem:[%s757 + $0x110] sm:$0xff]
        %v9730 = vld [vmem:[%s757 + $0x118] sm:$0xff]
        %v9731 = vld [vmem:[%s757 + $0x120] sm:$0xff]
        %v9732 = vld [vmem:[%s757 + $0x128] sm:$0xff]
        %v9733 = vld [vmem:[%s757 + $0x130] sm:$0xff]
        %v9734 = vld [vmem:[%s757 + $0x138] sm:$0xff]
        %v9735 = vld [vmem:[%s757 + $0x140] sm:$0xff]
        %v9736 = vld [vmem:[%s757 + $0x148] sm:$0xff]
        %v9737 = vld [vmem:[%s757 + $0x150] sm:$0xff]
        %v9738 = vld [vmem:[%s757 + $0x158] sm:$0xff]
        %v9739 = vld [vmem:[%s757 + $0x160] sm:$0xff]
        %v9740 = vld [vmem:[%s757 + $0x168] sm:$0xff]
        %v9741 = vld [vmem:[%s757 + $0x170] sm:$0xff]
        %v9742 = vld [vmem:[%s757 + $0x178] sm:$0xff]
        %v9743 = vld [vmem:[%s757 + $0x180] sm:$0xff]
        %v9744 = vld [vmem:[%s757 + $0x188] sm:$0xff]
        %v9745 = vld [vmem:[%s757 + $0x190] sm:$0xff]
        %v9746 = vld [vmem:[%s757 + $0x198] sm:$0xff]
        %v9747 = vld [vmem:[%s757 + $0x1a0] sm:$0xff]
        %v9748 = vld [vmem:[%s757 + $0x1a8] sm:$0xff]
        %v9749 = vld [vmem:[%s757 + $0x1b0] sm:$0xff]
        %v9750 = vld [vmem:[%s757 + $0x1b8] sm:$0xff]
        %v9751 = vld [vmem:[%s757 + $0x1c0] sm:$0xff]
        %v9752 = vld [vmem:[%s757 + $0x1c8] sm:$0xff]
        %v9753 = vld [vmem:[%s757 + $0x1d0] sm:$0xff]
        %v9754 = vld [vmem:[%s757 + $0x1d8] sm:$0xff]
        %v9755 = vld [vmem:[%s757 + $0x1e0] sm:$0xff]
        %v9756 = vld [vmem:[%s757 + $0x1e8] sm:$0xff]
        %v9757 = vld [vmem:[%s757 + $0x1f0] sm:$0xff]
        %v9758 = vld [vmem:[%s757 + $0x1f8] sm:$0xff]
        %v9759 = vld [vmem:[%s757 + $0x200] sm:$0xff]
        %v9760 = vld [vmem:[%s757 + $0x208] sm:$0xff]
        %v9761 = vld [vmem:[%s757 + $0x210] sm:$0xff]
        %v9762 = vld [vmem:[%s757 + $0x218] sm:$0xff]
        %v9763 = vld [vmem:[%s757 + $0x220] sm:$0xff]
        %v9764 = vld [vmem:[%s757 + $0x228] sm:$0xff]
        %v9765 = vld [vmem:[%s757 + $0x230] sm:$0xff]
        %v9766 = vld [vmem:[%s757 + $0x238] sm:$0xff]
        %v9767 = vld [vmem:[%s757 + $0x240] sm:$0xff]
        %v9768 = vld [vmem:[%s757 + $0x248] sm:$0xff]
        %v9769 = vld [vmem:[%s757 + $0x250] sm:$0xff]
        %v9770 = vld [vmem:[%s757 + $0x258] sm:$0xff]
        %v9771 = vld [vmem:[%s757 + $0x260] sm:$0xff]
        %v9772 = vld [vmem:[%s757 + $0x268] sm:$0xff]
        %v9773 = vld [vmem:[%s757 + $0x270] sm:$0xff]
        %v9774 = vld [vmem:[%s757 + $0x278] sm:$0xff]
        %v9775 = vld [vmem:[%s757 + $0x280] sm:$0xff]
        %v9776 = vld [vmem:[%s757 + $0x288] sm:$0xff]
        %v9777 = vld [vmem:[%s757 + $0x290] sm:$0xff]
        %v9778 = vld [vmem:[%s757 + $0x298] sm:$0xff]
        %v9779 = vld [vmem:[%s757 + $0x2a0] sm:$0xff]
        %v9780 = vld [vmem:[%s757 + $0x2a8] sm:$0xff]
        %v9781 = vld [vmem:[%s757 + $0x2b0] sm:$0xff]
        %v9782 = vld [vmem:[%s757 + $0x2b8] sm:$0xff]
        %v9783 = vld [vmem:[%s757 + $0x2c0] sm:$0xff]
        %v9784 = vld [vmem:[%s757 + $0x2c8] sm:$0xff]
        %v9785 = vld [vmem:[%s757 + $0x2d0] sm:$0xff]
        %v9786 = vld [vmem:[%s757 + $0x2d8] sm:$0xff]
        %v9787 = vld [vmem:[%s757 + $0x2e0] sm:$0xff]
        %v9788 = vld [vmem:[%s757 + $0x2e8] sm:$0xff]
        %v9789 = vld [vmem:[%s757 + $0x2f0] sm:$0xff]
        %v9790 = vld [vmem:[%s757 + $0x2f8] sm:$0xff]
        %v9791 = vld [vmem:[%s757 + $0x300] sm:$0xff]
        %v9792 = vld [vmem:[%s757 + $0x308] sm:$0xff]
        %v9793 = vld [vmem:[%s757 + $0x310] sm:$0xff]
        %v9794 = vld [vmem:[%s757 + $0x318] sm:$0xff]
        %v9795 = vld [vmem:[%s757 + $0x320] sm:$0xff]
        %v9796 = vld [vmem:[%s757 + $0x328] sm:$0xff]
        %v9797 = vld [vmem:[%s757 + $0x330] sm:$0xff]
        %v9798 = vld [vmem:[%s757 + $0x338] sm:$0xff]
        %v9799 = vld [vmem:[%s757 + $0x340] sm:$0xff]
        %v9800 = vld [vmem:[%s757 + $0x348] sm:$0xff]
        %v9801 = vld [vmem:[%s757 + $0x350] sm:$0xff]
        %v9802 = vld [vmem:[%s757 + $0x358] sm:$0xff]
        %v9803 = vld [vmem:[%s757 + $0x360] sm:$0xff]
        %v9804 = vld [vmem:[%s757 + $0x368] sm:$0xff]
        %v9805 = vld [vmem:[%s757 + $0x370] sm:$0xff]
        %v9806 = vld [vmem:[%s757 + $0x378] sm:$0xff]
        %v9807 = vld [vmem:[%s757 + $0x380] sm:$0xff]
        %v9808 = vld [vmem:[%s757 + $0x388] sm:$0xff]
        %v9809 = vld [vmem:[%s757 + $0x390] sm:$0xff]
        %v9810 = vld [vmem:[%s757 + $0x398] sm:$0xff]
        %v9811 = vld [vmem:[%s757 + $0x3a0] sm:$0xff]
        %v9812 = vld [vmem:[%s757 + $0x3a8] sm:$0xff]
        %v9813 = vld [vmem:[%s757 + $0x3b0] sm:$0xff]
        %v9814 = vld [vmem:[%s757 + $0x3b8] sm:$0xff]
        %v9815 = vld [vmem:[%s757 + $0x3c0] sm:$0xff]
        %v9816 = vld [vmem:[%s757 + $0x3c8] sm:$0xff]
        %v9817 = vld [vmem:[%s757 + $0x3d0] sm:$0xff]
        %v9818 = vld [vmem:[%s757 + $0x3d8] sm:$0xff]
        %v9819 = vld [vmem:[%s757 + $0x3e0] sm:$0xff]
        %v9820 = vld [vmem:[%s757 + $0x3e8] sm:$0xff]
        %v9821 = vld [vmem:[%s757 + $0x3f0] sm:$0xff]
        %v9822 = vld [vmem:[%s757 + $0x3f8] sm:$0xff]
        %v9823 = vld [vmem:[%s757 + $0x400] sm:$0xff]
        %v9824 = vld [vmem:[%s757 + $0x408] sm:$0xff]
        %v9825 = vld [vmem:[%s757 + $0x410] sm:$0xff]
        %v9826 = vld [vmem:[%s757 + $0x418] sm:$0xff]
        %v9827 = vld [vmem:[%s757 + $0x420] sm:$0xff]
        %v9828 = vld [vmem:[%s757 + $0x428] sm:$0xff]
        %v9829 = vld [vmem:[%s757 + $0x430] sm:$0xff]
        %v9830 = vld [vmem:[%s757 + $0x438] sm:$0xff]
        %v9831 = vld [vmem:[%s757 + $0x440] sm:$0xff]
        %v9832 = vld [vmem:[%s757 + $0x448] sm:$0xff]
        %v9833 = vld [vmem:[%s757 + $0x450] sm:$0xff]
        %v9834 = vld [vmem:[%s757 + $0x458] sm:$0xff]
        %v9835 = vld [vmem:[%s757 + $0x460] sm:$0xff]
        %v9836 = vld [vmem:[%s757 + $0x468] sm:$0xff]
        %v9837 = vld [vmem:[%s757 + $0x470] sm:$0xff]
        %v9838 = vld [vmem:[%s757 + $0x478] sm:$0xff]
        %v9839 = vld [vmem:[%s757 + $0x480] sm:$0xff]
        %v9840 = vld [vmem:[%s757 + $0x488] sm:$0xff]
        %v9841 = vld [vmem:[%s757 + $0x490] sm:$0xff]
        %v9842 = vld [vmem:[%s757 + $0x498] sm:$0xff]
        %v9843 = vld [vmem:[%s757 + $0x4a0] sm:$0xff]
        %v9844 = vld [vmem:[%s757 + $0x4a8] sm:$0xff]
        %v9845 = vld [vmem:[%s757 + $0x4b0] sm:$0xff]
        %v9846 = vld [vmem:[%s757 + $0x4b8] sm:$0xff]
        %v9847 = vld [vmem:[%s757 + $0x4c0] sm:$0xff]
        %v9848 = vld [vmem:[%s757 + $0x4c8] sm:$0xff]
        %v9849 = vld [vmem:[%s757 + $0x4d0] sm:$0xff]
        %v9850 = vld [vmem:[%s757 + $0x4d8] sm:$0xff]
        %v9851 = vld [vmem:[%s757 + $0x4e0] sm:$0xff]
        %v9852 = vld [vmem:[%s757 + $0x4e8] sm:$0xff]
        %v9853 = vld [vmem:[%s757 + $0x4f0] sm:$0xff]
        %v9854 = vld [vmem:[%s757 + $0x4f8] sm:$0xff]
        %v9855 = vld [vmem:[%s757 + $0x500] sm:$0xff]
        %v9856 = vld [vmem:[%s757 + $0x508] sm:$0xff]
        %v9857 = vld [vmem:[%s757 + $0x510] sm:$0xff]
        %v9858 = vld [vmem:[%s757 + $0x518] sm:$0xff]
        %v9859 = vld [vmem:[%s757 + $0x520] sm:$0xff]
        %v9860 = vld [vmem:[%s757 + $0x528] sm:$0xff]
        %v9861 = vld [vmem:[%s757 + $0x530] sm:$0xff]
        %v9862 = vld [vmem:[%s757 + $0x538] sm:$0xff]
        %v9863 = vld [vmem:[%s757 + $0x540] sm:$0xff]
        %v9864 = vld [vmem:[%s757 + $0x548] sm:$0xff]
        %v9865 = vld [vmem:[%s757 + $0x550] sm:$0xff]
        %v9866 = vld [vmem:[%s757 + $0x558] sm:$0xff]
        %v9867 = vld [vmem:[%s757 + $0x560] sm:$0xff]
        %v9868 = vld [vmem:[%s757 + $0x568] sm:$0xff]
        %v9869 = vld [vmem:[%s757 + $0x570] sm:$0xff]
        %v9870 = vld [vmem:[%s757 + $0x578] sm:$0xff]
        %v9871 = vld [vmem:[%s757 + $0x580] sm:$0xff]
        %v9872 = vld [vmem:[%s757 + $0x588] sm:$0xff]
        %v9873 = vld [vmem:[%s757 + $0x590] sm:$0xff]
        %v9874 = vld [vmem:[%s757 + $0x598] sm:$0xff]
        %v9875 = vld [vmem:[%s757 + $0x5a0] sm:$0xff]
        %v9876 = vld [vmem:[%s757 + $0x5a8] sm:$0xff]
        %v9877 = vld [vmem:[%s757 + $0x5b0] sm:$0xff]
        %v9878 = vld [vmem:[%s757 + $0x5b8] sm:$0xff]
        %v9879 = vld [vmem:[%s757 + $0x5c0] sm:$0xff]
        %v9880 = vld [vmem:[%s757 + $0x5c8] sm:$0xff]
        %v9881 = vld [vmem:[%s757 + $0x5d0] sm:$0xff]
        %v9882 = vld [vmem:[%s757 + $0x5d8] sm:$0xff]
        %v9883 = vld [vmem:[%s757 + $0x5e0] sm:$0xff]
        %v9884 = vld [vmem:[%s757 + $0x5e8] sm:$0xff]
        %v9885 = vld [vmem:[%s757 + $0x5f0] sm:$0xff]
        %v9886 = vld [vmem:[%s757 + $0x5f8] sm:$0xff]
        %v9887 = vld [vmem:[%s757 + $0x600] sm:$0xff]
        %v9888 = vld [vmem:[%s757 + $0x608] sm:$0xff]
        %v9889 = vld [vmem:[%s757 + $0x610] sm:$0xff]
        %v9890 = vld [vmem:[%s757 + $0x618] sm:$0xff]
        %v9891 = vld [vmem:[%s757 + $0x620] sm:$0xff]
        %v9892 = vld [vmem:[%s757 + $0x628] sm:$0xff]
        %v9893 = vld [vmem:[%s757 + $0x630] sm:$0xff]
        %v9894 = vld [vmem:[%s757 + $0x638] sm:$0xff]
        %v9895 = vld [vmem:[%s757 + $0x640] sm:$0xff]
        %v9896 = vld [vmem:[%s757 + $0x648] sm:$0xff]
        %v9897 = vld [vmem:[%s757 + $0x650] sm:$0xff]
        %v9898 = vld [vmem:[%s757 + $0x658] sm:$0xff]
        %v9899 = vld [vmem:[%s757 + $0x660] sm:$0xff]
        %v9900 = vld [vmem:[%s757 + $0x668] sm:$0xff]
        %v9901 = vld [vmem:[%s757 + $0x670] sm:$0xff]
        %v9902 = vld [vmem:[%s757 + $0x678] sm:$0xff]
        %v9903 = vld [vmem:[%s757 + $0x680] sm:$0xff]
        %v9904 = vld [vmem:[%s757 + $0x688] sm:$0xff]
        %v9905 = vld [vmem:[%s757 + $0x690] sm:$0xff]
        %v9906 = vld [vmem:[%s757 + $0x698] sm:$0xff]
        %v9907 = vld [vmem:[%s757 + $0x6a0] sm:$0xff]
        %v9908 = vld [vmem:[%s757 + $0x6a8] sm:$0xff]
        %v9909 = vld [vmem:[%s757 + $0x6b0] sm:$0xff]
        %v9910 = vld [vmem:[%s757 + $0x6b8] sm:$0xff]
        %v9911 = vld [vmem:[%s757 + $0x6c0] sm:$0xff]
        %v9912 = vld [vmem:[%s757 + $0x6c8] sm:$0xff]
        %v9913 = vld [vmem:[%s757 + $0x6d0] sm:$0xff]
        %v9914 = vld [vmem:[%s757 + $0x6d8] sm:$0xff]
        %v9915 = vld [vmem:[%s757 + $0x6e0] sm:$0xff]
        %v9916 = vld [vmem:[%s757 + $0x6e8] sm:$0xff]
        %v9917 = vld [vmem:[%s757 + $0x6f0] sm:$0xff]
        %v9918 = vld [vmem:[%s757 + $0x6f8] sm:$0xff]
        %v9919 = vld [vmem:[%s757 + $0x700] sm:$0xff]
        %v9920 = vld [vmem:[%s757 + $0x708] sm:$0xff]
        %v9921 = vld [vmem:[%s757 + $0x710] sm:$0xff]
        %v9922 = vld [vmem:[%s757 + $0x718] sm:$0xff]
        %v9923 = vld [vmem:[%s757 + $0x720] sm:$0xff]
        %v9924 = vld [vmem:[%s757 + $0x728] sm:$0xff]
        %v9925 = vld [vmem:[%s757 + $0x730] sm:$0xff]
        %v9926 = vld [vmem:[%s757 + $0x738] sm:$0xff]
        %v9927 = vld [vmem:[%s757 + $0x740] sm:$0xff]
        %v9928 = vld [vmem:[%s757 + $0x748] sm:$0xff]
        %v9929 = vld [vmem:[%s757 + $0x750] sm:$0xff]
        %v9930 = vld [vmem:[%s757 + $0x758] sm:$0xff]
        %v9931 = vld [vmem:[%s757 + $0x760] sm:$0xff]
        %v9932 = vld [vmem:[%s757 + $0x768] sm:$0xff]
        %v9933 = vld [vmem:[%s757 + $0x770] sm:$0xff]
        %v9934 = vld [vmem:[%s757 + $0x778] sm:$0xff]
        %v9935 = vld [vmem:[%s757 + $0x780] sm:$0xff]
        %v9936 = vld [vmem:[%s757 + $0x788] sm:$0xff]
        %v9937 = vld [vmem:[%s757 + $0x790] sm:$0xff]
        %v9938 = vld [vmem:[%s757 + $0x798] sm:$0xff]
        %v9939 = vld [vmem:[%s757 + $0x7a0] sm:$0xff]
        %v9940 = vld [vmem:[%s757 + $0x7a8] sm:$0xff]
        %v9941 = vld [vmem:[%s757 + $0x7b0] sm:$0xff]
        %v9942 = vld [vmem:[%s757 + $0x7b8] sm:$0xff]
        %v9943 = vld [vmem:[%s757 + $0x7c0] sm:$0xff]
        %v9944 = vld [vmem:[%s757 + $0x7c8] sm:$0xff]
        %v9945 = vld [vmem:[%s757 + $0x7d0] sm:$0xff]
        %v9946 = vld [vmem:[%s757 + $0x7d8] sm:$0xff]
        %v9947 = vld [vmem:[%s757 + $0x7e0] sm:$0xff]
        %v9948 = vld [vmem:[%s757 + $0x7e8] sm:$0xff]
        %v9949 = vld [vmem:[%s757 + $0x7f0] sm:$0xff]
        %v9950 = vld [vmem:[%s757 + $0x7f8] sm:$0xff]
        %v9951 = vperm.slane %v984, 6
        %v9952 = vperm.slane %v985, 6
        %v9953 = vperm.slane %v986, 6
        %v9954 = vperm.slane %v987, 6
        %v10211 = vunpack.c.l.b16 %v9695
        %v10212 = vunpack.c.h.b16 %v9695
        %v10213 = vunpack.c.l.b16 %v9696
        %v10214 = vunpack.c.h.b16 %v9696
        %v10215 = vunpack.c.l.b16 %v9697
        %v10216 = vunpack.c.h.b16 %v9697
        %v10217 = vunpack.c.l.b16 %v9698
        %v10218 = vunpack.c.h.b16 %v9698
        %v10219 = vunpack.c.l.b16 %v9699
        %v10220 = vunpack.c.h.b16 %v9699
        %v10221 = vunpack.c.l.b16 %v9700
        %v10222 = vunpack.c.h.b16 %v9700
        %v10223 = vunpack.c.l.b16 %v9701
        %v10224 = vunpack.c.h.b16 %v9701
        %v10225 = vunpack.c.l.b16 %v9702
        %v10226 = vunpack.c.h.b16 %v9702
        %v10227 = vunpack.c.l.b16 %v9703
        %v10228 = vunpack.c.h.b16 %v9703
        %v10229 = vunpack.c.l.b16 %v9704
        %v10230 = vunpack.c.h.b16 %v9704
        %v10231 = vunpack.c.l.b16 %v9705
        %v10232 = vunpack.c.h.b16 %v9705
        %v10233 = vunpack.c.l.b16 %v9706
        %v10234 = vunpack.c.h.b16 %v9706
        %v10235 = vunpack.c.l.b16 %v9707
        %v10236 = vunpack.c.h.b16 %v9707
        %v10237 = vunpack.c.l.b16 %v9708
        %v10238 = vunpack.c.h.b16 %v9708
        %v10239 = vunpack.c.l.b16 %v9709
        %v10240 = vunpack.c.h.b16 %v9709
        %v10241 = vunpack.c.l.b16 %v9710
        %v10242 = vunpack.c.h.b16 %v9710
        %v10243 = vunpack.c.l.b16 %v9711
        %v10244 = vunpack.c.h.b16 %v9711
        %v10245 = vunpack.c.l.b16 %v9712
        %v10246 = vunpack.c.h.b16 %v9712
        %v10247 = vunpack.c.l.b16 %v9713
        %v10248 = vunpack.c.h.b16 %v9713
        %v10249 = vunpack.c.l.b16 %v9714
        %v10250 = vunpack.c.h.b16 %v9714
        %v10251 = vunpack.c.l.b16 %v9715
        %v10252 = vunpack.c.h.b16 %v9715
        %v10253 = vunpack.c.l.b16 %v9716
        %v10254 = vunpack.c.h.b16 %v9716
        %v10255 = vunpack.c.l.b16 %v9717
        %v10256 = vunpack.c.h.b16 %v9717
        %v10257 = vunpack.c.l.b16 %v9718
        %v10258 = vunpack.c.h.b16 %v9718
        %v10259 = vunpack.c.l.b16 %v9719
        %v10260 = vunpack.c.h.b16 %v9719
        %v10261 = vunpack.c.l.b16 %v9720
        %v10262 = vunpack.c.h.b16 %v9720
        %v10263 = vunpack.c.l.b16 %v9721
        %v10264 = vunpack.c.h.b16 %v9721
        %v10265 = vunpack.c.l.b16 %v9722
        %v10266 = vunpack.c.h.b16 %v9722
        %v10267 = vunpack.c.l.b16 %v9723
        %v10268 = vunpack.c.h.b16 %v9723
        %v10269 = vunpack.c.l.b16 %v9724
        %v10270 = vunpack.c.h.b16 %v9724
        %v10271 = vunpack.c.l.b16 %v9725
        %v10272 = vunpack.c.h.b16 %v9725
        %v10273 = vunpack.c.l.b16 %v9726
        %v10274 = vunpack.c.h.b16 %v9726
        %v10275 = vunpack.c.l.b16 %v9727
        %v10276 = vunpack.c.h.b16 %v9727
        %v10277 = vunpack.c.l.b16 %v9728
        %v10278 = vunpack.c.h.b16 %v9728
        %v10279 = vunpack.c.l.b16 %v9729
        %v10280 = vunpack.c.h.b16 %v9729
        %v10281 = vunpack.c.l.b16 %v9730
        %v10282 = vunpack.c.h.b16 %v9730
        %v10283 = vunpack.c.l.b16 %v9731
        %v10284 = vunpack.c.h.b16 %v9731
        %v10285 = vunpack.c.l.b16 %v9732
        %v10286 = vunpack.c.h.b16 %v9732
        %v10287 = vunpack.c.l.b16 %v9733
        %v10288 = vunpack.c.h.b16 %v9733
        %v10289 = vunpack.c.l.b16 %v9734
        %v10290 = vunpack.c.h.b16 %v9734
        %v10291 = vunpack.c.l.b16 %v9735
        %v10292 = vunpack.c.h.b16 %v9735
        %v10293 = vunpack.c.l.b16 %v9736
        %v10294 = vunpack.c.h.b16 %v9736
        %v10295 = vunpack.c.l.b16 %v9737
        %v10296 = vunpack.c.h.b16 %v9737
        %v10297 = vunpack.c.l.b16 %v9738
        %v10298 = vunpack.c.h.b16 %v9738
        %v10299 = vunpack.c.l.b16 %v9739
        %v10300 = vunpack.c.h.b16 %v9739
        %v10301 = vunpack.c.l.b16 %v9740
        %v10302 = vunpack.c.h.b16 %v9740
        %v10303 = vunpack.c.l.b16 %v9741
        %v10304 = vunpack.c.h.b16 %v9741
        %v10305 = vunpack.c.l.b16 %v9742
        %v10306 = vunpack.c.h.b16 %v9742
        %v10307 = vunpack.c.l.b16 %v9743
        %v10308 = vunpack.c.h.b16 %v9743
        %v10309 = vunpack.c.l.b16 %v9744
        %v10310 = vunpack.c.h.b16 %v9744
        %v10311 = vunpack.c.l.b16 %v9745
        %v10312 = vunpack.c.h.b16 %v9745
        %v10313 = vunpack.c.l.b16 %v9746
        %v10314 = vunpack.c.h.b16 %v9746
        %v10315 = vunpack.c.l.b16 %v9747
        %v10316 = vunpack.c.h.b16 %v9747
        %v10317 = vunpack.c.l.b16 %v9748
        %v10318 = vunpack.c.h.b16 %v9748
        %v10319 = vunpack.c.l.b16 %v9749
        %v10320 = vunpack.c.h.b16 %v9749
        %v10321 = vunpack.c.l.b16 %v9750
        %v10322 = vunpack.c.h.b16 %v9750
        %v10323 = vunpack.c.l.b16 %v9751
        %v10324 = vunpack.c.h.b16 %v9751
        %v10325 = vunpack.c.l.b16 %v9752
        %v10326 = vunpack.c.h.b16 %v9752
        %v10327 = vunpack.c.l.b16 %v9753
        %v10328 = vunpack.c.h.b16 %v9753
        %v10329 = vunpack.c.l.b16 %v9754
        %v10330 = vunpack.c.h.b16 %v9754
        %v10331 = vunpack.c.l.b16 %v9755
        %v10332 = vunpack.c.h.b16 %v9755
        %v10333 = vunpack.c.l.b16 %v9756
        %v10334 = vunpack.c.h.b16 %v9756
        %v10335 = vunpack.c.l.b16 %v9757
        %v10336 = vunpack.c.h.b16 %v9757
        %v10337 = vunpack.c.l.b16 %v9758
        %v10338 = vunpack.c.h.b16 %v9758
        %v10339 = vunpack.c.l.b16 %v9759
        %v10340 = vunpack.c.h.b16 %v9759
        %v10341 = vunpack.c.l.b16 %v9760
        %v10342 = vunpack.c.h.b16 %v9760
        %v10343 = vunpack.c.l.b16 %v9761
        %v10344 = vunpack.c.h.b16 %v9761
        %v10345 = vunpack.c.l.b16 %v9762
        %v10346 = vunpack.c.h.b16 %v9762
        %v10347 = vunpack.c.l.b16 %v9763
        %v10348 = vunpack.c.h.b16 %v9763
        %v10349 = vunpack.c.l.b16 %v9764
        %v10350 = vunpack.c.h.b16 %v9764
        %v10351 = vunpack.c.l.b16 %v9765
        %v10352 = vunpack.c.h.b16 %v9765
        %v10353 = vunpack.c.l.b16 %v9766
        %v10354 = vunpack.c.h.b16 %v9766
        %v10355 = vunpack.c.l.b16 %v9767
        %v10356 = vunpack.c.h.b16 %v9767
        %v10357 = vunpack.c.l.b16 %v9768
        %v10358 = vunpack.c.h.b16 %v9768
        %v10359 = vunpack.c.l.b16 %v9769
        %v10360 = vunpack.c.h.b16 %v9769
        %v10361 = vunpack.c.l.b16 %v9770
        %v10362 = vunpack.c.h.b16 %v9770
        %v10363 = vunpack.c.l.b16 %v9771
        %v10364 = vunpack.c.h.b16 %v9771
        %v10365 = vunpack.c.l.b16 %v9772
        %v10366 = vunpack.c.h.b16 %v9772
        %v10367 = vunpack.c.l.b16 %v9773
        %v10368 = vunpack.c.h.b16 %v9773
        %v10369 = vunpack.c.l.b16 %v9774
        %v10370 = vunpack.c.h.b16 %v9774
        %v10371 = vunpack.c.l.b16 %v9775
        %v10372 = vunpack.c.h.b16 %v9775
        %v10373 = vunpack.c.l.b16 %v9776
        %v10374 = vunpack.c.h.b16 %v9776
        %v10375 = vunpack.c.l.b16 %v9777
        %v10376 = vunpack.c.h.b16 %v9777
        %v10377 = vunpack.c.l.b16 %v9778
        %v10378 = vunpack.c.h.b16 %v9778
        %v10379 = vunpack.c.l.b16 %v9779
        %v10380 = vunpack.c.h.b16 %v9779
        %v10381 = vunpack.c.l.b16 %v9780
        %v10382 = vunpack.c.h.b16 %v9780
        %v10383 = vunpack.c.l.b16 %v9781
        %v10384 = vunpack.c.h.b16 %v9781
        %v10385 = vunpack.c.l.b16 %v9782
        %v10386 = vunpack.c.h.b16 %v9782
        %v10387 = vunpack.c.l.b16 %v9783
        %v10388 = vunpack.c.h.b16 %v9783
        %v10389 = vunpack.c.l.b16 %v9784
        %v10390 = vunpack.c.h.b16 %v9784
        %v10391 = vunpack.c.l.b16 %v9785
        %v10392 = vunpack.c.h.b16 %v9785
        %v10393 = vunpack.c.l.b16 %v9786
        %v10394 = vunpack.c.h.b16 %v9786
        %v10395 = vunpack.c.l.b16 %v9787
        %v10396 = vunpack.c.h.b16 %v9787
        %v10397 = vunpack.c.l.b16 %v9788
        %v10398 = vunpack.c.h.b16 %v9788
        %v10399 = vunpack.c.l.b16 %v9789
        %v10400 = vunpack.c.h.b16 %v9789
        %v10401 = vunpack.c.l.b16 %v9790
        %v10402 = vunpack.c.h.b16 %v9790
        %v10403 = vunpack.c.l.b16 %v9791
        %v10404 = vunpack.c.h.b16 %v9791
        %v10405 = vunpack.c.l.b16 %v9792
        %v10406 = vunpack.c.h.b16 %v9792
        %v10407 = vunpack.c.l.b16 %v9793
        %v10408 = vunpack.c.h.b16 %v9793
        %v10409 = vunpack.c.l.b16 %v9794
        %v10410 = vunpack.c.h.b16 %v9794
        %v10411 = vunpack.c.l.b16 %v9795
        %v10412 = vunpack.c.h.b16 %v9795
        %v10413 = vunpack.c.l.b16 %v9796
        %v10414 = vunpack.c.h.b16 %v9796
        %v10415 = vunpack.c.l.b16 %v9797
        %v10416 = vunpack.c.h.b16 %v9797
        %v10417 = vunpack.c.l.b16 %v9798
        %v10418 = vunpack.c.h.b16 %v9798
        %v10419 = vunpack.c.l.b16 %v9799
        %v10420 = vunpack.c.h.b16 %v9799
        %v10421 = vunpack.c.l.b16 %v9800
        %v10422 = vunpack.c.h.b16 %v9800
        %v10423 = vunpack.c.l.b16 %v9801
        %v10424 = vunpack.c.h.b16 %v9801
        %v10425 = vunpack.c.l.b16 %v9802
        %v10426 = vunpack.c.h.b16 %v9802
        %v10427 = vunpack.c.l.b16 %v9803
        %v10428 = vunpack.c.h.b16 %v9803
        %v10429 = vunpack.c.l.b16 %v9804
        %v10430 = vunpack.c.h.b16 %v9804
        %v10431 = vunpack.c.l.b16 %v9805
        %v10432 = vunpack.c.h.b16 %v9805
        %v10433 = vunpack.c.l.b16 %v9806
        %v10434 = vunpack.c.h.b16 %v9806
        %v10435 = vunpack.c.l.b16 %v9807
        %v10436 = vunpack.c.h.b16 %v9807
        %v10437 = vunpack.c.l.b16 %v9808
        %v10438 = vunpack.c.h.b16 %v9808
        %v10439 = vunpack.c.l.b16 %v9809
        %v10440 = vunpack.c.h.b16 %v9809
        %v10441 = vunpack.c.l.b16 %v9810
        %v10442 = vunpack.c.h.b16 %v9810
        %v10443 = vunpack.c.l.b16 %v9811
        %v10444 = vunpack.c.h.b16 %v9811
        %v10445 = vunpack.c.l.b16 %v9812
        %v10446 = vunpack.c.h.b16 %v9812
        %v10447 = vunpack.c.l.b16 %v9813
        %v10448 = vunpack.c.h.b16 %v9813
        %v10449 = vunpack.c.l.b16 %v9814
        %v10450 = vunpack.c.h.b16 %v9814
        %v10451 = vunpack.c.l.b16 %v9815
        %v10452 = vunpack.c.h.b16 %v9815
        %v10453 = vunpack.c.l.b16 %v9816
        %v10454 = vunpack.c.h.b16 %v9816
        %v10455 = vunpack.c.l.b16 %v9817
        %v10456 = vunpack.c.h.b16 %v9817
        %v10457 = vunpack.c.l.b16 %v9818
        %v10458 = vunpack.c.h.b16 %v9818
        %v10459 = vunpack.c.l.b16 %v9819
        %v10460 = vunpack.c.h.b16 %v9819
        %v10461 = vunpack.c.l.b16 %v9820
        %v10462 = vunpack.c.h.b16 %v9820
        %v10463 = vunpack.c.l.b16 %v9821
        %v10464 = vunpack.c.h.b16 %v9821
        %v10465 = vunpack.c.l.b16 %v9822
        %v10466 = vunpack.c.h.b16 %v9822
        %v10467 = vunpack.c.l.b16 %v9823
        %v10468 = vunpack.c.h.b16 %v9823
        %v10469 = vunpack.c.l.b16 %v9824
        %v10470 = vunpack.c.h.b16 %v9824
        %v10471 = vunpack.c.l.b16 %v9825
        %v10472 = vunpack.c.h.b16 %v9825
        %v10473 = vunpack.c.l.b16 %v9826
        %v10474 = vunpack.c.h.b16 %v9826
        %v10475 = vunpack.c.l.b16 %v9827
        %v10476 = vunpack.c.h.b16 %v9827
        %v10477 = vunpack.c.l.b16 %v9828
        %v10478 = vunpack.c.h.b16 %v9828
        %v10479 = vunpack.c.l.b16 %v9829
        %v10480 = vunpack.c.h.b16 %v9829
        %v10481 = vunpack.c.l.b16 %v9830
        %v10482 = vunpack.c.h.b16 %v9830
        %v10483 = vunpack.c.l.b16 %v9831
        %v10484 = vunpack.c.h.b16 %v9831
        %v10485 = vunpack.c.l.b16 %v9832
        %v10486 = vunpack.c.h.b16 %v9832
        %v10487 = vunpack.c.l.b16 %v9833
        %v10488 = vunpack.c.h.b16 %v9833
        %v10489 = vunpack.c.l.b16 %v9834
        %v10490 = vunpack.c.h.b16 %v9834
        %v10491 = vunpack.c.l.b16 %v9835
        %v10492 = vunpack.c.h.b16 %v9835
        %v10493 = vunpack.c.l.b16 %v9836
        %v10494 = vunpack.c.h.b16 %v9836
        %v10495 = vunpack.c.l.b16 %v9837
        %v10496 = vunpack.c.h.b16 %v9837
        %v10497 = vunpack.c.l.b16 %v9838
        %v10498 = vunpack.c.h.b16 %v9838
        %v10499 = vunpack.c.l.b16 %v9839
        %v10500 = vunpack.c.h.b16 %v9839
        %v10501 = vunpack.c.l.b16 %v9840
        %v10502 = vunpack.c.h.b16 %v9840
        %v10503 = vunpack.c.l.b16 %v9841
        %v10504 = vunpack.c.h.b16 %v9841
        %v10505 = vunpack.c.l.b16 %v9842
        %v10506 = vunpack.c.h.b16 %v9842
        %v10507 = vunpack.c.l.b16 %v9843
        %v10508 = vunpack.c.h.b16 %v9843
        %v10509 = vunpack.c.l.b16 %v9844
        %v10510 = vunpack.c.h.b16 %v9844
        %v10511 = vunpack.c.l.b16 %v9845
        %v10512 = vunpack.c.h.b16 %v9845
        %v10513 = vunpack.c.l.b16 %v9846
        %v10514 = vunpack.c.h.b16 %v9846
        %v10515 = vunpack.c.l.b16 %v9847
        %v10516 = vunpack.c.h.b16 %v9847
        %v10517 = vunpack.c.l.b16 %v9848
        %v10518 = vunpack.c.h.b16 %v9848
        %v10519 = vunpack.c.l.b16 %v9849
        %v10520 = vunpack.c.h.b16 %v9849
        %v10521 = vunpack.c.l.b16 %v9850
        %v10522 = vunpack.c.h.b16 %v9850
        %v10523 = vunpack.c.l.b16 %v9851
        %v10524 = vunpack.c.h.b16 %v9851
        %v10525 = vunpack.c.l.b16 %v9852
        %v10526 = vunpack.c.h.b16 %v9852
        %v10527 = vunpack.c.l.b16 %v9853
        %v10528 = vunpack.c.h.b16 %v9853
        %v10529 = vunpack.c.l.b16 %v9854
        %v10530 = vunpack.c.h.b16 %v9854
        %v10531 = vunpack.c.l.b16 %v9855
        %v10532 = vunpack.c.h.b16 %v9855
        %v10533 = vunpack.c.l.b16 %v9856
        %v10534 = vunpack.c.h.b16 %v9856
        %v10535 = vunpack.c.l.b16 %v9857
        %v10536 = vunpack.c.h.b16 %v9857
        %v10537 = vunpack.c.l.b16 %v9858
        %v10538 = vunpack.c.h.b16 %v9858
        %v10539 = vunpack.c.l.b16 %v9859
        %v10540 = vunpack.c.h.b16 %v9859
        %v10541 = vunpack.c.l.b16 %v9860
        %v10542 = vunpack.c.h.b16 %v9860
        %v10543 = vunpack.c.l.b16 %v9861
        %v10544 = vunpack.c.h.b16 %v9861
        %v10545 = vunpack.c.l.b16 %v9862
        %v10546 = vunpack.c.h.b16 %v9862
        %v10547 = vunpack.c.l.b16 %v9863
        %v10548 = vunpack.c.h.b16 %v9863
        %v10549 = vunpack.c.l.b16 %v9864
        %v10550 = vunpack.c.h.b16 %v9864
        %v10551 = vunpack.c.l.b16 %v9865
        %v10552 = vunpack.c.h.b16 %v9865
        %v10553 = vunpack.c.l.b16 %v9866
        %v10554 = vunpack.c.h.b16 %v9866
        %v10555 = vunpack.c.l.b16 %v9867
        %v10556 = vunpack.c.h.b16 %v9867
        %v10557 = vunpack.c.l.b16 %v9868
        %v10558 = vunpack.c.h.b16 %v9868
        %v10559 = vunpack.c.l.b16 %v9869
        %v10560 = vunpack.c.h.b16 %v9869
        %v10561 = vunpack.c.l.b16 %v9870
        %v10562 = vunpack.c.h.b16 %v9870
        %v10563 = vunpack.c.l.b16 %v9871
        %v10564 = vunpack.c.h.b16 %v9871
        %v10565 = vunpack.c.l.b16 %v9872
        %v10566 = vunpack.c.h.b16 %v9872
        %v10567 = vunpack.c.l.b16 %v9873
        %v10568 = vunpack.c.h.b16 %v9873
        %v10569 = vunpack.c.l.b16 %v9874
        %v10570 = vunpack.c.h.b16 %v9874
        %v10571 = vunpack.c.l.b16 %v9875
        %v10572 = vunpack.c.h.b16 %v9875
        %v10573 = vunpack.c.l.b16 %v9876
        %v10574 = vunpack.c.h.b16 %v9876
        %v10575 = vunpack.c.l.b16 %v9877
        %v10576 = vunpack.c.h.b16 %v9877
        %v10577 = vunpack.c.l.b16 %v9878
        %v10578 = vunpack.c.h.b16 %v9878
        %v10579 = vunpack.c.l.b16 %v9879
        %v10580 = vunpack.c.h.b16 %v9879
        %v10581 = vunpack.c.l.b16 %v9880
        %v10582 = vunpack.c.h.b16 %v9880
        %v10583 = vunpack.c.l.b16 %v9881
        %v10584 = vunpack.c.h.b16 %v9881
        %v10585 = vunpack.c.l.b16 %v9882
        %v10586 = vunpack.c.h.b16 %v9882
        %v10587 = vunpack.c.l.b16 %v9883
        %v10588 = vunpack.c.h.b16 %v9883
        %v10589 = vunpack.c.l.b16 %v9884
        %v10590 = vunpack.c.h.b16 %v9884
        %v10591 = vunpack.c.l.b16 %v9885
        %v10592 = vunpack.c.h.b16 %v9885
        %v10593 = vunpack.c.l.b16 %v9886
        %v10594 = vunpack.c.h.b16 %v9886
        %v10595 = vunpack.c.l.b16 %v9887
        %v10596 = vunpack.c.h.b16 %v9887
        %v10597 = vunpack.c.l.b16 %v9888
        %v10598 = vunpack.c.h.b16 %v9888
        %v10599 = vunpack.c.l.b16 %v9889
        %v10600 = vunpack.c.h.b16 %v9889
        %v10601 = vunpack.c.l.b16 %v9890
        %v10602 = vunpack.c.h.b16 %v9890
        %v10603 = vunpack.c.l.b16 %v9891
        %v10604 = vunpack.c.h.b16 %v9891
        %v10605 = vunpack.c.l.b16 %v9892
        %v10606 = vunpack.c.h.b16 %v9892
        %v10607 = vunpack.c.l.b16 %v9893
        %v10608 = vunpack.c.h.b16 %v9893
        %v10609 = vunpack.c.l.b16 %v9894
        %v10610 = vunpack.c.h.b16 %v9894
        %v10611 = vunpack.c.l.b16 %v9895
        %v10612 = vunpack.c.h.b16 %v9895
        %v10613 = vunpack.c.l.b16 %v9896
        %v10614 = vunpack.c.h.b16 %v9896
        %v10615 = vunpack.c.l.b16 %v9897
        %v10616 = vunpack.c.h.b16 %v9897
        %v10617 = vunpack.c.l.b16 %v9898
        %v10618 = vunpack.c.h.b16 %v9898
        %v10619 = vunpack.c.l.b16 %v9899
        %v10620 = vunpack.c.h.b16 %v9899
        %v10621 = vunpack.c.l.b16 %v9900
        %v10622 = vunpack.c.h.b16 %v9900
        %v10623 = vunpack.c.l.b16 %v9901
        %v10624 = vunpack.c.h.b16 %v9901
        %v10625 = vunpack.c.l.b16 %v9902
        %v10626 = vunpack.c.h.b16 %v9902
        %v10627 = vunpack.c.l.b16 %v9903
        %v10628 = vunpack.c.h.b16 %v9903
        %v10629 = vunpack.c.l.b16 %v9904
        %v10630 = vunpack.c.h.b16 %v9904
        %v10631 = vunpack.c.l.b16 %v9905
        %v10632 = vunpack.c.h.b16 %v9905
        %v10633 = vunpack.c.l.b16 %v9906
        %v10634 = vunpack.c.h.b16 %v9906
        %v10635 = vunpack.c.l.b16 %v9907
        %v10636 = vunpack.c.h.b16 %v9907
        %v10637 = vunpack.c.l.b16 %v9908
        %v10638 = vunpack.c.h.b16 %v9908
        %v10639 = vunpack.c.l.b16 %v9909
        %v10640 = vunpack.c.h.b16 %v9909
        %v10641 = vunpack.c.l.b16 %v9910
        %v10642 = vunpack.c.h.b16 %v9910
        %v10643 = vunpack.c.l.b16 %v9911
        %v10644 = vunpack.c.h.b16 %v9911
        %v10645 = vunpack.c.l.b16 %v9912
        %v10646 = vunpack.c.h.b16 %v9912
        %v10647 = vunpack.c.l.b16 %v9913
        %v10648 = vunpack.c.h.b16 %v9913
        %v10649 = vunpack.c.l.b16 %v9914
        %v10650 = vunpack.c.h.b16 %v9914
        %v10651 = vunpack.c.l.b16 %v9915
        %v10652 = vunpack.c.h.b16 %v9915
        %v10653 = vunpack.c.l.b16 %v9916
        %v10654 = vunpack.c.h.b16 %v9916
        %v10655 = vunpack.c.l.b16 %v9917
        %v10656 = vunpack.c.h.b16 %v9917
        %v10657 = vunpack.c.l.b16 %v9918
        %v10658 = vunpack.c.h.b16 %v9918
        %v10659 = vunpack.c.l.b16 %v9919
        %v10660 = vunpack.c.h.b16 %v9919
        %v10661 = vunpack.c.l.b16 %v9920
        %v10662 = vunpack.c.h.b16 %v9920
        %v10663 = vunpack.c.l.b16 %v9921
        %v10664 = vunpack.c.h.b16 %v9921
        %v10665 = vunpack.c.l.b16 %v9922
        %v10666 = vunpack.c.h.b16 %v9922
        %v10667 = vunpack.c.l.b16 %v9923
        %v10668 = vunpack.c.h.b16 %v9923
        %v10669 = vunpack.c.l.b16 %v9924
        %v10670 = vunpack.c.h.b16 %v9924
        %v10671 = vunpack.c.l.b16 %v9925
        %v10672 = vunpack.c.h.b16 %v9925
        %v10673 = vunpack.c.l.b16 %v9926
        %v10674 = vunpack.c.h.b16 %v9926
        %v10675 = vunpack.c.l.b16 %v9927
        %v10676 = vunpack.c.h.b16 %v9927
        %v10677 = vunpack.c.l.b16 %v9928
        %v10678 = vunpack.c.h.b16 %v9928
        %v10679 = vunpack.c.l.b16 %v9929
        %v10680 = vunpack.c.h.b16 %v9929
        %v10681 = vunpack.c.l.b16 %v9930
        %v10682 = vunpack.c.h.b16 %v9930
        %v10683 = vunpack.c.l.b16 %v9931
        %v10684 = vunpack.c.h.b16 %v9931
        %v10685 = vunpack.c.l.b16 %v9932
        %v10686 = vunpack.c.h.b16 %v9932
        %v10687 = vunpack.c.l.b16 %v9933
        %v10688 = vunpack.c.h.b16 %v9933
        %v10689 = vunpack.c.l.b16 %v9934
        %v10690 = vunpack.c.h.b16 %v9934
        %v10691 = vunpack.c.l.b16 %v9935
        %v10692 = vunpack.c.h.b16 %v9935
        %v10693 = vunpack.c.l.b16 %v9936
        %v10694 = vunpack.c.h.b16 %v9936
        %v10695 = vunpack.c.l.b16 %v9937
        %v10696 = vunpack.c.h.b16 %v9937
        %v10697 = vunpack.c.l.b16 %v9938
        %v10698 = vunpack.c.h.b16 %v9938
        %v10699 = vunpack.c.l.b16 %v9939
        %v10700 = vunpack.c.h.b16 %v9939
        %v10701 = vunpack.c.l.b16 %v9940
        %v10702 = vunpack.c.h.b16 %v9940
        %v10703 = vunpack.c.l.b16 %v9941
        %v10704 = vunpack.c.h.b16 %v9941
        %v10705 = vunpack.c.l.b16 %v9942
        %v10706 = vunpack.c.h.b16 %v9942
        %v10707 = vunpack.c.l.b16 %v9943
        %v10708 = vunpack.c.h.b16 %v9943
        %v10709 = vunpack.c.l.b16 %v9944
        %v10710 = vunpack.c.h.b16 %v9944
        %v10711 = vunpack.c.l.b16 %v9945
        %v10712 = vunpack.c.h.b16 %v9945
        %v10713 = vunpack.c.l.b16 %v9946
        %v10714 = vunpack.c.h.b16 %v9946
        %v10715 = vunpack.c.l.b16 %v9947
        %v10716 = vunpack.c.h.b16 %v9947
        %v10717 = vunpack.c.l.b16 %v9948
        %v10718 = vunpack.c.h.b16 %v9948
        %v10719 = vunpack.c.l.b16 %v9949
        %v10720 = vunpack.c.h.b16 %v9949
        %v10721 = vunpack.c.l.b16 %v9950
        %v10722 = vunpack.c.h.b16 %v9950
        %v10723 = vpack.c.b16 %v10215, %v10211
        %v10724 = vpack.c.b16 %v10216, %v10212
        %v10725 = vpack.c.b16 %v10217, %v10213
        %v10726 = vpack.c.b16 %v10218, %v10214
        %v10727 = vpack.c.b16 %v10223, %v10219
        %v10728 = vpack.c.b16 %v10224, %v10220
        %v10729 = vpack.c.b16 %v10225, %v10221
        %v10730 = vpack.c.b16 %v10226, %v10222
        %v10731 = vpack.c.b16 %v10231, %v10227
        %v10732 = vpack.c.b16 %v10232, %v10228
        %v10733 = vpack.c.b16 %v10233, %v10229
        %v10734 = vpack.c.b16 %v10234, %v10230
        %v10735 = vpack.c.b16 %v10239, %v10235
        %v10736 = vpack.c.b16 %v10240, %v10236
        %v10737 = vpack.c.b16 %v10241, %v10237
        %v10738 = vpack.c.b16 %v10242, %v10238
        %v10739 = vpack.c.b16 %v10247, %v10243
        %v10740 = vpack.c.b16 %v10248, %v10244
        %v10741 = vpack.c.b16 %v10249, %v10245
        %v10742 = vpack.c.b16 %v10250, %v10246
        %v10743 = vpack.c.b16 %v10255, %v10251
        %v10744 = vpack.c.b16 %v10256, %v10252
        %v10745 = vpack.c.b16 %v10257, %v10253
        %v10746 = vpack.c.b16 %v10258, %v10254
        %v10747 = vpack.c.b16 %v10263, %v10259
        %v10748 = vpack.c.b16 %v10264, %v10260
        %v10749 = vpack.c.b16 %v10265, %v10261
        %v10750 = vpack.c.b16 %v10266, %v10262
        %v10751 = vpack.c.b16 %v10271, %v10267
        %v10752 = vpack.c.b16 %v10272, %v10268
        %v10753 = vpack.c.b16 %v10273, %v10269
        %v10754 = vpack.c.b16 %v10274, %v10270
        %v10755 = vpack.c.b16 %v10279, %v10275
        %v10756 = vpack.c.b16 %v10280, %v10276
        %v10757 = vpack.c.b16 %v10281, %v10277
        %v10758 = vpack.c.b16 %v10282, %v10278
        %v10759 = vpack.c.b16 %v10287, %v10283
        %v10760 = vpack.c.b16 %v10288, %v10284
        %v10761 = vpack.c.b16 %v10289, %v10285
        %v10762 = vpack.c.b16 %v10290, %v10286
        %v10763 = vpack.c.b16 %v10295, %v10291
        %v10764 = vpack.c.b16 %v10296, %v10292
        %v10765 = vpack.c.b16 %v10297, %v10293
        %v10766 = vpack.c.b16 %v10298, %v10294
        %v10767 = vpack.c.b16 %v10303, %v10299
        %v10768 = vpack.c.b16 %v10304, %v10300
        %v10769 = vpack.c.b16 %v10305, %v10301
        %v10770 = vpack.c.b16 %v10306, %v10302
        %v10771 = vpack.c.b16 %v10311, %v10307
        %v10772 = vpack.c.b16 %v10312, %v10308
        %v10773 = vpack.c.b16 %v10313, %v10309
        %v10774 = vpack.c.b16 %v10314, %v10310
        %v10775 = vpack.c.b16 %v10319, %v10315
        %v10776 = vpack.c.b16 %v10320, %v10316
        %v10777 = vpack.c.b16 %v10321, %v10317
        %v10778 = vpack.c.b16 %v10322, %v10318
        %v10779 = vpack.c.b16 %v10327, %v10323
        %v10780 = vpack.c.b16 %v10328, %v10324
        %v10781 = vpack.c.b16 %v10329, %v10325
        %v10782 = vpack.c.b16 %v10330, %v10326
        %v10783 = vpack.c.b16 %v10335, %v10331
        %v10784 = vpack.c.b16 %v10336, %v10332
        %v10785 = vpack.c.b16 %v10337, %v10333
        %v10786 = vpack.c.b16 %v10338, %v10334
        %v10787 = vpack.c.b16 %v10343, %v10339
        %v10788 = vpack.c.b16 %v10344, %v10340
        %v10789 = vpack.c.b16 %v10345, %v10341
        %v10790 = vpack.c.b16 %v10346, %v10342
        %v10791 = vpack.c.b16 %v10351, %v10347
        %v10792 = vpack.c.b16 %v10352, %v10348
        %v10793 = vpack.c.b16 %v10353, %v10349
        %v10794 = vpack.c.b16 %v10354, %v10350
        %v10795 = vpack.c.b16 %v10359, %v10355
        %v10796 = vpack.c.b16 %v10360, %v10356
        %v10797 = vpack.c.b16 %v10361, %v10357
        %v10798 = vpack.c.b16 %v10362, %v10358
        %v10799 = vpack.c.b16 %v10367, %v10363
        %v10800 = vpack.c.b16 %v10368, %v10364
        %v10801 = vpack.c.b16 %v10369, %v10365
        %v10802 = vpack.c.b16 %v10370, %v10366
        %v10803 = vpack.c.b16 %v10375, %v10371
        %v10804 = vpack.c.b16 %v10376, %v10372
        %v10805 = vpack.c.b16 %v10377, %v10373
        %v10806 = vpack.c.b16 %v10378, %v10374
        %v10807 = vpack.c.b16 %v10383, %v10379
        %v10808 = vpack.c.b16 %v10384, %v10380
        %v10809 = vpack.c.b16 %v10385, %v10381
        %v10810 = vpack.c.b16 %v10386, %v10382
        %v10811 = vpack.c.b16 %v10391, %v10387
        %v10812 = vpack.c.b16 %v10392, %v10388
        %v10813 = vpack.c.b16 %v10393, %v10389
        %v10814 = vpack.c.b16 %v10394, %v10390
        %v10815 = vpack.c.b16 %v10399, %v10395
        %v10816 = vpack.c.b16 %v10400, %v10396
        %v10817 = vpack.c.b16 %v10401, %v10397
        %v10818 = vpack.c.b16 %v10402, %v10398
        %v10819 = vpack.c.b16 %v10407, %v10403
        %v10820 = vpack.c.b16 %v10408, %v10404
        %v10821 = vpack.c.b16 %v10409, %v10405
        %v10822 = vpack.c.b16 %v10410, %v10406
        %v10823 = vpack.c.b16 %v10415, %v10411
        %v10824 = vpack.c.b16 %v10416, %v10412
        %v10825 = vpack.c.b16 %v10417, %v10413
        %v10826 = vpack.c.b16 %v10418, %v10414
        %v10827 = vpack.c.b16 %v10423, %v10419
        %v10828 = vpack.c.b16 %v10424, %v10420
        %v10829 = vpack.c.b16 %v10425, %v10421
        %v10830 = vpack.c.b16 %v10426, %v10422
        %v10831 = vpack.c.b16 %v10431, %v10427
        %v10832 = vpack.c.b16 %v10432, %v10428
        %v10833 = vpack.c.b16 %v10433, %v10429
        %v10834 = vpack.c.b16 %v10434, %v10430
        %v10835 = vpack.c.b16 %v10439, %v10435
        %v10836 = vpack.c.b16 %v10440, %v10436
        %v10837 = vpack.c.b16 %v10441, %v10437
        %v10838 = vpack.c.b16 %v10442, %v10438
        %v10839 = vpack.c.b16 %v10447, %v10443
        %v10840 = vpack.c.b16 %v10448, %v10444
        %v10841 = vpack.c.b16 %v10449, %v10445
        %v10842 = vpack.c.b16 %v10450, %v10446
        %v10843 = vpack.c.b16 %v10455, %v10451
        %v10844 = vpack.c.b16 %v10456, %v10452
        %v10845 = vpack.c.b16 %v10457, %v10453
        %v10846 = vpack.c.b16 %v10458, %v10454
        %v10847 = vpack.c.b16 %v10463, %v10459
        %v10848 = vpack.c.b16 %v10464, %v10460
        %v10849 = vpack.c.b16 %v10465, %v10461
        %v10850 = vpack.c.b16 %v10466, %v10462
        %v10851 = vpack.c.b16 %v10471, %v10467
        %v10852 = vpack.c.b16 %v10472, %v10468
        %v10853 = vpack.c.b16 %v10473, %v10469
        %v10854 = vpack.c.b16 %v10474, %v10470
        %v10855 = vpack.c.b16 %v10479, %v10475
        %v10856 = vpack.c.b16 %v10480, %v10476
        %v10857 = vpack.c.b16 %v10481, %v10477
        %v10858 = vpack.c.b16 %v10482, %v10478
        %v10859 = vpack.c.b16 %v10487, %v10483
        %v10860 = vpack.c.b16 %v10488, %v10484
        %v10861 = vpack.c.b16 %v10489, %v10485
        %v10862 = vpack.c.b16 %v10490, %v10486
        %v10863 = vpack.c.b16 %v10495, %v10491
        %v10864 = vpack.c.b16 %v10496, %v10492
        %v10865 = vpack.c.b16 %v10497, %v10493
        %v10866 = vpack.c.b16 %v10498, %v10494
        %v10867 = vpack.c.b16 %v10503, %v10499
        %v10868 = vpack.c.b16 %v10504, %v10500
        %v10869 = vpack.c.b16 %v10505, %v10501
        %v10870 = vpack.c.b16 %v10506, %v10502
        %v10871 = vpack.c.b16 %v10511, %v10507
        %v10872 = vpack.c.b16 %v10512, %v10508
        %v10873 = vpack.c.b16 %v10513, %v10509
        %v10874 = vpack.c.b16 %v10514, %v10510
        %v10875 = vpack.c.b16 %v10519, %v10515
        %v10876 = vpack.c.b16 %v10520, %v10516
        %v10877 = vpack.c.b16 %v10521, %v10517
        %v10878 = vpack.c.b16 %v10522, %v10518
        %v10879 = vpack.c.b16 %v10527, %v10523
        %v10880 = vpack.c.b16 %v10528, %v10524
        %v10881 = vpack.c.b16 %v10529, %v10525
        %v10882 = vpack.c.b16 %v10530, %v10526
        %v10883 = vpack.c.b16 %v10535, %v10531
        %v10884 = vpack.c.b16 %v10536, %v10532
        %v10885 = vpack.c.b16 %v10537, %v10533
        %v10886 = vpack.c.b16 %v10538, %v10534
        %v10887 = vpack.c.b16 %v10543, %v10539
        %v10888 = vpack.c.b16 %v10544, %v10540
        %v10889 = vpack.c.b16 %v10545, %v10541
        %v10890 = vpack.c.b16 %v10546, %v10542
        %v10891 = vpack.c.b16 %v10551, %v10547
        %v10892 = vpack.c.b16 %v10552, %v10548
        %v10893 = vpack.c.b16 %v10553, %v10549
        %v10894 = vpack.c.b16 %v10554, %v10550
        %v10895 = vpack.c.b16 %v10559, %v10555
        %v10896 = vpack.c.b16 %v10560, %v10556
        %v10897 = vpack.c.b16 %v10561, %v10557
        %v10898 = vpack.c.b16 %v10562, %v10558
        %v10899 = vpack.c.b16 %v10567, %v10563
        %v10900 = vpack.c.b16 %v10568, %v10564
        %v10901 = vpack.c.b16 %v10569, %v10565
        %v10902 = vpack.c.b16 %v10570, %v10566
        %v10903 = vpack.c.b16 %v10575, %v10571
        %v10904 = vpack.c.b16 %v10576, %v10572
        %v10905 = vpack.c.b16 %v10577, %v10573
        %v10906 = vpack.c.b16 %v10578, %v10574
        %v10907 = vpack.c.b16 %v10583, %v10579
        %v10908 = vpack.c.b16 %v10584, %v10580
        %v10909 = vpack.c.b16 %v10585, %v10581
        %v10910 = vpack.c.b16 %v10586, %v10582
        %v10911 = vpack.c.b16 %v10591, %v10587
        %v10912 = vpack.c.b16 %v10592, %v10588
        %v10913 = vpack.c.b16 %v10593, %v10589
        %v10914 = vpack.c.b16 %v10594, %v10590
        %v10915 = vpack.c.b16 %v10599, %v10595
        %v10916 = vpack.c.b16 %v10600, %v10596
        %v10917 = vpack.c.b16 %v10601, %v10597
        %v10918 = vpack.c.b16 %v10602, %v10598
        %v10919 = vpack.c.b16 %v10607, %v10603
        %v10920 = vpack.c.b16 %v10608, %v10604
        %v10921 = vpack.c.b16 %v10609, %v10605
        %v10922 = vpack.c.b16 %v10610, %v10606
        %v10923 = vpack.c.b16 %v10615, %v10611
        %v10924 = vpack.c.b16 %v10616, %v10612
        %v10925 = vpack.c.b16 %v10617, %v10613
        %v10926 = vpack.c.b16 %v10618, %v10614
        %v10927 = vpack.c.b16 %v10623, %v10619
        %v10928 = vpack.c.b16 %v10624, %v10620
        %v10929 = vpack.c.b16 %v10625, %v10621
        %v10930 = vpack.c.b16 %v10626, %v10622
        %v10931 = vpack.c.b16 %v10631, %v10627
        %v10932 = vpack.c.b16 %v10632, %v10628
        %v10933 = vpack.c.b16 %v10633, %v10629
        %v10934 = vpack.c.b16 %v10634, %v10630
        %v10935 = vpack.c.b16 %v10639, %v10635
        %v10936 = vpack.c.b16 %v10640, %v10636
        %v10937 = vpack.c.b16 %v10641, %v10637
        %v10938 = vpack.c.b16 %v10642, %v10638
        %v10939 = vpack.c.b16 %v10647, %v10643
        %v10940 = vpack.c.b16 %v10648, %v10644
        %v10941 = vpack.c.b16 %v10649, %v10645
        %v10942 = vpack.c.b16 %v10650, %v10646
        %v10943 = vpack.c.b16 %v10655, %v10651
        %v10944 = vpack.c.b16 %v10656, %v10652
        %v10945 = vpack.c.b16 %v10657, %v10653
        %v10946 = vpack.c.b16 %v10658, %v10654
        %v10947 = vpack.c.b16 %v10663, %v10659
        %v10948 = vpack.c.b16 %v10664, %v10660
        %v10949 = vpack.c.b16 %v10665, %v10661
        %v10950 = vpack.c.b16 %v10666, %v10662
        %v10951 = vpack.c.b16 %v10671, %v10667
        %v10952 = vpack.c.b16 %v10672, %v10668
        %v10953 = vpack.c.b16 %v10673, %v10669
        %v10954 = vpack.c.b16 %v10674, %v10670
        %v10955 = vpack.c.b16 %v10679, %v10675
        %v10956 = vpack.c.b16 %v10680, %v10676
        %v10957 = vpack.c.b16 %v10681, %v10677
        %v10958 = vpack.c.b16 %v10682, %v10678
        %v10959 = vpack.c.b16 %v10687, %v10683
        %v10960 = vpack.c.b16 %v10688, %v10684
        %v10961 = vpack.c.b16 %v10689, %v10685
        %v10962 = vpack.c.b16 %v10690, %v10686
        %v10963 = vpack.c.b16 %v10695, %v10691
        %v10964 = vpack.c.b16 %v10696, %v10692
        %v10965 = vpack.c.b16 %v10697, %v10693
        %v10966 = vpack.c.b16 %v10698, %v10694
        %v10967 = vpack.c.b16 %v10703, %v10699
        %v10968 = vpack.c.b16 %v10704, %v10700
        %v10969 = vpack.c.b16 %v10705, %v10701
        %v10970 = vpack.c.b16 %v10706, %v10702
        %v10971 = vpack.c.b16 %v10711, %v10707
        %v10972 = vpack.c.b16 %v10712, %v10708
        %v10973 = vpack.c.b16 %v10713, %v10709
        %v10974 = vpack.c.b16 %v10714, %v10710
        %v10975 = vpack.c.b16 %v10719, %v10715
        %v10976 = vpack.c.b16 %v10720, %v10716
        %v10977 = vpack.c.b16 %v10721, %v10717
        %v10978 = vpack.c.b16 %v10722, %v10718
        %11235 = vmatpush.bf16.msra.mxu0 %v10751
        %11236 = vmatpush.bf16.msra.mxu0 %v10747
        %11237 = vmatpush.bf16.msra.mxu0 %v10743
        %11238 = vmatpush.bf16.msra.mxu0 %v10739
        %11239 = vmatpush.bf16.msra.mxu0 %v10735
        %11240 = vmatpush.bf16.msra.mxu0 %v10731
        %11241 = vmatpush.bf16.msra.mxu0 %v10727
        %11242 = vmatpush.bf16.msra.mxu0 %v10723
        %11243 = vmatmul.bf16.gmra.mxu0 %v9679
        %v11244 = vpop.f32.mrf.mxu0
        %v11245 = vadd.f32 %v9951, %v11244
        %v11246 = vpop.f32.mrf.mxu0
        %v11247 = vadd.f32 %v9951, %v11246
        %11248 = vmatmul.bf16.gmra.mxu0 %v9687
        %v11249 = vpop.f32.mrf.mxu0
        %v11250 = vadd.f32 %v9951, %v11249
        %v11251 = vpop.f32.mrf.mxu0
        %v11252 = vadd.f32 %v9951, %v11251
        %11253 = vdwg.mxu0
        %11254 = vmatpush.bf16.msra.mxu0 %v10783
        %11255 = vmatpush.bf16.msra.mxu0 %v10779
        %11256 = vmatpush.bf16.msra.mxu0 %v10775
        %11257 = vmatpush.bf16.msra.mxu0 %v10771
        %11258 = vmatpush.bf16.msra.mxu0 %v10767
        %11259 = vmatpush.bf16.msra.mxu0 %v10763
        %11260 = vmatpush.bf16.msra.mxu0 %v10759
        %11261 = vmatpush.bf16.msra.mxu0 %v10755
        %11262 = vmatmul.bf16.gmra.mxu0 %v9680
        %v11263 = vpop.f32.mrf.mxu0
        %v11264 = vadd.f32 %v11245, %v11263
        %v11265 = vpop.f32.mrf.mxu0
        %v11266 = vadd.f32 %v11247, %v11265
        %11267 = vmatmul.bf16.gmra.mxu0 %v9688
        %v11268 = vpop.f32.mrf.mxu0
        %v11269 = vadd.f32 %v11250, %v11268
        %v11270 = vpop.f32.mrf.mxu0
        %v11271 = vadd.f32 %v11252, %v11270
        %11272 = vdwg.mxu0
        %11273 = vmatpush.bf16.msra.mxu0 %v10815
        %11274 = vmatpush.bf16.msra.mxu0 %v10811
        %11275 = vmatpush.bf16.msra.mxu0 %v10807
        %11276 = vmatpush.bf16.msra.mxu0 %v10803
        %11277 = vmatpush.bf16.msra.mxu0 %v10799
        %11278 = vmatpush.bf16.msra.mxu0 %v10795
        %11279 = vmatpush.bf16.msra.mxu0 %v10791
        %11280 = vmatpush.bf16.msra.mxu0 %v10787
        %11281 = vmatmul.bf16.gmra.mxu0 %v9681
        %v11282 = vpop.f32.mrf.mxu0
        %v11283 = vadd.f32 %v11264, %v11282
        %v11284 = vpop.f32.mrf.mxu0
        %v11285 = vadd.f32 %v11266, %v11284
        %11286 = vmatmul.bf16.gmra.mxu0 %v9689
        %v11287 = vpop.f32.mrf.mxu0
        %v11288 = vadd.f32 %v11269, %v11287
        %v11289 = vpop.f32.mrf.mxu0
        %v11290 = vadd.f32 %v11271, %v11289
        %11291 = vdwg.mxu0
        %11292 = vmatpush.bf16.msra.mxu0 %v10847
        %11293 = vmatpush.bf16.msra.mxu0 %v10843
        %11294 = vmatpush.bf16.msra.mxu0 %v10839
        %11295 = vmatpush.bf16.msra.mxu0 %v10835
        %11296 = vmatpush.bf16.msra.mxu0 %v10831
        %11297 = vmatpush.bf16.msra.mxu0 %v10827
        %11298 = vmatpush.bf16.msra.mxu0 %v10823
        %11299 = vmatpush.bf16.msra.mxu0 %v10819
        %11300 = vmatmul.bf16.gmra.mxu0 %v9682
        %v11301 = vpop.f32.mrf.mxu0
        %v11302 = vadd.f32 %v11283, %v11301
        %v11303 = vpop.f32.mrf.mxu0
        %v11304 = vadd.f32 %v11285, %v11303
        %11305 = vmatmul.bf16.gmra.mxu0 %v9690
        %v11306 = vpop.f32.mrf.mxu0
        %v11307 = vadd.f32 %v11288, %v11306
        %v11308 = vpop.f32.mrf.mxu0
        %v11309 = vadd.f32 %v11290, %v11308
        %11310 = vdwg.mxu0
        %11311 = vmatpush.bf16.msra.mxu0 %v10879
        %11312 = vmatpush.bf16.msra.mxu0 %v10875
        %11313 = vmatpush.bf16.msra.mxu0 %v10871
        %11314 = vmatpush.bf16.msra.mxu0 %v10867
        %11315 = vmatpush.bf16.msra.mxu0 %v10863
        %11316 = vmatpush.bf16.msra.mxu0 %v10859
        %11317 = vmatpush.bf16.msra.mxu0 %v10855
        %11318 = vmatpush.bf16.msra.mxu0 %v10851
        %11319 = vmatmul.bf16.gmra.mxu0 %v9683
        %v11320 = vpop.f32.mrf.mxu0
        %v11321 = vadd.f32 %v11302, %v11320
        %v11322 = vpop.f32.mrf.mxu0
        %v11323 = vadd.f32 %v11304, %v11322
        %11324 = vmatmul.bf16.gmra.mxu0 %v9691
        %v11325 = vpop.f32.mrf.mxu0
        %v11326 = vadd.f32 %v11307, %v11325
        %v11327 = vpop.f32.mrf.mxu0
        %v11328 = vadd.f32 %v11309, %v11327
        %11329 = vdwg.mxu0
        %11330 = vmatpush.bf16.msra.mxu0 %v10911
        %11331 = vmatpush.bf16.msra.mxu0 %v10907
        %11332 = vmatpush.bf16.msra.mxu0 %v10903
        %11333 = vmatpush.bf16.msra.mxu0 %v10899
        %11334 = vmatpush.bf16.msra.mxu0 %v10895
        %11335 = vmatpush.bf16.msra.mxu0 %v10891
        %11336 = vmatpush.bf16.msra.mxu0 %v10887
        %11337 = vmatpush.bf16.msra.mxu0 %v10883
        %11338 = vmatmul.bf16.gmra.mxu0 %v9684
        %v11339 = vpop.f32.mrf.mxu0
        %v11340 = vadd.f32 %v11321, %v11339
        %v11341 = vpop.f32.mrf.mxu0
        %v11342 = vadd.f32 %v11323, %v11341
        %11343 = vmatmul.bf16.gmra.mxu0 %v9692
        %v11344 = vpop.f32.mrf.mxu0
        %v11345 = vadd.f32 %v11326, %v11344
        %v11346 = vpop.f32.mrf.mxu0
        %v11347 = vadd.f32 %v11328, %v11346
        %11348 = vdwg.mxu0
        %11349 = vmatpush.bf16.msra.mxu0 %v10943
        %11350 = vmatpush.bf16.msra.mxu0 %v10939
        %11351 = vmatpush.bf16.msra.mxu0 %v10935
        %11352 = vmatpush.bf16.msra.mxu0 %v10931
        %11353 = vmatpush.bf16.msra.mxu0 %v10927
        %11354 = vmatpush.bf16.msra.mxu0 %v10923
        %11355 = vmatpush.bf16.msra.mxu0 %v10919
        %11356 = vmatpush.bf16.msra.mxu0 %v10915
        %11357 = vmatmul.bf16.gmra.mxu0 %v9685
        %v11358 = vpop.f32.mrf.mxu0
        %v11359 = vadd.f32 %v11340, %v11358
        %v11360 = vpop.f32.mrf.mxu0
        %v11361 = vadd.f32 %v11342, %v11360
        %11362 = vmatmul.bf16.gmra.mxu0 %v9693
        %v11363 = vpop.f32.mrf.mxu0
        %v11364 = vadd.f32 %v11345, %v11363
        %v11365 = vpop.f32.mrf.mxu0
        %v11366 = vadd.f32 %v11347, %v11365
        %11367 = vdwg.mxu0
        %11368 = vmatpush.bf16.msra.mxu0 %v10975
        %11369 = vmatpush.bf16.msra.mxu0 %v10971
        %11370 = vmatpush.bf16.msra.mxu0 %v10967
        %11371 = vmatpush.bf16.msra.mxu0 %v10963
        %11372 = vmatpush.bf16.msra.mxu0 %v10959
        %11373 = vmatpush.bf16.msra.mxu0 %v10955
        %11374 = vmatpush.bf16.msra.mxu0 %v10951
        %11375 = vmatpush.bf16.msra.mxu0 %v10947
        %11376 = vmatmul.bf16.gmra.mxu0 %v9686
        %v11377 = vpop.f32.mrf.mxu0
        %v11378 = vadd.f32 %v11359, %v11377
        %v11379 = vpop.f32.mrf.mxu0
        %v11380 = vadd.f32 %v11361, %v11379
        %11381 = vmatmul.bf16.gmra.mxu0 %v9694
        %v11382 = vpop.f32.mrf.mxu0
        %v11383 = vadd.f32 %v11364, %v11382
        %v11384 = vpop.f32.mrf.mxu0
        %v11385 = vadd.f32 %v11366, %v11384
        %11386 = vdwg.mxu0
        %11387 = vmatpush.bf16.msra.mxu0 %v10752
        %11388 = vmatpush.bf16.msra.mxu0 %v10748
        %11389 = vmatpush.bf16.msra.mxu0 %v10744
        %11390 = vmatpush.bf16.msra.mxu0 %v10740
        %11391 = vmatpush.bf16.msra.mxu0 %v10736
        %11392 = vmatpush.bf16.msra.mxu0 %v10732
        %11393 = vmatpush.bf16.msra.mxu0 %v10728
        %11394 = vmatpush.bf16.msra.mxu0 %v10724
        %11395 = vmatmul.bf16.gmra.mxu0 %v9679
        %v11396 = vpop.f32.mrf.mxu0
        %v11397 = vadd.f32 %v9952, %v11396
        %v11398 = vpop.f32.mrf.mxu0
        %v11399 = vadd.f32 %v9952, %v11398
        %11400 = vmatmul.bf16.gmra.mxu0 %v9687
        %v11401 = vpop.f32.mrf.mxu0
        %v11402 = vadd.f32 %v9952, %v11401
        %v11403 = vpop.f32.mrf.mxu0
        %v11404 = vadd.f32 %v9952, %v11403
        %11405 = vdwg.mxu0
        %11406 = vmatpush.bf16.msra.mxu0 %v10784
        %11407 = vmatpush.bf16.msra.mxu0 %v10780
        %11408 = vmatpush.bf16.msra.mxu0 %v10776
        %11409 = vmatpush.bf16.msra.mxu0 %v10772
        %11410 = vmatpush.bf16.msra.mxu0 %v10768
        %11411 = vmatpush.bf16.msra.mxu0 %v10764
        %11412 = vmatpush.bf16.msra.mxu0 %v10760
        %11413 = vmatpush.bf16.msra.mxu0 %v10756
        %11414 = vmatmul.bf16.gmra.mxu0 %v9680
        %v11415 = vpop.f32.mrf.mxu0
        %v11416 = vadd.f32 %v11397, %v11415
        %v11417 = vpop.f32.mrf.mxu0
        %v11418 = vadd.f32 %v11399, %v11417
        %11419 = vmatmul.bf16.gmra.mxu0 %v9688
        %v11420 = vpop.f32.mrf.mxu0
        %v11421 = vadd.f32 %v11402, %v11420
        %v11422 = vpop.f32.mrf.mxu0
        %v11423 = vadd.f32 %v11404, %v11422
        %11424 = vdwg.mxu0
        %11425 = vmatpush.bf16.msra.mxu0 %v10816
        %11426 = vmatpush.bf16.msra.mxu0 %v10812
        %11427 = vmatpush.bf16.msra.mxu0 %v10808
        %11428 = vmatpush.bf16.msra.mxu0 %v10804
        %11429 = vmatpush.bf16.msra.mxu0 %v10800
        %11430 = vmatpush.bf16.msra.mxu0 %v10796
        %11431 = vmatpush.bf16.msra.mxu0 %v10792
        %11432 = vmatpush.bf16.msra.mxu0 %v10788
        %11433 = vmatmul.bf16.gmra.mxu0 %v9681
        %v11434 = vpop.f32.mrf.mxu0
        %v11435 = vadd.f32 %v11416, %v11434
        %v11436 = vpop.f32.mrf.mxu0
        %v11437 = vadd.f32 %v11418, %v11436
        %11438 = vmatmul.bf16.gmra.mxu0 %v9689
        %v11439 = vpop.f32.mrf.mxu0
        %v11440 = vadd.f32 %v11421, %v11439
        %v11441 = vpop.f32.mrf.mxu0
        %v11442 = vadd.f32 %v11423, %v11441
        %11443 = vdwg.mxu0
        %11444 = vmatpush.bf16.msra.mxu0 %v10848
        %11445 = vmatpush.bf16.msra.mxu0 %v10844
        %11446 = vmatpush.bf16.msra.mxu0 %v10840
        %11447 = vmatpush.bf16.msra.mxu0 %v10836
        %11448 = vmatpush.bf16.msra.mxu0 %v10832
        %11449 = vmatpush.bf16.msra.mxu0 %v10828
        %11450 = vmatpush.bf16.msra.mxu0 %v10824
        %11451 = vmatpush.bf16.msra.mxu0 %v10820
        %11452 = vmatmul.bf16.gmra.mxu0 %v9682
        %v11453 = vpop.f32.mrf.mxu0
        %v11454 = vadd.f32 %v11435, %v11453
        %v11455 = vpop.f32.mrf.mxu0
        %v11456 = vadd.f32 %v11437, %v11455
        %11457 = vmatmul.bf16.gmra.mxu0 %v9690
        %v11458 = vpop.f32.mrf.mxu0
        %v11459 = vadd.f32 %v11440, %v11458
        %v11460 = vpop.f32.mrf.mxu0
        %v11461 = vadd.f32 %v11442, %v11460
        %11462 = vdwg.mxu0
        %11463 = vmatpush.bf16.msra.mxu0 %v10880
        %11464 = vmatpush.bf16.msra.mxu0 %v10876
        %11465 = vmatpush.bf16.msra.mxu0 %v10872
        %11466 = vmatpush.bf16.msra.mxu0 %v10868
        %11467 = vmatpush.bf16.msra.mxu0 %v10864
        %11468 = vmatpush.bf16.msra.mxu0 %v10860
        %11469 = vmatpush.bf16.msra.mxu0 %v10856
        %11470 = vmatpush.bf16.msra.mxu0 %v10852
        %11471 = vmatmul.bf16.gmra.mxu0 %v9683
        %v11472 = vpop.f32.mrf.mxu0
        %v11473 = vadd.f32 %v11454, %v11472
        %v11474 = vpop.f32.mrf.mxu0
        %v11475 = vadd.f32 %v11456, %v11474
        %11476 = vmatmul.bf16.gmra.mxu0 %v9691
        %v11477 = vpop.f32.mrf.mxu0
        %v11478 = vadd.f32 %v11459, %v11477
        %v11479 = vpop.f32.mrf.mxu0
        %v11480 = vadd.f32 %v11461, %v11479
        %11481 = vdwg.mxu0
        %11482 = vmatpush.bf16.msra.mxu0 %v10912
        %11483 = vmatpush.bf16.msra.mxu0 %v10908
        %11484 = vmatpush.bf16.msra.mxu0 %v10904
        %11485 = vmatpush.bf16.msra.mxu0 %v10900
        %11486 = vmatpush.bf16.msra.mxu0 %v10896
        %11487 = vmatpush.bf16.msra.mxu0 %v10892
        %11488 = vmatpush.bf16.msra.mxu0 %v10888
        %11489 = vmatpush.bf16.msra.mxu0 %v10884
        %11490 = vmatmul.bf16.gmra.mxu0 %v9684
        %v11491 = vpop.f32.mrf.mxu0
        %v11492 = vadd.f32 %v11473, %v11491
        %v11493 = vpop.f32.mrf.mxu0
        %v11494 = vadd.f32 %v11475, %v11493
        %11495 = vmatmul.bf16.gmra.mxu0 %v9692
        %v11496 = vpop.f32.mrf.mxu0
        %v11497 = vadd.f32 %v11478, %v11496
        %v11498 = vpop.f32.mrf.mxu0
        %v11499 = vadd.f32 %v11480, %v11498
        %11500 = vdwg.mxu0
        %11501 = vmatpush.bf16.msra.mxu0 %v10944
        %11502 = vmatpush.bf16.msra.mxu0 %v10940
        %11503 = vmatpush.bf16.msra.mxu0 %v10936
        %11504 = vmatpush.bf16.msra.mxu0 %v10932
        %11505 = vmatpush.bf16.msra.mxu0 %v10928
        %11506 = vmatpush.bf16.msra.mxu0 %v10924
        %11507 = vmatpush.bf16.msra.mxu0 %v10920
        %11508 = vmatpush.bf16.msra.mxu0 %v10916
        %11509 = vmatmul.bf16.gmra.mxu0 %v9685
        %v11510 = vpop.f32.mrf.mxu0
        %v11511 = vadd.f32 %v11492, %v11510
        %v11512 = vpop.f32.mrf.mxu0
        %v11513 = vadd.f32 %v11494, %v11512
        %11514 = vmatmul.bf16.gmra.mxu0 %v9693
        %v11515 = vpop.f32.mrf.mxu0
        %v11516 = vadd.f32 %v11497, %v11515
        %v11517 = vpop.f32.mrf.mxu0
        %v11518 = vadd.f32 %v11499, %v11517
        %11519 = vdwg.mxu0
        %11520 = vmatpush.bf16.msra.mxu0 %v10976
        %11521 = vmatpush.bf16.msra.mxu0 %v10972
        %11522 = vmatpush.bf16.msra.mxu0 %v10968
        %11523 = vmatpush.bf16.msra.mxu0 %v10964
        %11524 = vmatpush.bf16.msra.mxu0 %v10960
        %11525 = vmatpush.bf16.msra.mxu0 %v10956
        %11526 = vmatpush.bf16.msra.mxu0 %v10952
        %11527 = vmatpush.bf16.msra.mxu0 %v10948
        %11528 = vmatmul.bf16.gmra.mxu0 %v9686
        %v11529 = vpop.f32.mrf.mxu0
        %v11530 = vadd.f32 %v11511, %v11529
        %v11531 = vpop.f32.mrf.mxu0
        %v11532 = vadd.f32 %v11513, %v11531
        %11533 = vmatmul.bf16.gmra.mxu0 %v9694
        %v11534 = vpop.f32.mrf.mxu0
        %v11535 = vadd.f32 %v11516, %v11534
        %v11536 = vpop.f32.mrf.mxu0
        %v11537 = vadd.f32 %v11518, %v11536
        %11538 = vdwg.mxu0
        %11539 = vmatpush.bf16.msra.mxu0 %v10753
        %11540 = vmatpush.bf16.msra.mxu0 %v10749
        %11541 = vmatpush.bf16.msra.mxu0 %v10745
        %11542 = vmatpush.bf16.msra.mxu0 %v10741
        %11543 = vmatpush.bf16.msra.mxu0 %v10737
        %11544 = vmatpush.bf16.msra.mxu0 %v10733
        %11545 = vmatpush.bf16.msra.mxu0 %v10729
        %11546 = vmatpush.bf16.msra.mxu0 %v10725
        %11547 = vmatmul.bf16.gmra.mxu0 %v9679
        %v11548 = vpop.f32.mrf.mxu0
        %v11549 = vadd.f32 %v9953, %v11548
        %v11550 = vpop.f32.mrf.mxu0
        %v11551 = vadd.f32 %v9953, %v11550
        %11552 = vmatmul.bf16.gmra.mxu0 %v9687
        %v11553 = vpop.f32.mrf.mxu0
        %v11554 = vadd.f32 %v9953, %v11553
        %v11555 = vpop.f32.mrf.mxu0
        %v11556 = vadd.f32 %v9953, %v11555
        %11557 = vdwg.mxu0
        %11558 = vmatpush.bf16.msra.mxu0 %v10785
        %11559 = vmatpush.bf16.msra.mxu0 %v10781
        %11560 = vmatpush.bf16.msra.mxu0 %v10777
        %11561 = vmatpush.bf16.msra.mxu0 %v10773
        %11562 = vmatpush.bf16.msra.mxu0 %v10769
        %11563 = vmatpush.bf16.msra.mxu0 %v10765
        %11564 = vmatpush.bf16.msra.mxu0 %v10761
        %11565 = vmatpush.bf16.msra.mxu0 %v10757
        %11566 = vmatmul.bf16.gmra.mxu0 %v9680
        %v11567 = vpop.f32.mrf.mxu0
        %v11568 = vadd.f32 %v11549, %v11567
        %v11569 = vpop.f32.mrf.mxu0
        %v11570 = vadd.f32 %v11551, %v11569
        %11571 = vmatmul.bf16.gmra.mxu0 %v9688
        %v11572 = vpop.f32.mrf.mxu0
        %v11573 = vadd.f32 %v11554, %v11572
        %v11574 = vpop.f32.mrf.mxu0
        %v11575 = vadd.f32 %v11556, %v11574
        %11576 = vdwg.mxu0
        %11577 = vmatpush.bf16.msra.mxu0 %v10817
        %11578 = vmatpush.bf16.msra.mxu0 %v10813
        %11579 = vmatpush.bf16.msra.mxu0 %v10809
        %11580 = vmatpush.bf16.msra.mxu0 %v10805
        %11581 = vmatpush.bf16.msra.mxu0 %v10801
        %11582 = vmatpush.bf16.msra.mxu0 %v10797
        %11583 = vmatpush.bf16.msra.mxu0 %v10793
        %11584 = vmatpush.bf16.msra.mxu0 %v10789
        %11585 = vmatmul.bf16.gmra.mxu0 %v9681
        %v11586 = vpop.f32.mrf.mxu0
        %v11587 = vadd.f32 %v11568, %v11586
        %v11588 = vpop.f32.mrf.mxu0
        %v11589 = vadd.f32 %v11570, %v11588
        %11590 = vmatmul.bf16.gmra.mxu0 %v9689
        %v11591 = vpop.f32.mrf.mxu0
        %v11592 = vadd.f32 %v11573, %v11591
        %v11593 = vpop.f32.mrf.mxu0
        %v11594 = vadd.f32 %v11575, %v11593
        %11595 = vdwg.mxu0
        %11596 = vmatpush.bf16.msra.mxu0 %v10849
        %11597 = vmatpush.bf16.msra.mxu0 %v10845
        %11598 = vmatpush.bf16.msra.mxu0 %v10841
        %11599 = vmatpush.bf16.msra.mxu0 %v10837
        %11600 = vmatpush.bf16.msra.mxu0 %v10833
        %11601 = vmatpush.bf16.msra.mxu0 %v10829
        %11602 = vmatpush.bf16.msra.mxu0 %v10825
        %11603 = vmatpush.bf16.msra.mxu0 %v10821
        %11604 = vmatmul.bf16.gmra.mxu0 %v9682
        %v11605 = vpop.f32.mrf.mxu0
        %v11606 = vadd.f32 %v11587, %v11605
        %v11607 = vpop.f32.mrf.mxu0
        %v11608 = vadd.f32 %v11589, %v11607
        %11609 = vmatmul.bf16.gmra.mxu0 %v9690
        %v11610 = vpop.f32.mrf.mxu0
        %v11611 = vadd.f32 %v11592, %v11610
        %v11612 = vpop.f32.mrf.mxu0
        %v11613 = vadd.f32 %v11594, %v11612
        %11614 = vdwg.mxu0
        %11615 = vmatpush.bf16.msra.mxu0 %v10881
        %11616 = vmatpush.bf16.msra.mxu0 %v10877
        %11617 = vmatpush.bf16.msra.mxu0 %v10873
        %11618 = vmatpush.bf16.msra.mxu0 %v10869
        %11619 = vmatpush.bf16.msra.mxu0 %v10865
        %11620 = vmatpush.bf16.msra.mxu0 %v10861
        %11621 = vmatpush.bf16.msra.mxu0 %v10857
        %11622 = vmatpush.bf16.msra.mxu0 %v10853
        %11623 = vmatmul.bf16.gmra.mxu0 %v9683
        %v11624 = vpop.f32.mrf.mxu0
        %v11625 = vadd.f32 %v11606, %v11624
        %v11626 = vpop.f32.mrf.mxu0
        %v11627 = vadd.f32 %v11608, %v11626
        %11628 = vmatmul.bf16.gmra.mxu0 %v9691
        %v11629 = vpop.f32.mrf.mxu0
        %v11630 = vadd.f32 %v11611, %v11629
        %v11631 = vpop.f32.mrf.mxu0
        %v11632 = vadd.f32 %v11613, %v11631
        %11633 = vdwg.mxu0
        %11634 = vmatpush.bf16.msra.mxu0 %v10913
        %11635 = vmatpush.bf16.msra.mxu0 %v10909
        %11636 = vmatpush.bf16.msra.mxu0 %v10905
        %11637 = vmatpush.bf16.msra.mxu0 %v10901
        %11638 = vmatpush.bf16.msra.mxu0 %v10897
        %11639 = vmatpush.bf16.msra.mxu0 %v10893
        %11640 = vmatpush.bf16.msra.mxu0 %v10889
        %11641 = vmatpush.bf16.msra.mxu0 %v10885
        %11642 = vmatmul.bf16.gmra.mxu0 %v9684
        %v11643 = vpop.f32.mrf.mxu0
        %v11644 = vadd.f32 %v11625, %v11643
        %v11645 = vpop.f32.mrf.mxu0
        %v11646 = vadd.f32 %v11627, %v11645
        %11647 = vmatmul.bf16.gmra.mxu0 %v9692
        %v11648 = vpop.f32.mrf.mxu0
        %v11649 = vadd.f32 %v11630, %v11648
        %v11650 = vpop.f32.mrf.mxu0
        %v11651 = vadd.f32 %v11632, %v11650
        %11652 = vdwg.mxu0
        %11653 = vmatpush.bf16.msra.mxu0 %v10945
        %11654 = vmatpush.bf16.msra.mxu0 %v10941
        %11655 = vmatpush.bf16.msra.mxu0 %v10937
        %11656 = vmatpush.bf16.msra.mxu0 %v10933
        %11657 = vmatpush.bf16.msra.mxu0 %v10929
        %11658 = vmatpush.bf16.msra.mxu0 %v10925
        %11659 = vmatpush.bf16.msra.mxu0 %v10921
        %11660 = vmatpush.bf16.msra.mxu0 %v10917
        %11661 = vmatmul.bf16.gmra.mxu0 %v9685
        %v11662 = vpop.f32.mrf.mxu0
        %v11663 = vadd.f32 %v11644, %v11662
        %v11664 = vpop.f32.mrf.mxu0
        %v11665 = vadd.f32 %v11646, %v11664
        %11666 = vmatmul.bf16.gmra.mxu0 %v9693
        %v11667 = vpop.f32.mrf.mxu0
        %v11668 = vadd.f32 %v11649, %v11667
        %v11669 = vpop.f32.mrf.mxu0
        %v11670 = vadd.f32 %v11651, %v11669
        %11671 = vdwg.mxu0
        %11672 = vmatpush.bf16.msra.mxu0 %v10977
        %11673 = vmatpush.bf16.msra.mxu0 %v10973
        %11674 = vmatpush.bf16.msra.mxu0 %v10969
        %11675 = vmatpush.bf16.msra.mxu0 %v10965
        %11676 = vmatpush.bf16.msra.mxu0 %v10961
        %11677 = vmatpush.bf16.msra.mxu0 %v10957
        %11678 = vmatpush.bf16.msra.mxu0 %v10953
        %11679 = vmatpush.bf16.msra.mxu0 %v10949
        %11680 = vmatmul.bf16.gmra.mxu0 %v9686
        %v11681 = vpop.f32.mrf.mxu0
        %v11682 = vadd.f32 %v11663, %v11681
        %v11683 = vpop.f32.mrf.mxu0
        %v11684 = vadd.f32 %v11665, %v11683
        %11685 = vmatmul.bf16.gmra.mxu0 %v9694
        %v11686 = vpop.f32.mrf.mxu0
        %v11687 = vadd.f32 %v11668, %v11686
        %v11688 = vpop.f32.mrf.mxu0
        %v11689 = vadd.f32 %v11670, %v11688
        %11690 = vdwg.mxu0
        %11691 = vmatpush.bf16.msra.mxu0 %v10754
        %11692 = vmatpush.bf16.msra.mxu0 %v10750
        %11693 = vmatpush.bf16.msra.mxu0 %v10746
        %11694 = vmatpush.bf16.msra.mxu0 %v10742
        %11695 = vmatpush.bf16.msra.mxu0 %v10738
        %11696 = vmatpush.bf16.msra.mxu0 %v10734
        %11697 = vmatpush.bf16.msra.mxu0 %v10730
        %11698 = vmatpush.bf16.msra.mxu0 %v10726
        %11699 = vmatmul.bf16.gmra.mxu0 %v9679
        %v11700 = vpop.f32.mrf.mxu0
        %v11701 = vadd.f32 %v9954, %v11700
        %v11702 = vpop.f32.mrf.mxu0
        %v11703 = vadd.f32 %v9954, %v11702
        %11704 = vmatmul.bf16.gmra.mxu0 %v9687
        %v11705 = vpop.f32.mrf.mxu0
        %v11706 = vadd.f32 %v9954, %v11705
        %v11707 = vpop.f32.mrf.mxu0
        %v11708 = vadd.f32 %v9954, %v11707
        %11709 = vdwg.mxu0
        %11710 = vmatpush.bf16.msra.mxu0 %v10786
        %11711 = vmatpush.bf16.msra.mxu0 %v10782
        %11712 = vmatpush.bf16.msra.mxu0 %v10778
        %11713 = vmatpush.bf16.msra.mxu0 %v10774
        %11714 = vmatpush.bf16.msra.mxu0 %v10770
        %11715 = vmatpush.bf16.msra.mxu0 %v10766
        %11716 = vmatpush.bf16.msra.mxu0 %v10762
        %11717 = vmatpush.bf16.msra.mxu0 %v10758
        %11718 = vmatmul.bf16.gmra.mxu0 %v9680
        %v11719 = vpop.f32.mrf.mxu0
        %v11720 = vadd.f32 %v11701, %v11719
        %v11721 = vpop.f32.mrf.mxu0
        %v11722 = vadd.f32 %v11703, %v11721
        %11723 = vmatmul.bf16.gmra.mxu0 %v9688
        %v11724 = vpop.f32.mrf.mxu0
        %v11725 = vadd.f32 %v11706, %v11724
        %v11726 = vpop.f32.mrf.mxu0
        %v11727 = vadd.f32 %v11708, %v11726
        %11728 = vdwg.mxu0
        %11729 = vmatpush.bf16.msra.mxu0 %v10818
        %11730 = vmatpush.bf16.msra.mxu0 %v10814
        %11731 = vmatpush.bf16.msra.mxu0 %v10810
        %11732 = vmatpush.bf16.msra.mxu0 %v10806
        %11733 = vmatpush.bf16.msra.mxu0 %v10802
        %11734 = vmatpush.bf16.msra.mxu0 %v10798
        %11735 = vmatpush.bf16.msra.mxu0 %v10794
        %11736 = vmatpush.bf16.msra.mxu0 %v10790
        %11737 = vmatmul.bf16.gmra.mxu0 %v9681
        %v11738 = vpop.f32.mrf.mxu0
        %v11739 = vadd.f32 %v11720, %v11738
        %v11740 = vpop.f32.mrf.mxu0
        %v11741 = vadd.f32 %v11722, %v11740
        %11742 = vmatmul.bf16.gmra.mxu0 %v9689
        %v11743 = vpop.f32.mrf.mxu0
        %v11744 = vadd.f32 %v11725, %v11743
        %v11745 = vpop.f32.mrf.mxu0
        %v11746 = vadd.f32 %v11727, %v11745
        %11747 = vdwg.mxu0
        %11748 = vmatpush.bf16.msra.mxu0 %v10850
        %11749 = vmatpush.bf16.msra.mxu0 %v10846
        %11750 = vmatpush.bf16.msra.mxu0 %v10842
        %11751 = vmatpush.bf16.msra.mxu0 %v10838
        %11752 = vmatpush.bf16.msra.mxu0 %v10834
        %11753 = vmatpush.bf16.msra.mxu0 %v10830
        %11754 = vmatpush.bf16.msra.mxu0 %v10826
        %11755 = vmatpush.bf16.msra.mxu0 %v10822
        %11756 = vmatmul.bf16.gmra.mxu0 %v9682
        %v11757 = vpop.f32.mrf.mxu0
        %v11758 = vadd.f32 %v11739, %v11757
        %v11759 = vpop.f32.mrf.mxu0
        %v11760 = vadd.f32 %v11741, %v11759
        %11761 = vmatmul.bf16.gmra.mxu0 %v9690
        %v11762 = vpop.f32.mrf.mxu0
        %v11763 = vadd.f32 %v11744, %v11762
        %v11764 = vpop.f32.mrf.mxu0
        %v11765 = vadd.f32 %v11746, %v11764
        %11766 = vdwg.mxu0
        %11767 = vmatpush.bf16.msra.mxu0 %v10882
        %11768 = vmatpush.bf16.msra.mxu0 %v10878
        %11769 = vmatpush.bf16.msra.mxu0 %v10874
        %11770 = vmatpush.bf16.msra.mxu0 %v10870
        %11771 = vmatpush.bf16.msra.mxu0 %v10866
        %11772 = vmatpush.bf16.msra.mxu0 %v10862
        %11773 = vmatpush.bf16.msra.mxu0 %v10858
        %11774 = vmatpush.bf16.msra.mxu0 %v10854
        %11775 = vmatmul.bf16.gmra.mxu0 %v9683
        %v11776 = vpop.f32.mrf.mxu0
        %v11777 = vadd.f32 %v11758, %v11776
        %v11778 = vpop.f32.mrf.mxu0
        %v11779 = vadd.f32 %v11760, %v11778
        %11780 = vmatmul.bf16.gmra.mxu0 %v9691
        %v11781 = vpop.f32.mrf.mxu0
        %v11782 = vadd.f32 %v11763, %v11781
        %v11783 = vpop.f32.mrf.mxu0
        %v11784 = vadd.f32 %v11765, %v11783
        %11785 = vdwg.mxu0
        %11786 = vmatpush.bf16.msra.mxu0 %v10914
        %11787 = vmatpush.bf16.msra.mxu0 %v10910
        %11788 = vmatpush.bf16.msra.mxu0 %v10906
        %11789 = vmatpush.bf16.msra.mxu0 %v10902
        %11790 = vmatpush.bf16.msra.mxu0 %v10898
        %11791 = vmatpush.bf16.msra.mxu0 %v10894
        %11792 = vmatpush.bf16.msra.mxu0 %v10890
        %11793 = vmatpush.bf16.msra.mxu0 %v10886
        %11794 = vmatmul.bf16.gmra.mxu0 %v9684
        %v11795 = vpop.f32.mrf.mxu0
        %v11796 = vadd.f32 %v11777, %v11795
        %v11797 = vpop.f32.mrf.mxu0
        %v11798 = vadd.f32 %v11779, %v11797
        %11799 = vmatmul.bf16.gmra.mxu0 %v9692
        %v11800 = vpop.f32.mrf.mxu0
        %v11801 = vadd.f32 %v11782, %v11800
        %v11802 = vpop.f32.mrf.mxu0
        %v11803 = vadd.f32 %v11784, %v11802
        %11804 = vdwg.mxu0
        %11805 = vmatpush.bf16.msra.mxu0 %v10946
        %11806 = vmatpush.bf16.msra.mxu0 %v10942
        %11807 = vmatpush.bf16.msra.mxu0 %v10938
        %11808 = vmatpush.bf16.msra.mxu0 %v10934
        %11809 = vmatpush.bf16.msra.mxu0 %v10930
        %11810 = vmatpush.bf16.msra.mxu0 %v10926
        %11811 = vmatpush.bf16.msra.mxu0 %v10922
        %11812 = vmatpush.bf16.msra.mxu0 %v10918
        %11813 = vmatmul.bf16.gmra.mxu0 %v9685
        %v11814 = vpop.f32.mrf.mxu0
        %v11815 = vadd.f32 %v11796, %v11814
        %v11816 = vpop.f32.mrf.mxu0
        %v11817 = vadd.f32 %v11798, %v11816
        %11818 = vmatmul.bf16.gmra.mxu0 %v9693
        %v11819 = vpop.f32.mrf.mxu0
        %v11820 = vadd.f32 %v11801, %v11819
        %v11821 = vpop.f32.mrf.mxu0
        %v11822 = vadd.f32 %v11803, %v11821
        %11823 = vdwg.mxu0
        %11824 = vmatpush.bf16.msra.mxu0 %v10978
        %11825 = vmatpush.bf16.msra.mxu0 %v10974
        %11826 = vmatpush.bf16.msra.mxu0 %v10970
        %11827 = vmatpush.bf16.msra.mxu0 %v10966
        %11828 = vmatpush.bf16.msra.mxu0 %v10962
        %11829 = vmatpush.bf16.msra.mxu0 %v10958
        %11830 = vmatpush.bf16.msra.mxu0 %v10954
        %11831 = vmatpush.bf16.msra.mxu0 %v10950
        %11832 = vmatmul.bf16.gmra.mxu0 %v9686
        %v11833 = vpop.f32.mrf.mxu0
        %v11834 = vadd.f32 %v11815, %v11833
        %v11835 = vpop.f32.mrf.mxu0
        %v11836 = vadd.f32 %v11817, %v11835
        %11837 = vmatmul.bf16.gmra.mxu0 %v9694
        %v11838 = vpop.f32.mrf.mxu0
        %v11839 = vadd.f32 %v11820, %v11838
        %v11840 = vpop.f32.mrf.mxu0
        %v11841 = vadd.f32 %v11822, %v11840
        %11842 = vdwg.mxu0
        %v11843 = vmax.f32 %v11378, -100.0
        %v11844 = vmax.f32 %v11530, -100.0
        %v11845 = vmax.f32 %v11682, -100.0
        %v11846 = vmax.f32 %v11834, -100.0
        %v11847 = vmax.f32 %v11380, -100.0
        %v11848 = vmax.f32 %v11532, -100.0
        %v11849 = vmax.f32 %v11684, -100.0
        %v11850 = vmax.f32 %v11836, -100.0
        %v11851 = vmax.f32 %v11383, -100.0
        %v11852 = vmax.f32 %v11535, -100.0
        %v11853 = vmax.f32 %v11687, -100.0
        %v11854 = vmax.f32 %v11839, -100.0
        %v11855 = vmax.f32 %v11385, -100.0
        %v11856 = vmax.f32 %v11537, -100.0
        %v11857 = vmax.f32 %v11689, -100.0
        %v11858 = vmax.f32 %v11841, -100.0
        %v11859 = vmin.f32 %v11843, 100.0
        %v11860 = vmin.f32 %v11844, 100.0
        %v11861 = vmin.f32 %v11845, 100.0
        %v11862 = vmin.f32 %v11846, 100.0
        %v11863 = vmin.f32 %v11847, 100.0
        %v11864 = vmin.f32 %v11848, 100.0
        %v11865 = vmin.f32 %v11849, 100.0
        %v11866 = vmin.f32 %v11850, 100.0
        %v11867 = vmin.f32 %v11851, 100.0
        %v11868 = vmin.f32 %v11852, 100.0
        %v11869 = vmin.f32 %v11853, 100.0
        %v11870 = vmin.f32 %v11854, 100.0
        %v11871 = vmin.f32 %v11855, 100.0
        %v11872 = vmin.f32 %v11856, 100.0
        %v11873 = vmin.f32 %v11857, 100.0
        %v11874 = vmin.f32 %v11858, 100.0
        %v11875 = vadd.f32 %v4753, %v11859
        %v11876 = vadd.f32 %v4754, %v11860
        %v11877 = vadd.f32 %v4755, %v11861
        %v11878 = vadd.f32 %v4756, %v11862
        %v11879 = vadd.f32 %v4757, %v11863
        %v11880 = vadd.f32 %v4758, %v11864
        %v11881 = vadd.f32 %v4759, %v11865
        %v11882 = vadd.f32 %v4760, %v11866
        %v11883 = vadd.f32 %v4761, %v11867
        %v11884 = vadd.f32 %v4762, %v11868
        %v11885 = vadd.f32 %v4763, %v11869
        %v11886 = vadd.f32 %v4764, %v11870
        %v11887 = vadd.f32 %v4765, %v11871
        %v11888 = vadd.f32 %v4766, %v11872
        %v11889 = vadd.f32 %v4767, %v11873
        %v11890 = vadd.f32 %v4768, %v11874
        %v11891 = vmax.f32 %v11875, -100.0
        %v11892 = vmax.f32 %v11876, -100.0
        %v11893 = vmax.f32 %v11877, -100.0
        %v11894 = vmax.f32 %v11878, -100.0
        %v11895 = vmax.f32 %v11879, -100.0
        %v11896 = vmax.f32 %v11880, -100.0
        %v11897 = vmax.f32 %v11881, -100.0
        %v11898 = vmax.f32 %v11882, -100.0
        %v11899 = vmax.f32 %v11883, -100.0
        %v11900 = vmax.f32 %v11884, -100.0
        %v11901 = vmax.f32 %v11885, -100.0
        %v11902 = vmax.f32 %v11886, -100.0
        %v11903 = vmax.f32 %v11887, -100.0
        %v11904 = vmax.f32 %v11888, -100.0
        %v11905 = vmax.f32 %v11889, -100.0
        %v11906 = vmax.f32 %v11890, -100.0
        %v11907 = vmin.f32 %v11891, 100.0
        %v11908 = vmin.f32 %v11892, 100.0
        %v11909 = vmin.f32 %v11893, 100.0
        %v11910 = vmin.f32 %v11894, 100.0
        %v11911 = vmin.f32 %v11895, 100.0
        %v11912 = vmin.f32 %v11896, 100.0
        %v11913 = vmin.f32 %v11897, 100.0
        %v11914 = vmin.f32 %v11898, 100.0
        %v11915 = vmin.f32 %v11899, 100.0
        %v11916 = vmin.f32 %v11900, 100.0
        %v11917 = vmin.f32 %v11901, 100.0
        %v11918 = vmin.f32 %v11902, 100.0
        %v11919 = vmin.f32 %v11903, 100.0
        %v11920 = vmin.f32 %v11904, 100.0
        %v11921 = vmin.f32 %v11905, 100.0
        %v11922 = vmin.f32 %v11906, 100.0
        %v11923 = vand.u32 2147483647, %v11907
        %v11924 = vand.u32 2147483647, %v11908
        %v11925 = vand.u32 2147483647, %v11909
        %v11926 = vand.u32 2147483647, %v11910
        %v11927 = vand.u32 2147483647, %v11911
        %v11928 = vand.u32 2147483647, %v11912
        %v11929 = vand.u32 2147483647, %v11913
        %v11930 = vand.u32 2147483647, %v11914
        %v11931 = vand.u32 2147483647, %v11915
        %v11932 = vand.u32 2147483647, %v11916
        %v11933 = vand.u32 2147483647, %v11917
        %v11934 = vand.u32 2147483647, %v11918
        %v11935 = vand.u32 2147483647, %v11919
        %v11936 = vand.u32 2147483647, %v11920
        %v11937 = vand.u32 2147483647, %v11921
        %v11938 = vand.u32 2147483647, %v11922
        %vm11939 = vcmp.lt.f32.partialorder %v11923, inf
        %vm11940 = vcmp.lt.f32.partialorder %v11924, inf
        %vm11941 = vcmp.lt.f32.partialorder %v11925, inf
        %vm11942 = vcmp.lt.f32.partialorder %v11926, inf
        %vm11943 = vcmp.lt.f32.partialorder %v11927, inf
        %vm11944 = vcmp.lt.f32.partialorder %v11928, inf
        %vm11945 = vcmp.lt.f32.partialorder %v11929, inf
        %vm11946 = vcmp.lt.f32.partialorder %v11930, inf
        %vm11947 = vcmp.lt.f32.partialorder %v11931, inf
        %vm11948 = vcmp.lt.f32.partialorder %v11932, inf
        %vm11949 = vcmp.lt.f32.partialorder %v11933, inf
        %vm11950 = vcmp.lt.f32.partialorder %v11934, inf
        %vm11951 = vcmp.lt.f32.partialorder %v11935, inf
        %vm11952 = vcmp.lt.f32.partialorder %v11936, inf
        %vm11953 = vcmp.lt.f32.partialorder %v11937, inf
        %vm11954 = vcmp.lt.f32.partialorder %v11938, inf
        %v11955 = vsel %vm11939, %v11907, %v936
        %v11956 = vsel %vm11940, %v11908, %v937
        %v11957 = vsel %vm11941, %v11909, %v938
        %v11958 = vsel %vm11942, %v11910, %v939
        %v11959 = vsel %vm11943, %v11911, %v940
        %v11960 = vsel %vm11944, %v11912, %v941
        %v11961 = vsel %vm11945, %v11913, %v942
        %v11962 = vsel %vm11946, %v11914, %v943
        %v11963 = vsel %vm11947, %v11915, %v944
        %v11964 = vsel %vm11948, %v11916, %v945
        %v11965 = vsel %vm11949, %v11917, %v946
        %v11966 = vsel %vm11950, %v11918, %v947
        %v11967 = vsel %vm11951, %v11919, %v948
        %v11968 = vsel %vm11952, %v11920, %v949
        %v11969 = vsel %vm11953, %v11921, %v950
        %v11970 = vsel %vm11954, %v11922, %v951
        %11971 = vst [vmem:[#allocation2] sm:$0xff] %v11955
        %11972 = vst [vmem:[#allocation2 + $0x8] sm:$0xff] %v11956
        %11973 = vst [vmem:[#allocation2 + $0x10] sm:$0xff] %v11957
        %11974 = vst [vmem:[#allocation2 + $0x18] sm:$0xff] %v11958
        %11975 = vst [vmem:[#allocation2 + $0x20] sm:$0xff] %v11959
        %11976 = vst [vmem:[#allocation2 + $0x28] sm:$0xff] %v11960
        %11977 = vst [vmem:[#allocation2 + $0x30] sm:$0xff] %v11961
        %11978 = vst [vmem:[#allocation2 + $0x38] sm:$0xff] %v11962
        %11979 = vst [vmem:[#allocation2 + $0x40] sm:$0xff] %v11963
        %11980 = vst [vmem:[#allocation2 + $0x48] sm:$0xff] %v11964
        %11981 = vst [vmem:[#allocation2 + $0x50] sm:$0xff] %v11965
        %11982 = vst [vmem:[#allocation2 + $0x58] sm:$0xff] %v11966
        %11983 = vst [vmem:[#allocation2 + $0x60] sm:$0xff] %v11967
        %11984 = vst [vmem:[#allocation2 + $0x68] sm:$0xff] %v11968
        %11985 = vst [vmem:[#allocation2 + $0x70] sm:$0xff] %v11969
        %11986 = vst [vmem:[#allocation2 + $0x78] sm:$0xff] %v11970
        %p11987 = scmp.eq.s32.totalorder %s42, 3
        // Predicated region
        $region129: #{backbone_forward.1} parent=71 // pred_check
          %p11988 = pneg %p11987
        $region130: #{backbone_forward.1} parent=71 // pred_check_branch
          %11990 = sbr.rel (%p11988) target = $region132
        $region131: #{backbone_forward.1} parent=71 // pred_region
          %v11991 = vld [vmem:[#allocation2] sm:$0xff]
          %v11992 = vld [vmem:[#allocation2 + $0x8] sm:$0xff]
          %v11993 = vld [vmem:[#allocation2 + $0x10] sm:$0xff]
          %v11994 = vld [vmem:[#allocation2 + $0x18] sm:$0xff]
          %v11995 = vld [vmem:[#allocation2 + $0x20] sm:$0xff]
          %v11996 = vld [vmem:[#allocation2 + $0x28] sm:$0xff]
          %v11997 = vld [vmem:[#allocation2 + $0x30] sm:$0xff]
          %v11998 = vld [vmem:[#allocation2 + $0x38] sm:$0xff]
          %v11999 = vld [vmem:[#allocation2 + $0x40] sm:$0xff]
          %v12000 = vld [vmem:[#allocation2 + $0x48] sm:$0xff]
          %v12001 = vld [vmem:[#allocation2 + $0x50] sm:$0xff]
          %v12002 = vld [vmem:[#allocation2 + $0x58] sm:$0xff]
          %v12003 = vld [vmem:[#allocation2 + $0x60] sm:$0xff]
          %v12004 = vld [vmem:[#allocation2 + $0x68] sm:$0xff]
          %v12005 = vld [vmem:[#allocation2 + $0x70] sm:$0xff]
          %v12006 = vld [vmem:[#allocation2 + $0x78] sm:$0xff]
          %v12007 = vld [vmem:[#allocation21] sm:$0xf]
          %v12008 = vld [vmem:[#allocation23] sm:$0xf]
          %v12009 = vadd.f32 %v11991, %v11992
          %v12010 = vadd.f32 %v12009, %v11993
          %v12011 = vadd.f32 %v12010, %v11994
          %12012 = vadd.xlane.f32.xlu0 %v12011
          %v12013 = vpop.xlane.xlu0 %12012
          %v12014 = vadd.f32 %v11995, %v11996
          %v12015 = vadd.f32 %v12014, %v11997
          %v12016 = vadd.f32 %v12015, %v11998
          %12017 = vadd.xlane.f32.xlu0 %v12016
          %v12018 = vpop.xlane.xlu0 %12017
          %v12019 = vadd.f32 %v11999, %v12000
          %v12020 = vadd.f32 %v12019, %v12001
          %v12021 = vadd.f32 %v12020, %v12002
          %12022 = vadd.xlane.f32.xlu0 %v12021
          %v12023 = vpop.xlane.xlu0 %12022
          %v12024 = vadd.f32 %v12003, %v12004
          %v12025 = vadd.f32 %v12024, %v12005
          %v12026 = vadd.f32 %v12025, %v12006
          %12027 = vadd.xlane.f32.xlu0 %v12026
          %v12028 = vpop.xlane.xlu0 %12027
          %v12029 = vmul.f32 %v12013, %v1017
          %v12030 = vmul.f32 %v12018, %v1017
          %v12031 = vmul.f32 %v12023, %v1017
          %v12032 = vmul.f32 %v12028, %v1017
          %v12033 = vsub.f32 %v11991, %v12029
          %v12034 = vsub.f32 %v11992, %v12029
          %v12035 = vsub.f32 %v11993, %v12029
          %v12036 = vsub.f32 %v11994, %v12029
          %v12037 = vsub.f32 %v11995, %v12030
          %v12038 = vsub.f32 %v11996, %v12030
          %v12039 = vsub.f32 %v11997, %v12030
          %v12040 = vsub.f32 %v11998, %v12030
          %v12041 = vsub.f32 %v11999, %v12031
          %v12042 = vsub.f32 %v12000, %v12031
          %v12043 = vsub.f32 %v12001, %v12031
          %v12044 = vsub.f32 %v12002, %v12031
          %v12045 = vsub.f32 %v12003, %v12032
          %v12046 = vsub.f32 %v12004, %v12032
          %v12047 = vsub.f32 %v12005, %v12032
          %v12048 = vsub.f32 %v12006, %v12032
          %v12049 = vmul.f32 %v12033, %v12033
          %v12050 = vmul.f32 %v12034, %v12034
          %v12051 = vmul.f32 %v12035, %v12035
          %v12052 = vmul.f32 %v12036, %v12036
          %v12053 = vmul.f32 %v12037, %v12037
          %v12054 = vmul.f32 %v12038, %v12038
          %v12055 = vmul.f32 %v12039, %v12039
          %v12056 = vmul.f32 %v12040, %v12040
          %v12057 = vmul.f32 %v12041, %v12041
          %v12058 = vmul.f32 %v12042, %v12042
          %v12059 = vmul.f32 %v12043, %v12043
          %v12060 = vmul.f32 %v12044, %v12044
          %v12061 = vmul.f32 %v12045, %v12045
          %v12062 = vmul.f32 %v12046, %v12046
          %v12063 = vmul.f32 %v12047, %v12047
          %v12064 = vmul.f32 %v12048, %v12048
          %v12065 = vadd.f32 %v12049, %v12050
          %v12066 = vadd.f32 %v12065, %v12051
          %v12067 = vadd.f32 %v12066, %v12052
          %12068 = vadd.xlane.f32.xlu0 %v12067
          %v12069 = vpop.xlane.xlu0 %12068
          %v12070 = vadd.f32 %v12053, %v12054
          %v12071 = vadd.f32 %v12070, %v12055
          %v12072 = vadd.f32 %v12071, %v12056
          %12073 = vadd.xlane.f32.xlu0 %v12072
          %v12074 = vpop.xlane.xlu0 %12073
          %v12075 = vadd.f32 %v12057, %v12058
          %v12076 = vadd.f32 %v12075, %v12059
          %v12077 = vadd.f32 %v12076, %v12060
          %12078 = vadd.xlane.f32.xlu0 %v12077
          %v12079 = vpop.xlane.xlu0 %12078
          %v12080 = vadd.f32 %v12061, %v12062
          %v12081 = vadd.f32 %v12080, %v12063
          %v12082 = vadd.f32 %v12081, %v12064
          %12083 = vadd.xlane.f32.xlu0 %v12082
          %v12084 = vpop.xlane.xlu0 %12083
          %v12085 = vmul.f32 %v12069, %v1017
          %v12086 = vmul.f32 %v12074, %v1017
          %v12087 = vmul.f32 %v12079, %v1017
          %v12088 = vmul.f32 %v12084, %v1017
          %v12089 = vadd.f32 %v12085, 1e-05
          %v12090 = vadd.f32 %v12086, 1e-05
          %v12091 = vadd.f32 %v12087, 1e-05
          %v12092 = vadd.f32 %v12088, 1e-05
          %v12093 = vrsqrt.pop %v12089
          %v12094 = vmul.f32 %v12093, %v12089
          %v12095 = vmul.f32 %v12094, %v12093
          %v12096 = vmul.f32 0.5, %v12095
          %v12097 = vsub.f32 1.5, %v12096
          %v12098 = vmul.f32 %v12093, %v12097
          %vm12099 = vweird.f32 %v12089
          %vm12100 = vweird.f32 %v12093
          %vm12101 = vmor %vm12099, %vm12100
          %v12102 = vsel %vm12101, %v12093, %v12098
          %v12103 = vrsqrt.pop %v12090
          %v12104 = vmul.f32 %v12103, %v12090
          %v12105 = vmul.f32 %v12104, %v12103
          %v12106 = vmul.f32 0.5, %v12105
          %v12107 = vsub.f32 1.5, %v12106
          %v12108 = vmul.f32 %v12103, %v12107
          %vm12109 = vweird.f32 %v12090
          %vm12110 = vweird.f32 %v12103
          %vm12111 = vmor %vm12109, %vm12110
          %v12112 = vsel %vm12111, %v12103, %v12108
          %v12113 = vrsqrt.pop %v12091
          %v12114 = vmul.f32 %v12113, %v12091
          %v12115 = vmul.f32 %v12114, %v12113
          %v12116 = vmul.f32 0.5, %v12115
          %v12117 = vsub.f32 1.5, %v12116
          %v12118 = vmul.f32 %v12113, %v12117
          %vm12119 = vweird.f32 %v12091
          %vm12120 = vweird.f32 %v12113
          %vm12121 = vmor %vm12119, %vm12120
          %v12122 = vsel %vm12121, %v12113, %v12118
          %v12123 = vrsqrt.pop %v12092
          %v12124 = vmul.f32 %v12123, %v12092
          %v12125 = vmul.f32 %v12124, %v12123
          %v12126 = vmul.f32 0.5, %v12125
          %v12127 = vsub.f32 1.5, %v12126
          %v12128 = vmul.f32 %v12123, %v12127
          %vm12129 = vweird.f32 %v12092
          %vm12130 = vweird.f32 %v12123
          %vm12131 = vmor %vm12129, %vm12130
          %v12132 = vsel %vm12131, %v12123, %v12128
          %v12133 = vmul.f32 %v12033, %v12102
          %v12134 = vmul.f32 %v12034, %v12102
          %v12135 = vmul.f32 %v12035, %v12102
          %v12136 = vmul.f32 %v12036, %v12102
          %v12137 = vmul.f32 %v12037, %v12112
          %v12138 = vmul.f32 %v12038, %v12112
          %v12139 = vmul.f32 %v12039, %v12112
          %v12140 = vmul.f32 %v12040, %v12112
          %v12141 = vmul.f32 %v12041, %v12122
          %v12142 = vmul.f32 %v12042, %v12122
          %v12143 = vmul.f32 %v12043, %v12122
          %v12144 = vmul.f32 %v12044, %v12122
          %v12145 = vmul.f32 %v12045, %v12132
          %v12146 = vmul.f32 %v12046, %v12132
          %v12147 = vmul.f32 %v12047, %v12132
          %v12148 = vmul.f32 %v12048, %v12132
          %v12150 = vperm.slane %v12007, 0
          %v12151 = vperm.slane %v12007, 1
          %v12152 = vperm.slane %v12007, 2
          %v12153 = vperm.slane %v12007, 3
          %v12158 = vmul.f32 %v12133, %v12150
          %v12159 = vmul.f32 %v12134, %v12151
          %v12160 = vmul.f32 %v12135, %v12152
          %v12161 = vmul.f32 %v12136, %v12153
          %v12162 = vmul.f32 %v12137, %v12150
          %v12163 = vmul.f32 %v12138, %v12151
          %v12164 = vmul.f32 %v12139, %v12152
          %v12165 = vmul.f32 %v12140, %v12153
          %v12166 = vmul.f32 %v12141, %v12150
          %v12167 = vmul.f32 %v12142, %v12151
          %v12168 = vmul.f32 %v12143, %v12152
          %v12169 = vmul.f32 %v12144, %v12153
          %v12170 = vmul.f32 %v12145, %v12150
          %v12171 = vmul.f32 %v12146, %v12151
          %v12172 = vmul.f32 %v12147, %v12152
          %v12173 = vmul.f32 %v12148, %v12153
          %v12175 = vperm.slane %v12008, 0
          %v12176 = vperm.slane %v12008, 1
          %v12177 = vperm.slane %v12008, 2
          %v12178 = vperm.slane %v12008, 3
          %v12183 = vadd.f32 %v12158, %v12175
          %v12184 = vadd.f32 %v12159, %v12176
          %v12185 = vadd.f32 %v12160, %v12177
          %v12186 = vadd.f32 %v12161, %v12178
          %v12187 = vadd.f32 %v12162, %v12175
          %v12188 = vadd.f32 %v12163, %v12176
          %v12189 = vadd.f32 %v12164, %v12177
          %v12190 = vadd.f32 %v12165, %v12178
          %v12191 = vadd.f32 %v12166, %v12175
          %v12192 = vadd.f32 %v12167, %v12176
          %v12193 = vadd.f32 %v12168, %v12177
          %v12194 = vadd.f32 %v12169, %v12178
          %v12195 = vadd.f32 %v12170, %v12175
          %v12196 = vadd.f32 %v12171, %v12176
          %v12197 = vadd.f32 %v12172, %v12177
          %v12198 = vadd.f32 %v12173, %v12178
          %12199 = vst [vmem:[#allocation24] sm:$0xff] %v12183
          %12200 = vst [vmem:[#allocation24 + $0x8] sm:$0xff] %v12184
          %12201 = vst [vmem:[#allocation24 + $0x10] sm:$0xff] %v12185
          %12202 = vst [vmem:[#allocation24 + $0x18] sm:$0xff] %v12186
          %12203 = vst [vmem:[#allocation24 + $0x20] sm:$0xff] %v12187
          %12204 = vst [vmem:[#allocation24 + $0x28] sm:$0xff] %v12188
          %12205 = vst [vmem:[#allocation24 + $0x30] sm:$0xff] %v12189
          %12206 = vst [vmem:[#allocation24 + $0x38] sm:$0xff] %v12190
          %12207 = vst [vmem:[#allocation24 + $0x40] sm:$0xff] %v12191
          %12208 = vst [vmem:[#allocation24 + $0x48] sm:$0xff] %v12192
          %12209 = vst [vmem:[#allocation24 + $0x50] sm:$0xff] %v12193
          %12210 = vst [vmem:[#allocation24 + $0x58] sm:$0xff] %v12194
          %12211 = vst [vmem:[#allocation24 + $0x60] sm:$0xff] %v12195
          %12212 = vst [vmem:[#allocation24 + $0x68] sm:$0xff] %v12196
          %12213 = vst [vmem:[#allocation24 + $0x70] sm:$0xff] %v12197
          %12214 = vst [vmem:[#allocation24 + $0x78] sm:$0xff] %v12198
        $region132: #{backbone_forward.1} parent=71 // pred_fallthru
          _
        // Predicated region
        $region133: #{backbone_forward.1} parent=71 // pred_check
          %p12215 = pneg %p378
        $region134: #{backbone_forward.1} parent=71 // pred_check_branch
          %12217 = sbr.rel (%p12215) target = $region136
        $region135: #{backbone_forward.1} parent=71 // pred_region
          %12219 = vsyncadd [#allocation5], 0
          %s12220 = sshll.u32 [#allocation24], 4
          %s12221 = int_to_ptr.vmem [resolvable:$true] %s12220
          %s12222 = sshll.u32 %s13, 4
          %s12223 = int_to_ptr.hbm [resolvable:$true] %s12222
          %12228 = dma.vmem_to_hbm [thread:$0]  %s12221, 2048, %s12223, [#allocation5], 512, 512, 32
        $region136: #{backbone_forward.1} parent=71 // pred_fallthru
          _
        // Predicated region
        $region137: #{backbone_forward.1} parent=71 // pred_check
          %p12229 = pneg %p378
        $region138: #{backbone_forward.1} parent=71 // pred_check_branch
          %12231 = sbr.rel (%p12229) target = $region140
        $region139: #{backbone_forward.1} parent=71 // pred_region
          %12233 = dma.done [#allocation5], 2048
        $region140: #{backbone_forward.1} parent=71 // pred_fallthru
          _
      $region72: #{backbone_forward.1} parent=5 // pred_fallthru
        _
      %p12234 = scmp.le.s32.totalorder 2, %s37
      // Predicated region
      $region141: #{backbone_forward.1} parent=5 // pred_check
        %p12235 = pneg %p12234
      $region142: #{backbone_forward.1} parent=5 // pred_check_branch
        %12237 = sbr.rel (%p12235) target = $region144
      $region143: #{backbone_forward.1} parent=5 // pred_region
        %s12238 = ssub.s32 %s37, 2
      $region144: #{backbone_forward.1} parent=5 // pred_fallthru
        _
    $region6: #{backbone_forward.1} parent=1 // loop_footer
      %s41 = sadd.s32 1, %s37
    $region7: #{backbone_forward.1} parent=1 // loop_footer_branch
      %36 = sbr.rel target = $region3
    $region8: #{backbone_forward.1} parent=1 // loop_exit
      _
    %12239 = vsyncpa [#allocation4], 1
    %s12240 = scalar_lea.sflag [#allocation4], 1
    %12241 = vsyncpa %s12240, 1
    %12242 = vsyncpa [#allocation7], 1
    %s12243 = scalar_lea.sflag [#allocation7], 1
    %12244 = vsyncpa %s12243, 1
    %12245 = vsyncpa [#allocation10], 1
    %s12246 = scalar_lea.sflag [#allocation10], 1
    %12247 = vsyncpa %s12246, 1
    %12248 = vsyncpa [#allocation13], 1
    %s12249 = scalar_lea.sflag [#allocation13], 1
    %12250 = vsyncpa %s12249, 1
    %12251 = vsyncpa [#allocation16], 1
    %s12252 = scalar_lea.sflag [#allocation16], 1
    %12253 = vsyncpa %s12252, 1
    %12254 = vsyncpa [#allocation19], 1
    %s12255 = scalar_lea.sflag [#allocation19], 1
    %12256 = vsyncpa %s12255, 1
    %12257 = vsyncpa [#allocation22], 1
    %12258 = vsyncpa [#allocation5], 1
    %s12259 = scalar_lea.sflag [#allocation5], 1
    %12260 = vsyncpa %s12259, 1

</llo_original>
